<compile_context>
chip_gen: v5e
topology: v5e:2x2
jax: 0.10.0
libtpu: 0.0.40
codegen_flags: <defaults>
</compile_context>

<pallas_src>
import functools

import jax
import jax.numpy as jnp
from jax.experimental import pallas as pl
from jax.experimental.pallas import tpu as pltpu

BN_EPS = 1e-5
LRELU_SLOPE = 0.2
KW = 3          # conv kernel size
STRIDE = 2      # conv stride
N_CLS = 10
HEAD_HIDDEN = 1024


def conv_out_size(s):
    return (s - KW) // STRIDE + 1


# ----------------------------------------------------------------------------
# Fused Pallas kernel: conv1 -> (conv+BN)x3 -> Linear -> Linear -> entropy
# ----------------------------------------------------------------------------
def classifier_kernel(cols1_ref, wconv_ref, bgb_ref, wf1_ref, wf2_ref, bhead_ref,
                      logits_ref, ent_ref,
                      a1_ref, a2_ref, a3_ref, c2_ref, c3_ref, c4_ref,
                      *, batch, chans, spatials, ita):
    f32 = jnp.float32
    bf16 = jnp.bfloat16

    def act_fn(y, li, cout, use_bn):
        # y: (M, cout) f32 pre-activation; bgb[li] = [bias; gamma; beta].
        y = y + bgb_ref[li, 0:1, :cout]
        if use_bn:
            # Two-pass training-mode BatchNorm over rows (biased variance).
            m = y.shape[0]
            mean = jnp.sum(y, axis=0, keepdims=True) * (1.0 / m)
            d = y - mean
            var = jnp.sum(d * d, axis=0, keepdims=True) * (1.0 / m)
            y = d * jax.lax.rsqrt(var + BN_EPS)
            y = y * bgb_ref[li, 1:2, :cout] + bgb_ref[li, 2:3, :cout]
        return jnp.where(y >= 0, y, LRELU_SLOPE * y)

    def conv_from_cols(cols_bf16, li, cin, cout, use_bn):
        # Single fused matmul with K = 9*cin (instead of 9 small matmuls).
        w = wconv_ref[li, :KW * KW * cin, :cout]
        y = jnp.dot(cols_bf16, w, preferred_element_type=f32)
        return act_fn(y, li, cout, use_bn)

    def build_cols(act_ref, cols_ref, h, cin):
        """In-kernel im2col for a 3x3 / stride-2 / VALID conv.

        act_ref : (batch*h*h, cin) f32 flattened-NHWC activation scratch.
        cols_ref: (batch*ho*ho, 9*cin) f32 destination scratch.
        All indices are static; the W-stride-2 tap selection is a strided
        sublane load (ref[pl.ds(row, Wo, stride=2), :]) -- no gather matmuls.
        """
        ho = conv_out_size(h)
        for n in range(batch):
            for r in range(ho):
                dst = (n * ho + r) * ho
                for i in range(KW):
                    src = n * h * h + (STRIDE * r + i) * h
                    for j in range(KW):
                        t = i * KW + j
                        if ho > 1:
                            rows = pl.ds(src + j, ho, stride=STRIDE)
                        else:
                            rows = pl.ds(src + j, 1)
                        cols_ref[pl.ds(dst, ho), t * cin:(t + 1) * cin] = \
                            act_ref[rows, :]
        return cols_ref[...].astype(bf16)

    # ---- Layer 1 (no BN): cols pre-built on the host -> single matmul. ----
    cin1, cout1 = chans[0]
    a1 = conv_from_cols(cols1_ref[...], 0, cin1, cout1, use_bn=False)
    a1_ref[...] = a1                                   # (N*15*15, ndf)

    # ---- Layers 2..4: in-kernel im2col via static strided tap slices. ----
    cols_refs = (c2_ref, c3_ref, c4_ref)
    next_act_refs = (a2_ref, a3_ref, None)
    prev = a1_ref
    a_last = None
    for idx in range(1, 4):
        cin, cout = chans[idx]
        cols_b = build_cols(prev, cols_refs[idx - 1], spatials[idx], cin)
        a = conv_from_cols(cols_b, idx, cin, cout, use_bn=True)
        a_last = a
        nxt = next_act_refs[idx - 1]
        if nxt is not None:
            nxt[...] = a
            prev = nxt
    # a_last: (N, 4*ndf) f32 (final spatial is 1x1)

    # ---- Head: Linear(4ndf -> 1024) -> Linear(1024 -> 10). ----
    h1 = jnp.dot(a_last.astype(bf16), wf1_ref[...], preferred_element_type=f32)
    h1 = h1 + bhead_ref[0:1, :]
    logits = jnp.dot(h1.astype(bf16), wf2_ref[...], preferred_element_type=f32)
    logits = logits + bhead_ref[1:2, :N_CLS]
    logits_ref[...] = logits

    # ---- Entropy side-loss (self.loss_ent), f32 VPU/EUP math. ----
    mmax = jnp.max(logits, axis=1, keepdims=True)
    z = logits - mmax
    ez = jnp.exp(z)
    s = jnp.sum(ez, axis=1, keepdims=True)
    p = ez / s
    logp = z - jnp.log(s)
    ent = -jnp.sum(p * logp, axis=1, keepdims=True)    # (N, 1)
    ent = ent / 2.9444
    ent = ent * ent + 1e-08
    ent = jnp.exp(ita * jnp.log(ent))                  # ent ** ita (ent > 0)
    ent_ref[...] = jnp.sum(ent, axis=0, keepdims=True) * (1.0 / batch)


# ----------------------------------------------------------------------------
# pallas_call wrapper (single fused launch)
# ----------------------------------------------------------------------------
def classifier_forward(kp, x_nhwc, ita=1.5):
    """Returns (logits, loss_ent).  x_nhwc: (N, H, W, C) float32."""
    batch, h, w, input_nc = x_nhwc.shape
    assert h == w, "square inputs only"
    ndf = kp["wf1"].shape[0] // 4
    chans = ((input_nc, ndf), (ndf, ndf), (ndf, 2 * ndf), (2 * ndf, 4 * ndf))

    spatials = []
    s = h
    for _ in range(4):
        spatials.append(s)
        s = conv_out_size(s)
    assert s == 1, "flatten->Linear(4*ndf) requires final spatial size 1"
    m_list = [batch * conv_out_size(sp) ** 2 for sp in spatials]

    cols1 = im2col(x_nhwc).astype(jnp.bfloat16)        # (N*15*15, 9*Cin)

    args = (cols1, kp["wconv"], kp["bgb"], kp["wf1"], kp["wf2"], kp["bhead"])

    def full_spec(a):
        zeros = (0,) * a.ndim
        return pl.BlockSpec(a.shape, lambda i: zeros)

    scratch_shapes = [
        pltpu.VMEM((m_list[0], chans[0][1]), jnp.float32),            # a1
        pltpu.VMEM((m_list[1], chans[1][1]), jnp.float32),            # a2
        pltpu.VMEM((m_list[2], chans[2][1]), jnp.float32),            # a3
        pltpu.VMEM((m_list[1], KW * KW * chans[1][0]), jnp.float32),  # cols2
        pltpu.VMEM((m_list[2], KW * KW * chans[2][0]), jnp.float32),  # cols3
        pltpu.VMEM((m_list[3], KW * KW * chans[3][0]), jnp.float32),  # cols4
    ]

    flops = 0
    for (cin, cout), m in zip(chans, m_list):
        flops += 2 * m * (KW * KW * cin) * cout
    flops += 2 * batch * (4 * ndf * HEAD_HIDDEN + HEAD_HIDDEN * N_CLS)
    bytes_accessed = sum(int(a.size) * a.dtype.itemsize for a in args)
    bytes_accessed += batch * N_CLS * 4 + 4
    cost = pl.CostEstimate(flops=flops,
                           transcendentals=batch * (N_CLS + 3),
                           bytes_accessed=bytes_accessed)

    kern = functools.partial(classifier_kernel, batch=batch, chans=chans,
                             spatials=tuple(spatials), ita=ita)
    logits, ent = pl.pallas_call(
        kern,
        out_shape=(jax.ShapeDtypeStruct((batch, N_CLS), jnp.float32),
                   jax.ShapeDtypeStruct((1, 1), jnp.float32)),
        grid=(1,),
        in_specs=[full_spec(a) for a in args],
        out_specs=(pl.BlockSpec((batch, N_CLS), lambda i: (0, 0)),
                   pl.BlockSpec((1, 1), lambda i: (0, 0))),
        scratch_shapes=scratch_shapes,
        compiler_params=pltpu.CompilerParams(
            dimension_semantics=("arbitrary",),
            vmem_limit_bytes=32 * 1024 * 1024),
        cost_estimate=cost,
    )(*args)
    return logits, ent[0, 0]


# ----------------------------------------------------------------------------
# Host-side glue: layer-1 im2col + parameter packing
# ----------------------------------------------------------------------------
def im2col(x):
    """x: (N, H, W, C) -> (N*Ho*Wo, 9*C) for k=3 / stride=2 / valid padding."""
    n, h, w, c = x.shape
    ho, wo = conv_out_size(h), conv_out_size(w)
    patches = []
    for i in range(KW):
        for j in range(KW):
            patches.append(x[:, i:i + STRIDE * (ho - 1) + 1:STRIDE,
                              j:j + STRIDE * (wo - 1) + 1:STRIDE, :])
    p = jnp.stack(patches, axis=3)                     # (N, Ho, Wo, 9, C)
    return p.reshape(n * ho * wo, KW * KW * c)


def oihw_to_matmul(w_oihw):
    """(Cout, Cin, KH, KW) -> (KH*KW*Cin, Cout), matching im2col ordering."""
    cout, cin, kh, kw = w_oihw.shape
    return jnp.transpose(w_oihw, (2, 3, 1, 0)).reshape(kh * kw * cin, cout)


def init_params(key, input_nc, ndf):
    """Deterministic synthetic parameters matching the PyTorch module shapes."""
    chans = [(input_nc, ndf), (ndf, ndf), (ndf, 2 * ndf), (2 * ndf, 4 * ndf)]
    convs = []
    for (cin, cout) in chans:
        key, kw_, kb_ = jax.random.split(key, 3)
        w = 0.01 * jax.random.normal(kw_, (cout, cin, KW, KW), jnp.float32)
        b = 0.01 * jax.random.normal(kb_, (1, cout), jnp.float32)
        gamma = jnp.ones((1, cout), jnp.float32)       # BN weight.fill_(1)
        beta = jnp.zeros((1, cout), jnp.float32)       # BN bias.zero_()
        convs.append((w, b, gamma, beta))
    key, k1, k2, k3, k4 = jax.random.split(key, 5)
    w1 = 0.01 * jax.random.normal(k1, (HEAD_HIDDEN, 4 * ndf), jnp.float32)
    b1 = 0.01 * jax.random.normal(k2, (1, HEAD_HIDDEN), jnp.float32)
    w2 = 0.01 * jax.random.normal(k3, (N_CLS, HEAD_HIDDEN), jnp.float32)
    b2 = 0.01 * jax.random.normal(k4, (1, N_CLS), jnp.float32)
    return {"convs": convs, "head": (w1, b1, w2, b2)}


def prepare_kernel_params(params):
    """Pack parameters into a handful of batch-independent kernel inputs:
       wconv (4, Kmax, Cmax) bf16, bgb (4, 3, Cmax) f32, wf1/wf2 bf16,
       bhead (2, 1024) f32."""
    bf16 = jnp.bfloat16
    convs = params["convs"]
    w1, b1, w2, b2 = params["head"]

    kmax = max(KW * KW * w.shape[1] for (w, _, _, _) in convs)
    cmax = max(w.shape[0] for (w, _, _, _) in convs)
    wconv = jnp.zeros((len(convs), kmax, cmax), jnp.float32)
    bgb = jnp.zeros((len(convs), 3, cmax), jnp.float32)
    for li, (w, b, gamma, beta) in enumerate(convs):
        cout, cin = w.shape[0], w.shape[1]
        k = KW * KW * cin
        wconv = wconv.at[li, :k, :cout].set(oihw_to_matmul(w))
        bgb = bgb.at[li, 0, :cout].set(b[0])
        bgb = bgb.at[li, 1, :cout].set(gamma[0])
        bgb = bgb.at[li, 2, :cout].set(beta[0])

    bhead = jnp.zeros((2, HEAD_HIDDEN), jnp.float32)
    bhead = bhead.at[0, :].set(b1[0])
    bhead = bhead.at[1, :N_CLS].set(b2[0])

    return {"wconv": wconv.astype(bf16),
            "bgb": bgb,
            "wf1": w1.T.astype(bf16),                  # (4*ndf, 1024)
            "wf2": w2.T.astype(bf16),                  # (1024, 10)
            "bhead": bhead}


# ----------------------------------------------------------------------------
# Pure-JAX f32 reference (correctness check only)
# ----------------------------------------------------------------------------
def reference_forward(params, x_nhwc, ita=1.5):
    y = x_nhwc
    for li, (w_oihw, b, gamma, beta) in enumerate(params["convs"]):
        w_hwio = jnp.transpose(w_oihw, (2, 3, 1, 0))
        y = jax.lax.conv_general_dilated(
            y, w_hwio, window_strides=(STRIDE, STRIDE), padding="VALID",
            dimension_numbers=("NHWC", "HWIO", "NHWC")) + b.reshape(1, 1, 1, -1)
        if li > 0:
            mean = jnp.mean(y, axis=(0, 1, 2), keepdims=True)
            var = jnp.mean((y - mean) ** 2, axis=(0, 1, 2), keepdims=True)
            y = (y - mean) * jax.lax.rsqrt(var + BN_EPS)
            y = y * gamma.reshape(1, 1, 1, -1) + beta.reshape(1, 1, 1, -1)
        y = jnp.where(y >= 0, y, LRELU_SLOPE * y)
    flat = y.reshape(y.shape[0], -1)
    w1, b1, w2, b2 = params["head"]
    logits = (flat @ w1.T + b1) @ w2.T + b2
    p = jax.nn.softmax(logits, axis=1)
    logp = jax.nn.log_softmax(logits, axis=1)
    ent = -jnp.sum(p * logp, axis=1) / 2.9444
    ent = ent ** 2.0 + 1e-08
    ent = ent ** ita
    return logits, jnp.mean(ent)


# ----------------------------------------------------------------------------
if __name__ == "__main__":
    key = jax.random.PRNGKey(0)
    key, kx, kp_key = jax.random.split(key, 3)

    # Smallest spatial size consistent with the flatten->Linear is 32x32
    # (four stride-2 valid k3 convs: 32 -> 15 -> 7 -> 3 -> 1).
    batch, input_nc, spatial, ndf = 2, 3, 32, 16
    x = jax.random.normal(kx, (batch, input_nc, spatial, spatial), jnp.float32)
    x_nhwc = jnp.transpose(x, (0, 2, 3, 1))            # PyTorch NCHW -> NHWC

    params = init_params(kp_key, input_nc, ndf)
    kparams = prepare_kernel_params(params)            # batch-independent

    fwd = jax.jit(classifier_forward)                  # single fused launch
    logits, loss_ent = fwd(kparams, x_nhwc)
    logits = jax.block_until_ready(logits)
    loss_ent = jax.block_until_ready(loss_ent)

    ref_logits, ref_ent = reference_forward(params, x_nhwc, ita=1.5)
    assert logits.shape == (batch, N_CLS)
    # Kernel uses bf16 MXU operands (f32 accumulation), so compare against
    # the pure-f32 reference with bf16-appropriate tolerances.
    assert jnp.allclose(logits, ref_logits, atol=5e-3, rtol=5e-2), "logits mismatch"
    assert jnp.allclose(loss_ent, ref_ent, atol=2e-3, rtol=2e-2), "loss_ent mismatch"

    print("KERNEL_OK")
</pallas_src>

<mosaic_0001>
module attributes {stable_mosaic.version = 11 : i64} {
  func.func @classifier_kernel(%arg0: i32, %arg1: memref<450x27xbf16, #tpu.memory_space<vmem>>, %arg2: memref<4x288x64xbf16, #tpu.memory_space<vmem>>, %arg3: memref<4x3x64xf32, #tpu.memory_space<vmem>>, %arg4: memref<64x1024xbf16, #tpu.memory_space<vmem>>, %arg5: memref<1024x10xbf16, #tpu.memory_space<vmem>>, %arg6: memref<2x1024xf32, #tpu.memory_space<vmem>>, %arg7: memref<2x10xf32, #tpu.memory_space<vmem>>, %arg8: memref<1x1xf32, #tpu.memory_space<vmem>>, %arg9: memref<450x16xf32, #tpu.memory_space<vmem>>, %arg10: memref<98x16xf32, #tpu.memory_space<vmem>>, %arg11: memref<18x32xf32, #tpu.memory_space<vmem>>, %arg12: memref<98x144xf32, #tpu.memory_space<vmem>>, %arg13: memref<18x144xf32, #tpu.memory_space<vmem>>, %arg14: memref<2x288xf32, #tpu.memory_space<vmem>>) attributes {dimension_semantics = [#tpu.dimension_semantics<arbitrary>], iteration_bounds = array<i64: 1>, scalar_prefetch = 0 : i64, scratch_operands = 6 : i64, tpu.core_type = #tpu.core_type<tc>, window_params = [{pipeline_mode = #tpu.pipeline_mode<synchronous>, transform_indices = @transform_0, window_bounds = array<i64: 450, 27>}, {pipeline_mode = #tpu.pipeline_mode<synchronous>, transform_indices = @transform_1, window_bounds = array<i64: 4, 288, 64>}, {pipeline_mode = #tpu.pipeline_mode<synchronous>, transform_indices = @transform_2, window_bounds = array<i64: 4, 3, 64>}, {pipeline_mode = #tpu.pipeline_mode<synchronous>, transform_indices = @transform_3, window_bounds = array<i64: 64, 1024>}, {pipeline_mode = #tpu.pipeline_mode<synchronous>, transform_indices = @transform_4, window_bounds = array<i64: 1024, 10>}, {pipeline_mode = #tpu.pipeline_mode<synchronous>, transform_indices = @transform_5, window_bounds = array<i64: 2, 1024>}, {pipeline_mode = #tpu.pipeline_mode<synchronous>, transform_indices = @transform_6, window_bounds = array<i64: 2, 10>}, {pipeline_mode = #tpu.pipeline_mode<synchronous>, transform_indices = @transform_7, window_bounds = array<i64: 1, 1>}]} {
    %c0 = arith.constant 0 : index
    %c0_0 = arith.constant 0 : index
    %0 = vector.load %arg1[%c0, %c0_0] : memref<450x27xbf16, #tpu.memory_space<vmem>>, vector<450x27xbf16>
    %c0_1 = arith.constant 0 : index
    %c0_2 = arith.constant 0 : index
    %c0_3 = arith.constant 0 : index
    %1 = vector.load %arg2[%c0_1, %c0_2, %c0_3] : memref<4x288x64xbf16, #tpu.memory_space<vmem>>, vector<1x27x16xbf16>
    %2 = vector.shape_cast %1 : vector<1x27x16xbf16> to vector<27x16xbf16>
    %cst = arith.constant dense<0.000000e+00> : vector<450x16xf32>
    %3 = tpu.matmul %0, %2, %cst {dimension_numbers = #tpu.dot_dimension_numbers<[1], [0], [0], [1], [0, 0, 1, 1], [], []>} : vector<450x27xbf16>, vector<27x16xbf16>, vector<450x16xf32> -> vector<450x16xf32>
    %c0_4 = arith.constant 0 : index
    %c0_5 = arith.constant 0 : index
    %c0_6 = arith.constant 0 : index
    %4 = vector.load %arg3[%c0_4, %c0_5, %c0_6] : memref<4x3x64xf32, #tpu.memory_space<vmem>>, vector<1x1x16xf32>
    %5 = vector.shape_cast %4 : vector<1x1x16xf32> to vector<1x16xf32>
    %6 = vector.broadcast %5 : vector<1x16xf32> to vector<450x16xf32>
    %7 = arith.addf %3, %6 : vector<450x16xf32>
    %cst_7 = arith.constant 0.000000e+00 : f32
    %8 = vector.broadcast %cst_7 : f32 to vector<450x16xf32>
    %9 = arith.cmpf oge, %7, %8 : vector<450x16xf32>
    %cst_8 = arith.constant 2.000000e-01 : f32
    %10 = vector.broadcast %cst_8 : f32 to vector<450x16xf32>
    %11 = arith.mulf %10, %7 : vector<450x16xf32>
    %12 = arith.select %9, %7, %11 : vector<450x16xi1>, vector<450x16xf32>
    %c0_9 = arith.constant 0 : index
    %c0_10 = arith.constant 0 : index
    %13 = vector.load %arg9[%c0_9, %c0_10] : memref<450x16xf32, #tpu.memory_space<vmem>>, vector<450x16xf32>
    tpu.vector_store %arg9[%c0_9, %c0_10], %12 {strides = array<i32>} : memref<450x16xf32, #tpu.memory_space<vmem>>, vector<450x16xf32>,
    %c0_11 = arith.constant 0 : index
    %c0_12 = arith.constant 0 : index
    %14 = tpu.strided_load %arg9[%c0_11, %c0_12] {strides = array<i32: 2, 1>} : memref<450x16xf32, #tpu.memory_space<vmem>>, vector<7x16xf32>
    %c0_13 = arith.constant 0 : index
    %c0_14 = arith.constant 0 : index
    %15 = vector.load %arg12[%c0_13, %c0_14] : memref<98x144xf32, #tpu.memory_space<vmem>>, vector<7x16xf32>
    tpu.vector_store %arg12[%c0_13, %c0_14], %14 {strides = array<i32>} : memref<98x144xf32, #tpu.memory_space<vmem>>, vector<7x16xf32>,
    %c1 = arith.constant 1 : index
    %c0_15 = arith.constant 0 : index
    %16 = tpu.strided_load %arg9[%c1, %c0_15] {strides = array<i32: 2, 1>} : memref<450x16xf32, #tpu.memory_space<vmem>>, vector<7x16xf32>
    %c0_16 = arith.constant 0 : index
    %c16 = arith.constant 16 : index
    %17 = vector.load %arg12[%c0_16, %c16] : memref<98x144xf32, #tpu.memory_space<vmem>>, vector<7x16xf32>
    tpu.vector_store %arg12[%c0_16, %c16], %16 {strides = array<i32>} : memref<98x144xf32, #tpu.memory_space<vmem>>, vector<7x16xf32>,
    %c2 = arith.constant 2 : index
    %c0_17 = arith.constant 0 : index
    %18 = tpu.strided_load %arg9[%c2, %c0_17] {strides = array<i32: 2, 1>} : memref<450x16xf32, #tpu.memory_space<vmem>>, vector<7x16xf32>
    %c0_18 = arith.constant 0 : index
    %c32 = arith.constant 32 : index
    %19 = vector.load %arg12[%c0_18, %c32] : memref<98x144xf32, #tpu.memory_space<vmem>>, vector<7x16xf32>
    tpu.vector_store %arg12[%c0_18, %c32], %18 {strides = array<i32>} : memref<98x144xf32, #tpu.memory_space<vmem>>, vector<7x16xf32>,
    %c15 = arith.constant 15 : index
    %c0_19 = arith.constant 0 : index
    %20 = tpu.strided_load %arg9[%c15, %c0_19] {strides = array<i32: 2, 1>} : memref<450x16xf32, #tpu.memory_space<vmem>>, vector<7x16xf32>
    %c0_20 = arith.constant 0 : index
    %c48 = arith.constant 48 : index
    %21 = vector.load %arg12[%c0_20, %c48] : memref<98x144xf32, #tpu.memory_space<vmem>>, vector<7x16xf32>
    tpu.vector_store %arg12[%c0_20, %c48], %20 {strides = array<i32>} : memref<98x144xf32, #tpu.memory_space<vmem>>, vector<7x16xf32>,
    %c16_21 = arith.constant 16 : index
    %c0_22 = arith.constant 0 : index
    %22 = tpu.strided_load %arg9[%c16_21, %c0_22] {strides = array<i32: 2, 1>} : memref<450x16xf32, #tpu.memory_space<vmem>>, vector<7x16xf32>
    %c0_23 = arith.constant 0 : index
    %c64 = arith.constant 64 : index
    %23 = vector.load %arg12[%c0_23, %c64] : memref<98x144xf32, #tpu.memory_space<vmem>>, vector<7x16xf32>
    tpu.vector_store %arg12[%c0_23, %c64], %22 {strides = array<i32>} : memref<98x144xf32, #tpu.memory_space<vmem>>, vector<7x16xf32>,
    %c17 = arith.constant 17 : index
    %c0_24 = arith.constant 0 : index
    %24 = tpu.strided_load %arg9[%c17, %c0_24] {strides = array<i32: 2, 1>} : memref<450x16xf32, #tpu.memory_space<vmem>>, vector<7x16xf32>
    %c0_25 = arith.constant 0 : index
    %c80 = arith.constant 80 : index
    %25 = vector.load %arg12[%c0_25, %c80] : memref<98x144xf32, #tpu.memory_space<vmem>>, vector<7x16xf32>
    tpu.vector_store %arg12[%c0_25, %c80], %24 {strides = array<i32>} : memref<98x144xf32, #tpu.memory_space<vmem>>, vector<7x16xf32>,
    %c30 = arith.constant 30 : index
    %c0_26 = arith.constant 0 : index
    %26 = tpu.strided_load %arg9[%c30, %c0_26] {strides = array<i32: 2, 1>} : memref<450x16xf32, #tpu.memory_space<vmem>>, vector<7x16xf32>
    %c0_27 = arith.constant 0 : index
    %c96 = arith.constant 96 : index
    %27 = vector.load %arg12[%c0_27, %c96] : memref<98x144xf32, #tpu.memory_space<vmem>>, vector<7x16xf32>
    tpu.vector_store %arg12[%c0_27, %c96], %26 {strides = array<i32>} : memref<98x144xf32, #tpu.memory_space<vmem>>, vector<7x16xf32>,
    %c31 = arith.constant 31 : index
    %c0_28 = arith.constant 0 : index
    %28 = tpu.strided_load %arg9[%c31, %c0_28] {strides = array<i32: 2, 1>} : memref<450x16xf32, #tpu.memory_space<vmem>>, vector<7x16xf32>
    %c0_29 = arith.constant 0 : index
    %c112 = arith.constant 112 : index
    %29 = vector.load %arg12[%c0_29, %c112] : memref<98x144xf32, #tpu.memory_space<vmem>>, vector<7x16xf32>
    tpu.vector_store %arg12[%c0_29, %c112], %28 {strides = array<i32>} : memref<98x144xf32, #tpu.memory_space<vmem>>, vector<7x16xf32>,
    %c32_30 = arith.constant 32 : index
    %c0_31 = arith.constant 0 : index
    %30 = tpu.strided_load %arg9[%c32_30, %c0_31] {strides = array<i32: 2, 1>} : memref<450x16xf32, #tpu.memory_space<vmem>>, vector<7x16xf32>
    %c0_32 = arith.constant 0 : index
    %c128 = arith.constant 128 : index
    %31 = vector.load %arg12[%c0_32, %c128] : memref<98x144xf32, #tpu.memory_space<vmem>>, vector<7x16xf32>
    tpu.vector_store %arg12[%c0_32, %c128], %30 {strides = array<i32>} : memref<98x144xf32, #tpu.memory_space<vmem>>, vector<7x16xf32>,
    %c30_33 = arith.constant 30 : index
    %c0_34 = arith.constant 0 : index
    %32 = tpu.strided_load %arg9[%c30_33, %c0_34] {strides = array<i32: 2, 1>} : memref<450x16xf32, #tpu.memory_space<vmem>>, vector<7x16xf32>
    %c7 = arith.constant 7 : index
    %c0_35 = arith.constant 0 : index
    %33 = vector.load %arg12[%c7, %c0_35] : memref<98x144xf32, #tpu.memory_space<vmem>>, vector<7x16xf32>
    tpu.vector_store %arg12[%c7, %c0_35], %32 {strides = array<i32>} : memref<98x144xf32, #tpu.memory_space<vmem>>, vector<7x16xf32>,
    %c31_36 = arith.constant 31 : index
    %c0_37 = arith.constant 0 : index
    %34 = tpu.strided_load %arg9[%c31_36, %c0_37] {strides = array<i32: 2, 1>} : memref<450x16xf32, #tpu.memory_space<vmem>>, vector<7x16xf32>
    %c7_38 = arith.constant 7 : index
    %c16_39 = arith.constant 16 : index
    %35 = vector.load %arg12[%c7_38, %c16_39] : memref<98x144xf32, #tpu.memory_space<vmem>>, vector<7x16xf32>
    tpu.vector_store %arg12[%c7_38, %c16_39], %34 {strides = array<i32>} : memref<98x144xf32, #tpu.memory_space<vmem>>, vector<7x16xf32>,
    %c32_40 = arith.constant 32 : index
    %c0_41 = arith.constant 0 : index
    %36 = tpu.strided_load %arg9[%c32_40, %c0_41] {strides = array<i32: 2, 1>} : memref<450x16xf32, #tpu.memory_space<vmem>>, vector<7x16xf32>
    %c7_42 = arith.constant 7 : index
    %c32_43 = arith.constant 32 : index
    %37 = vector.load %arg12[%c7_42, %c32_43] : memref<98x144xf32, #tpu.memory_space<vmem>>, vector<7x16xf32>
    tpu.vector_store %arg12[%c7_42, %c32_43], %36 {strides = array<i32>} : memref<98x144xf32, #tpu.memory_space<vmem>>, vector<7x16xf32>,
    %c45 = arith.constant 45 : index
    %c0_44 = arith.constant 0 : index
    %38 = tpu.strided_load %arg9[%c45, %c0_44] {strides = array<i32: 2, 1>} : memref<450x16xf32, #tpu.memory_space<vmem>>, vector<7x16xf32>
    %c7_45 = arith.constant 7 : index
    %c48_46 = arith.constant 48 : index
    %39 = vector.load %arg12[%c7_45, %c48_46] : memref<98x144xf32, #tpu.memory_space<vmem>>, vector<7x16xf32>
    tpu.vector_store %arg12[%c7_45, %c48_46], %38 {strides = array<i32>} : memref<98x144xf32, #tpu.memory_space<vmem>>, vector<7x16xf32>,
    %c46 = arith.constant 46 : index
    %c0_47 = arith.constant 0 : index
    %40 = tpu.strided_load %arg9[%c46, %c0_47] {strides = array<i32: 2, 1>} : memref<450x16xf32, #tpu.memory_space<vmem>>, vector<7x16xf32>
    %c7_48 = arith.constant 7 : index
    %c64_49 = arith.constant 64 : index
    %41 = vector.load %arg12[%c7_48, %c64_49] : memref<98x144xf32, #tpu.memory_space<vmem>>, vector<7x16xf32>
    tpu.vector_store %arg12[%c7_48, %c64_49], %40 {strides = array<i32>} : memref<98x144xf32, #tpu.memory_space<vmem>>, vector<7x16xf32>,
    %c47 = arith.constant 47 : index
    %c0_50 = arith.constant 0 : index
    %42 = tpu.strided_load %arg9[%c47, %c0_50] {strides = array<i32: 2, 1>} : memref<450x16xf32, #tpu.memory_space<vmem>>, vector<7x16xf32>
    %c7_51 = arith.constant 7 : index
    %c80_52 = arith.constant 80 : index
    %43 = vector.load %arg12[%c7_51, %c80_52] : memref<98x144xf32, #tpu.memory_space<vmem>>, vector<7x16xf32>
    tpu.vector_store %arg12[%c7_51, %c80_52], %42 {strides = array<i32>} : memref<98x144xf32, #tpu.memory_space<vmem>>, vector<7x16xf32>,
    %c60 = arith.constant 60 : index
    %c0_53 = arith.constant 0 : index
    %44 = tpu.strided_load %arg9[%c60, %c0_53] {strides = array<i32: 2, 1>} : memref<450x16xf32, #tpu.memory_space<vmem>>, vector<7x16xf32>
    %c7_54 = arith.constant 7 : index
    %c96_55 = arith.constant 96 : index
    %45 = vector.load %arg12[%c7_54, %c96_55] : memref<98x144xf32, #tpu.memory_space<vmem>>, vector<7x16xf32>
    tpu.vector_store %arg12[%c7_54, %c96_55], %44 {strides = array<i32>} : memref<98x144xf32, #tpu.memory_space<vmem>>, vector<7x16xf32>,
    %c61 = arith.constant 61 : index
    %c0_56 = arith.constant 0 : index
    %46 = tpu.strided_load %arg9[%c61, %c0_56] {strides = array<i32: 2, 1>} : memref<450x16xf32, #tpu.memory_space<vmem>>, vector<7x16xf32>
    %c7_57 = arith.constant 7 : index
    %c112_58 = arith.constant 112 : index
    %47 = vector.load %arg12[%c7_57, %c112_58] : memref<98x144xf32, #tpu.memory_space<vmem>>, vector<7x16xf32>
    tpu.vector_store %arg12[%c7_57, %c112_58], %46 {strides = array<i32>} : memref<98x144xf32, #tpu.memory_space<vmem>>, vector<7x16xf32>,
    %c62 = arith.constant 62 : index
    %c0_59 = arith.constant 0 : index
    %48 = tpu.strided_load %arg9[%c62, %c0_59] {strides = array<i32: 2, 1>} : memref<450x16xf32, #tpu.memory_space<vmem>>, vector<7x16xf32>
    %c7_60 = arith.constant 7 : index
    %c128_61 = arith.constant 128 : index
    %49 = vector.load %arg12[%c7_60, %c128_61] : memref<98x144xf32, #tpu.memory_space<vmem>>, vector<7x16xf32>
    tpu.vector_store %arg12[%c7_60, %c128_61], %48 {strides = array<i32>} : memref<98x144xf32, #tpu.memory_space<vmem>>, vector<7x16xf32>,
    %c60_62 = arith.constant 60 : index
    %c0_63 = arith.constant 0 : index
    %50 = tpu.strided_load %arg9[%c60_62, %c0_63] {strides = array<i32: 2, 1>} : memref<450x16xf32, #tpu.memory_space<vmem>>, vector<7x16xf32>
    %c14 = arith.constant 14 : index
    %c0_64 = arith.constant 0 : index
    %51 = vector.load %arg12[%c14, %c0_64] : memref<98x144xf32, #tpu.memory_space<vmem>>, vector<7x16xf32>
    tpu.vector_store %arg12[%c14, %c0_64], %50 {strides = array<i32>} : memref<98x144xf32, #tpu.memory_space<vmem>>, vector<7x16xf32>,
    %c61_65 = arith.constant 61 : index
    %c0_66 = arith.constant 0 : index
    %52 = tpu.strided_load %arg9[%c61_65, %c0_66] {strides = array<i32: 2, 1>} : memref<450x16xf32, #tpu.memory_space<vmem>>, vector<7x16xf32>
    %c14_67 = arith.constant 14 : index
    %c16_68 = arith.constant 16 : index
    %53 = vector.load %arg12[%c14_67, %c16_68] : memref<98x144xf32, #tpu.memory_space<vmem>>, vector<7x16xf32>
    tpu.vector_store %arg12[%c14_67, %c16_68], %52 {strides = array<i32>} : memref<98x144xf32, #tpu.memory_space<vmem>>, vector<7x16xf32>,
    %c62_69 = arith.constant 62 : index
    %c0_70 = arith.constant 0 : index
    %54 = tpu.strided_load %arg9[%c62_69, %c0_70] {strides = array<i32: 2, 1>} : memref<450x16xf32, #tpu.memory_space<vmem>>, vector<7x16xf32>
    %c14_71 = arith.constant 14 : index
    %c32_72 = arith.constant 32 : index
    %55 = vector.load %arg12[%c14_71, %c32_72] : memref<98x144xf32, #tpu.memory_space<vmem>>, vector<7x16xf32>
    tpu.vector_store %arg12[%c14_71, %c32_72], %54 {strides = array<i32>} : memref<98x144xf32, #tpu.memory_space<vmem>>, vector<7x16xf32>,
    %c75 = arith.constant 75 : index
    %c0_73 = arith.constant 0 : index
    %56 = tpu.strided_load %arg9[%c75, %c0_73] {strides = array<i32: 2, 1>} : memref<450x16xf32, #tpu.memory_space<vmem>>, vector<7x16xf32>
    %c14_74 = arith.constant 14 : index
    %c48_75 = arith.constant 48 : index
    %57 = vector.load %arg12[%c14_74, %c48_75] : memref<98x144xf32, #tpu.memory_space<vmem>>, vector<7x16xf32>
    tpu.vector_store %arg12[%c14_74, %c48_75], %56 {strides = array<i32>} : memref<98x144xf32, #tpu.memory_space<vmem>>, vector<7x16xf32>,
    %c76 = arith.constant 76 : index
    %c0_76 = arith.constant 0 : index
    %58 = tpu.strided_load %arg9[%c76, %c0_76] {strides = array<i32: 2, 1>} : memref<450x16xf32, #tpu.memory_space<vmem>>, vector<7x16xf32>
    %c14_77 = arith.constant 14 : index
    %c64_78 = arith.constant 64 : index
    %59 = vector.load %arg12[%c14_77, %c64_78] : memref<98x144xf32, #tpu.memory_space<vmem>>, vector<7x16xf32>
    tpu.vector_store %arg12[%c14_77, %c64_78], %58 {strides = array<i32>} : memref<98x144xf32, #tpu.memory_space<vmem>>, vector<7x16xf32>,
    %c77 = arith.constant 77 : index
    %c0_79 = arith.constant 0 : index
    %60 = tpu.strided_load %arg9[%c77, %c0_79] {strides = array<i32: 2, 1>} : memref<450x16xf32, #tpu.memory_space<vmem>>, vector<7x16xf32>
    %c14_80 = arith.constant 14 : index
    %c80_81 = arith.constant 80 : index
    %61 = vector.load %arg12[%c14_80, %c80_81] : memref<98x144xf32, #tpu.memory_space<vmem>>, vector<7x16xf32>
    tpu.vector_store %arg12[%c14_80, %c80_81], %60 {strides = array<i32>} : memref<98x144xf32, #tpu.memory_space<vmem>>, vector<7x16xf32>,
    %c90 = arith.constant 90 : index
    %c0_82 = arith.constant 0 : index
    %62 = tpu.strided_load %arg9[%c90, %c0_82] {strides = array<i32: 2, 1>} : memref<450x16xf32, #tpu.memory_space<vmem>>, vector<7x16xf32>
    %c14_83 = arith.constant 14 : index
    %c96_84 = arith.constant 96 : index
    %63 = vector.load %arg12[%c14_83, %c96_84] : memref<98x144xf32, #tpu.memory_space<vmem>>, vector<7x16xf32>
    tpu.vector_store %arg12[%c14_83, %c96_84], %62 {strides = array<i32>} : memref<98x144xf32, #tpu.memory_space<vmem>>, vector<7x16xf32>,
    %c91 = arith.constant 91 : index
    %c0_85 = arith.constant 0 : index
    %64 = tpu.strided_load %arg9[%c91, %c0_85] {strides = array<i32: 2, 1>} : memref<450x16xf32, #tpu.memory_space<vmem>>, vector<7x16xf32>
    %c14_86 = arith.constant 14 : index
    %c112_87 = arith.constant 112 : index
    %65 = vector.load %arg12[%c14_86, %c112_87] : memref<98x144xf32, #tpu.memory_space<vmem>>, vector<7x16xf32>
    tpu.vector_store %arg12[%c14_86, %c112_87], %64 {strides = array<i32>} : memref<98x144xf32, #tpu.memory_space<vmem>>, vector<7x16xf32>,
    %c92 = arith.constant 92 : index
    %c0_88 = arith.constant 0 : index
    %66 = tpu.strided_load %arg9[%c92, %c0_88] {strides = array<i32: 2, 1>} : memref<450x16xf32, #tpu.memory_space<vmem>>, vector<7x16xf32>
    %c14_89 = arith.constant 14 : index
    %c128_90 = arith.constant 128 : index
    %67 = vector.load %arg12[%c14_89, %c128_90] : memref<98x144xf32, #tpu.memory_space<vmem>>, vector<7x16xf32>
    tpu.vector_store %arg12[%c14_89, %c128_90], %66 {strides = array<i32>} : memref<98x144xf32, #tpu.memory_space<vmem>>, vector<7x16xf32>,
    %c90_91 = arith.constant 90 : index
    %c0_92 = arith.constant 0 : index
    %68 = tpu.strided_load %arg9[%c90_91, %c0_92] {strides = array<i32: 2, 1>} : memref<450x16xf32, #tpu.memory_space<vmem>>, vector<7x16xf32>
    %c21 = arith.constant 21 : index
    %c0_93 = arith.constant 0 : index
    %69 = vector.load %arg12[%c21, %c0_93] : memref<98x144xf32, #tpu.memory_space<vmem>>, vector<7x16xf32>
    tpu.vector_store %arg12[%c21, %c0_93], %68 {strides = array<i32>} : memref<98x144xf32, #tpu.memory_space<vmem>>, vector<7x16xf32>,
    %c91_94 = arith.constant 91 : index
    %c0_95 = arith.constant 0 : index
    %70 = tpu.strided_load %arg9[%c91_94, %c0_95] {strides = array<i32: 2, 1>} : memref<450x16xf32, #tpu.memory_space<vmem>>, vector<7x16xf32>
    %c21_96 = arith.constant 21 : index
    %c16_97 = arith.constant 16 : index
    %71 = vector.load %arg12[%c21_96, %c16_97] : memref<98x144xf32, #tpu.memory_space<vmem>>, vector<7x16xf32>
    tpu.vector_store %arg12[%c21_96, %c16_97], %70 {strides = array<i32>} : memref<98x144xf32, #tpu.memory_space<vmem>>, vector<7x16xf32>,
    %c92_98 = arith.constant 92 : index
    %c0_99 = arith.constant 0 : index
    %72 = tpu.strided_load %arg9[%c92_98, %c0_99] {strides = array<i32: 2, 1>} : memref<450x16xf32, #tpu.memory_space<vmem>>, vector<7x16xf32>
    %c21_100 = arith.constant 21 : index
    %c32_101 = arith.constant 32 : index
    %73 = vector.load %arg12[%c21_100, %c32_101] : memref<98x144xf32, #tpu.memory_space<vmem>>, vector<7x16xf32>
    tpu.vector_store %arg12[%c21_100, %c32_101], %72 {strides = array<i32>} : memref<98x144xf32, #tpu.memory_space<vmem>>, vector<7x16xf32>,
    %c105 = arith.constant 105 : index
    %c0_102 = arith.constant 0 : index
    %74 = tpu.strided_load %arg9[%c105, %c0_102] {strides = array<i32: 2, 1>} : memref<450x16xf32, #tpu.memory_space<vmem>>, vector<7x16xf32>
    %c21_103 = arith.constant 21 : index
    %c48_104 = arith.constant 48 : index
    %75 = vector.load %arg12[%c21_103, %c48_104] : memref<98x144xf32, #tpu.memory_space<vmem>>, vector<7x16xf32>
    tpu.vector_store %arg12[%c21_103, %c48_104], %74 {strides = array<i32>} : memref<98x144xf32, #tpu.memory_space<vmem>>, vector<7x16xf32>,
    %c106 = arith.constant 106 : index
    %c0_105 = arith.constant 0 : index
    %76 = tpu.strided_load %arg9[%c106, %c0_105] {strides = array<i32: 2, 1>} : memref<450x16xf32, #tpu.memory_space<vmem>>, vector<7x16xf32>
    %c21_106 = arith.constant 21 : index
    %c64_107 = arith.constant 64 : index
    %77 = vector.load %arg12[%c21_106, %c64_107] : memref<98x144xf32, #tpu.memory_space<vmem>>, vector<7x16xf32>
    tpu.vector_store %arg12[%c21_106, %c64_107], %76 {strides = array<i32>} : memref<98x144xf32, #tpu.memory_space<vmem>>, vector<7x16xf32>,
    %c107 = arith.constant 107 : index
    %c0_108 = arith.constant 0 : index
    %78 = tpu.strided_load %arg9[%c107, %c0_108] {strides = array<i32: 2, 1>} : memref<450x16xf32, #tpu.memory_space<vmem>>, vector<7x16xf32>
    %c21_109 = arith.constant 21 : index
    %c80_110 = arith.constant 80 : index
    %79 = vector.load %arg12[%c21_109, %c80_110] : memref<98x144xf32, #tpu.memory_space<vmem>>, vector<7x16xf32>
    tpu.vector_store %arg12[%c21_109, %c80_110], %78 {strides = array<i32>} : memref<98x144xf32, #tpu.memory_space<vmem>>, vector<7x16xf32>,
    %c120 = arith.constant 120 : index
    %c0_111 = arith.constant 0 : index
    %80 = tpu.strided_load %arg9[%c120, %c0_111] {strides = array<i32: 2, 1>} : memref<450x16xf32, #tpu.memory_space<vmem>>, vector<7x16xf32>
    %c21_112 = arith.constant 21 : index
    %c96_113 = arith.constant 96 : index
    %81 = vector.load %arg12[%c21_112, %c96_113] : memref<98x144xf32, #tpu.memory_space<vmem>>, vector<7x16xf32>
    tpu.vector_store %arg12[%c21_112, %c96_113], %80 {strides = array<i32>} : memref<98x144xf32, #tpu.memory_space<vmem>>, vector<7x16xf32>,
    %c121 = arith.constant 121 : index
    %c0_114 = arith.constant 0 : index
    %82 = tpu.strided_load %arg9[%c121, %c0_114] {strides = array<i32: 2, 1>} : memref<450x16xf32, #tpu.memory_space<vmem>>, vector<7x16xf32>
    %c21_115 = arith.constant 21 : index
    %c112_116 = arith.constant 112 : index
    %83 = vector.load %arg12[%c21_115, %c112_116] : memref<98x144xf32, #tpu.memory_space<vmem>>, vector<7x16xf32>
    tpu.vector_store %arg12[%c21_115, %c112_116], %82 {strides = array<i32>} : memref<98x144xf32, #tpu.memory_space<vmem>>, vector<7x16xf32>,
    %c122 = arith.constant 122 : index
    %c0_117 = arith.constant 0 : index
    %84 = tpu.strided_load %arg9[%c122, %c0_117] {strides = array<i32: 2, 1>} : memref<450x16xf32, #tpu.memory_space<vmem>>, vector<7x16xf32>
    %c21_118 = arith.constant 21 : index
    %c128_119 = arith.constant 128 : index
    %85 = vector.load %arg12[%c21_118, %c128_119] : memref<98x144xf32, #tpu.memory_space<vmem>>, vector<7x16xf32>
    tpu.vector_store %arg12[%c21_118, %c128_119], %84 {strides = array<i32>} : memref<98x144xf32, #tpu.memory_space<vmem>>, vector<7x16xf32>,
    %c120_120 = arith.constant 120 : index
    %c0_121 = arith.constant 0 : index
    %86 = tpu.strided_load %arg9[%c120_120, %c0_121] {strides = array<i32: 2, 1>} : memref<450x16xf32, #tpu.memory_space<vmem>>, vector<7x16xf32>
    %c28 = arith.constant 28 : index
    %c0_122 = arith.constant 0 : index
    %87 = vector.load %arg12[%c28, %c0_122] : memref<98x144xf32, #tpu.memory_space<vmem>>, vector<7x16xf32>
    tpu.vector_store %arg12[%c28, %c0_122], %86 {strides = array<i32>} : memref<98x144xf32, #tpu.memory_space<vmem>>, vector<7x16xf32>,
    %c121_123 = arith.constant 121 : index
    %c0_124 = arith.constant 0 : index
    %88 = tpu.strided_load %arg9[%c121_123, %c0_124] {strides = array<i32: 2, 1>} : memref<450x16xf32, #tpu.memory_space<vmem>>, vector<7x16xf32>
    %c28_125 = arith.constant 28 : index
    %c16_126 = arith.constant 16 : index
    %89 = vector.load %arg12[%c28_125, %c16_126] : memref<98x144xf32, #tpu.memory_space<vmem>>, vector<7x16xf32>
    tpu.vector_store %arg12[%c28_125, %c16_126], %88 {strides = array<i32>} : memref<98x144xf32, #tpu.memory_space<vmem>>, vector<7x16xf32>,
    %c122_127 = arith.constant 122 : index
    %c0_128 = arith.constant 0 : index
    %90 = tpu.strided_load %arg9[%c122_127, %c0_128] {strides = array<i32: 2, 1>} : memref<450x16xf32, #tpu.memory_space<vmem>>, vector<7x16xf32>
    %c28_129 = arith.constant 28 : index
    %c32_130 = arith.constant 32 : index
    %91 = vector.load %arg12[%c28_129, %c32_130] : memref<98x144xf32, #tpu.memory_space<vmem>>, vector<7x16xf32>
    tpu.vector_store %arg12[%c28_129, %c32_130], %90 {strides = array<i32>} : memref<98x144xf32, #tpu.memory_space<vmem>>, vector<7x16xf32>,
    %c135 = arith.constant 135 : index
    %c0_131 = arith.constant 0 : index
    %92 = tpu.strided_load %arg9[%c135, %c0_131] {strides = array<i32: 2, 1>} : memref<450x16xf32, #tpu.memory_space<vmem>>, vector<7x16xf32>
    %c28_132 = arith.constant 28 : index
    %c48_133 = arith.constant 48 : index
    %93 = vector.load %arg12[%c28_132, %c48_133] : memref<98x144xf32, #tpu.memory_space<vmem>>, vector<7x16xf32>
    tpu.vector_store %arg12[%c28_132, %c48_133], %92 {strides = array<i32>} : memref<98x144xf32, #tpu.memory_space<vmem>>, vector<7x16xf32>,
    %c136 = arith.constant 136 : index
    %c0_134 = arith.constant 0 : index
    %94 = tpu.strided_load %arg9[%c136, %c0_134] {strides = array<i32: 2, 1>} : memref<450x16xf32, #tpu.memory_space<vmem>>, vector<7x16xf32>
    %c28_135 = arith.constant 28 : index
    %c64_136 = arith.constant 64 : index
    %95 = vector.load %arg12[%c28_135, %c64_136] : memref<98x144xf32, #tpu.memory_space<vmem>>, vector<7x16xf32>
    tpu.vector_store %arg12[%c28_135, %c64_136], %94 {strides = array<i32>} : memref<98x144xf32, #tpu.memory_space<vmem>>, vector<7x16xf32>,
    %c137 = arith.constant 137 : index
    %c0_137 = arith.constant 0 : index
    %96 = tpu.strided_load %arg9[%c137, %c0_137] {strides = array<i32: 2, 1>} : memref<450x16xf32, #tpu.memory_space<vmem>>, vector<7x16xf32>
    %c28_138 = arith.constant 28 : index
    %c80_139 = arith.constant 80 : index
    %97 = vector.load %arg12[%c28_138, %c80_139] : memref<98x144xf32, #tpu.memory_space<vmem>>, vector<7x16xf32>
    tpu.vector_store %arg12[%c28_138, %c80_139], %96 {strides = array<i32>} : memref<98x144xf32, #tpu.memory_space<vmem>>, vector<7x16xf32>,
    %c150 = arith.constant 150 : index
    %c0_140 = arith.constant 0 : index
    %98 = tpu.strided_load %arg9[%c150, %c0_140] {strides = array<i32: 2, 1>} : memref<450x16xf32, #tpu.memory_space<vmem>>, vector<7x16xf32>
    %c28_141 = arith.constant 28 : index
    %c96_142 = arith.constant 96 : index
    %99 = vector.load %arg12[%c28_141, %c96_142] : memref<98x144xf32, #tpu.memory_space<vmem>>, vector<7x16xf32>
    tpu.vector_store %arg12[%c28_141, %c96_142], %98 {strides = array<i32>} : memref<98x144xf32, #tpu.memory_space<vmem>>, vector<7x16xf32>,
    %c151 = arith.constant 151 : index
    %c0_143 = arith.constant 0 : index
    %100 = tpu.strided_load %arg9[%c151, %c0_143] {strides = array<i32: 2, 1>} : memref<450x16xf32, #tpu.memory_space<vmem>>, vector<7x16xf32>
    %c28_144 = arith.constant 28 : index
    %c112_145 = arith.constant 112 : index
    %101 = vector.load %arg12[%c28_144, %c112_145] : memref<98x144xf32, #tpu.memory_space<vmem>>, vector<7x16xf32>
    tpu.vector_store %arg12[%c28_144, %c112_145], %100 {strides = array<i32>} : memref<98x144xf32, #tpu.memory_space<vmem>>, vector<7x16xf32>,
    %c152 = arith.constant 152 : index
    %c0_146 = arith.constant 0 : index
    %102 = tpu.strided_load %arg9[%c152, %c0_146] {strides = array<i32: 2, 1>} : memref<450x16xf32, #tpu.memory_space<vmem>>, vector<7x16xf32>
    %c28_147 = arith.constant 28 : index
    %c128_148 = arith.constant 128 : index
    %103 = vector.load %arg12[%c28_147, %c128_148] : memref<98x144xf32, #tpu.memory_space<vmem>>, vector<7x16xf32>
    tpu.vector_store %arg12[%c28_147, %c128_148], %102 {strides = array<i32>} : memref<98x144xf32, #tpu.memory_space<vmem>>, vector<7x16xf32>,
    %c150_149 = arith.constant 150 : index
    %c0_150 = arith.constant 0 : index
    %104 = tpu.strided_load %arg9[%c150_149, %c0_150] {strides = array<i32: 2, 1>} : memref<450x16xf32, #tpu.memory_space<vmem>>, vector<7x16xf32>
    %c35 = arith.constant 35 : index
    %c0_151 = arith.constant 0 : index
    %105 = vector.load %arg12[%c35, %c0_151] : memref<98x144xf32, #tpu.memory_space<vmem>>, vector<7x16xf32>
    tpu.vector_store %arg12[%c35, %c0_151], %104 {strides = array<i32>} : memref<98x144xf32, #tpu.memory_space<vmem>>, vector<7x16xf32>,
    %c151_152 = arith.constant 151 : index
    %c0_153 = arith.constant 0 : index
    %106 = tpu.strided_load %arg9[%c151_152, %c0_153] {strides = array<i32: 2, 1>} : memref<450x16xf32, #tpu.memory_space<vmem>>, vector<7x16xf32>
    %c35_154 = arith.constant 35 : index
    %c16_155 = arith.constant 16 : index
    %107 = vector.load %arg12[%c35_154, %c16_155] : memref<98x144xf32, #tpu.memory_space<vmem>>, vector<7x16xf32>
    tpu.vector_store %arg12[%c35_154, %c16_155], %106 {strides = array<i32>} : memref<98x144xf32, #tpu.memory_space<vmem>>, vector<7x16xf32>,
    %c152_156 = arith.constant 152 : index
    %c0_157 = arith.constant 0 : index
    %108 = tpu.strided_load %arg9[%c152_156, %c0_157] {strides = array<i32: 2, 1>} : memref<450x16xf32, #tpu.memory_space<vmem>>, vector<7x16xf32>
    %c35_158 = arith.constant 35 : index
    %c32_159 = arith.constant 32 : index
    %109 = vector.load %arg12[%c35_158, %c32_159] : memref<98x144xf32, #tpu.memory_space<vmem>>, vector<7x16xf32>
    tpu.vector_store %arg12[%c35_158, %c32_159], %108 {strides = array<i32>} : memref<98x144xf32, #tpu.memory_space<vmem>>, vector<7x16xf32>,
    %c165 = arith.constant 165 : index
    %c0_160 = arith.constant 0 : index
    %110 = tpu.strided_load %arg9[%c165, %c0_160] {strides = array<i32: 2, 1>} : memref<450x16xf32, #tpu.memory_space<vmem>>, vector<7x16xf32>
    %c35_161 = arith.constant 35 : index
    %c48_162 = arith.constant 48 : index
    %111 = vector.load %arg12[%c35_161, %c48_162] : memref<98x144xf32, #tpu.memory_space<vmem>>, vector<7x16xf32>
    tpu.vector_store %arg12[%c35_161, %c48_162], %110 {strides = array<i32>} : memref<98x144xf32, #tpu.memory_space<vmem>>, vector<7x16xf32>,
    %c166 = arith.constant 166 : index
    %c0_163 = arith.constant 0 : index
    %112 = tpu.strided_load %arg9[%c166, %c0_163] {strides = array<i32: 2, 1>} : memref<450x16xf32, #tpu.memory_space<vmem>>, vector<7x16xf32>
    %c35_164 = arith.constant 35 : index
    %c64_165 = arith.constant 64 : index
    %113 = vector.load %arg12[%c35_164, %c64_165] : memref<98x144xf32, #tpu.memory_space<vmem>>, vector<7x16xf32>
    tpu.vector_store %arg12[%c35_164, %c64_165], %112 {strides = array<i32>} : memref<98x144xf32, #tpu.memory_space<vmem>>, vector<7x16xf32>,
    %c167 = arith.constant 167 : index
    %c0_166 = arith.constant 0 : index
    %114 = tpu.strided_load %arg9[%c167, %c0_166] {strides = array<i32: 2, 1>} : memref<450x16xf32, #tpu.memory_space<vmem>>, vector<7x16xf32>
    %c35_167 = arith.constant 35 : index
    %c80_168 = arith.constant 80 : index
    %115 = vector.load %arg12[%c35_167, %c80_168] : memref<98x144xf32, #tpu.memory_space<vmem>>, vector<7x16xf32>
    tpu.vector_store %arg12[%c35_167, %c80_168], %114 {strides = array<i32>} : memref<98x144xf32, #tpu.memory_space<vmem>>, vector<7x16xf32>,
    %c180 = arith.constant 180 : index
    %c0_169 = arith.constant 0 : index
    %116 = tpu.strided_load %arg9[%c180, %c0_169] {strides = array<i32: 2, 1>} : memref<450x16xf32, #tpu.memory_space<vmem>>, vector<7x16xf32>
    %c35_170 = arith.constant 35 : index
    %c96_171 = arith.constant 96 : index
    %117 = vector.load %arg12[%c35_170, %c96_171] : memref<98x144xf32, #tpu.memory_space<vmem>>, vector<7x16xf32>
    tpu.vector_store %arg12[%c35_170, %c96_171], %116 {strides = array<i32>} : memref<98x144xf32, #tpu.memory_space<vmem>>, vector<7x16xf32>,
    %c181 = arith.constant 181 : index
    %c0_172 = arith.constant 0 : index
    %118 = tpu.strided_load %arg9[%c181, %c0_172] {strides = array<i32: 2, 1>} : memref<450x16xf32, #tpu.memory_space<vmem>>, vector<7x16xf32>
    %c35_173 = arith.constant 35 : index
    %c112_174 = arith.constant 112 : index
    %119 = vector.load %arg12[%c35_173, %c112_174] : memref<98x144xf32, #tpu.memory_space<vmem>>, vector<7x16xf32>
    tpu.vector_store %arg12[%c35_173, %c112_174], %118 {strides = array<i32>} : memref<98x144xf32, #tpu.memory_space<vmem>>, vector<7x16xf32>,
    %c182 = arith.constant 182 : index
    %c0_175 = arith.constant 0 : index
    %120 = tpu.strided_load %arg9[%c182, %c0_175] {strides = array<i32: 2, 1>} : memref<450x16xf32, #tpu.memory_space<vmem>>, vector<7x16xf32>
    %c35_176 = arith.constant 35 : index
    %c128_177 = arith.constant 128 : index
    %121 = vector.load %arg12[%c35_176, %c128_177] : memref<98x144xf32, #tpu.memory_space<vmem>>, vector<7x16xf32>
    tpu.vector_store %arg12[%c35_176, %c128_177], %120 {strides = array<i32>} : memref<98x144xf32, #tpu.memory_space<vmem>>, vector<7x16xf32>,
    %c180_178 = arith.constant 180 : index
    %c0_179 = arith.constant 0 : index
    %122 = tpu.strided_load %arg9[%c180_178, %c0_179] {strides = array<i32: 2, 1>} : memref<450x16xf32, #tpu.memory_space<vmem>>, vector<7x16xf32>
    %c42 = arith.constant 42 : index
    %c0_180 = arith.constant 0 : index
    %123 = vector.load %arg12[%c42, %c0_180] : memref<98x144xf32, #tpu.memory_space<vmem>>, vector<7x16xf32>
    tpu.vector_store %arg12[%c42, %c0_180], %122 {strides = array<i32>} : memref<98x144xf32, #tpu.memory_space<vmem>>, vector<7x16xf32>,
    %c181_181 = arith.constant 181 : index
    %c0_182 = arith.constant 0 : index
    %124 = tpu.strided_load %arg9[%c181_181, %c0_182] {strides = array<i32: 2, 1>} : memref<450x16xf32, #tpu.memory_space<vmem>>, vector<7x16xf32>
    %c42_183 = arith.constant 42 : index
    %c16_184 = arith.constant 16 : index
    %125 = vector.load %arg12[%c42_183, %c16_184] : memref<98x144xf32, #tpu.memory_space<vmem>>, vector<7x16xf32>
    tpu.vector_store %arg12[%c42_183, %c16_184], %124 {strides = array<i32>} : memref<98x144xf32, #tpu.memory_space<vmem>>, vector<7x16xf32>,
    %c182_185 = arith.constant 182 : index
    %c0_186 = arith.constant 0 : index
    %126 = tpu.strided_load %arg9[%c182_185, %c0_186] {strides = array<i32: 2, 1>} : memref<450x16xf32, #tpu.memory_space<vmem>>, vector<7x16xf32>
    %c42_187 = arith.constant 42 : index
    %c32_188 = arith.constant 32 : index
    %127 = vector.load %arg12[%c42_187, %c32_188] : memref<98x144xf32, #tpu.memory_space<vmem>>, vector<7x16xf32>
    tpu.vector_store %arg12[%c42_187, %c32_188], %126 {strides = array<i32>} : memref<98x144xf32, #tpu.memory_space<vmem>>, vector<7x16xf32>,
    %c195 = arith.constant 195 : index
    %c0_189 = arith.constant 0 : index
    %128 = tpu.strided_load %arg9[%c195, %c0_189] {strides = array<i32: 2, 1>} : memref<450x16xf32, #tpu.memory_space<vmem>>, vector<7x16xf32>
    %c42_190 = arith.constant 42 : index
    %c48_191 = arith.constant 48 : index
    %129 = vector.load %arg12[%c42_190, %c48_191] : memref<98x144xf32, #tpu.memory_space<vmem>>, vector<7x16xf32>
    tpu.vector_store %arg12[%c42_190, %c48_191], %128 {strides = array<i32>} : memref<98x144xf32, #tpu.memory_space<vmem>>, vector<7x16xf32>,
    %c196 = arith.constant 196 : index
    %c0_192 = arith.constant 0 : index
    %130 = tpu.strided_load %arg9[%c196, %c0_192] {strides = array<i32: 2, 1>} : memref<450x16xf32, #tpu.memory_space<vmem>>, vector<7x16xf32>
    %c42_193 = arith.constant 42 : index
    %c64_194 = arith.constant 64 : index
    %131 = vector.load %arg12[%c42_193, %c64_194] : memref<98x144xf32, #tpu.memory_space<vmem>>, vector<7x16xf32>
    tpu.vector_store %arg12[%c42_193, %c64_194], %130 {strides = array<i32>} : memref<98x144xf32, #tpu.memory_space<vmem>>, vector<7x16xf32>,
    %c197 = arith.constant 197 : index
    %c0_195 = arith.constant 0 : index
    %132 = tpu.strided_load %arg9[%c197, %c0_195] {strides = array<i32: 2, 1>} : memref<450x16xf32, #tpu.memory_space<vmem>>, vector<7x16xf32>
    %c42_196 = arith.constant 42 : index
    %c80_197 = arith.constant 80 : index
    %133 = vector.load %arg12[%c42_196, %c80_197] : memref<98x144xf32, #tpu.memory_space<vmem>>, vector<7x16xf32>
    tpu.vector_store %arg12[%c42_196, %c80_197], %132 {strides = array<i32>} : memref<98x144xf32, #tpu.memory_space<vmem>>, vector<7x16xf32>,
    %c210 = arith.constant 210 : index
    %c0_198 = arith.constant 0 : index
    %134 = tpu.strided_load %arg9[%c210, %c0_198] {strides = array<i32: 2, 1>} : memref<450x16xf32, #tpu.memory_space<vmem>>, vector<7x16xf32>
    %c42_199 = arith.constant 42 : index
    %c96_200 = arith.constant 96 : index
    %135 = vector.load %arg12[%c42_199, %c96_200] : memref<98x144xf32, #tpu.memory_space<vmem>>, vector<7x16xf32>
    tpu.vector_store %arg12[%c42_199, %c96_200], %134 {strides = array<i32>} : memref<98x144xf32, #tpu.memory_space<vmem>>, vector<7x16xf32>,
    %c211 = arith.constant 211 : index
    %c0_201 = arith.constant 0 : index
    %136 = tpu.strided_load %arg9[%c211, %c0_201] {strides = array<i32: 2, 1>} : memref<450x16xf32, #tpu.memory_space<vmem>>, vector<7x16xf32>
    %c42_202 = arith.constant 42 : index
    %c112_203 = arith.constant 112 : index
    %137 = vector.load %arg12[%c42_202, %c112_203] : memref<98x144xf32, #tpu.memory_space<vmem>>, vector<7x16xf32>
    tpu.vector_store %arg12[%c42_202, %c112_203], %136 {strides = array<i32>} : memref<98x144xf32, #tpu.memory_space<vmem>>, vector<7x16xf32>,
    %c212 = arith.constant 212 : index
    %c0_204 = arith.constant 0 : index
    %138 = tpu.strided_load %arg9[%c212, %c0_204] {strides = array<i32: 2, 1>} : memref<450x16xf32, #tpu.memory_space<vmem>>, vector<7x16xf32>
    %c42_205 = arith.constant 42 : index
    %c128_206 = arith.constant 128 : index
    %139 = vector.load %arg12[%c42_205, %c128_206] : memref<98x144xf32, #tpu.memory_space<vmem>>, vector<7x16xf32>
    tpu.vector_store %arg12[%c42_205, %c128_206], %138 {strides = array<i32>} : memref<98x144xf32, #tpu.memory_space<vmem>>, vector<7x16xf32>,
    %c225 = arith.constant 225 : index
    %c0_207 = arith.constant 0 : index
    %140 = tpu.strided_load %arg9[%c225, %c0_207] {strides = array<i32: 2, 1>} : memref<450x16xf32, #tpu.memory_space<vmem>>, vector<7x16xf32>
    %c49 = arith.constant 49 : index
    %c0_208 = arith.constant 0 : index
    %141 = vector.load %arg12[%c49, %c0_208] : memref<98x144xf32, #tpu.memory_space<vmem>>, vector<7x16xf32>
    tpu.vector_store %arg12[%c49, %c0_208], %140 {strides = array<i32>} : memref<98x144xf32, #tpu.memory_space<vmem>>, vector<7x16xf32>,
    %c226 = arith.constant 226 : index
    %c0_209 = arith.constant 0 : index
    %142 = tpu.strided_load %arg9[%c226, %c0_209] {strides = array<i32: 2, 1>} : memref<450x16xf32, #tpu.memory_space<vmem>>, vector<7x16xf32>
    %c49_210 = arith.constant 49 : index
    %c16_211 = arith.constant 16 : index
    %143 = vector.load %arg12[%c49_210, %c16_211] : memref<98x144xf32, #tpu.memory_space<vmem>>, vector<7x16xf32>
    tpu.vector_store %arg12[%c49_210, %c16_211], %142 {strides = array<i32>} : memref<98x144xf32, #tpu.memory_space<vmem>>, vector<7x16xf32>,
    %c227 = arith.constant 227 : index
    %c0_212 = arith.constant 0 : index
    %144 = tpu.strided_load %arg9[%c227, %c0_212] {strides = array<i32: 2, 1>} : memref<450x16xf32, #tpu.memory_space<vmem>>, vector<7x16xf32>
    %c49_213 = arith.constant 49 : index
    %c32_214 = arith.constant 32 : index
    %145 = vector.load %arg12[%c49_213, %c32_214] : memref<98x144xf32, #tpu.memory_space<vmem>>, vector<7x16xf32>
    tpu.vector_store %arg12[%c49_213, %c32_214], %144 {strides = array<i32>} : memref<98x144xf32, #tpu.memory_space<vmem>>, vector<7x16xf32>,
    %c240 = arith.constant 240 : index
    %c0_215 = arith.constant 0 : index
    %146 = tpu.strided_load %arg9[%c240, %c0_215] {strides = array<i32: 2, 1>} : memref<450x16xf32, #tpu.memory_space<vmem>>, vector<7x16xf32>
    %c49_216 = arith.constant 49 : index
    %c48_217 = arith.constant 48 : index
    %147 = vector.load %arg12[%c49_216, %c48_217] : memref<98x144xf32, #tpu.memory_space<vmem>>, vector<7x16xf32>
    tpu.vector_store %arg12[%c49_216, %c48_217], %146 {strides = array<i32>} : memref<98x144xf32, #tpu.memory_space<vmem>>, vector<7x16xf32>,
    %c241 = arith.constant 241 : index
    %c0_218 = arith.constant 0 : index
    %148 = tpu.strided_load %arg9[%c241, %c0_218] {strides = array<i32: 2, 1>} : memref<450x16xf32, #tpu.memory_space<vmem>>, vector<7x16xf32>
    %c49_219 = arith.constant 49 : index
    %c64_220 = arith.constant 64 : index
    %149 = vector.load %arg12[%c49_219, %c64_220] : memref<98x144xf32, #tpu.memory_space<vmem>>, vector<7x16xf32>
    tpu.vector_store %arg12[%c49_219, %c64_220], %148 {strides = array<i32>} : memref<98x144xf32, #tpu.memory_space<vmem>>, vector<7x16xf32>,
    %c242 = arith.constant 242 : index
    %c0_221 = arith.constant 0 : index
    %150 = tpu.strided_load %arg9[%c242, %c0_221] {strides = array<i32: 2, 1>} : memref<450x16xf32, #tpu.memory_space<vmem>>, vector<7x16xf32>
    %c49_222 = arith.constant 49 : index
    %c80_223 = arith.constant 80 : index
    %151 = vector.load %arg12[%c49_222, %c80_223] : memref<98x144xf32, #tpu.memory_space<vmem>>, vector<7x16xf32>
    tpu.vector_store %arg12[%c49_222, %c80_223], %150 {strides = array<i32>} : memref<98x144xf32, #tpu.memory_space<vmem>>, vector<7x16xf32>,
    %c255 = arith.constant 255 : index
    %c0_224 = arith.constant 0 : index
    %152 = tpu.strided_load %arg9[%c255, %c0_224] {strides = array<i32: 2, 1>} : memref<450x16xf32, #tpu.memory_space<vmem>>, vector<7x16xf32>
    %c49_225 = arith.constant 49 : index
    %c96_226 = arith.constant 96 : index
    %153 = vector.load %arg12[%c49_225, %c96_226] : memref<98x144xf32, #tpu.memory_space<vmem>>, vector<7x16xf32>
    tpu.vector_store %arg12[%c49_225, %c96_226], %152 {strides = array<i32>} : memref<98x144xf32, #tpu.memory_space<vmem>>, vector<7x16xf32>,
    %c256 = arith.constant 256 : index
    %c0_227 = arith.constant 0 : index
    %154 = tpu.strided_load %arg9[%c256, %c0_227] {strides = array<i32: 2, 1>} : memref<450x16xf32, #tpu.memory_space<vmem>>, vector<7x16xf32>
    %c49_228 = arith.constant 49 : index
    %c112_229 = arith.constant 112 : index
    %155 = vector.load %arg12[%c49_228, %c112_229] : memref<98x144xf32, #tpu.memory_space<vmem>>, vector<7x16xf32>
    tpu.vector_store %arg12[%c49_228, %c112_229], %154 {strides = array<i32>} : memref<98x144xf32, #tpu.memory_space<vmem>>, vector<7x16xf32>,
    %c257 = arith.constant 257 : index
    %c0_230 = arith.constant 0 : index
    %156 = tpu.strided_load %arg9[%c257, %c0_230] {strides = array<i32: 2, 1>} : memref<450x16xf32, #tpu.memory_space<vmem>>, vector<7x16xf32>
    %c49_231 = arith.constant 49 : index
    %c128_232 = arith.constant 128 : index
    %157 = vector.load %arg12[%c49_231, %c128_232] : memref<98x144xf32, #tpu.memory_space<vmem>>, vector<7x16xf32>
    tpu.vector_store %arg12[%c49_231, %c128_232], %156 {strides = array<i32>} : memref<98x144xf32, #tpu.memory_space<vmem>>, vector<7x16xf32>,
    %c255_233 = arith.constant 255 : index
    %c0_234 = arith.constant 0 : index
    %158 = tpu.strided_load %arg9[%c255_233, %c0_234] {strides = array<i32: 2, 1>} : memref<450x16xf32, #tpu.memory_space<vmem>>, vector<7x16xf32>
    %c56 = arith.constant 56 : index
    %c0_235 = arith.constant 0 : index
    %159 = vector.load %arg12[%c56, %c0_235] : memref<98x144xf32, #tpu.memory_space<vmem>>, vector<7x16xf32>
    tpu.vector_store %arg12[%c56, %c0_235], %158 {strides = array<i32>} : memref<98x144xf32, #tpu.memory_space<vmem>>, vector<7x16xf32>,
    %c256_236 = arith.constant 256 : index
    %c0_237 = arith.constant 0 : index
    %160 = tpu.strided_load %arg9[%c256_236, %c0_237] {strides = array<i32: 2, 1>} : memref<450x16xf32, #tpu.memory_space<vmem>>, vector<7x16xf32>
    %c56_238 = arith.constant 56 : index
    %c16_239 = arith.constant 16 : index
    %161 = vector.load %arg12[%c56_238, %c16_239] : memref<98x144xf32, #tpu.memory_space<vmem>>, vector<7x16xf32>
    tpu.vector_store %arg12[%c56_238, %c16_239], %160 {strides = array<i32>} : memref<98x144xf32, #tpu.memory_space<vmem>>, vector<7x16xf32>,
    %c257_240 = arith.constant 257 : index
    %c0_241 = arith.constant 0 : index
    %162 = tpu.strided_load %arg9[%c257_240, %c0_241] {strides = array<i32: 2, 1>} : memref<450x16xf32, #tpu.memory_space<vmem>>, vector<7x16xf32>
    %c56_242 = arith.constant 56 : index
    %c32_243 = arith.constant 32 : index
    %163 = vector.load %arg12[%c56_242, %c32_243] : memref<98x144xf32, #tpu.memory_space<vmem>>, vector<7x16xf32>
    tpu.vector_store %arg12[%c56_242, %c32_243], %162 {strides = array<i32>} : memref<98x144xf32, #tpu.memory_space<vmem>>, vector<7x16xf32>,
    %c270 = arith.constant 270 : index
    %c0_244 = arith.constant 0 : index
    %164 = tpu.strided_load %arg9[%c270, %c0_244] {strides = array<i32: 2, 1>} : memref<450x16xf32, #tpu.memory_space<vmem>>, vector<7x16xf32>
    %c56_245 = arith.constant 56 : index
    %c48_246 = arith.constant 48 : index
    %165 = vector.load %arg12[%c56_245, %c48_246] : memref<98x144xf32, #tpu.memory_space<vmem>>, vector<7x16xf32>
    tpu.vector_store %arg12[%c56_245, %c48_246], %164 {strides = array<i32>} : memref<98x144xf32, #tpu.memory_space<vmem>>, vector<7x16xf32>,
    %c271 = arith.constant 271 : index
    %c0_247 = arith.constant 0 : index
    %166 = tpu.strided_load %arg9[%c271, %c0_247] {strides = array<i32: 2, 1>} : memref<450x16xf32, #tpu.memory_space<vmem>>, vector<7x16xf32>
    %c56_248 = arith.constant 56 : index
    %c64_249 = arith.constant 64 : index
    %167 = vector.load %arg12[%c56_248, %c64_249] : memref<98x144xf32, #tpu.memory_space<vmem>>, vector<7x16xf32>
    tpu.vector_store %arg12[%c56_248, %c64_249], %166 {strides = array<i32>} : memref<98x144xf32, #tpu.memory_space<vmem>>, vector<7x16xf32>,
    %c272 = arith.constant 272 : index
    %c0_250 = arith.constant 0 : index
    %168 = tpu.strided_load %arg9[%c272, %c0_250] {strides = array<i32: 2, 1>} : memref<450x16xf32, #tpu.memory_space<vmem>>, vector<7x16xf32>
    %c56_251 = arith.constant 56 : index
    %c80_252 = arith.constant 80 : index
    %169 = vector.load %arg12[%c56_251, %c80_252] : memref<98x144xf32, #tpu.memory_space<vmem>>, vector<7x16xf32>
    tpu.vector_store %arg12[%c56_251, %c80_252], %168 {strides = array<i32>} : memref<98x144xf32, #tpu.memory_space<vmem>>, vector<7x16xf32>,
    %c285 = arith.constant 285 : index
    %c0_253 = arith.constant 0 : index
    %170 = tpu.strided_load %arg9[%c285, %c0_253] {strides = array<i32: 2, 1>} : memref<450x16xf32, #tpu.memory_space<vmem>>, vector<7x16xf32>
    %c56_254 = arith.constant 56 : index
    %c96_255 = arith.constant 96 : index
    %171 = vector.load %arg12[%c56_254, %c96_255] : memref<98x144xf32, #tpu.memory_space<vmem>>, vector<7x16xf32>
    tpu.vector_store %arg12[%c56_254, %c96_255], %170 {strides = array<i32>} : memref<98x144xf32, #tpu.memory_space<vmem>>, vector<7x16xf32>,
    %c286 = arith.constant 286 : index
    %c0_256 = arith.constant 0 : index
    %172 = tpu.strided_load %arg9[%c286, %c0_256] {strides = array<i32: 2, 1>} : memref<450x16xf32, #tpu.memory_space<vmem>>, vector<7x16xf32>
    %c56_257 = arith.constant 56 : index
    %c112_258 = arith.constant 112 : index
    %173 = vector.load %arg12[%c56_257, %c112_258] : memref<98x144xf32, #tpu.memory_space<vmem>>, vector<7x16xf32>
    tpu.vector_store %arg12[%c56_257, %c112_258], %172 {strides = array<i32>} : memref<98x144xf32, #tpu.memory_space<vmem>>, vector<7x16xf32>,
    %c287 = arith.constant 287 : index
    %c0_259 = arith.constant 0 : index
    %174 = tpu.strided_load %arg9[%c287, %c0_259] {strides = array<i32: 2, 1>} : memref<450x16xf32, #tpu.memory_space<vmem>>, vector<7x16xf32>
    %c56_260 = arith.constant 56 : index
    %c128_261 = arith.constant 128 : index
    %175 = vector.load %arg12[%c56_260, %c128_261] : memref<98x144xf32, #tpu.memory_space<vmem>>, vector<7x16xf32>
    tpu.vector_store %arg12[%c56_260, %c128_261], %174 {strides = array<i32>} : memref<98x144xf32, #tpu.memory_space<vmem>>, vector<7x16xf32>,
    %c285_262 = arith.constant 285 : index
    %c0_263 = arith.constant 0 : index
    %176 = tpu.strided_load %arg9[%c285_262, %c0_263] {strides = array<i32: 2, 1>} : memref<450x16xf32, #tpu.memory_space<vmem>>, vector<7x16xf32>
    %c63 = arith.constant 63 : index
    %c0_264 = arith.constant 0 : index
    %177 = vector.load %arg12[%c63, %c0_264] : memref<98x144xf32, #tpu.memory_space<vmem>>, vector<7x16xf32>
    tpu.vector_store %arg12[%c63, %c0_264], %176 {strides = array<i32>} : memref<98x144xf32, #tpu.memory_space<vmem>>, vector<7x16xf32>,
    %c286_265 = arith.constant 286 : index
    %c0_266 = arith.constant 0 : index
    %178 = tpu.strided_load %arg9[%c286_265, %c0_266] {strides = array<i32: 2, 1>} : memref<450x16xf32, #tpu.memory_space<vmem>>, vector<7x16xf32>
    %c63_267 = arith.constant 63 : index
    %c16_268 = arith.constant 16 : index
    %179 = vector.load %arg12[%c63_267, %c16_268] : memref<98x144xf32, #tpu.memory_space<vmem>>, vector<7x16xf32>
    tpu.vector_store %arg12[%c63_267, %c16_268], %178 {strides = array<i32>} : memref<98x144xf32, #tpu.memory_space<vmem>>, vector<7x16xf32>,
    %c287_269 = arith.constant 287 : index
    %c0_270 = arith.constant 0 : index
    %180 = tpu.strided_load %arg9[%c287_269, %c0_270] {strides = array<i32: 2, 1>} : memref<450x16xf32, #tpu.memory_space<vmem>>, vector<7x16xf32>
    %c63_271 = arith.constant 63 : index
    %c32_272 = arith.constant 32 : index
    %181 = vector.load %arg12[%c63_271, %c32_272] : memref<98x144xf32, #tpu.memory_space<vmem>>, vector<7x16xf32>
    tpu.vector_store %arg12[%c63_271, %c32_272], %180 {strides = array<i32>} : memref<98x144xf32, #tpu.memory_space<vmem>>, vector<7x16xf32>,
    %c300 = arith.constant 300 : index
    %c0_273 = arith.constant 0 : index
    %182 = tpu.strided_load %arg9[%c300, %c0_273] {strides = array<i32: 2, 1>} : memref<450x16xf32, #tpu.memory_space<vmem>>, vector<7x16xf32>
    %c63_274 = arith.constant 63 : index
    %c48_275 = arith.constant 48 : index
    %183 = vector.load %arg12[%c63_274, %c48_275] : memref<98x144xf32, #tpu.memory_space<vmem>>, vector<7x16xf32>
    tpu.vector_store %arg12[%c63_274, %c48_275], %182 {strides = array<i32>} : memref<98x144xf32, #tpu.memory_space<vmem>>, vector<7x16xf32>,
    %c301 = arith.constant 301 : index
    %c0_276 = arith.constant 0 : index
    %184 = tpu.strided_load %arg9[%c301, %c0_276] {strides = array<i32: 2, 1>} : memref<450x16xf32, #tpu.memory_space<vmem>>, vector<7x16xf32>
    %c63_277 = arith.constant 63 : index
    %c64_278 = arith.constant 64 : index
    %185 = vector.load %arg12[%c63_277, %c64_278] : memref<98x144xf32, #tpu.memory_space<vmem>>, vector<7x16xf32>
    tpu.vector_store %arg12[%c63_277, %c64_278], %184 {strides = array<i32>} : memref<98x144xf32, #tpu.memory_space<vmem>>, vector<7x16xf32>,
    %c302 = arith.constant 302 : index
    %c0_279 = arith.constant 0 : index
    %186 = tpu.strided_load %arg9[%c302, %c0_279] {strides = array<i32: 2, 1>} : memref<450x16xf32, #tpu.memory_space<vmem>>, vector<7x16xf32>
    %c63_280 = arith.constant 63 : index
    %c80_281 = arith.constant 80 : index
    %187 = vector.load %arg12[%c63_280, %c80_281] : memref<98x144xf32, #tpu.memory_space<vmem>>, vector<7x16xf32>
    tpu.vector_store %arg12[%c63_280, %c80_281], %186 {strides = array<i32>} : memref<98x144xf32, #tpu.memory_space<vmem>>, vector<7x16xf32>,
    %c315 = arith.constant 315 : index
    %c0_282 = arith.constant 0 : index
    %188 = tpu.strided_load %arg9[%c315, %c0_282] {strides = array<i32: 2, 1>} : memref<450x16xf32, #tpu.memory_space<vmem>>, vector<7x16xf32>
    %c63_283 = arith.constant 63 : index
    %c96_284 = arith.constant 96 : index
    %189 = vector.load %arg12[%c63_283, %c96_284] : memref<98x144xf32, #tpu.memory_space<vmem>>, vector<7x16xf32>
    tpu.vector_store %arg12[%c63_283, %c96_284], %188 {strides = array<i32>} : memref<98x144xf32, #tpu.memory_space<vmem>>, vector<7x16xf32>,
    %c316 = arith.constant 316 : index
    %c0_285 = arith.constant 0 : index
    %190 = tpu.strided_load %arg9[%c316, %c0_285] {strides = array<i32: 2, 1>} : memref<450x16xf32, #tpu.memory_space<vmem>>, vector<7x16xf32>
    %c63_286 = arith.constant 63 : index
    %c112_287 = arith.constant 112 : index
    %191 = vector.load %arg12[%c63_286, %c112_287] : memref<98x144xf32, #tpu.memory_space<vmem>>, vector<7x16xf32>
    tpu.vector_store %arg12[%c63_286, %c112_287], %190 {strides = array<i32>} : memref<98x144xf32, #tpu.memory_space<vmem>>, vector<7x16xf32>,
    %c317 = arith.constant 317 : index
    %c0_288 = arith.constant 0 : index
    %192 = tpu.strided_load %arg9[%c317, %c0_288] {strides = array<i32: 2, 1>} : memref<450x16xf32, #tpu.memory_space<vmem>>, vector<7x16xf32>
    %c63_289 = arith.constant 63 : index
    %c128_290 = arith.constant 128 : index
    %193 = vector.load %arg12[%c63_289, %c128_290] : memref<98x144xf32, #tpu.memory_space<vmem>>, vector<7x16xf32>
    tpu.vector_store %arg12[%c63_289, %c128_290], %192 {strides = array<i32>} : memref<98x144xf32, #tpu.memory_space<vmem>>, vector<7x16xf32>,
    %c315_291 = arith.constant 315 : index
    %c0_292 = arith.constant 0 : index
    %194 = tpu.strided_load %arg9[%c315_291, %c0_292] {strides = array<i32: 2, 1>} : memref<450x16xf32, #tpu.memory_space<vmem>>, vector<7x16xf32>
    %c70 = arith.constant 70 : index
    %c0_293 = arith.constant 0 : index
    %195 = vector.load %arg12[%c70, %c0_293] : memref<98x144xf32, #tpu.memory_space<vmem>>, vector<7x16xf32>
    tpu.vector_store %arg12[%c70, %c0_293], %194 {strides = array<i32>} : memref<98x144xf32, #tpu.memory_space<vmem>>, vector<7x16xf32>,
    %c316_294 = arith.constant 316 : index
    %c0_295 = arith.constant 0 : index
    %196 = tpu.strided_load %arg9[%c316_294, %c0_295] {strides = array<i32: 2, 1>} : memref<450x16xf32, #tpu.memory_space<vmem>>, vector<7x16xf32>
    %c70_296 = arith.constant 70 : index
    %c16_297 = arith.constant 16 : index
    %197 = vector.load %arg12[%c70_296, %c16_297] : memref<98x144xf32, #tpu.memory_space<vmem>>, vector<7x16xf32>
    tpu.vector_store %arg12[%c70_296, %c16_297], %196 {strides = array<i32>} : memref<98x144xf32, #tpu.memory_space<vmem>>, vector<7x16xf32>,
    %c317_298 = arith.constant 317 : index
    %c0_299 = arith.constant 0 : index
    %198 = tpu.strided_load %arg9[%c317_298, %c0_299] {strides = array<i32: 2, 1>} : memref<450x16xf32, #tpu.memory_space<vmem>>, vector<7x16xf32>
    %c70_300 = arith.constant 70 : index
    %c32_301 = arith.constant 32 : index
    %199 = vector.load %arg12[%c70_300, %c32_301] : memref<98x144xf32, #tpu.memory_space<vmem>>, vector<7x16xf32>
    tpu.vector_store %arg12[%c70_300, %c32_301], %198 {strides = array<i32>} : memref<98x144xf32, #tpu.memory_space<vmem>>, vector<7x16xf32>,
    %c330 = arith.constant 330 : index
    %c0_302 = arith.constant 0 : index
    %200 = tpu.strided_load %arg9[%c330, %c0_302] {strides = array<i32: 2, 1>} : memref<450x16xf32, #tpu.memory_space<vmem>>, vector<7x16xf32>
    %c70_303 = arith.constant 70 : index
    %c48_304 = arith.constant 48 : index
    %201 = vector.load %arg12[%c70_303, %c48_304] : memref<98x144xf32, #tpu.memory_space<vmem>>, vector<7x16xf32>
    tpu.vector_store %arg12[%c70_303, %c48_304], %200 {strides = array<i32>} : memref<98x144xf32, #tpu.memory_space<vmem>>, vector<7x16xf32>,
    %c331 = arith.constant 331 : index
    %c0_305 = arith.constant 0 : index
    %202 = tpu.strided_load %arg9[%c331, %c0_305] {strides = array<i32: 2, 1>} : memref<450x16xf32, #tpu.memory_space<vmem>>, vector<7x16xf32>
    %c70_306 = arith.constant 70 : index
    %c64_307 = arith.constant 64 : index
    %203 = vector.load %arg12[%c70_306, %c64_307] : memref<98x144xf32, #tpu.memory_space<vmem>>, vector<7x16xf32>
    tpu.vector_store %arg12[%c70_306, %c64_307], %202 {strides = array<i32>} : memref<98x144xf32, #tpu.memory_space<vmem>>, vector<7x16xf32>,
    %c332 = arith.constant 332 : index
    %c0_308 = arith.constant 0 : index
    %204 = tpu.strided_load %arg9[%c332, %c0_308] {strides = array<i32: 2, 1>} : memref<450x16xf32, #tpu.memory_space<vmem>>, vector<7x16xf32>
    %c70_309 = arith.constant 70 : index
    %c80_310 = arith.constant 80 : index
    %205 = vector.load %arg12[%c70_309, %c80_310] : memref<98x144xf32, #tpu.memory_space<vmem>>, vector<7x16xf32>
    tpu.vector_store %arg12[%c70_309, %c80_310], %204 {strides = array<i32>} : memref<98x144xf32, #tpu.memory_space<vmem>>, vector<7x16xf32>,
    %c345 = arith.constant 345 : index
    %c0_311 = arith.constant 0 : index
    %206 = tpu.strided_load %arg9[%c345, %c0_311] {strides = array<i32: 2, 1>} : memref<450x16xf32, #tpu.memory_space<vmem>>, vector<7x16xf32>
    %c70_312 = arith.constant 70 : index
    %c96_313 = arith.constant 96 : index
    %207 = vector.load %arg12[%c70_312, %c96_313] : memref<98x144xf32, #tpu.memory_space<vmem>>, vector<7x16xf32>
    tpu.vector_store %arg12[%c70_312, %c96_313], %206 {strides = array<i32>} : memref<98x144xf32, #tpu.memory_space<vmem>>, vector<7x16xf32>,
    %c346 = arith.constant 346 : index
    %c0_314 = arith.constant 0 : index
    %208 = tpu.strided_load %arg9[%c346, %c0_314] {strides = array<i32: 2, 1>} : memref<450x16xf32, #tpu.memory_space<vmem>>, vector<7x16xf32>
    %c70_315 = arith.constant 70 : index
    %c112_316 = arith.constant 112 : index
    %209 = vector.load %arg12[%c70_315, %c112_316] : memref<98x144xf32, #tpu.memory_space<vmem>>, vector<7x16xf32>
    tpu.vector_store %arg12[%c70_315, %c112_316], %208 {strides = array<i32>} : memref<98x144xf32, #tpu.memory_space<vmem>>, vector<7x16xf32>,
    %c347 = arith.constant 347 : index
    %c0_317 = arith.constant 0 : index
    %210 = tpu.strided_load %arg9[%c347, %c0_317] {strides = array<i32: 2, 1>} : memref<450x16xf32, #tpu.memory_space<vmem>>, vector<7x16xf32>
    %c70_318 = arith.constant 70 : index
    %c128_319 = arith.constant 128 : index
    %211 = vector.load %arg12[%c70_318, %c128_319] : memref<98x144xf32, #tpu.memory_space<vmem>>, vector<7x16xf32>
    tpu.vector_store %arg12[%c70_318, %c128_319], %210 {strides = array<i32>} : memref<98x144xf32, #tpu.memory_space<vmem>>, vector<7x16xf32>,
    %c345_320 = arith.constant 345 : index
    %c0_321 = arith.constant 0 : index
    %212 = tpu.strided_load %arg9[%c345_320, %c0_321] {strides = array<i32: 2, 1>} : memref<450x16xf32, #tpu.memory_space<vmem>>, vector<7x16xf32>
    %c77_322 = arith.constant 77 : index
    %c0_323 = arith.constant 0 : index
    %213 = vector.load %arg12[%c77_322, %c0_323] : memref<98x144xf32, #tpu.memory_space<vmem>>, vector<7x16xf32>
    tpu.vector_store %arg12[%c77_322, %c0_323], %212 {strides = array<i32>} : memref<98x144xf32, #tpu.memory_space<vmem>>, vector<7x16xf32>,
    %c346_324 = arith.constant 346 : index
    %c0_325 = arith.constant 0 : index
    %214 = tpu.strided_load %arg9[%c346_324, %c0_325] {strides = array<i32: 2, 1>} : memref<450x16xf32, #tpu.memory_space<vmem>>, vector<7x16xf32>
    %c77_326 = arith.constant 77 : index
    %c16_327 = arith.constant 16 : index
    %215 = vector.load %arg12[%c77_326, %c16_327] : memref<98x144xf32, #tpu.memory_space<vmem>>, vector<7x16xf32>
    tpu.vector_store %arg12[%c77_326, %c16_327], %214 {strides = array<i32>} : memref<98x144xf32, #tpu.memory_space<vmem>>, vector<7x16xf32>,
    %c347_328 = arith.constant 347 : index
    %c0_329 = arith.constant 0 : index
    %216 = tpu.strided_load %arg9[%c347_328, %c0_329] {strides = array<i32: 2, 1>} : memref<450x16xf32, #tpu.memory_space<vmem>>, vector<7x16xf32>
    %c77_330 = arith.constant 77 : index
    %c32_331 = arith.constant 32 : index
    %217 = vector.load %arg12[%c77_330, %c32_331] : memref<98x144xf32, #tpu.memory_space<vmem>>, vector<7x16xf32>
    tpu.vector_store %arg12[%c77_330, %c32_331], %216 {strides = array<i32>} : memref<98x144xf32, #tpu.memory_space<vmem>>, vector<7x16xf32>,
    %c360 = arith.constant 360 : index
    %c0_332 = arith.constant 0 : index
    %218 = tpu.strided_load %arg9[%c360, %c0_332] {strides = array<i32: 2, 1>} : memref<450x16xf32, #tpu.memory_space<vmem>>, vector<7x16xf32>
    %c77_333 = arith.constant 77 : index
    %c48_334 = arith.constant 48 : index
    %219 = vector.load %arg12[%c77_333, %c48_334] : memref<98x144xf32, #tpu.memory_space<vmem>>, vector<7x16xf32>
    tpu.vector_store %arg12[%c77_333, %c48_334], %218 {strides = array<i32>} : memref<98x144xf32, #tpu.memory_space<vmem>>, vector<7x16xf32>,
    %c361 = arith.constant 361 : index
    %c0_335 = arith.constant 0 : index
    %220 = tpu.strided_load %arg9[%c361, %c0_335] {strides = array<i32: 2, 1>} : memref<450x16xf32, #tpu.memory_space<vmem>>, vector<7x16xf32>
    %c77_336 = arith.constant 77 : index
    %c64_337 = arith.constant 64 : index
    %221 = vector.load %arg12[%c77_336, %c64_337] : memref<98x144xf32, #tpu.memory_space<vmem>>, vector<7x16xf32>
    tpu.vector_store %arg12[%c77_336, %c64_337], %220 {strides = array<i32>} : memref<98x144xf32, #tpu.memory_space<vmem>>, vector<7x16xf32>,
    %c362 = arith.constant 362 : index
    %c0_338 = arith.constant 0 : index
    %222 = tpu.strided_load %arg9[%c362, %c0_338] {strides = array<i32: 2, 1>} : memref<450x16xf32, #tpu.memory_space<vmem>>, vector<7x16xf32>
    %c77_339 = arith.constant 77 : index
    %c80_340 = arith.constant 80 : index
    %223 = vector.load %arg12[%c77_339, %c80_340] : memref<98x144xf32, #tpu.memory_space<vmem>>, vector<7x16xf32>
    tpu.vector_store %arg12[%c77_339, %c80_340], %222 {strides = array<i32>} : memref<98x144xf32, #tpu.memory_space<vmem>>, vector<7x16xf32>,
    %c375 = arith.constant 375 : index
    %c0_341 = arith.constant 0 : index
    %224 = tpu.strided_load %arg9[%c375, %c0_341] {strides = array<i32: 2, 1>} : memref<450x16xf32, #tpu.memory_space<vmem>>, vector<7x16xf32>
    %c77_342 = arith.constant 77 : index
    %c96_343 = arith.constant 96 : index
    %225 = vector.load %arg12[%c77_342, %c96_343] : memref<98x144xf32, #tpu.memory_space<vmem>>, vector<7x16xf32>
    tpu.vector_store %arg12[%c77_342, %c96_343], %224 {strides = array<i32>} : memref<98x144xf32, #tpu.memory_space<vmem>>, vector<7x16xf32>,
    %c376 = arith.constant 376 : index
    %c0_344 = arith.constant 0 : index
    %226 = tpu.strided_load %arg9[%c376, %c0_344] {strides = array<i32: 2, 1>} : memref<450x16xf32, #tpu.memory_space<vmem>>, vector<7x16xf32>
    %c77_345 = arith.constant 77 : index
    %c112_346 = arith.constant 112 : index
    %227 = vector.load %arg12[%c77_345, %c112_346] : memref<98x144xf32, #tpu.memory_space<vmem>>, vector<7x16xf32>
    tpu.vector_store %arg12[%c77_345, %c112_346], %226 {strides = array<i32>} : memref<98x144xf32, #tpu.memory_space<vmem>>, vector<7x16xf32>,
    %c377 = arith.constant 377 : index
    %c0_347 = arith.constant 0 : index
    %228 = tpu.strided_load %arg9[%c377, %c0_347] {strides = array<i32: 2, 1>} : memref<450x16xf32, #tpu.memory_space<vmem>>, vector<7x16xf32>
    %c77_348 = arith.constant 77 : index
    %c128_349 = arith.constant 128 : index
    %229 = vector.load %arg12[%c77_348, %c128_349] : memref<98x144xf32, #tpu.memory_space<vmem>>, vector<7x16xf32>
    tpu.vector_store %arg12[%c77_348, %c128_349], %228 {strides = array<i32>} : memref<98x144xf32, #tpu.memory_space<vmem>>, vector<7x16xf32>,
    %c375_350 = arith.constant 375 : index
    %c0_351 = arith.constant 0 : index
    %230 = tpu.strided_load %arg9[%c375_350, %c0_351] {strides = array<i32: 2, 1>} : memref<450x16xf32, #tpu.memory_space<vmem>>, vector<7x16xf32>
    %c84 = arith.constant 84 : index
    %c0_352 = arith.constant 0 : index
    %231 = vector.load %arg12[%c84, %c0_352] : memref<98x144xf32, #tpu.memory_space<vmem>>, vector<7x16xf32>
    tpu.vector_store %arg12[%c84, %c0_352], %230 {strides = array<i32>} : memref<98x144xf32, #tpu.memory_space<vmem>>, vector<7x16xf32>,
    %c376_353 = arith.constant 376 : index
    %c0_354 = arith.constant 0 : index
    %232 = tpu.strided_load %arg9[%c376_353, %c0_354] {strides = array<i32: 2, 1>} : memref<450x16xf32, #tpu.memory_space<vmem>>, vector<7x16xf32>
    %c84_355 = arith.constant 84 : index
    %c16_356 = arith.constant 16 : index
    %233 = vector.load %arg12[%c84_355, %c16_356] : memref<98x144xf32, #tpu.memory_space<vmem>>, vector<7x16xf32>
    tpu.vector_store %arg12[%c84_355, %c16_356], %232 {strides = array<i32>} : memref<98x144xf32, #tpu.memory_space<vmem>>, vector<7x16xf32>,
    %c377_357 = arith.constant 377 : index
    %c0_358 = arith.constant 0 : index
    %234 = tpu.strided_load %arg9[%c377_357, %c0_358] {strides = array<i32: 2, 1>} : memref<450x16xf32, #tpu.memory_space<vmem>>, vector<7x16xf32>
    %c84_359 = arith.constant 84 : index
    %c32_360 = arith.constant 32 : index
    %235 = vector.load %arg12[%c84_359, %c32_360] : memref<98x144xf32, #tpu.memory_space<vmem>>, vector<7x16xf32>
    tpu.vector_store %arg12[%c84_359, %c32_360], %234 {strides = array<i32>} : memref<98x144xf32, #tpu.memory_space<vmem>>, vector<7x16xf32>,
    %c390 = arith.constant 390 : index
    %c0_361 = arith.constant 0 : index
    %236 = tpu.strided_load %arg9[%c390, %c0_361] {strides = array<i32: 2, 1>} : memref<450x16xf32, #tpu.memory_space<vmem>>, vector<7x16xf32>
    %c84_362 = arith.constant 84 : index
    %c48_363 = arith.constant 48 : index
    %237 = vector.load %arg12[%c84_362, %c48_363] : memref<98x144xf32, #tpu.memory_space<vmem>>, vector<7x16xf32>
    tpu.vector_store %arg12[%c84_362, %c48_363], %236 {strides = array<i32>} : memref<98x144xf32, #tpu.memory_space<vmem>>, vector<7x16xf32>,
    %c391 = arith.constant 391 : index
    %c0_364 = arith.constant 0 : index
    %238 = tpu.strided_load %arg9[%c391, %c0_364] {strides = array<i32: 2, 1>} : memref<450x16xf32, #tpu.memory_space<vmem>>, vector<7x16xf32>
    %c84_365 = arith.constant 84 : index
    %c64_366 = arith.constant 64 : index
    %239 = vector.load %arg12[%c84_365, %c64_366] : memref<98x144xf32, #tpu.memory_space<vmem>>, vector<7x16xf32>
    tpu.vector_store %arg12[%c84_365, %c64_366], %238 {strides = array<i32>} : memref<98x144xf32, #tpu.memory_space<vmem>>, vector<7x16xf32>,
    %c392 = arith.constant 392 : index
    %c0_367 = arith.constant 0 : index
    %240 = tpu.strided_load %arg9[%c392, %c0_367] {strides = array<i32: 2, 1>} : memref<450x16xf32, #tpu.memory_space<vmem>>, vector<7x16xf32>
    %c84_368 = arith.constant 84 : index
    %c80_369 = arith.constant 80 : index
    %241 = vector.load %arg12[%c84_368, %c80_369] : memref<98x144xf32, #tpu.memory_space<vmem>>, vector<7x16xf32>
    tpu.vector_store %arg12[%c84_368, %c80_369], %240 {strides = array<i32>} : memref<98x144xf32, #tpu.memory_space<vmem>>, vector<7x16xf32>,
    %c405 = arith.constant 405 : index
    %c0_370 = arith.constant 0 : index
    %242 = tpu.strided_load %arg9[%c405, %c0_370] {strides = array<i32: 2, 1>} : memref<450x16xf32, #tpu.memory_space<vmem>>, vector<7x16xf32>
    %c84_371 = arith.constant 84 : index
    %c96_372 = arith.constant 96 : index
    %243 = vector.load %arg12[%c84_371, %c96_372] : memref<98x144xf32, #tpu.memory_space<vmem>>, vector<7x16xf32>
    tpu.vector_store %arg12[%c84_371, %c96_372], %242 {strides = array<i32>} : memref<98x144xf32, #tpu.memory_space<vmem>>, vector<7x16xf32>,
    %c406 = arith.constant 406 : index
    %c0_373 = arith.constant 0 : index
    %244 = tpu.strided_load %arg9[%c406, %c0_373] {strides = array<i32: 2, 1>} : memref<450x16xf32, #tpu.memory_space<vmem>>, vector<7x16xf32>
    %c84_374 = arith.constant 84 : index
    %c112_375 = arith.constant 112 : index
    %245 = vector.load %arg12[%c84_374, %c112_375] : memref<98x144xf32, #tpu.memory_space<vmem>>, vector<7x16xf32>
    tpu.vector_store %arg12[%c84_374, %c112_375], %244 {strides = array<i32>} : memref<98x144xf32, #tpu.memory_space<vmem>>, vector<7x16xf32>,
    %c407 = arith.constant 407 : index
    %c0_376 = arith.constant 0 : index
    %246 = tpu.strided_load %arg9[%c407, %c0_376] {strides = array<i32: 2, 1>} : memref<450x16xf32, #tpu.memory_space<vmem>>, vector<7x16xf32>
    %c84_377 = arith.constant 84 : index
    %c128_378 = arith.constant 128 : index
    %247 = vector.load %arg12[%c84_377, %c128_378] : memref<98x144xf32, #tpu.memory_space<vmem>>, vector<7x16xf32>
    tpu.vector_store %arg12[%c84_377, %c128_378], %246 {strides = array<i32>} : memref<98x144xf32, #tpu.memory_space<vmem>>, vector<7x16xf32>,
    %c405_379 = arith.constant 405 : index
    %c0_380 = arith.constant 0 : index
    %248 = tpu.strided_load %arg9[%c405_379, %c0_380] {strides = array<i32: 2, 1>} : memref<450x16xf32, #tpu.memory_space<vmem>>, vector<7x16xf32>
    %c91_381 = arith.constant 91 : index
    %c0_382 = arith.constant 0 : index
    %249 = vector.load %arg12[%c91_381, %c0_382] : memref<98x144xf32, #tpu.memory_space<vmem>>, vector<7x16xf32>
    tpu.vector_store %arg12[%c91_381, %c0_382], %248 {strides = array<i32>} : memref<98x144xf32, #tpu.memory_space<vmem>>, vector<7x16xf32>,
    %c406_383 = arith.constant 406 : index
    %c0_384 = arith.constant 0 : index
    %250 = tpu.strided_load %arg9[%c406_383, %c0_384] {strides = array<i32: 2, 1>} : memref<450x16xf32, #tpu.memory_space<vmem>>, vector<7x16xf32>
    %c91_385 = arith.constant 91 : index
    %c16_386 = arith.constant 16 : index
    %251 = vector.load %arg12[%c91_385, %c16_386] : memref<98x144xf32, #tpu.memory_space<vmem>>, vector<7x16xf32>
    tpu.vector_store %arg12[%c91_385, %c16_386], %250 {strides = array<i32>} : memref<98x144xf32, #tpu.memory_space<vmem>>, vector<7x16xf32>,
    %c407_387 = arith.constant 407 : index
    %c0_388 = arith.constant 0 : index
    %252 = tpu.strided_load %arg9[%c407_387, %c0_388] {strides = array<i32: 2, 1>} : memref<450x16xf32, #tpu.memory_space<vmem>>, vector<7x16xf32>
    %c91_389 = arith.constant 91 : index
    %c32_390 = arith.constant 32 : index
    %253 = vector.load %arg12[%c91_389, %c32_390] : memref<98x144xf32, #tpu.memory_space<vmem>>, vector<7x16xf32>
    tpu.vector_store %arg12[%c91_389, %c32_390], %252 {strides = array<i32>} : memref<98x144xf32, #tpu.memory_space<vmem>>, vector<7x16xf32>,
    %c420 = arith.constant 420 : index
    %c0_391 = arith.constant 0 : index
    %254 = tpu.strided_load %arg9[%c420, %c0_391] {strides = array<i32: 2, 1>} : memref<450x16xf32, #tpu.memory_space<vmem>>, vector<7x16xf32>
    %c91_392 = arith.constant 91 : index
    %c48_393 = arith.constant 48 : index
    %255 = vector.load %arg12[%c91_392, %c48_393] : memref<98x144xf32, #tpu.memory_space<vmem>>, vector<7x16xf32>
    tpu.vector_store %arg12[%c91_392, %c48_393], %254 {strides = array<i32>} : memref<98x144xf32, #tpu.memory_space<vmem>>, vector<7x16xf32>,
    %c421 = arith.constant 421 : index
    %c0_394 = arith.constant 0 : index
    %256 = tpu.strided_load %arg9[%c421, %c0_394] {strides = array<i32: 2, 1>} : memref<450x16xf32, #tpu.memory_space<vmem>>, vector<7x16xf32>
    %c91_395 = arith.constant 91 : index
    %c64_396 = arith.constant 64 : index
    %257 = vector.load %arg12[%c91_395, %c64_396] : memref<98x144xf32, #tpu.memory_space<vmem>>, vector<7x16xf32>
    tpu.vector_store %arg12[%c91_395, %c64_396], %256 {strides = array<i32>} : memref<98x144xf32, #tpu.memory_space<vmem>>, vector<7x16xf32>,
    %c422 = arith.constant 422 : index
    %c0_397 = arith.constant 0 : index
    %258 = tpu.strided_load %arg9[%c422, %c0_397] {strides = array<i32: 2, 1>} : memref<450x16xf32, #tpu.memory_space<vmem>>, vector<7x16xf32>
    %c91_398 = arith.constant 91 : index
    %c80_399 = arith.constant 80 : index
    %259 = vector.load %arg12[%c91_398, %c80_399] : memref<98x144xf32, #tpu.memory_space<vmem>>, vector<7x16xf32>
    tpu.vector_store %arg12[%c91_398, %c80_399], %258 {strides = array<i32>} : memref<98x144xf32, #tpu.memory_space<vmem>>, vector<7x16xf32>,
    %c435 = arith.constant 435 : index
    %c0_400 = arith.constant 0 : index
    %260 = tpu.strided_load %arg9[%c435, %c0_400] {strides = array<i32: 2, 1>} : memref<450x16xf32, #tpu.memory_space<vmem>>, vector<7x16xf32>
    %c91_401 = arith.constant 91 : index
    %c96_402 = arith.constant 96 : index
    %261 = vector.load %arg12[%c91_401, %c96_402] : memref<98x144xf32, #tpu.memory_space<vmem>>, vector<7x16xf32>
    tpu.vector_store %arg12[%c91_401, %c96_402], %260 {strides = array<i32>} : memref<98x144xf32, #tpu.memory_space<vmem>>, vector<7x16xf32>,
    %c436 = arith.constant 436 : index
    %c0_403 = arith.constant 0 : index
    %262 = tpu.strided_load %arg9[%c436, %c0_403] {strides = array<i32: 2, 1>} : memref<450x16xf32, #tpu.memory_space<vmem>>, vector<7x16xf32>
    %c91_404 = arith.constant 91 : index
    %c112_405 = arith.constant 112 : index
    %263 = vector.load %arg12[%c91_404, %c112_405] : memref<98x144xf32, #tpu.memory_space<vmem>>, vector<7x16xf32>
    tpu.vector_store %arg12[%c91_404, %c112_405], %262 {strides = array<i32>} : memref<98x144xf32, #tpu.memory_space<vmem>>, vector<7x16xf32>,
    %c437 = arith.constant 437 : index
    %c0_406 = arith.constant 0 : index
    %264 = tpu.strided_load %arg9[%c437, %c0_406] {strides = array<i32: 2, 1>} : memref<450x16xf32, #tpu.memory_space<vmem>>, vector<7x16xf32>
    %c91_407 = arith.constant 91 : index
    %c128_408 = arith.constant 128 : index
    %265 = vector.load %arg12[%c91_407, %c128_408] : memref<98x144xf32, #tpu.memory_space<vmem>>, vector<7x16xf32>
    tpu.vector_store %arg12[%c91_407, %c128_408], %264 {strides = array<i32>} : memref<98x144xf32, #tpu.memory_space<vmem>>, vector<7x16xf32>,
    %c0_409 = arith.constant 0 : index
    %c0_410 = arith.constant 0 : index
    %266 = vector.load %arg12[%c0_409, %c0_410] : memref<98x144xf32, #tpu.memory_space<vmem>>, vector<98x144xf32>
    %267 = arith.truncf %266 : vector<98x144xf32> to vector<98x144xbf16>
    %c1_411 = arith.constant 1 : index
    %c0_412 = arith.constant 0 : index
    %c0_413 = arith.constant 0 : index
    %268 = vector.load %arg2[%c1_411, %c0_412, %c0_413] : memref<4x288x64xbf16, #tpu.memory_space<vmem>>, vector<1x144x16xbf16>
    %269 = vector.shape_cast %268 : vector<1x144x16xbf16> to vector<144x16xbf16>
    %cst_414 = arith.constant dense<0.000000e+00> : vector<98x16xf32>
    %270 = tpu.matmul %267, %269, %cst_414 {dimension_numbers = #tpu.dot_dimension_numbers<[1], [0], [0], [1], [0, 0, 1, 1], [], []>} : vector<98x144xbf16>, vector<144x16xbf16>, vector<98x16xf32> -> vector<98x16xf32>
    %c1_415 = arith.constant 1 : index
    %c0_416 = arith.constant 0 : index
    %c0_417 = arith.constant 0 : index
    %271 = vector.load %arg3[%c1_415, %c0_416, %c0_417] : memref<4x3x64xf32, #tpu.memory_space<vmem>>, vector<1x1x16xf32>
    %272 = vector.shape_cast %271 : vector<1x1x16xf32> to vector<1x16xf32>
    %273 = vector.broadcast %272 : vector<1x16xf32> to vector<98x16xf32>
    %274 = arith.addf %270, %273 : vector<98x16xf32>
    %cst_418 = arith.constant dense<0.000000e+00> : vector<16xf32>
    %275 = vector.multi_reduction <add>, %274, %cst_418 [0] : vector<98x16xf32> to vector<16xf32>
    %276 = vector.shape_cast %275 : vector<16xf32> to vector<1x16xf32>
    %cst_419 = arith.constant 0.0102040814 : f32
    %277 = vector.broadcast %cst_419 : f32 to vector<1x16xf32>
    %278 = arith.mulf %276, %277 : vector<1x16xf32>
    %279 = vector.broadcast %278 : vector<1x16xf32> to vector<98x16xf32>
    %280 = arith.subf %274, %279 : vector<98x16xf32>
    %281 = arith.mulf %280, %280 : vector<98x16xf32>
    %cst_420 = arith.constant dense<0.000000e+00> : vector<16xf32>
    %282 = vector.multi_reduction <add>, %281, %cst_420 [0] : vector<98x16xf32> to vector<16xf32>
    %283 = vector.shape_cast %282 : vector<16xf32> to vector<1x16xf32>
    %cst_421 = arith.constant 0.0102040814 : f32
    %284 = vector.broadcast %cst_421 : f32 to vector<1x16xf32>
    %285 = arith.mulf %283, %284 : vector<1x16xf32>
    %cst_422 = arith.constant 9.99999974E-6 : f32
    %286 = vector.broadcast %cst_422 : f32 to vector<1x16xf32>
    %287 = arith.addf %285, %286 : vector<1x16xf32>
    %288 = math.rsqrt %287 : vector<1x16xf32>
    %289 = vector.broadcast %288 : vector<1x16xf32> to vector<98x16xf32>
    %290 = arith.mulf %280, %289 : vector<98x16xf32>
    %c1_423 = arith.constant 1 : index
    %c1_424 = arith.constant 1 : index
    %c0_425 = arith.constant 0 : index
    %291 = vector.load %arg3[%c1_423, %c1_424, %c0_425] : memref<4x3x64xf32, #tpu.memory_space<vmem>>, vector<1x1x16xf32>
    %292 = vector.shape_cast %291 : vector<1x1x16xf32> to vector<1x16xf32>
    %293 = vector.broadcast %292 : vector<1x16xf32> to vector<98x16xf32>
    %294 = arith.mulf %290, %293 : vector<98x16xf32>
    %c1_426 = arith.constant 1 : index
    %c2_427 = arith.constant 2 : index
    %c0_428 = arith.constant 0 : index
    %295 = vector.load %arg3[%c1_426, %c2_427, %c0_428] : memref<4x3x64xf32, #tpu.memory_space<vmem>>, vector<1x1x16xf32>
    %296 = vector.shape_cast %295 : vector<1x1x16xf32> to vector<1x16xf32>
    %297 = vector.broadcast %296 : vector<1x16xf32> to vector<98x16xf32>
    %298 = arith.addf %294, %297 : vector<98x16xf32>
    %cst_429 = arith.constant 0.000000e+00 : f32
    %299 = vector.broadcast %cst_429 : f32 to vector<98x16xf32>
    %300 = arith.cmpf oge, %298, %299 : vector<98x16xf32>
    %cst_430 = arith.constant 2.000000e-01 : f32
    %301 = vector.broadcast %cst_430 : f32 to vector<98x16xf32>
    %302 = arith.mulf %301, %298 : vector<98x16xf32>
    %303 = arith.select %300, %298, %302 : vector<98x16xi1>, vector<98x16xf32>
    %c0_431 = arith.constant 0 : index
    %c0_432 = arith.constant 0 : index
    %304 = vector.load %arg10[%c0_431, %c0_432] : memref<98x16xf32, #tpu.memory_space<vmem>>, vector<98x16xf32>
    tpu.vector_store %arg10[%c0_431, %c0_432], %303 {strides = array<i32>} : memref<98x16xf32, #tpu.memory_space<vmem>>, vector<98x16xf32>,
    %c0_433 = arith.constant 0 : index
    %c0_434 = arith.constant 0 : index
    %305 = tpu.strided_load %arg10[%c0_433, %c0_434] {strides = array<i32: 2, 1>} : memref<98x16xf32, #tpu.memory_space<vmem>>, vector<3x16xf32>
    %c0_435 = arith.constant 0 : index
    %c0_436 = arith.constant 0 : index
    %306 = vector.load %arg13[%c0_435, %c0_436] : memref<18x144xf32, #tpu.memory_space<vmem>>, vector<3x16xf32>
    tpu.vector_store %arg13[%c0_435, %c0_436], %305 {strides = array<i32>} : memref<18x144xf32, #tpu.memory_space<vmem>>, vector<3x16xf32>,
    %c1_437 = arith.constant 1 : index
    %c0_438 = arith.constant 0 : index
    %307 = tpu.strided_load %arg10[%c1_437, %c0_438] {strides = array<i32: 2, 1>} : memref<98x16xf32, #tpu.memory_space<vmem>>, vector<3x16xf32>
    %c0_439 = arith.constant 0 : index
    %c16_440 = arith.constant 16 : index
    %308 = vector.load %arg13[%c0_439, %c16_440] : memref<18x144xf32, #tpu.memory_space<vmem>>, vector<3x16xf32>
    tpu.vector_store %arg13[%c0_439, %c16_440], %307 {strides = array<i32>} : memref<18x144xf32, #tpu.memory_space<vmem>>, vector<3x16xf32>,
    %c2_441 = arith.constant 2 : index
    %c0_442 = arith.constant 0 : index
    %309 = tpu.strided_load %arg10[%c2_441, %c0_442] {strides = array<i32: 2, 1>} : memref<98x16xf32, #tpu.memory_space<vmem>>, vector<3x16xf32>
    %c0_443 = arith.constant 0 : index
    %c32_444 = arith.constant 32 : index
    %310 = vector.load %arg13[%c0_443, %c32_444] : memref<18x144xf32, #tpu.memory_space<vmem>>, vector<3x16xf32>
    tpu.vector_store %arg13[%c0_443, %c32_444], %309 {strides = array<i32>} : memref<18x144xf32, #tpu.memory_space<vmem>>, vector<3x16xf32>,
    %c7_445 = arith.constant 7 : index
    %c0_446 = arith.constant 0 : index
    %311 = tpu.strided_load %arg10[%c7_445, %c0_446] {strides = array<i32: 2, 1>} : memref<98x16xf32, #tpu.memory_space<vmem>>, vector<3x16xf32>
    %c0_447 = arith.constant 0 : index
    %c48_448 = arith.constant 48 : index
    %312 = vector.load %arg13[%c0_447, %c48_448] : memref<18x144xf32, #tpu.memory_space<vmem>>, vector<3x16xf32>
    tpu.vector_store %arg13[%c0_447, %c48_448], %311 {strides = array<i32>} : memref<18x144xf32, #tpu.memory_space<vmem>>, vector<3x16xf32>,
    %c8 = arith.constant 8 : index
    %c0_449 = arith.constant 0 : index
    %313 = tpu.strided_load %arg10[%c8, %c0_449] {strides = array<i32: 2, 1>} : memref<98x16xf32, #tpu.memory_space<vmem>>, vector<3x16xf32>
    %c0_450 = arith.constant 0 : index
    %c64_451 = arith.constant 64 : index
    %314 = vector.load %arg13[%c0_450, %c64_451] : memref<18x144xf32, #tpu.memory_space<vmem>>, vector<3x16xf32>
    tpu.vector_store %arg13[%c0_450, %c64_451], %313 {strides = array<i32>} : memref<18x144xf32, #tpu.memory_space<vmem>>, vector<3x16xf32>,
    %c9 = arith.constant 9 : index
    %c0_452 = arith.constant 0 : index
    %315 = tpu.strided_load %arg10[%c9, %c0_452] {strides = array<i32: 2, 1>} : memref<98x16xf32, #tpu.memory_space<vmem>>, vector<3x16xf32>
    %c0_453 = arith.constant 0 : index
    %c80_454 = arith.constant 80 : index
    %316 = vector.load %arg13[%c0_453, %c80_454] : memref<18x144xf32, #tpu.memory_space<vmem>>, vector<3x16xf32>
    tpu.vector_store %arg13[%c0_453, %c80_454], %315 {strides = array<i32>} : memref<18x144xf32, #tpu.memory_space<vmem>>, vector<3x16xf32>,
    %c14_455 = arith.constant 14 : index
    %c0_456 = arith.constant 0 : index
    %317 = tpu.strided_load %arg10[%c14_455, %c0_456] {strides = array<i32: 2, 1>} : memref<98x16xf32, #tpu.memory_space<vmem>>, vector<3x16xf32>
    %c0_457 = arith.constant 0 : index
    %c96_458 = arith.constant 96 : index
    %318 = vector.load %arg13[%c0_457, %c96_458] : memref<18x144xf32, #tpu.memory_space<vmem>>, vector<3x16xf32>
    tpu.vector_store %arg13[%c0_457, %c96_458], %317 {strides = array<i32>} : memref<18x144xf32, #tpu.memory_space<vmem>>, vector<3x16xf32>,
    %c15_459 = arith.constant 15 : index
    %c0_460 = arith.constant 0 : index
    %319 = tpu.strided_load %arg10[%c15_459, %c0_460] {strides = array<i32: 2, 1>} : memref<98x16xf32, #tpu.memory_space<vmem>>, vector<3x16xf32>
    %c0_461 = arith.constant 0 : index
    %c112_462 = arith.constant 112 : index
    %320 = vector.load %arg13[%c0_461, %c112_462] : memref<18x144xf32, #tpu.memory_space<vmem>>, vector<3x16xf32>
    tpu.vector_store %arg13[%c0_461, %c112_462], %319 {strides = array<i32>} : memref<18x144xf32, #tpu.memory_space<vmem>>, vector<3x16xf32>,
    %c16_463 = arith.constant 16 : index
    %c0_464 = arith.constant 0 : index
    %321 = tpu.strided_load %arg10[%c16_463, %c0_464] {strides = array<i32: 2, 1>} : memref<98x16xf32, #tpu.memory_space<vmem>>, vector<3x16xf32>
    %c0_465 = arith.constant 0 : index
    %c128_466 = arith.constant 128 : index
    %322 = vector.load %arg13[%c0_465, %c128_466] : memref<18x144xf32, #tpu.memory_space<vmem>>, vector<3x16xf32>
    tpu.vector_store %arg13[%c0_465, %c128_466], %321 {strides = array<i32>} : memref<18x144xf32, #tpu.memory_space<vmem>>, vector<3x16xf32>,
    %c14_467 = arith.constant 14 : index
    %c0_468 = arith.constant 0 : index
    %323 = tpu.strided_load %arg10[%c14_467, %c0_468] {strides = array<i32: 2, 1>} : memref<98x16xf32, #tpu.memory_space<vmem>>, vector<3x16xf32>
    %c3 = arith.constant 3 : index
    %c0_469 = arith.constant 0 : index
    %324 = vector.load %arg13[%c3, %c0_469] : memref<18x144xf32, #tpu.memory_space<vmem>>, vector<3x16xf32>
    tpu.vector_store %arg13[%c3, %c0_469], %323 {strides = array<i32>} : memref<18x144xf32, #tpu.memory_space<vmem>>, vector<3x16xf32>,
    %c15_470 = arith.constant 15 : index
    %c0_471 = arith.constant 0 : index
    %325 = tpu.strided_load %arg10[%c15_470, %c0_471] {strides = array<i32: 2, 1>} : memref<98x16xf32, #tpu.memory_space<vmem>>, vector<3x16xf32>
    %c3_472 = arith.constant 3 : index
    %c16_473 = arith.constant 16 : index
    %326 = vector.load %arg13[%c3_472, %c16_473] : memref<18x144xf32, #tpu.memory_space<vmem>>, vector<3x16xf32>
    tpu.vector_store %arg13[%c3_472, %c16_473], %325 {strides = array<i32>} : memref<18x144xf32, #tpu.memory_space<vmem>>, vector<3x16xf32>,
    %c16_474 = arith.constant 16 : index
    %c0_475 = arith.constant 0 : index
    %327 = tpu.strided_load %arg10[%c16_474, %c0_475] {strides = array<i32: 2, 1>} : memref<98x16xf32, #tpu.memory_space<vmem>>, vector<3x16xf32>
    %c3_476 = arith.constant 3 : index
    %c32_477 = arith.constant 32 : index
    %328 = vector.load %arg13[%c3_476, %c32_477] : memref<18x144xf32, #tpu.memory_space<vmem>>, vector<3x16xf32>
    tpu.vector_store %arg13[%c3_476, %c32_477], %327 {strides = array<i32>} : memref<18x144xf32, #tpu.memory_space<vmem>>, vector<3x16xf32>,
    %c21_478 = arith.constant 21 : index
    %c0_479 = arith.constant 0 : index
    %329 = tpu.strided_load %arg10[%c21_478, %c0_479] {strides = array<i32: 2, 1>} : memref<98x16xf32, #tpu.memory_space<vmem>>, vector<3x16xf32>
    %c3_480 = arith.constant 3 : index
    %c48_481 = arith.constant 48 : index
    %330 = vector.load %arg13[%c3_480, %c48_481] : memref<18x144xf32, #tpu.memory_space<vmem>>, vector<3x16xf32>
    tpu.vector_store %arg13[%c3_480, %c48_481], %329 {strides = array<i32>} : memref<18x144xf32, #tpu.memory_space<vmem>>, vector<3x16xf32>,
    %c22 = arith.constant 22 : index
    %c0_482 = arith.constant 0 : index
    %331 = tpu.strided_load %arg10[%c22, %c0_482] {strides = array<i32: 2, 1>} : memref<98x16xf32, #tpu.memory_space<vmem>>, vector<3x16xf32>
    %c3_483 = arith.constant 3 : index
    %c64_484 = arith.constant 64 : index
    %332 = vector.load %arg13[%c3_483, %c64_484] : memref<18x144xf32, #tpu.memory_space<vmem>>, vector<3x16xf32>
    tpu.vector_store %arg13[%c3_483, %c64_484], %331 {strides = array<i32>} : memref<18x144xf32, #tpu.memory_space<vmem>>, vector<3x16xf32>,
    %c23 = arith.constant 23 : index
    %c0_485 = arith.constant 0 : index
    %333 = tpu.strided_load %arg10[%c23, %c0_485] {strides = array<i32: 2, 1>} : memref<98x16xf32, #tpu.memory_space<vmem>>, vector<3x16xf32>
    %c3_486 = arith.constant 3 : index
    %c80_487 = arith.constant 80 : index
    %334 = vector.load %arg13[%c3_486, %c80_487] : memref<18x144xf32, #tpu.memory_space<vmem>>, vector<3x16xf32>
    tpu.vector_store %arg13[%c3_486, %c80_487], %333 {strides = array<i32>} : memref<18x144xf32, #tpu.memory_space<vmem>>, vector<3x16xf32>,
    %c28_488 = arith.constant 28 : index
    %c0_489 = arith.constant 0 : index
    %335 = tpu.strided_load %arg10[%c28_488, %c0_489] {strides = array<i32: 2, 1>} : memref<98x16xf32, #tpu.memory_space<vmem>>, vector<3x16xf32>
    %c3_490 = arith.constant 3 : index
    %c96_491 = arith.constant 96 : index
    %336 = vector.load %arg13[%c3_490, %c96_491] : memref<18x144xf32, #tpu.memory_space<vmem>>, vector<3x16xf32>
    tpu.vector_store %arg13[%c3_490, %c96_491], %335 {strides = array<i32>} : memref<18x144xf32, #tpu.memory_space<vmem>>, vector<3x16xf32>,
    %c29 = arith.constant 29 : index
    %c0_492 = arith.constant 0 : index
    %337 = tpu.strided_load %arg10[%c29, %c0_492] {strides = array<i32: 2, 1>} : memref<98x16xf32, #tpu.memory_space<vmem>>, vector<3x16xf32>
    %c3_493 = arith.constant 3 : index
    %c112_494 = arith.constant 112 : index
    %338 = vector.load %arg13[%c3_493, %c112_494] : memref<18x144xf32, #tpu.memory_space<vmem>>, vector<3x16xf32>
    tpu.vector_store %arg13[%c3_493, %c112_494], %337 {strides = array<i32>} : memref<18x144xf32, #tpu.memory_space<vmem>>, vector<3x16xf32>,
    %c30_495 = arith.constant 30 : index
    %c0_496 = arith.constant 0 : index
    %339 = tpu.strided_load %arg10[%c30_495, %c0_496] {strides = array<i32: 2, 1>} : memref<98x16xf32, #tpu.memory_space<vmem>>, vector<3x16xf32>
    %c3_497 = arith.constant 3 : index
    %c128_498 = arith.constant 128 : index
    %340 = vector.load %arg13[%c3_497, %c128_498] : memref<18x144xf32, #tpu.memory_space<vmem>>, vector<3x16xf32>
    tpu.vector_store %arg13[%c3_497, %c128_498], %339 {strides = array<i32>} : memref<18x144xf32, #tpu.memory_space<vmem>>, vector<3x16xf32>,
    %c28_499 = arith.constant 28 : index
    %c0_500 = arith.constant 0 : index
    %341 = tpu.strided_load %arg10[%c28_499, %c0_500] {strides = array<i32: 2, 1>} : memref<98x16xf32, #tpu.memory_space<vmem>>, vector<3x16xf32>
    %c6 = arith.constant 6 : index
    %c0_501 = arith.constant 0 : index
    %342 = vector.load %arg13[%c6, %c0_501] : memref<18x144xf32, #tpu.memory_space<vmem>>, vector<3x16xf32>
    tpu.vector_store %arg13[%c6, %c0_501], %341 {strides = array<i32>} : memref<18x144xf32, #tpu.memory_space<vmem>>, vector<3x16xf32>,
    %c29_502 = arith.constant 29 : index
    %c0_503 = arith.constant 0 : index
    %343 = tpu.strided_load %arg10[%c29_502, %c0_503] {strides = array<i32: 2, 1>} : memref<98x16xf32, #tpu.memory_space<vmem>>, vector<3x16xf32>
    %c6_504 = arith.constant 6 : index
    %c16_505 = arith.constant 16 : index
    %344 = vector.load %arg13[%c6_504, %c16_505] : memref<18x144xf32, #tpu.memory_space<vmem>>, vector<3x16xf32>
    tpu.vector_store %arg13[%c6_504, %c16_505], %343 {strides = array<i32>} : memref<18x144xf32, #tpu.memory_space<vmem>>, vector<3x16xf32>,
    %c30_506 = arith.constant 30 : index
    %c0_507 = arith.constant 0 : index
    %345 = tpu.strided_load %arg10[%c30_506, %c0_507] {strides = array<i32: 2, 1>} : memref<98x16xf32, #tpu.memory_space<vmem>>, vector<3x16xf32>
    %c6_508 = arith.constant 6 : index
    %c32_509 = arith.constant 32 : index
    %346 = vector.load %arg13[%c6_508, %c32_509] : memref<18x144xf32, #tpu.memory_space<vmem>>, vector<3x16xf32>
    tpu.vector_store %arg13[%c6_508, %c32_509], %345 {strides = array<i32>} : memref<18x144xf32, #tpu.memory_space<vmem>>, vector<3x16xf32>,
    %c35_510 = arith.constant 35 : index
    %c0_511 = arith.constant 0 : index
    %347 = tpu.strided_load %arg10[%c35_510, %c0_511] {strides = array<i32: 2, 1>} : memref<98x16xf32, #tpu.memory_space<vmem>>, vector<3x16xf32>
    %c6_512 = arith.constant 6 : index
    %c48_513 = arith.constant 48 : index
    %348 = vector.load %arg13[%c6_512, %c48_513] : memref<18x144xf32, #tpu.memory_space<vmem>>, vector<3x16xf32>
    tpu.vector_store %arg13[%c6_512, %c48_513], %347 {strides = array<i32>} : memref<18x144xf32, #tpu.memory_space<vmem>>, vector<3x16xf32>,
    %c36 = arith.constant 36 : index
    %c0_514 = arith.constant 0 : index
    %349 = tpu.strided_load %arg10[%c36, %c0_514] {strides = array<i32: 2, 1>} : memref<98x16xf32, #tpu.memory_space<vmem>>, vector<3x16xf32>
    %c6_515 = arith.constant 6 : index
    %c64_516 = arith.constant 64 : index
    %350 = vector.load %arg13[%c6_515, %c64_516] : memref<18x144xf32, #tpu.memory_space<vmem>>, vector<3x16xf32>
    tpu.vector_store %arg13[%c6_515, %c64_516], %349 {strides = array<i32>} : memref<18x144xf32, #tpu.memory_space<vmem>>, vector<3x16xf32>,
    %c37 = arith.constant 37 : index
    %c0_517 = arith.constant 0 : index
    %351 = tpu.strided_load %arg10[%c37, %c0_517] {strides = array<i32: 2, 1>} : memref<98x16xf32, #tpu.memory_space<vmem>>, vector<3x16xf32>
    %c6_518 = arith.constant 6 : index
    %c80_519 = arith.constant 80 : index
    %352 = vector.load %arg13[%c6_518, %c80_519] : memref<18x144xf32, #tpu.memory_space<vmem>>, vector<3x16xf32>
    tpu.vector_store %arg13[%c6_518, %c80_519], %351 {strides = array<i32>} : memref<18x144xf32, #tpu.memory_space<vmem>>, vector<3x16xf32>,
    %c42_520 = arith.constant 42 : index
    %c0_521 = arith.constant 0 : index
    %353 = tpu.strided_load %arg10[%c42_520, %c0_521] {strides = array<i32: 2, 1>} : memref<98x16xf32, #tpu.memory_space<vmem>>, vector<3x16xf32>
    %c6_522 = arith.constant 6 : index
    %c96_523 = arith.constant 96 : index
    %354 = vector.load %arg13[%c6_522, %c96_523] : memref<18x144xf32, #tpu.memory_space<vmem>>, vector<3x16xf32>
    tpu.vector_store %arg13[%c6_522, %c96_523], %353 {strides = array<i32>} : memref<18x144xf32, #tpu.memory_space<vmem>>, vector<3x16xf32>,
    %c43 = arith.constant 43 : index
    %c0_524 = arith.constant 0 : index
    %355 = tpu.strided_load %arg10[%c43, %c0_524] {strides = array<i32: 2, 1>} : memref<98x16xf32, #tpu.memory_space<vmem>>, vector<3x16xf32>
    %c6_525 = arith.constant 6 : index
    %c112_526 = arith.constant 112 : index
    %356 = vector.load %arg13[%c6_525, %c112_526] : memref<18x144xf32, #tpu.memory_space<vmem>>, vector<3x16xf32>
    tpu.vector_store %arg13[%c6_525, %c112_526], %355 {strides = array<i32>} : memref<18x144xf32, #tpu.memory_space<vmem>>, vector<3x16xf32>,
    %c44 = arith.constant 44 : index
    %c0_527 = arith.constant 0 : index
    %357 = tpu.strided_load %arg10[%c44, %c0_527] {strides = array<i32: 2, 1>} : memref<98x16xf32, #tpu.memory_space<vmem>>, vector<3x16xf32>
    %c6_528 = arith.constant 6 : index
    %c128_529 = arith.constant 128 : index
    %358 = vector.load %arg13[%c6_528, %c128_529] : memref<18x144xf32, #tpu.memory_space<vmem>>, vector<3x16xf32>
    tpu.vector_store %arg13[%c6_528, %c128_529], %357 {strides = array<i32>} : memref<18x144xf32, #tpu.memory_space<vmem>>, vector<3x16xf32>,
    %c49_530 = arith.constant 49 : index
    %c0_531 = arith.constant 0 : index
    %359 = tpu.strided_load %arg10[%c49_530, %c0_531] {strides = array<i32: 2, 1>} : memref<98x16xf32, #tpu.memory_space<vmem>>, vector<3x16xf32>
    %c9_532 = arith.constant 9 : index
    %c0_533 = arith.constant 0 : index
    %360 = vector.load %arg13[%c9_532, %c0_533] : memref<18x144xf32, #tpu.memory_space<vmem>>, vector<3x16xf32>
    tpu.vector_store %arg13[%c9_532, %c0_533], %359 {strides = array<i32>} : memref<18x144xf32, #tpu.memory_space<vmem>>, vector<3x16xf32>,
    %c50 = arith.constant 50 : index
    %c0_534 = arith.constant 0 : index
    %361 = tpu.strided_load %arg10[%c50, %c0_534] {strides = array<i32: 2, 1>} : memref<98x16xf32, #tpu.memory_space<vmem>>, vector<3x16xf32>
    %c9_535 = arith.constant 9 : index
    %c16_536 = arith.constant 16 : index
    %362 = vector.load %arg13[%c9_535, %c16_536] : memref<18x144xf32, #tpu.memory_space<vmem>>, vector<3x16xf32>
    tpu.vector_store %arg13[%c9_535, %c16_536], %361 {strides = array<i32>} : memref<18x144xf32, #tpu.memory_space<vmem>>, vector<3x16xf32>,
    %c51 = arith.constant 51 : index
    %c0_537 = arith.constant 0 : index
    %363 = tpu.strided_load %arg10[%c51, %c0_537] {strides = array<i32: 2, 1>} : memref<98x16xf32, #tpu.memory_space<vmem>>, vector<3x16xf32>
    %c9_538 = arith.constant 9 : index
    %c32_539 = arith.constant 32 : index
    %364 = vector.load %arg13[%c9_538, %c32_539] : memref<18x144xf32, #tpu.memory_space<vmem>>, vector<3x16xf32>
    tpu.vector_store %arg13[%c9_538, %c32_539], %363 {strides = array<i32>} : memref<18x144xf32, #tpu.memory_space<vmem>>, vector<3x16xf32>,
    %c56_540 = arith.constant 56 : index
    %c0_541 = arith.constant 0 : index
    %365 = tpu.strided_load %arg10[%c56_540, %c0_541] {strides = array<i32: 2, 1>} : memref<98x16xf32, #tpu.memory_space<vmem>>, vector<3x16xf32>
    %c9_542 = arith.constant 9 : index
    %c48_543 = arith.constant 48 : index
    %366 = vector.load %arg13[%c9_542, %c48_543] : memref<18x144xf32, #tpu.memory_space<vmem>>, vector<3x16xf32>
    tpu.vector_store %arg13[%c9_542, %c48_543], %365 {strides = array<i32>} : memref<18x144xf32, #tpu.memory_space<vmem>>, vector<3x16xf32>,
    %c57 = arith.constant 57 : index
    %c0_544 = arith.constant 0 : index
    %367 = tpu.strided_load %arg10[%c57, %c0_544] {strides = array<i32: 2, 1>} : memref<98x16xf32, #tpu.memory_space<vmem>>, vector<3x16xf32>
    %c9_545 = arith.constant 9 : index
    %c64_546 = arith.constant 64 : index
    %368 = vector.load %arg13[%c9_545, %c64_546] : memref<18x144xf32, #tpu.memory_space<vmem>>, vector<3x16xf32>
    tpu.vector_store %arg13[%c9_545, %c64_546], %367 {strides = array<i32>} : memref<18x144xf32, #tpu.memory_space<vmem>>, vector<3x16xf32>,
    %c58 = arith.constant 58 : index
    %c0_547 = arith.constant 0 : index
    %369 = tpu.strided_load %arg10[%c58, %c0_547] {strides = array<i32: 2, 1>} : memref<98x16xf32, #tpu.memory_space<vmem>>, vector<3x16xf32>
    %c9_548 = arith.constant 9 : index
    %c80_549 = arith.constant 80 : index
    %370 = vector.load %arg13[%c9_548, %c80_549] : memref<18x144xf32, #tpu.memory_space<vmem>>, vector<3x16xf32>
    tpu.vector_store %arg13[%c9_548, %c80_549], %369 {strides = array<i32>} : memref<18x144xf32, #tpu.memory_space<vmem>>, vector<3x16xf32>,
    %c63_550 = arith.constant 63 : index
    %c0_551 = arith.constant 0 : index
    %371 = tpu.strided_load %arg10[%c63_550, %c0_551] {strides = array<i32: 2, 1>} : memref<98x16xf32, #tpu.memory_space<vmem>>, vector<3x16xf32>
    %c9_552 = arith.constant 9 : index
    %c96_553 = arith.constant 96 : index
    %372 = vector.load %arg13[%c9_552, %c96_553] : memref<18x144xf32, #tpu.memory_space<vmem>>, vector<3x16xf32>
    tpu.vector_store %arg13[%c9_552, %c96_553], %371 {strides = array<i32>} : memref<18x144xf32, #tpu.memory_space<vmem>>, vector<3x16xf32>,
    %c64_554 = arith.constant 64 : index
    %c0_555 = arith.constant 0 : index
    %373 = tpu.strided_load %arg10[%c64_554, %c0_555] {strides = array<i32: 2, 1>} : memref<98x16xf32, #tpu.memory_space<vmem>>, vector<3x16xf32>
    %c9_556 = arith.constant 9 : index
    %c112_557 = arith.constant 112 : index
    %374 = vector.load %arg13[%c9_556, %c112_557] : memref<18x144xf32, #tpu.memory_space<vmem>>, vector<3x16xf32>
    tpu.vector_store %arg13[%c9_556, %c112_557], %373 {strides = array<i32>} : memref<18x144xf32, #tpu.memory_space<vmem>>, vector<3x16xf32>,
    %c65 = arith.constant 65 : index
    %c0_558 = arith.constant 0 : index
    %375 = tpu.strided_load %arg10[%c65, %c0_558] {strides = array<i32: 2, 1>} : memref<98x16xf32, #tpu.memory_space<vmem>>, vector<3x16xf32>
    %c9_559 = arith.constant 9 : index
    %c128_560 = arith.constant 128 : index
    %376 = vector.load %arg13[%c9_559, %c128_560] : memref<18x144xf32, #tpu.memory_space<vmem>>, vector<3x16xf32>
    tpu.vector_store %arg13[%c9_559, %c128_560], %375 {strides = array<i32>} : memref<18x144xf32, #tpu.memory_space<vmem>>, vector<3x16xf32>,
    %c63_561 = arith.constant 63 : index
    %c0_562 = arith.constant 0 : index
    %377 = tpu.strided_load %arg10[%c63_561, %c0_562] {strides = array<i32: 2, 1>} : memref<98x16xf32, #tpu.memory_space<vmem>>, vector<3x16xf32>
    %c12 = arith.constant 12 : index
    %c0_563 = arith.constant 0 : index
    %378 = vector.load %arg13[%c12, %c0_563] : memref<18x144xf32, #tpu.memory_space<vmem>>, vector<3x16xf32>
    tpu.vector_store %arg13[%c12, %c0_563], %377 {strides = array<i32>} : memref<18x144xf32, #tpu.memory_space<vmem>>, vector<3x16xf32>,
    %c64_564 = arith.constant 64 : index
    %c0_565 = arith.constant 0 : index
    %379 = tpu.strided_load %arg10[%c64_564, %c0_565] {strides = array<i32: 2, 1>} : memref<98x16xf32, #tpu.memory_space<vmem>>, vector<3x16xf32>
    %c12_566 = arith.constant 12 : index
    %c16_567 = arith.constant 16 : index
    %380 = vector.load %arg13[%c12_566, %c16_567] : memref<18x144xf32, #tpu.memory_space<vmem>>, vector<3x16xf32>
    tpu.vector_store %arg13[%c12_566, %c16_567], %379 {strides = array<i32>} : memref<18x144xf32, #tpu.memory_space<vmem>>, vector<3x16xf32>,
    %c65_568 = arith.constant 65 : index
    %c0_569 = arith.constant 0 : index
    %381 = tpu.strided_load %arg10[%c65_568, %c0_569] {strides = array<i32: 2, 1>} : memref<98x16xf32, #tpu.memory_space<vmem>>, vector<3x16xf32>
    %c12_570 = arith.constant 12 : index
    %c32_571 = arith.constant 32 : index
    %382 = vector.load %arg13[%c12_570, %c32_571] : memref<18x144xf32, #tpu.memory_space<vmem>>, vector<3x16xf32>
    tpu.vector_store %arg13[%c12_570, %c32_571], %381 {strides = array<i32>} : memref<18x144xf32, #tpu.memory_space<vmem>>, vector<3x16xf32>,
    %c70_572 = arith.constant 70 : index
    %c0_573 = arith.constant 0 : index
    %383 = tpu.strided_load %arg10[%c70_572, %c0_573] {strides = array<i32: 2, 1>} : memref<98x16xf32, #tpu.memory_space<vmem>>, vector<3x16xf32>
    %c12_574 = arith.constant 12 : index
    %c48_575 = arith.constant 48 : index
    %384 = vector.load %arg13[%c12_574, %c48_575] : memref<18x144xf32, #tpu.memory_space<vmem>>, vector<3x16xf32>
    tpu.vector_store %arg13[%c12_574, %c48_575], %383 {strides = array<i32>} : memref<18x144xf32, #tpu.memory_space<vmem>>, vector<3x16xf32>,
    %c71 = arith.constant 71 : index
    %c0_576 = arith.constant 0 : index
    %385 = tpu.strided_load %arg10[%c71, %c0_576] {strides = array<i32: 2, 1>} : memref<98x16xf32, #tpu.memory_space<vmem>>, vector<3x16xf32>
    %c12_577 = arith.constant 12 : index
    %c64_578 = arith.constant 64 : index
    %386 = vector.load %arg13[%c12_577, %c64_578] : memref<18x144xf32, #tpu.memory_space<vmem>>, vector<3x16xf32>
    tpu.vector_store %arg13[%c12_577, %c64_578], %385 {strides = array<i32>} : memref<18x144xf32, #tpu.memory_space<vmem>>, vector<3x16xf32>,
    %c72 = arith.constant 72 : index
    %c0_579 = arith.constant 0 : index
    %387 = tpu.strided_load %arg10[%c72, %c0_579] {strides = array<i32: 2, 1>} : memref<98x16xf32, #tpu.memory_space<vmem>>, vector<3x16xf32>
    %c12_580 = arith.constant 12 : index
    %c80_581 = arith.constant 80 : index
    %388 = vector.load %arg13[%c12_580, %c80_581] : memref<18x144xf32, #tpu.memory_space<vmem>>, vector<3x16xf32>
    tpu.vector_store %arg13[%c12_580, %c80_581], %387 {strides = array<i32>} : memref<18x144xf32, #tpu.memory_space<vmem>>, vector<3x16xf32>,
    %c77_582 = arith.constant 77 : index
    %c0_583 = arith.constant 0 : index
    %389 = tpu.strided_load %arg10[%c77_582, %c0_583] {strides = array<i32: 2, 1>} : memref<98x16xf32, #tpu.memory_space<vmem>>, vector<3x16xf32>
    %c12_584 = arith.constant 12 : index
    %c96_585 = arith.constant 96 : index
    %390 = vector.load %arg13[%c12_584, %c96_585] : memref<18x144xf32, #tpu.memory_space<vmem>>, vector<3x16xf32>
    tpu.vector_store %arg13[%c12_584, %c96_585], %389 {strides = array<i32>} : memref<18x144xf32, #tpu.memory_space<vmem>>, vector<3x16xf32>,
    %c78 = arith.constant 78 : index
    %c0_586 = arith.constant 0 : index
    %391 = tpu.strided_load %arg10[%c78, %c0_586] {strides = array<i32: 2, 1>} : memref<98x16xf32, #tpu.memory_space<vmem>>, vector<3x16xf32>
    %c12_587 = arith.constant 12 : index
    %c112_588 = arith.constant 112 : index
    %392 = vector.load %arg13[%c12_587, %c112_588] : memref<18x144xf32, #tpu.memory_space<vmem>>, vector<3x16xf32>
    tpu.vector_store %arg13[%c12_587, %c112_588], %391 {strides = array<i32>} : memref<18x144xf32, #tpu.memory_space<vmem>>, vector<3x16xf32>,
    %c79 = arith.constant 79 : index
    %c0_589 = arith.constant 0 : index
    %393 = tpu.strided_load %arg10[%c79, %c0_589] {strides = array<i32: 2, 1>} : memref<98x16xf32, #tpu.memory_space<vmem>>, vector<3x16xf32>
    %c12_590 = arith.constant 12 : index
    %c128_591 = arith.constant 128 : index
    %394 = vector.load %arg13[%c12_590, %c128_591] : memref<18x144xf32, #tpu.memory_space<vmem>>, vector<3x16xf32>
    tpu.vector_store %arg13[%c12_590, %c128_591], %393 {strides = array<i32>} : memref<18x144xf32, #tpu.memory_space<vmem>>, vector<3x16xf32>,
    %c77_592 = arith.constant 77 : index
    %c0_593 = arith.constant 0 : index
    %395 = tpu.strided_load %arg10[%c77_592, %c0_593] {strides = array<i32: 2, 1>} : memref<98x16xf32, #tpu.memory_space<vmem>>, vector<3x16xf32>
    %c15_594 = arith.constant 15 : index
    %c0_595 = arith.constant 0 : index
    %396 = vector.load %arg13[%c15_594, %c0_595] : memref<18x144xf32, #tpu.memory_space<vmem>>, vector<3x16xf32>
    tpu.vector_store %arg13[%c15_594, %c0_595], %395 {strides = array<i32>} : memref<18x144xf32, #tpu.memory_space<vmem>>, vector<3x16xf32>,
    %c78_596 = arith.constant 78 : index
    %c0_597 = arith.constant 0 : index
    %397 = tpu.strided_load %arg10[%c78_596, %c0_597] {strides = array<i32: 2, 1>} : memref<98x16xf32, #tpu.memory_space<vmem>>, vector<3x16xf32>
    %c15_598 = arith.constant 15 : index
    %c16_599 = arith.constant 16 : index
    %398 = vector.load %arg13[%c15_598, %c16_599] : memref<18x144xf32, #tpu.memory_space<vmem>>, vector<3x16xf32>
    tpu.vector_store %arg13[%c15_598, %c16_599], %397 {strides = array<i32>} : memref<18x144xf32, #tpu.memory_space<vmem>>, vector<3x16xf32>,
    %c79_600 = arith.constant 79 : index
    %c0_601 = arith.constant 0 : index
    %399 = tpu.strided_load %arg10[%c79_600, %c0_601] {strides = array<i32: 2, 1>} : memref<98x16xf32, #tpu.memory_space<vmem>>, vector<3x16xf32>
    %c15_602 = arith.constant 15 : index
    %c32_603 = arith.constant 32 : index
    %400 = vector.load %arg13[%c15_602, %c32_603] : memref<18x144xf32, #tpu.memory_space<vmem>>, vector<3x16xf32>
    tpu.vector_store %arg13[%c15_602, %c32_603], %399 {strides = array<i32>} : memref<18x144xf32, #tpu.memory_space<vmem>>, vector<3x16xf32>,
    %c84_604 = arith.constant 84 : index
    %c0_605 = arith.constant 0 : index
    %401 = tpu.strided_load %arg10[%c84_604, %c0_605] {strides = array<i32: 2, 1>} : memref<98x16xf32, #tpu.memory_space<vmem>>, vector<3x16xf32>
    %c15_606 = arith.constant 15 : index
    %c48_607 = arith.constant 48 : index
    %402 = vector.load %arg13[%c15_606, %c48_607] : memref<18x144xf32, #tpu.memory_space<vmem>>, vector<3x16xf32>
    tpu.vector_store %arg13[%c15_606, %c48_607], %401 {strides = array<i32>} : memref<18x144xf32, #tpu.memory_space<vmem>>, vector<3x16xf32>,
    %c85 = arith.constant 85 : index
    %c0_608 = arith.constant 0 : index
    %403 = tpu.strided_load %arg10[%c85, %c0_608] {strides = array<i32: 2, 1>} : memref<98x16xf32, #tpu.memory_space<vmem>>, vector<3x16xf32>
    %c15_609 = arith.constant 15 : index
    %c64_610 = arith.constant 64 : index
    %404 = vector.load %arg13[%c15_609, %c64_610] : memref<18x144xf32, #tpu.memory_space<vmem>>, vector<3x16xf32>
    tpu.vector_store %arg13[%c15_609, %c64_610], %403 {strides = array<i32>} : memref<18x144xf32, #tpu.memory_space<vmem>>, vector<3x16xf32>,
    %c86 = arith.constant 86 : index
    %c0_611 = arith.constant 0 : index
    %405 = tpu.strided_load %arg10[%c86, %c0_611] {strides = array<i32: 2, 1>} : memref<98x16xf32, #tpu.memory_space<vmem>>, vector<3x16xf32>
    %c15_612 = arith.constant 15 : index
    %c80_613 = arith.constant 80 : index
    %406 = vector.load %arg13[%c15_612, %c80_613] : memref<18x144xf32, #tpu.memory_space<vmem>>, vector<3x16xf32>
    tpu.vector_store %arg13[%c15_612, %c80_613], %405 {strides = array<i32>} : memref<18x144xf32, #tpu.memory_space<vmem>>, vector<3x16xf32>,
    %c91_614 = arith.constant 91 : index
    %c0_615 = arith.constant 0 : index
    %407 = tpu.strided_load %arg10[%c91_614, %c0_615] {strides = array<i32: 2, 1>} : memref<98x16xf32, #tpu.memory_space<vmem>>, vector<3x16xf32>
    %c15_616 = arith.constant 15 : index
    %c96_617 = arith.constant 96 : index
    %408 = vector.load %arg13[%c15_616, %c96_617] : memref<18x144xf32, #tpu.memory_space<vmem>>, vector<3x16xf32>
    tpu.vector_store %arg13[%c15_616, %c96_617], %407 {strides = array<i32>} : memref<18x144xf32, #tpu.memory_space<vmem>>, vector<3x16xf32>,
    %c92_618 = arith.constant 92 : index
    %c0_619 = arith.constant 0 : index
    %409 = tpu.strided_load %arg10[%c92_618, %c0_619] {strides = array<i32: 2, 1>} : memref<98x16xf32, #tpu.memory_space<vmem>>, vector<3x16xf32>
    %c15_620 = arith.constant 15 : index
    %c112_621 = arith.constant 112 : index
    %410 = vector.load %arg13[%c15_620, %c112_621] : memref<18x144xf32, #tpu.memory_space<vmem>>, vector<3x16xf32>
    tpu.vector_store %arg13[%c15_620, %c112_621], %409 {strides = array<i32>} : memref<18x144xf32, #tpu.memory_space<vmem>>, vector<3x16xf32>,
    %c93 = arith.constant 93 : index
    %c0_622 = arith.constant 0 : index
    %411 = tpu.strided_load %arg10[%c93, %c0_622] {strides = array<i32: 2, 1>} : memref<98x16xf32, #tpu.memory_space<vmem>>, vector<3x16xf32>
    %c15_623 = arith.constant 15 : index
    %c128_624 = arith.constant 128 : index
    %412 = vector.load %arg13[%c15_623, %c128_624] : memref<18x144xf32, #tpu.memory_space<vmem>>, vector<3x16xf32>
    tpu.vector_store %arg13[%c15_623, %c128_624], %411 {strides = array<i32>} : memref<18x144xf32, #tpu.memory_space<vmem>>, vector<3x16xf32>,
    %c0_625 = arith.constant 0 : index
    %c0_626 = arith.constant 0 : index
    %413 = vector.load %arg13[%c0_625, %c0_626] : memref<18x144xf32, #tpu.memory_space<vmem>>, vector<18x144xf32>
    %414 = arith.truncf %413 : vector<18x144xf32> to vector<18x144xbf16>
    %c2_627 = arith.constant 2 : index
    %c0_628 = arith.constant 0 : index
    %c0_629 = arith.constant 0 : index
    %415 = vector.load %arg2[%c2_627, %c0_628, %c0_629] : memref<4x288x64xbf16, #tpu.memory_space<vmem>>, vector<1x144x32xbf16>
    %416 = vector.shape_cast %415 : vector<1x144x32xbf16> to vector<144x32xbf16>
    %cst_630 = arith.constant dense<0.000000e+00> : vector<18x32xf32>
    %417 = tpu.matmul %414, %416, %cst_630 {dimension_numbers = #tpu.dot_dimension_numbers<[1], [0], [0], [1], [0, 0, 1, 1], [], []>} : vector<18x144xbf16>, vector<144x32xbf16>, vector<18x32xf32> -> vector<18x32xf32>
    %c2_631 = arith.constant 2 : index
    %c0_632 = arith.constant 0 : index
    %c0_633 = arith.constant 0 : index
    %418 = vector.load %arg3[%c2_631, %c0_632, %c0_633] : memref<4x3x64xf32, #tpu.memory_space<vmem>>, vector<1x1x32xf32>
    %419 = vector.shape_cast %418 : vector<1x1x32xf32> to vector<1x32xf32>
    %420 = vector.broadcast %419 : vector<1x32xf32> to vector<18x32xf32>
    %421 = arith.addf %417, %420 : vector<18x32xf32>
    %cst_634 = arith.constant dense<0.000000e+00> : vector<32xf32>
    %422 = vector.multi_reduction <add>, %421, %cst_634 [0] : vector<18x32xf32> to vector<32xf32>
    %423 = vector.shape_cast %422 : vector<32xf32> to vector<1x32xf32>
    %cst_635 = arith.constant 0.055555556 : f32
    %424 = vector.broadcast %cst_635 : f32 to vector<1x32xf32>
    %425 = arith.mulf %423, %424 : vector<1x32xf32>
    %426 = vector.broadcast %425 : vector<1x32xf32> to vector<18x32xf32>
    %427 = arith.subf %421, %426 : vector<18x32xf32>
    %428 = arith.mulf %427, %427 : vector<18x32xf32>
    %cst_636 = arith.constant dense<0.000000e+00> : vector<32xf32>
    %429 = vector.multi_reduction <add>, %428, %cst_636 [0] : vector<18x32xf32> to vector<32xf32>
    %430 = vector.shape_cast %429 : vector<32xf32> to vector<1x32xf32>
    %cst_637 = arith.constant 0.055555556 : f32
    %431 = vector.broadcast %cst_637 : f32 to vector<1x32xf32>
    %432 = arith.mulf %430, %431 : vector<1x32xf32>
    %cst_638 = arith.constant 9.99999974E-6 : f32
    %433 = vector.broadcast %cst_638 : f32 to vector<1x32xf32>
    %434 = arith.addf %432, %433 : vector<1x32xf32>
    %435 = math.rsqrt %434 : vector<1x32xf32>
    %436 = vector.broadcast %435 : vector<1x32xf32> to vector<18x32xf32>
    %437 = arith.mulf %427, %436 : vector<18x32xf32>
    %c2_639 = arith.constant 2 : index
    %c1_640 = arith.constant 1 : index
    %c0_641 = arith.constant 0 : index
    %438 = vector.load %arg3[%c2_639, %c1_640, %c0_641] : memref<4x3x64xf32, #tpu.memory_space<vmem>>, vector<1x1x32xf32>
    %439 = vector.shape_cast %438 : vector<1x1x32xf32> to vector<1x32xf32>
    %440 = vector.broadcast %439 : vector<1x32xf32> to vector<18x32xf32>
    %441 = arith.mulf %437, %440 : vector<18x32xf32>
    %c2_642 = arith.constant 2 : index
    %c2_643 = arith.constant 2 : index
    %c0_644 = arith.constant 0 : index
    %442 = vector.load %arg3[%c2_642, %c2_643, %c0_644] : memref<4x3x64xf32, #tpu.memory_space<vmem>>, vector<1x1x32xf32>
    %443 = vector.shape_cast %442 : vector<1x1x32xf32> to vector<1x32xf32>
    %444 = vector.broadcast %443 : vector<1x32xf32> to vector<18x32xf32>
    %445 = arith.addf %441, %444 : vector<18x32xf32>
    %cst_645 = arith.constant 0.000000e+00 : f32
    %446 = vector.broadcast %cst_645 : f32 to vector<18x32xf32>
    %447 = arith.cmpf oge, %445, %446 : vector<18x32xf32>
    %cst_646 = arith.constant 2.000000e-01 : f32
    %448 = vector.broadcast %cst_646 : f32 to vector<18x32xf32>
    %449 = arith.mulf %448, %445 : vector<18x32xf32>
    %450 = arith.select %447, %445, %449 : vector<18x32xi1>, vector<18x32xf32>
    %c0_647 = arith.constant 0 : index
    %c0_648 = arith.constant 0 : index
    %451 = vector.load %arg11[%c0_647, %c0_648] : memref<18x32xf32, #tpu.memory_space<vmem>>, vector<18x32xf32>
    tpu.vector_store %arg11[%c0_647, %c0_648], %450 {strides = array<i32>} : memref<18x32xf32, #tpu.memory_space<vmem>>, vector<18x32xf32>,
    %c0_649 = arith.constant 0 : index
    %c0_650 = arith.constant 0 : index
    %452 = vector.load %arg11[%c0_649, %c0_650] : memref<18x32xf32, #tpu.memory_space<vmem>>, vector<1x32xf32>
    %c0_651 = arith.constant 0 : index
    %c0_652 = arith.constant 0 : index
    %453 = vector.load %arg14[%c0_651, %c0_652] : memref<2x288xf32, #tpu.memory_space<vmem>>, vector<1x32xf32>
    tpu.vector_store %arg14[%c0_651, %c0_652], %452 {strides = array<i32>} : memref<2x288xf32, #tpu.memory_space<vmem>>, vector<1x32xf32>,
    %c1_653 = arith.constant 1 : index
    %c0_654 = arith.constant 0 : index
    %454 = vector.load %arg11[%c1_653, %c0_654] : memref<18x32xf32, #tpu.memory_space<vmem>>, vector<1x32xf32>
    %c0_655 = arith.constant 0 : index
    %c32_656 = arith.constant 32 : index
    %455 = vector.load %arg14[%c0_655, %c32_656] : memref<2x288xf32, #tpu.memory_space<vmem>>, vector<1x32xf32>
    tpu.vector_store %arg14[%c0_655, %c32_656], %454 {strides = array<i32>} : memref<2x288xf32, #tpu.memory_space<vmem>>, vector<1x32xf32>,
    %c2_657 = arith.constant 2 : index
    %c0_658 = arith.constant 0 : index
    %456 = vector.load %arg11[%c2_657, %c0_658] : memref<18x32xf32, #tpu.memory_space<vmem>>, vector<1x32xf32>
    %c0_659 = arith.constant 0 : index
    %c64_660 = arith.constant 64 : index
    %457 = vector.load %arg14[%c0_659, %c64_660] : memref<2x288xf32, #tpu.memory_space<vmem>>, vector<1x32xf32>
    tpu.vector_store %arg14[%c0_659, %c64_660], %456 {strides = array<i32>} : memref<2x288xf32, #tpu.memory_space<vmem>>, vector<1x32xf32>,
    %c3_661 = arith.constant 3 : index
    %c0_662 = arith.constant 0 : index
    %458 = vector.load %arg11[%c3_661, %c0_662] : memref<18x32xf32, #tpu.memory_space<vmem>>, vector<1x32xf32>
    %c0_663 = arith.constant 0 : index
    %c96_664 = arith.constant 96 : index
    %459 = vector.load %arg14[%c0_663, %c96_664] : memref<2x288xf32, #tpu.memory_space<vmem>>, vector<1x32xf32>
    tpu.vector_store %arg14[%c0_663, %c96_664], %458 {strides = array<i32>} : memref<2x288xf32, #tpu.memory_space<vmem>>, vector<1x32xf32>,
    %c4 = arith.constant 4 : index
    %c0_665 = arith.constant 0 : index
    %460 = vector.load %arg11[%c4, %c0_665] : memref<18x32xf32, #tpu.memory_space<vmem>>, vector<1x32xf32>
    %c0_666 = arith.constant 0 : index
    %c128_667 = arith.constant 128 : index
    %461 = vector.load %arg14[%c0_666, %c128_667] : memref<2x288xf32, #tpu.memory_space<vmem>>, vector<1x32xf32>
    tpu.vector_store %arg14[%c0_666, %c128_667], %460 {strides = array<i32>} : memref<2x288xf32, #tpu.memory_space<vmem>>, vector<1x32xf32>,
    %c5 = arith.constant 5 : index
    %c0_668 = arith.constant 0 : index
    %462 = vector.load %arg11[%c5, %c0_668] : memref<18x32xf32, #tpu.memory_space<vmem>>, vector<1x32xf32>
    %c0_669 = arith.constant 0 : index
    %c160 = arith.constant 160 : index
    %463 = vector.load %arg14[%c0_669, %c160] : memref<2x288xf32, #tpu.memory_space<vmem>>, vector<1x32xf32>
    tpu.vector_store %arg14[%c0_669, %c160], %462 {strides = array<i32>} : memref<2x288xf32, #tpu.memory_space<vmem>>, vector<1x32xf32>,
    %c6_670 = arith.constant 6 : index
    %c0_671 = arith.constant 0 : index
    %464 = vector.load %arg11[%c6_670, %c0_671] : memref<18x32xf32, #tpu.memory_space<vmem>>, vector<1x32xf32>
    %c0_672 = arith.constant 0 : index
    %c192 = arith.constant 192 : index
    %465 = vector.load %arg14[%c0_672, %c192] : memref<2x288xf32, #tpu.memory_space<vmem>>, vector<1x32xf32>
    tpu.vector_store %arg14[%c0_672, %c192], %464 {strides = array<i32>} : memref<2x288xf32, #tpu.memory_space<vmem>>, vector<1x32xf32>,
    %c7_673 = arith.constant 7 : index
    %c0_674 = arith.constant 0 : index
    %466 = vector.load %arg11[%c7_673, %c0_674] : memref<18x32xf32, #tpu.memory_space<vmem>>, vector<1x32xf32>
    %c0_675 = arith.constant 0 : index
    %c224 = arith.constant 224 : index
    %467 = vector.load %arg14[%c0_675, %c224] : memref<2x288xf32, #tpu.memory_space<vmem>>, vector<1x32xf32>
    tpu.vector_store %arg14[%c0_675, %c224], %466 {strides = array<i32>} : memref<2x288xf32, #tpu.memory_space<vmem>>, vector<1x32xf32>,
    %c8_676 = arith.constant 8 : index
    %c0_677 = arith.constant 0 : index
    %468 = vector.load %arg11[%c8_676, %c0_677] : memref<18x32xf32, #tpu.memory_space<vmem>>, vector<1x32xf32>
    %c0_678 = arith.constant 0 : index
    %c256_679 = arith.constant 256 : index
    %469 = vector.load %arg14[%c0_678, %c256_679] : memref<2x288xf32, #tpu.memory_space<vmem>>, vector<1x32xf32>
    tpu.vector_store %arg14[%c0_678, %c256_679], %468 {strides = array<i32>} : memref<2x288xf32, #tpu.memory_space<vmem>>, vector<1x32xf32>,
    %c9_680 = arith.constant 9 : index
    %c0_681 = arith.constant 0 : index
    %470 = vector.load %arg11[%c9_680, %c0_681] : memref<18x32xf32, #tpu.memory_space<vmem>>, vector<1x32xf32>
    %c1_682 = arith.constant 1 : index
    %c0_683 = arith.constant 0 : index
    %471 = vector.load %arg14[%c1_682, %c0_683] : memref<2x288xf32, #tpu.memory_space<vmem>>, vector<1x32xf32>
    tpu.vector_store %arg14[%c1_682, %c0_683], %470 {strides = array<i32>} : memref<2x288xf32, #tpu.memory_space<vmem>>, vector<1x32xf32>,
    %c10 = arith.constant 10 : index
    %c0_684 = arith.constant 0 : index
    %472 = vector.load %arg11[%c10, %c0_684] : memref<18x32xf32, #tpu.memory_space<vmem>>, vector<1x32xf32>
    %c1_685 = arith.constant 1 : index
    %c32_686 = arith.constant 32 : index
    %473 = vector.load %arg14[%c1_685, %c32_686] : memref<2x288xf32, #tpu.memory_space<vmem>>, vector<1x32xf32>
    tpu.vector_store %arg14[%c1_685, %c32_686], %472 {strides = array<i32>} : memref<2x288xf32, #tpu.memory_space<vmem>>, vector<1x32xf32>,
    %c11 = arith.constant 11 : index
    %c0_687 = arith.constant 0 : index
    %474 = vector.load %arg11[%c11, %c0_687] : memref<18x32xf32, #tpu.memory_space<vmem>>, vector<1x32xf32>
    %c1_688 = arith.constant 1 : index
    %c64_689 = arith.constant 64 : index
    %475 = vector.load %arg14[%c1_688, %c64_689] : memref<2x288xf32, #tpu.memory_space<vmem>>, vector<1x32xf32>
    tpu.vector_store %arg14[%c1_688, %c64_689], %474 {strides = array<i32>} : memref<2x288xf32, #tpu.memory_space<vmem>>, vector<1x32xf32>,
    %c12_690 = arith.constant 12 : index
    %c0_691 = arith.constant 0 : index
    %476 = vector.load %arg11[%c12_690, %c0_691] : memref<18x32xf32, #tpu.memory_space<vmem>>, vector<1x32xf32>
    %c1_692 = arith.constant 1 : index
    %c96_693 = arith.constant 96 : index
    %477 = vector.load %arg14[%c1_692, %c96_693] : memref<2x288xf32, #tpu.memory_space<vmem>>, vector<1x32xf32>
    tpu.vector_store %arg14[%c1_692, %c96_693], %476 {strides = array<i32>} : memref<2x288xf32, #tpu.memory_space<vmem>>, vector<1x32xf32>,
    %c13 = arith.constant 13 : index
    %c0_694 = arith.constant 0 : index
    %478 = vector.load %arg11[%c13, %c0_694] : memref<18x32xf32, #tpu.memory_space<vmem>>, vector<1x32xf32>
    %c1_695 = arith.constant 1 : index
    %c128_696 = arith.constant 128 : index
    %479 = vector.load %arg14[%c1_695, %c128_696] : memref<2x288xf32, #tpu.memory_space<vmem>>, vector<1x32xf32>
    tpu.vector_store %arg14[%c1_695, %c128_696], %478 {strides = array<i32>} : memref<2x288xf32, #tpu.memory_space<vmem>>, vector<1x32xf32>,
    %c14_697 = arith.constant 14 : index
    %c0_698 = arith.constant 0 : index
    %480 = vector.load %arg11[%c14_697, %c0_698] : memref<18x32xf32, #tpu.memory_space<vmem>>, vector<1x32xf32>
    %c1_699 = arith.constant 1 : index
    %c160_700 = arith.constant 160 : index
    %481 = vector.load %arg14[%c1_699, %c160_700] : memref<2x288xf32, #tpu.memory_space<vmem>>, vector<1x32xf32>
    tpu.vector_store %arg14[%c1_699, %c160_700], %480 {strides = array<i32>} : memref<2x288xf32, #tpu.memory_space<vmem>>, vector<1x32xf32>,
    %c15_701 = arith.constant 15 : index
    %c0_702 = arith.constant 0 : index
    %482 = vector.load %arg11[%c15_701, %c0_702] : memref<18x32xf32, #tpu.memory_space<vmem>>, vector<1x32xf32>
    %c1_703 = arith.constant 1 : index
    %c192_704 = arith.constant 192 : index
    %483 = vector.load %arg14[%c1_703, %c192_704] : memref<2x288xf32, #tpu.memory_space<vmem>>, vector<1x32xf32>
    tpu.vector_store %arg14[%c1_703, %c192_704], %482 {strides = array<i32>} : memref<2x288xf32, #tpu.memory_space<vmem>>, vector<1x32xf32>,
    %c16_705 = arith.constant 16 : index
    %c0_706 = arith.constant 0 : index
    %484 = vector.load %arg11[%c16_705, %c0_706] : memref<18x32xf32, #tpu.memory_space<vmem>>, vector<1x32xf32>
    %c1_707 = arith.constant 1 : index
    %c224_708 = arith.constant 224 : index
    %485 = vector.load %arg14[%c1_707, %c224_708] : memref<2x288xf32, #tpu.memory_space<vmem>>, vector<1x32xf32>
    tpu.vector_store %arg14[%c1_707, %c224_708], %484 {strides = array<i32>} : memref<2x288xf32, #tpu.memory_space<vmem>>, vector<1x32xf32>,
    %c17_709 = arith.constant 17 : index
    %c0_710 = arith.constant 0 : index
    %486 = vector.load %arg11[%c17_709, %c0_710] : memref<18x32xf32, #tpu.memory_space<vmem>>, vector<1x32xf32>
    %c1_711 = arith.constant 1 : index
    %c256_712 = arith.constant 256 : index
    %487 = vector.load %arg14[%c1_711, %c256_712] : memref<2x288xf32, #tpu.memory_space<vmem>>, vector<1x32xf32>
    tpu.vector_store %arg14[%c1_711, %c256_712], %486 {strides = array<i32>} : memref<2x288xf32, #tpu.memory_space<vmem>>, vector<1x32xf32>,
    %c0_713 = arith.constant 0 : index
    %c0_714 = arith.constant 0 : index
    %488 = vector.load %arg14[%c0_713, %c0_714] : memref<2x288xf32, #tpu.memory_space<vmem>>, vector<2x288xf32>
    %489 = arith.truncf %488 : vector<2x288xf32> to vector<2x288xbf16>
    %c3_715 = arith.constant 3 : index
    %c0_716 = arith.constant 0 : index
    %c0_717 = arith.constant 0 : index
    %490 = vector.load %arg2[%c3_715, %c0_716, %c0_717] : memref<4x288x64xbf16, #tpu.memory_space<vmem>>, vector<1x288x64xbf16>
    %491 = vector.shape_cast %490 : vector<1x288x64xbf16> to vector<288x64xbf16>
    %cst_718 = arith.constant dense<0.000000e+00> : vector<2x64xf32>
    %492 = tpu.matmul %489, %491, %cst_718 {dimension_numbers = #tpu.dot_dimension_numbers<[1], [0], [0], [1], [0, 0, 1, 1], [], []>} : vector<2x288xbf16>, vector<288x64xbf16>, vector<2x64xf32> -> vector<2x64xf32>
    %c3_719 = arith.constant 3 : index
    %c0_720 = arith.constant 0 : index
    %c0_721 = arith.constant 0 : index
    %493 = vector.load %arg3[%c3_719, %c0_720, %c0_721] : memref<4x3x64xf32, #tpu.memory_space<vmem>>, vector<1x1x64xf32>
    %494 = vector.shape_cast %493 : vector<1x1x64xf32> to vector<1x64xf32>
    %495 = vector.broadcast %494 : vector<1x64xf32> to vector<2x64xf32>
    %496 = arith.addf %492, %495 : vector<2x64xf32>
    %cst_722 = arith.constant dense<0.000000e+00> : vector<64xf32>
    %497 = vector.multi_reduction <add>, %496, %cst_722 [0] : vector<2x64xf32> to vector<64xf32>
    %498 = vector.shape_cast %497 : vector<64xf32> to vector<1x64xf32>
    %cst_723 = arith.constant 5.000000e-01 : f32
    %499 = vector.broadcast %cst_723 : f32 to vector<1x64xf32>
    %500 = arith.mulf %498, %499 : vector<1x64xf32>
    %501 = vector.broadcast %500 : vector<1x64xf32> to vector<2x64xf32>
    %502 = arith.subf %496, %501 : vector<2x64xf32>
    %503 = arith.mulf %502, %502 : vector<2x64xf32>
    %cst_724 = arith.constant dense<0.000000e+00> : vector<64xf32>
    %504 = vector.multi_reduction <add>, %503, %cst_724 [0] : vector<2x64xf32> to vector<64xf32>
    %505 = vector.shape_cast %504 : vector<64xf32> to vector<1x64xf32>
    %cst_725 = arith.constant 5.000000e-01 : f32
    %506 = vector.broadcast %cst_725 : f32 to vector<1x64xf32>
    %507 = arith.mulf %505, %506 : vector<1x64xf32>
    %cst_726 = arith.constant 9.99999974E-6 : f32
    %508 = vector.broadcast %cst_726 : f32 to vector<1x64xf32>
    %509 = arith.addf %507, %508 : vector<1x64xf32>
    %510 = math.rsqrt %509 : vector<1x64xf32>
    %511 = vector.broadcast %510 : vector<1x64xf32> to vector<2x64xf32>
    %512 = arith.mulf %502, %511 : vector<2x64xf32>
    %c3_727 = arith.constant 3 : index
    %c1_728 = arith.constant 1 : index
    %c0_729 = arith.constant 0 : index
    %513 = vector.load %arg3[%c3_727, %c1_728, %c0_729] : memref<4x3x64xf32, #tpu.memory_space<vmem>>, vector<1x1x64xf32>
    %514 = vector.shape_cast %513 : vector<1x1x64xf32> to vector<1x64xf32>
    %515 = vector.broadcast %514 : vector<1x64xf32> to vector<2x64xf32>
    %516 = arith.mulf %512, %515 : vector<2x64xf32>
    %c3_730 = arith.constant 3 : index
    %c2_731 = arith.constant 2 : index
    %c0_732 = arith.constant 0 : index
    %517 = vector.load %arg3[%c3_730, %c2_731, %c0_732] : memref<4x3x64xf32, #tpu.memory_space<vmem>>, vector<1x1x64xf32>
    %518 = vector.shape_cast %517 : vector<1x1x64xf32> to vector<1x64xf32>
    %519 = vector.broadcast %518 : vector<1x64xf32> to vector<2x64xf32>
    %520 = arith.addf %516, %519 : vector<2x64xf32>
    %cst_733 = arith.constant 0.000000e+00 : f32
    %521 = vector.broadcast %cst_733 : f32 to vector<2x64xf32>
    %522 = arith.cmpf oge, %520, %521 : vector<2x64xf32>
    %cst_734 = arith.constant 2.000000e-01 : f32
    %523 = vector.broadcast %cst_734 : f32 to vector<2x64xf32>
    %524 = arith.mulf %523, %520 : vector<2x64xf32>
    %525 = arith.select %522, %520, %524 : vector<2x64xi1>, vector<2x64xf32>
    %526 = arith.truncf %525 : vector<2x64xf32> to vector<2x64xbf16>
    %c0_735 = arith.constant 0 : index
    %c0_736 = arith.constant 0 : index
    %527 = vector.load %arg4[%c0_735, %c0_736] : memref<64x1024xbf16, #tpu.memory_space<vmem>>, vector<64x1024xbf16>
    %cst_737 = arith.constant dense<0.000000e+00> : vector<2x1024xf32>
    %528 = tpu.matmul %526, %527, %cst_737 {dimension_numbers = #tpu.dot_dimension_numbers<[1], [0], [0], [1], [0, 0, 1, 1], [], []>} : vector<2x64xbf16>, vector<64x1024xbf16>, vector<2x1024xf32> -> vector<2x1024xf32>
    %c0_738 = arith.constant 0 : index
    %c0_739 = arith.constant 0 : index
    %529 = vector.load %arg6[%c0_738, %c0_739] : memref<2x1024xf32, #tpu.memory_space<vmem>>, vector<1x1024xf32>
    %530 = vector.broadcast %529 : vector<1x1024xf32> to vector<2x1024xf32>
    %531 = arith.addf %528, %530 : vector<2x1024xf32>
    %532 = arith.truncf %531 : vector<2x1024xf32> to vector<2x1024xbf16>
    %c0_740 = arith.constant 0 : index
    %c0_741 = arith.constant 0 : index
    %533 = vector.load %arg5[%c0_740, %c0_741] : memref<1024x10xbf16, #tpu.memory_space<vmem>>, vector<1024x10xbf16>
    %cst_742 = arith.constant dense<0.000000e+00> : vector<2x10xf32>
    %534 = tpu.matmul %532, %533, %cst_742 {dimension_numbers = #tpu.dot_dimension_numbers<[1], [0], [0], [1], [0, 0, 1, 1], [], []>} : vector<2x1024xbf16>, vector<1024x10xbf16>, vector<2x10xf32> -> vector<2x10xf32>
    %c1_743 = arith.constant 1 : index
    %c0_744 = arith.constant 0 : index
    %535 = vector.load %arg6[%c1_743, %c0_744] : memref<2x1024xf32, #tpu.memory_space<vmem>>, vector<1x10xf32>
    %536 = vector.broadcast %535 : vector<1x10xf32> to vector<2x10xf32>
    %537 = arith.addf %534, %536 : vector<2x10xf32>
    %c0_745 = arith.constant 0 : index
    %c0_746 = arith.constant 0 : index
    %538 = vector.load %arg7[%c0_745, %c0_746] : memref<2x10xf32, #tpu.memory_space<vmem>>, vector<2x10xf32>
    tpu.vector_store %arg7[%c0_745, %c0_746], %537 {strides = array<i32>} : memref<2x10xf32, #tpu.memory_space<vmem>>, vector<2x10xf32>,
    %cst_747 = arith.constant dense<0xFF800000> : vector<2xf32>
    %539 = vector.multi_reduction <maximumf>, %537, %cst_747 [1] : vector<2x10xf32> to vector<2xf32>
    %540 = vector.shape_cast %539 : vector<2xf32> to vector<2x1xf32>
    %541 = vector.broadcast %540 : vector<2x1xf32> to vector<2x10xf32>
    %542 = arith.subf %537, %541 : vector<2x10xf32>
    %543 = math.exp %542 : vector<2x10xf32>
    %cst_748 = arith.constant dense<0.000000e+00> : vector<2xf32>
    %544 = vector.multi_reduction <add>, %543, %cst_748 [1] : vector<2x10xf32> to vector<2xf32>
    %545 = vector.shape_cast %544 : vector<2xf32> to vector<2x1xf32>
    %546 = vector.broadcast %545 : vector<2x1xf32> to vector<2x10xf32>
    %547 = arith.divf %543, %546 : vector<2x10xf32>
    %548 = math.log %545 : vector<2x1xf32>
    %549 = vector.broadcast %548 : vector<2x1xf32> to vector<2x10xf32>
    %550 = arith.subf %542, %549 : vector<2x10xf32>
    %551 = arith.mulf %547, %550 : vector<2x10xf32>
    %cst_749 = arith.constant dense<0.000000e+00> : vector<2xf32>
    %552 = vector.multi_reduction <add>, %551, %cst_749 [1] : vector<2x10xf32> to vector<2xf32>
    %553 = vector.shape_cast %552 : vector<2xf32> to vector<2x1xf32>
    %cst_750 = arith.constant 0.000000e+00 : f32
    %554 = vector.broadcast %cst_750 : f32 to vector<2x1xf32>
    %555 = arith.subf %554, %553 : vector<2x1xf32>
    %cst_751 = arith.constant 2.944400e+00 : f32
    %556 = vector.broadcast %cst_751 : f32 to vector<2x1xf32>
    %557 = arith.divf %555, %556 : vector<2x1xf32>
    %558 = arith.mulf %557, %557 : vector<2x1xf32>
    %cst_752 = arith.constant 9.99999993E-9 : f32
    %559 = vector.broadcast %cst_752 : f32 to vector<2x1xf32>
    %560 = arith.addf %558, %559 : vector<2x1xf32>
    %561 = math.log %560 : vector<2x1xf32>
    %cst_753 = arith.constant 1.500000e+00 : f32
    %562 = vector.broadcast %cst_753 : f32 to vector<2x1xf32>
    %563 = arith.mulf %562, %561 : vector<2x1xf32>
    %564 = math.exp %563 : vector<2x1xf32>
    %cst_754 = arith.constant dense<0.000000e+00> : vector<1xf32>
    %565 = vector.multi_reduction <add>, %564, %cst_754 [0] : vector<2x1xf32> to vector<1xf32>
    %566 = vector.shape_cast %565 : vector<1xf32> to vector<1x1xf32>
    %cst_755 = arith.constant 5.000000e-01 : f32
    %567 = vector.broadcast %cst_755 : f32 to vector<1x1xf32>
    %568 = arith.mulf %566, %567 : vector<1x1xf32>
    %c0_756 = arith.constant 0 : index
    %c0_757 = arith.constant 0 : index
    %569 = vector.load %arg8[%c0_756, %c0_757] : memref<1x1xf32, #tpu.memory_space<vmem>>, vector<1x1xf32>
    tpu.vector_store %arg8[%c0_756, %c0_757], %568 {strides = array<i32>} : memref<1x1xf32, #tpu.memory_space<vmem>>, vector<1x1xf32>,
    return
  }
  func.func @transform_0(%arg0: i32) -> (i32, i32) {
    %c0_i32 = arith.constant 0 : i32
    %c0_i32_0 = arith.constant 0 : i32
    %c0_i32_1 = arith.constant 0 : i32
    return %c0_i32, %c0_i32_0 : i32, i32
  }
  func.func @transform_1(%arg0: i32) -> (i32, i32, i32) {
    %c0_i32 = arith.constant 0 : i32
    %c0_i32_0 = arith.constant 0 : i32
    %c0_i32_1 = arith.constant 0 : i32
    %c0_i32_2 = arith.constant 0 : i32
    return %c0_i32, %c0_i32_0, %c0_i32_1 : i32, i32, i32
  }
  func.func @transform_2(%arg0: i32) -> (i32, i32, i32) {
    %c0_i32 = arith.constant 0 : i32
    %c0_i32_0 = arith.constant 0 : i32
    %c0_i32_1 = arith.constant 0 : i32
    %c0_i32_2 = arith.constant 0 : i32
    return %c0_i32, %c0_i32_0, %c0_i32_1 : i32, i32, i32
  }
  func.func @transform_3(%arg0: i32) -> (i32, i32) {
    %c0_i32 = arith.constant 0 : i32
    %c0_i32_0 = arith.constant 0 : i32
    %c0_i32_1 = arith.constant 0 : i32
    return %c0_i32, %c0_i32_0 : i32, i32
  }
  func.func @transform_4(%arg0: i32) -> (i32, i32) {
    %c0_i32 = arith.constant 0 : i32
    %c0_i32_0 = arith.constant 0 : i32
    %c0_i32_1 = arith.constant 0 : i32
    return %c0_i32, %c0_i32_0 : i32, i32
  }
  func.func @transform_5(%arg0: i32) -> (i32, i32) {
    %c0_i32 = arith.constant 0 : i32
    %c0_i32_0 = arith.constant 0 : i32
    %c0_i32_1 = arith.constant 0 : i32
    return %c0_i32, %c0_i32_0 : i32, i32
  }
  func.func @transform_6(%arg0: i32) -> (i32, i32) {
    %c0_i32 = arith.constant 0 : i32
    %c0_i32_0 = arith.constant 0 : i32
    %c0_i32_1 = arith.constant 0 : i32
    return %c0_i32, %c0_i32_0 : i32, i32
  }
  func.func @transform_7(%arg0: i32) -> (i32, i32) {
    %c0_i32 = arith.constant 0 : i32
    %c0_i32_0 = arith.constant 0 : i32
    %c0_i32_1 = arith.constant 0 : i32
    return %c0_i32, %c0_i32_0 : i32, i32
  }
}

</mosaic_0001>

<llo_original>
// kernel: classifier_forward.1
$region0: #{classifier_forward.1}
  #allocation0 [shape = 'u32[]', space=smem, size = 0x4, offset = 0x4, fixed_abs, tag = 'smem constant byte address 0x4 - core index']
  #allocation1 [shape = 'u32[72,128]{1,0:T(1,128)}', space=vmem, size = 0x9000, scoped, tag = 'internal scratch']
  #allocation2 [shape = 'f32[450,16]{1,0:T(8,128)}', space=vmem, size = 0x39000, scoped, tag = 'scratch operand']
  #allocation3 [shape = 'f32[98,16]{1,0:T(8,128)}', space=vmem, size = 0xd000, scoped, tag = 'scratch operand']
  #allocation4 [shape = 'f32[18,32]{1,0:T(8,128)}', space=vmem, size = 0x3000, scoped, tag = 'scratch operand']
  #allocation5 [shape = 'f32[98,144]{1,0:T(8,128)}', space=vmem, size = 0x1a000, scoped, tag = 'scratch operand']
  #allocation6 [shape = 'f32[18,144]{1,0:T(8,128)}', space=vmem, size = 0x6000, scoped, tag = 'scratch operand']
  #allocation7 [shape = 'f32[2,288]{1,0:T(2,128)}', space=vmem, size = 0xc00, scoped, tag = 'scratch operand']
  %s0 = inlined_call_operand.vmem [shape: bf16[450,27], index: 0, kind: input, shape index: {}]
  %s1 = inlined_call_operand.vmem [shape: bf16[4,288,64], index: 1, kind: input, shape index: {}]
  %s2 = inlined_call_operand.vmem [shape: f32[4,3,64], index: 2, kind: input, shape index: {}]
  %s3 = inlined_call_operand.vmem [shape: bf16[64,1024], index: 3, kind: input, shape index: {}]
  %s4 = inlined_call_operand.vmem [shape: bf16[1024,10], index: 4, kind: input, shape index: {}]
  %s5 = inlined_call_operand.vmem [shape: f32[2,1024], index: 5, kind: input, shape index: {}]
  %s6 = inlined_call_operand.hbm [shape: f32[2,10], index: 6, kind: output, shape index: {0}]
  %s7 = inlined_call_operand.hbm [shape: f32[1,1], index: 7, kind: output, shape index: {1}]
  %8 = xla_tuple %s6, %s7
  %s9 = sld [smem:[#allocation0]]
  $region42: #{classifier_forward.1} parent=0
    _
  %s11 = ssub.s32 1, %s9
  %s12 = scalar_select 0, %s11, %s9
  $region1: #{classifier_forward.1} parent=0
    #allocation8 [shape = 'u8[1024]{0}', space=vmem, size = 0x400, scoped, tag = 'output window, operand 0, single buffered']
    #allocation9 [shape = 's32[1]{0}', space=sflag, size = 0x4, scoped, tag = 'scoped memory for classifier_forward.1']
    #allocation10 [shape = 'u8[512]{0}', space=vmem, size = 0x400, scoped, tag = 'output window, operand 1, single buffered']
    #allocation11 [shape = 's32[1]{0}', space=sflag, size = 0x4, scoped, tag = 'scoped memory for classifier_forward.1']
    %13 = vsyncpa [#allocation9], 0
    %14 = vsyncpa [#allocation11], 0
    // Predicated region
    $region2: #{classifier_forward.1} parent=1 // pred_check
      _
    $region3: #{classifier_forward.1} parent=1 // pred_check_branch
      %16 = sbr.rel (0) target = $region5
    $region4: #{classifier_forward.1} parent=1 // pred_region
      _
    $region5: #{classifier_forward.1} parent=1 // pred_fallthru
      _
    // Predicated region
    $region6: #{classifier_forward.1} parent=1 // pred_check
      _
    $region7: #{classifier_forward.1} parent=1 // pred_check_branch
      %18 = sbr.rel (0) target = $region9
    $region8: #{classifier_forward.1} parent=1 // pred_region
      _
    $region9: #{classifier_forward.1} parent=1 // pred_fallthru
      _
    // Predicated region
    $region10: #{classifier_forward.1} parent=1 // pred_check
      _
    $region11: #{classifier_forward.1} parent=1 // pred_check_branch
      %20 = sbr.rel (0) target = $region13
    $region12: #{classifier_forward.1} parent=1 // pred_region
      _
    $region13: #{classifier_forward.1} parent=1 // pred_fallthru
      _
    // Predicated region
    $region14: #{classifier_forward.1} parent=1 // pred_check
      _
    $region15: #{classifier_forward.1} parent=1 // pred_check_branch
      %22 = sbr.rel (0) target = $region17
    $region16: #{classifier_forward.1} parent=1 // pred_region
      _
    $region17: #{classifier_forward.1} parent=1 // pred_fallthru
      _
    // Predicated region
    $region18: #{classifier_forward.1} parent=1 // pred_check
      _
    $region19: #{classifier_forward.1} parent=1 // pred_check_branch
      %24 = sbr.rel (0) target = $region21
    $region20: #{classifier_forward.1} parent=1 // pred_region
      _
    $region21: #{classifier_forward.1} parent=1 // pred_fallthru
      _
    // Predicated region
    $region22: #{classifier_forward.1} parent=1 // pred_check
      _
    $region23: #{classifier_forward.1} parent=1 // pred_check_branch
      %26 = sbr.rel (0) target = $region25
    $region24: #{classifier_forward.1} parent=1 // pred_region
      _
    $region25: #{classifier_forward.1} parent=1 // pred_fallthru
      _
    %v28 = vld [vmem:[%s0] sm:$0xf]
    %v29 = vld [vmem:[%s0 + $0x4] sm:$0xf]
    %v30 = vld [vmem:[%s0 + $0x8] sm:$0xf]
    %v31 = vld [vmem:[%s0 + $0xc] sm:$0xf]
    %v32 = vld [vmem:[%s0 + $0x10] sm:$0xf]
    %v33 = vld [vmem:[%s0 + $0x14] sm:$0xf]
    %v34 = vld [vmem:[%s0 + $0x18] sm:$0xf]
    %v35 = vld [vmem:[%s0 + $0x1c] sm:$0xf]
    %v36 = vld [vmem:[%s0 + $0x20] sm:$0xf]
    %v37 = vld [vmem:[%s0 + $0x24] sm:$0xf]
    %v38 = vld [vmem:[%s0 + $0x28] sm:$0xf]
    %v39 = vld [vmem:[%s0 + $0x2c] sm:$0xf]
    %v40 = vld [vmem:[%s0 + $0x30] sm:$0xf]
    %v41 = vld [vmem:[%s0 + $0x34] sm:$0xf]
    %v42 = vld [vmem:[%s0 + $0x38] sm:$0xf]
    %v43 = vld [vmem:[%s0 + $0x3c] sm:$0xf]
    %v44 = vld [vmem:[%s0 + $0x40] sm:$0xf]
    %v45 = vld [vmem:[%s0 + $0x44] sm:$0xf]
    %v46 = vld [vmem:[%s0 + $0x48] sm:$0xf]
    %v47 = vld [vmem:[%s0 + $0x4c] sm:$0xf]
    %v48 = vld [vmem:[%s0 + $0x50] sm:$0xf]
    %v49 = vld [vmem:[%s0 + $0x54] sm:$0xf]
    %v50 = vld [vmem:[%s0 + $0x58] sm:$0xf]
    %v51 = vld [vmem:[%s0 + $0x5c] sm:$0xf]
    %v52 = vld [vmem:[%s0 + $0x60] sm:$0xf]
    %v53 = vld [vmem:[%s0 + $0x64] sm:$0xf]
    %v54 = vld [vmem:[%s0 + $0x68] sm:$0xf]
    %v55 = vld [vmem:[%s0 + $0x6c] sm:$0xf]
    %v56 = vld [vmem:[%s0 + $0x70] sm:$0xf]
    %v57 = vld [vmem:[%s0 + $0x74] sm:$0xf]
    %v58 = vld [vmem:[%s0 + $0x78] sm:$0xf]
    %v59 = vld [vmem:[%s0 + $0x7c] sm:$0xf]
    %v60 = vld [vmem:[%s0 + $0x80] sm:$0xf]
    %v61 = vld [vmem:[%s0 + $0x84] sm:$0xf]
    %v62 = vld [vmem:[%s0 + $0x88] sm:$0xf]
    %v63 = vld [vmem:[%s0 + $0x8c] sm:$0xf]
    %v64 = vld [vmem:[%s0 + $0x90] sm:$0xf]
    %v65 = vld [vmem:[%s0 + $0x94] sm:$0xf]
    %v66 = vld [vmem:[%s0 + $0x98] sm:$0xf]
    %v67 = vld [vmem:[%s0 + $0x9c] sm:$0xf]
    %v68 = vld [vmem:[%s0 + $0xa0] sm:$0xf]
    %v69 = vld [vmem:[%s0 + $0xa4] sm:$0xf]
    %v70 = vld [vmem:[%s0 + $0xa8] sm:$0xf]
    %v71 = vld [vmem:[%s0 + $0xac] sm:$0xf]
    %v72 = vld [vmem:[%s0 + $0xb0] sm:$0xf]
    %v73 = vld [vmem:[%s0 + $0xb4] sm:$0xf]
    %v74 = vld [vmem:[%s0 + $0xb8] sm:$0xf]
    %v75 = vld [vmem:[%s0 + $0xbc] sm:$0xf]
    %v76 = vld [vmem:[%s0 + $0xc0] sm:$0xf]
    %v77 = vld [vmem:[%s0 + $0xc4] sm:$0xf]
    %v78 = vld [vmem:[%s0 + $0xc8] sm:$0xf]
    %v79 = vld [vmem:[%s0 + $0xcc] sm:$0xf]
    %v80 = vld [vmem:[%s0 + $0xd0] sm:$0xf]
    %v81 = vld [vmem:[%s0 + $0xd4] sm:$0xf]
    %v82 = vld [vmem:[%s0 + $0xd8] sm:$0xf]
    %v83 = vld [vmem:[%s0 + $0xdc] sm:$0xf]
    %v84 = vld [vmem:[%s0 + $0xe0] sm:$0x1]
    %v85 = vld [vmem:[%s1] sm:$0xf]
    %v86 = vld [vmem:[%s1 + $0x4] sm:$0xf]
    %v87 = vld [vmem:[%s1 + $0x8] sm:$0xf]
    %v88 = vld [vmem:[%s1 + $0xc] sm:$0x3]
    %v89 = vld [vmem:[%s2] sm:$0x1]
    %v90 = vperm.slane %v89, 0
    %v148 = vunpack.c.l.b16 %v28
    %v149 = vunpack.c.l.b16 %v29
    %v150 = vunpack.c.l.b16 %v30
    %v151 = vunpack.c.l.b16 %v31
    %v152 = vunpack.c.l.b16 %v32
    %v153 = vunpack.c.l.b16 %v33
    %v154 = vunpack.c.l.b16 %v34
    %v155 = vunpack.c.l.b16 %v35
    %v156 = vunpack.c.l.b16 %v36
    %v157 = vunpack.c.l.b16 %v37
    %v158 = vunpack.c.l.b16 %v38
    %v159 = vunpack.c.l.b16 %v39
    %v160 = vunpack.c.l.b16 %v40
    %v161 = vunpack.c.l.b16 %v41
    %v162 = vunpack.c.l.b16 %v42
    %v163 = vunpack.c.l.b16 %v43
    %v164 = vunpack.c.l.b16 %v44
    %v165 = vunpack.c.l.b16 %v45
    %v166 = vunpack.c.l.b16 %v46
    %v167 = vunpack.c.l.b16 %v47
    %v168 = vunpack.c.l.b16 %v48
    %v169 = vunpack.c.l.b16 %v49
    %v170 = vunpack.c.l.b16 %v50
    %v171 = vunpack.c.l.b16 %v51
    %v172 = vunpack.c.l.b16 %v52
    %v173 = vunpack.c.l.b16 %v53
    %v174 = vunpack.c.l.b16 %v54
    %v175 = vunpack.c.l.b16 %v55
    %v176 = vunpack.c.l.b16 %v56
    %v177 = vunpack.c.l.b16 %v57
    %v178 = vunpack.c.l.b16 %v58
    %v179 = vunpack.c.l.b16 %v59
    %v180 = vunpack.c.l.b16 %v60
    %v181 = vunpack.c.l.b16 %v61
    %v182 = vunpack.c.l.b16 %v62
    %v183 = vunpack.c.l.b16 %v63
    %v184 = vunpack.c.l.b16 %v64
    %v185 = vunpack.c.l.b16 %v65
    %v186 = vunpack.c.l.b16 %v66
    %v187 = vunpack.c.l.b16 %v67
    %v188 = vunpack.c.l.b16 %v68
    %v189 = vunpack.c.l.b16 %v69
    %v190 = vunpack.c.l.b16 %v70
    %v191 = vunpack.c.l.b16 %v71
    %v192 = vunpack.c.l.b16 %v72
    %v193 = vunpack.c.l.b16 %v73
    %v194 = vunpack.c.l.b16 %v74
    %v195 = vunpack.c.l.b16 %v75
    %v196 = vunpack.c.l.b16 %v76
    %v197 = vunpack.c.l.b16 %v77
    %v198 = vunpack.c.l.b16 %v78
    %v199 = vunpack.c.l.b16 %v79
    %v200 = vunpack.c.l.b16 %v80
    %v201 = vunpack.c.l.b16 %v81
    %v202 = vunpack.c.l.b16 %v82
    %v203 = vunpack.c.l.b16 %v83
    %v204 = vunpack.c.l.b16 %v84
    %v205 = vpack.c.b16 %v149, %v148
    %v206 = vpack.c.b16 %v151, %v150
    %v207 = vpack.c.b16 %v153, %v152
    %v208 = vpack.c.b16 %v155, %v154
    %v209 = vpack.c.b16 %v157, %v156
    %v210 = vpack.c.b16 %v159, %v158
    %v211 = vpack.c.b16 %v161, %v160
    %v212 = vpack.c.b16 %v163, %v162
    %v213 = vpack.c.b16 %v165, %v164
    %v214 = vpack.c.b16 %v167, %v166
    %v215 = vpack.c.b16 %v169, %v168
    %v216 = vpack.c.b16 %v171, %v170
    %v217 = vpack.c.b16 %v173, %v172
    %v218 = vpack.c.b16 %v175, %v174
    %v219 = vpack.c.b16 %v177, %v176
    %v220 = vpack.c.b16 %v179, %v178
    %v221 = vpack.c.b16 %v181, %v180
    %v222 = vpack.c.b16 %v183, %v182
    %v223 = vpack.c.b16 %v185, %v184
    %v224 = vpack.c.b16 %v187, %v186
    %v225 = vpack.c.b16 %v189, %v188
    %v226 = vpack.c.b16 %v191, %v190
    %v227 = vpack.c.b16 %v193, %v192
    %v228 = vpack.c.b16 %v195, %v194
    %v229 = vpack.c.b16 %v197, %v196
    %v230 = vpack.c.b16 %v199, %v198
    %v231 = vpack.c.b16 %v201, %v200
    %v232 = vpack.c.b16 %v203, %v202
    %v233 = vpack.c.b16 %v204, %v204
    %v238 = vunpack.c.l.b16 %v85
    %v239 = vunpack.c.l.b16 %v86
    %v240 = vunpack.c.l.b16 %v87
    %v241 = vunpack.c.l.b16 %v88
    %v242 = vpack.c.b16 %v239, %v238
    %v243 = vpack.c.b16 %v241, %v240
    %vm245 = vcmask 220160
    %v247 = vsel %vm245, %v205, 0
    %v250 = vsel %vm245, %v206, 0
    %v253 = vsel %vm245, %v207, 0
    %v256 = vsel %vm245, %v208, 0
    %v259 = vsel %vm245, %v209, 0
    %v262 = vsel %vm245, %v210, 0
    %v265 = vsel %vm245, %v211, 0
    %v268 = vsel %vm245, %v212, 0
    %v271 = vsel %vm245, %v213, 0
    %v274 = vsel %vm245, %v214, 0
    %v277 = vsel %vm245, %v215, 0
    %v280 = vsel %vm245, %v216, 0
    %v283 = vsel %vm245, %v217, 0
    %v286 = vsel %vm245, %v218, 0
    %v289 = vsel %vm245, %v219, 0
    %v292 = vsel %vm245, %v220, 0
    %v295 = vsel %vm245, %v221, 0
    %v298 = vsel %vm245, %v222, 0
    %v301 = vsel %vm245, %v223, 0
    %v304 = vsel %vm245, %v224, 0
    %v307 = vsel %vm245, %v225, 0
    %v310 = vsel %vm245, %v226, 0
    %v313 = vsel %vm245, %v227, 0
    %v316 = vsel %vm245, %v228, 0
    %v319 = vsel %vm245, %v229, 0
    %v322 = vsel %vm245, %v230, 0
    %v325 = vsel %vm245, %v231, 0
    %v328 = vsel %vm245, %v232, 0
    %v331 = vsel %vm245, %v233, 0
    %vm333 = vcmask 1044480
    %vm334 = vcmask 1045504
    %v335 = vsel %vm333, 4294967295, 65535
    %v336 = vsel %vm334, %v335, 0
    %v338 = vand.u32 %v243, %v336
    %340 = vmatpush.bf16.msra.mxu0 0
    %341 = vmatpush.bf16.msra.mxu0 0
    %342 = vmatpush.bf16.msra.mxu0 0
    %343 = vmatpush.bf16.msra.mxu0 0
    %344 = vmatpush.bf16.msra.mxu0 0
    %345 = vmatpush.bf16.msra.mxu0 0
    %346 = vmatpush.bf16.msra.mxu0 %v338
    %347 = vmatpush.bf16.msra.mxu0 %v242
    %348 = vmatmul.bf16.gmra.mxu0 %v247
    %v349 = vpop.f32.mrf.mxu0
    %v350 = vadd.f32 %v90, %v349
    %v351 = vpop.f32.mrf.mxu0
    %v352 = vadd.f32 %v90, %v351
    %353 = vmatmul.bf16.gmra.mxu0 %v250
    %v354 = vpop.f32.mrf.mxu0
    %v355 = vadd.f32 %v90, %v354
    %v356 = vpop.f32.mrf.mxu0
    %v357 = vadd.f32 %v90, %v356
    %358 = vmatmul.bf16.gmra.mxu0 %v253
    %v359 = vpop.f32.mrf.mxu0
    %v360 = vadd.f32 %v90, %v359
    %v361 = vpop.f32.mrf.mxu0
    %v362 = vadd.f32 %v90, %v361
    %363 = vmatmul.bf16.gmra.mxu0 %v256
    %v364 = vpop.f32.mrf.mxu0
    %v365 = vadd.f32 %v90, %v364
    %v366 = vpop.f32.mrf.mxu0
    %v367 = vadd.f32 %v90, %v366
    %368 = vmatmul.bf16.gmra.mxu0 %v259
    %v369 = vpop.f32.mrf.mxu0
    %v370 = vadd.f32 %v90, %v369
    %v371 = vpop.f32.mrf.mxu0
    %v372 = vadd.f32 %v90, %v371
    %373 = vmatmul.bf16.gmra.mxu0 %v262
    %v374 = vpop.f32.mrf.mxu0
    %v375 = vadd.f32 %v90, %v374
    %v376 = vpop.f32.mrf.mxu0
    %v377 = vadd.f32 %v90, %v376
    %378 = vmatmul.bf16.gmra.mxu0 %v265
    %v379 = vpop.f32.mrf.mxu0
    %v380 = vadd.f32 %v90, %v379
    %v381 = vpop.f32.mrf.mxu0
    %v382 = vadd.f32 %v90, %v381
    %383 = vmatmul.bf16.gmra.mxu0 %v268
    %v384 = vpop.f32.mrf.mxu0
    %v385 = vadd.f32 %v90, %v384
    %v386 = vpop.f32.mrf.mxu0
    %v387 = vadd.f32 %v90, %v386
    %388 = vmatmul.bf16.gmra.mxu0 %v271
    %v389 = vpop.f32.mrf.mxu0
    %v390 = vadd.f32 %v90, %v389
    %v391 = vpop.f32.mrf.mxu0
    %v392 = vadd.f32 %v90, %v391
    %393 = vmatmul.bf16.gmra.mxu0 %v274
    %v394 = vpop.f32.mrf.mxu0
    %v395 = vadd.f32 %v90, %v394
    %v396 = vpop.f32.mrf.mxu0
    %v397 = vadd.f32 %v90, %v396
    %398 = vmatmul.bf16.gmra.mxu0 %v277
    %v399 = vpop.f32.mrf.mxu0
    %v400 = vadd.f32 %v90, %v399
    %v401 = vpop.f32.mrf.mxu0
    %v402 = vadd.f32 %v90, %v401
    %403 = vmatmul.bf16.gmra.mxu0 %v280
    %v404 = vpop.f32.mrf.mxu0
    %v405 = vadd.f32 %v90, %v404
    %v406 = vpop.f32.mrf.mxu0
    %v407 = vadd.f32 %v90, %v406
    %408 = vmatmul.bf16.gmra.mxu0 %v283
    %v409 = vpop.f32.mrf.mxu0
    %v410 = vadd.f32 %v90, %v409
    %v411 = vpop.f32.mrf.mxu0
    %v412 = vadd.f32 %v90, %v411
    %413 = vmatmul.bf16.gmra.mxu0 %v286
    %v414 = vpop.f32.mrf.mxu0
    %v415 = vadd.f32 %v90, %v414
    %v416 = vpop.f32.mrf.mxu0
    %v417 = vadd.f32 %v90, %v416
    %418 = vmatmul.bf16.gmra.mxu0 %v289
    %v419 = vpop.f32.mrf.mxu0
    %v420 = vadd.f32 %v90, %v419
    %v421 = vpop.f32.mrf.mxu0
    %v422 = vadd.f32 %v90, %v421
    %423 = vmatmul.bf16.gmra.mxu0 %v292
    %v424 = vpop.f32.mrf.mxu0
    %v425 = vadd.f32 %v90, %v424
    %v426 = vpop.f32.mrf.mxu0
    %v427 = vadd.f32 %v90, %v426
    %428 = vmatmul.bf16.gmra.mxu0 %v295
    %v429 = vpop.f32.mrf.mxu0
    %v430 = vadd.f32 %v90, %v429
    %v431 = vpop.f32.mrf.mxu0
    %v432 = vadd.f32 %v90, %v431
    %433 = vmatmul.bf16.gmra.mxu0 %v298
    %v434 = vpop.f32.mrf.mxu0
    %v435 = vadd.f32 %v90, %v434
    %v436 = vpop.f32.mrf.mxu0
    %v437 = vadd.f32 %v90, %v436
    %438 = vmatmul.bf16.gmra.mxu0 %v301
    %v439 = vpop.f32.mrf.mxu0
    %v440 = vadd.f32 %v90, %v439
    %v441 = vpop.f32.mrf.mxu0
    %v442 = vadd.f32 %v90, %v441
    %443 = vmatmul.bf16.gmra.mxu0 %v304
    %v444 = vpop.f32.mrf.mxu0
    %v445 = vadd.f32 %v90, %v444
    %v446 = vpop.f32.mrf.mxu0
    %v447 = vadd.f32 %v90, %v446
    %448 = vmatmul.bf16.gmra.mxu0 %v307
    %v449 = vpop.f32.mrf.mxu0
    %v450 = vadd.f32 %v90, %v449
    %v451 = vpop.f32.mrf.mxu0
    %v452 = vadd.f32 %v90, %v451
    %453 = vmatmul.bf16.gmra.mxu0 %v310
    %v454 = vpop.f32.mrf.mxu0
    %v455 = vadd.f32 %v90, %v454
    %v456 = vpop.f32.mrf.mxu0
    %v457 = vadd.f32 %v90, %v456
    %458 = vmatmul.bf16.gmra.mxu0 %v313
    %v459 = vpop.f32.mrf.mxu0
    %v460 = vadd.f32 %v90, %v459
    %v461 = vpop.f32.mrf.mxu0
    %v462 = vadd.f32 %v90, %v461
    %463 = vmatmul.bf16.gmra.mxu0 %v316
    %v464 = vpop.f32.mrf.mxu0
    %v465 = vadd.f32 %v90, %v464
    %v466 = vpop.f32.mrf.mxu0
    %v467 = vadd.f32 %v90, %v466
    %468 = vmatmul.bf16.gmra.mxu0 %v319
    %v469 = vpop.f32.mrf.mxu0
    %v470 = vadd.f32 %v90, %v469
    %v471 = vpop.f32.mrf.mxu0
    %v472 = vadd.f32 %v90, %v471
    %473 = vmatmul.bf16.gmra.mxu0 %v322
    %v474 = vpop.f32.mrf.mxu0
    %v475 = vadd.f32 %v90, %v474
    %v476 = vpop.f32.mrf.mxu0
    %v477 = vadd.f32 %v90, %v476
    %478 = vmatmul.bf16.gmra.mxu0 %v325
    %v479 = vpop.f32.mrf.mxu0
    %v480 = vadd.f32 %v90, %v479
    %v481 = vpop.f32.mrf.mxu0
    %v482 = vadd.f32 %v90, %v481
    %483 = vmatmul.bf16.gmra.mxu0 %v328
    %v484 = vpop.f32.mrf.mxu0
    %v485 = vadd.f32 %v90, %v484
    %v486 = vpop.f32.mrf.mxu0
    %v487 = vadd.f32 %v90, %v486
    %488 = vmatmul.bf16.gmra.mxu0 %v331
    %v489 = vpop.f32.mrf.mxu0
    %v490 = vadd.f32 %v90, %v489
    %v491 = vpop.f32.mrf.mxu0
    %492 = vdwg.mxu0
    %vm493 = vcmp.ge.f32.partialorder %v350, 0.0
    %vm494 = vcmp.ge.f32.partialorder %v352, 0.0
    %vm495 = vcmp.ge.f32.partialorder %v355, 0.0
    %vm496 = vcmp.ge.f32.partialorder %v357, 0.0
    %vm497 = vcmp.ge.f32.partialorder %v360, 0.0
    %vm498 = vcmp.ge.f32.partialorder %v362, 0.0
    %vm499 = vcmp.ge.f32.partialorder %v365, 0.0
    %vm500 = vcmp.ge.f32.partialorder %v367, 0.0
    %vm501 = vcmp.ge.f32.partialorder %v370, 0.0
    %vm502 = vcmp.ge.f32.partialorder %v372, 0.0
    %vm503 = vcmp.ge.f32.partialorder %v375, 0.0
    %vm504 = vcmp.ge.f32.partialorder %v377, 0.0
    %vm505 = vcmp.ge.f32.partialorder %v380, 0.0
    %vm506 = vcmp.ge.f32.partialorder %v382, 0.0
    %vm507 = vcmp.ge.f32.partialorder %v385, 0.0
    %vm508 = vcmp.ge.f32.partialorder %v387, 0.0
    %vm509 = vcmp.ge.f32.partialorder %v390, 0.0
    %vm510 = vcmp.ge.f32.partialorder %v392, 0.0
    %vm511 = vcmp.ge.f32.partialorder %v395, 0.0
    %vm512 = vcmp.ge.f32.partialorder %v397, 0.0
    %vm513 = vcmp.ge.f32.partialorder %v400, 0.0
    %vm514 = vcmp.ge.f32.partialorder %v402, 0.0
    %vm515 = vcmp.ge.f32.partialorder %v405, 0.0
    %vm516 = vcmp.ge.f32.partialorder %v407, 0.0
    %vm517 = vcmp.ge.f32.partialorder %v410, 0.0
    %vm518 = vcmp.ge.f32.partialorder %v412, 0.0
    %vm519 = vcmp.ge.f32.partialorder %v415, 0.0
    %vm520 = vcmp.ge.f32.partialorder %v417, 0.0
    %vm521 = vcmp.ge.f32.partialorder %v420, 0.0
    %vm522 = vcmp.ge.f32.partialorder %v422, 0.0
    %vm523 = vcmp.ge.f32.partialorder %v425, 0.0
    %vm524 = vcmp.ge.f32.partialorder %v427, 0.0
    %vm525 = vcmp.ge.f32.partialorder %v430, 0.0
    %vm526 = vcmp.ge.f32.partialorder %v432, 0.0
    %vm527 = vcmp.ge.f32.partialorder %v435, 0.0
    %vm528 = vcmp.ge.f32.partialorder %v437, 0.0
    %vm529 = vcmp.ge.f32.partialorder %v440, 0.0
    %vm530 = vcmp.ge.f32.partialorder %v442, 0.0
    %vm531 = vcmp.ge.f32.partialorder %v445, 0.0
    %vm532 = vcmp.ge.f32.partialorder %v447, 0.0
    %vm533 = vcmp.ge.f32.partialorder %v450, 0.0
    %vm534 = vcmp.ge.f32.partialorder %v452, 0.0
    %vm535 = vcmp.ge.f32.partialorder %v455, 0.0
    %vm536 = vcmp.ge.f32.partialorder %v457, 0.0
    %vm537 = vcmp.ge.f32.partialorder %v460, 0.0
    %vm538 = vcmp.ge.f32.partialorder %v462, 0.0
    %vm539 = vcmp.ge.f32.partialorder %v465, 0.0
    %vm540 = vcmp.ge.f32.partialorder %v467, 0.0
    %vm541 = vcmp.ge.f32.partialorder %v470, 0.0
    %vm542 = vcmp.ge.f32.partialorder %v472, 0.0
    %vm543 = vcmp.ge.f32.partialorder %v475, 0.0
    %vm544 = vcmp.ge.f32.partialorder %v477, 0.0
    %vm545 = vcmp.ge.f32.partialorder %v480, 0.0
    %vm546 = vcmp.ge.f32.partialorder %v482, 0.0
    %vm547 = vcmp.ge.f32.partialorder %v485, 0.0
    %vm548 = vcmp.ge.f32.partialorder %v487, 0.0
    %vm549 = vcmp.ge.f32.partialorder %v490, 0.0
    %v550 = vmul.f32 %v350, 0.2
    %v551 = vmul.f32 %v352, 0.2
    %v552 = vmul.f32 %v355, 0.2
    %v553 = vmul.f32 %v357, 0.2
    %v554 = vmul.f32 %v360, 0.2
    %v555 = vmul.f32 %v362, 0.2
    %v556 = vmul.f32 %v365, 0.2
    %v557 = vmul.f32 %v367, 0.2
    %v558 = vmul.f32 %v370, 0.2
    %v559 = vmul.f32 %v372, 0.2
    %v560 = vmul.f32 %v375, 0.2
    %v561 = vmul.f32 %v377, 0.2
    %v562 = vmul.f32 %v380, 0.2
    %v563 = vmul.f32 %v382, 0.2
    %v564 = vmul.f32 %v385, 0.2
    %v565 = vmul.f32 %v387, 0.2
    %v566 = vmul.f32 %v390, 0.2
    %v567 = vmul.f32 %v392, 0.2
    %v568 = vmul.f32 %v395, 0.2
    %v569 = vmul.f32 %v397, 0.2
    %v570 = vmul.f32 %v400, 0.2
    %v571 = vmul.f32 %v402, 0.2
    %v572 = vmul.f32 %v405, 0.2
    %v573 = vmul.f32 %v407, 0.2
    %v574 = vmul.f32 %v410, 0.2
    %v575 = vmul.f32 %v412, 0.2
    %v576 = vmul.f32 %v415, 0.2
    %v577 = vmul.f32 %v417, 0.2
    %v578 = vmul.f32 %v420, 0.2
    %v579 = vmul.f32 %v422, 0.2
    %v580 = vmul.f32 %v425, 0.2
    %v581 = vmul.f32 %v427, 0.2
    %v582 = vmul.f32 %v430, 0.2
    %v583 = vmul.f32 %v432, 0.2
    %v584 = vmul.f32 %v435, 0.2
    %v585 = vmul.f32 %v437, 0.2
    %v586 = vmul.f32 %v440, 0.2
    %v587 = vmul.f32 %v442, 0.2
    %v588 = vmul.f32 %v445, 0.2
    %v589 = vmul.f32 %v447, 0.2
    %v590 = vmul.f32 %v450, 0.2
    %v591 = vmul.f32 %v452, 0.2
    %v592 = vmul.f32 %v455, 0.2
    %v593 = vmul.f32 %v457, 0.2
    %v594 = vmul.f32 %v460, 0.2
    %v595 = vmul.f32 %v462, 0.2
    %v596 = vmul.f32 %v465, 0.2
    %v597 = vmul.f32 %v467, 0.2
    %v598 = vmul.f32 %v470, 0.2
    %v599 = vmul.f32 %v472, 0.2
    %v600 = vmul.f32 %v475, 0.2
    %v601 = vmul.f32 %v477, 0.2
    %v602 = vmul.f32 %v480, 0.2
    %v603 = vmul.f32 %v482, 0.2
    %v604 = vmul.f32 %v485, 0.2
    %v605 = vmul.f32 %v487, 0.2
    %v606 = vmul.f32 %v490, 0.2
    %v607 = vsel %vm493, %v350, %v550
    %v608 = vsel %vm494, %v352, %v551
    %v609 = vsel %vm495, %v355, %v552
    %v610 = vsel %vm496, %v357, %v553
    %v611 = vsel %vm497, %v360, %v554
    %v612 = vsel %vm498, %v362, %v555
    %v613 = vsel %vm499, %v365, %v556
    %v614 = vsel %vm500, %v367, %v557
    %v615 = vsel %vm501, %v370, %v558
    %v616 = vsel %vm502, %v372, %v559
    %v617 = vsel %vm503, %v375, %v560
    %v618 = vsel %vm504, %v377, %v561
    %v619 = vsel %vm505, %v380, %v562
    %v620 = vsel %vm506, %v382, %v563
    %v621 = vsel %vm507, %v385, %v564
    %v622 = vsel %vm508, %v387, %v565
    %v623 = vsel %vm509, %v390, %v566
    %v624 = vsel %vm510, %v392, %v567
    %v625 = vsel %vm511, %v395, %v568
    %v626 = vsel %vm512, %v397, %v569
    %v627 = vsel %vm513, %v400, %v570
    %v628 = vsel %vm514, %v402, %v571
    %v629 = vsel %vm515, %v405, %v572
    %v630 = vsel %vm516, %v407, %v573
    %v631 = vsel %vm517, %v410, %v574
    %v632 = vsel %vm518, %v412, %v575
    %v633 = vsel %vm519, %v415, %v576
    %v634 = vsel %vm520, %v417, %v577
    %v635 = vsel %vm521, %v420, %v578
    %v636 = vsel %vm522, %v422, %v579
    %v637 = vsel %vm523, %v425, %v580
    %v638 = vsel %vm524, %v427, %v581
    %v639 = vsel %vm525, %v430, %v582
    %v640 = vsel %vm526, %v432, %v583
    %v641 = vsel %vm527, %v435, %v584
    %v642 = vsel %vm528, %v437, %v585
    %v643 = vsel %vm529, %v440, %v586
    %v644 = vsel %vm530, %v442, %v587
    %v645 = vsel %vm531, %v445, %v588
    %v646 = vsel %vm532, %v447, %v589
    %v647 = vsel %vm533, %v450, %v590
    %v648 = vsel %vm534, %v452, %v591
    %v649 = vsel %vm535, %v455, %v592
    %v650 = vsel %vm536, %v457, %v593
    %v651 = vsel %vm537, %v460, %v594
    %v652 = vsel %vm538, %v462, %v595
    %v653 = vsel %vm539, %v465, %v596
    %v654 = vsel %vm540, %v467, %v597
    %v655 = vsel %vm541, %v470, %v598
    %v656 = vsel %vm542, %v472, %v599
    %v657 = vsel %vm543, %v475, %v600
    %v658 = vsel %vm544, %v477, %v601
    %v659 = vsel %vm545, %v480, %v602
    %v660 = vsel %vm546, %v482, %v603
    %v661 = vsel %vm547, %v485, %v604
    %v662 = vsel %vm548, %v487, %v605
    %v663 = vsel %vm549, %v490, %v606
    %vm664 = vcmask 130048
    %665 = vst.msk [vmem:[#allocation2] sm:$0xff] %vm664, %v607
    %666 = vst.msk [vmem:[#allocation2 + $0x8] sm:$0xff] %vm664, %v608
    %667 = vst.msk [vmem:[#allocation2 + $0x10] sm:$0xff] %vm664, %v609
    %668 = vst.msk [vmem:[#allocation2 + $0x18] sm:$0xff] %vm664, %v610
    %669 = vst.msk [vmem:[#allocation2 + $0x20] sm:$0xff] %vm664, %v611
    %670 = vst.msk [vmem:[#allocation2 + $0x28] sm:$0xff] %vm664, %v612
    %671 = vst.msk [vmem:[#allocation2 + $0x30] sm:$0xff] %vm664, %v613
    %672 = vst.msk [vmem:[#allocation2 + $0x38] sm:$0xff] %vm664, %v614
    %673 = vst.msk [vmem:[#allocation2 + $0x40] sm:$0xff] %vm664, %v615
    %674 = vst.msk [vmem:[#allocation2 + $0x48] sm:$0xff] %vm664, %v616
    %675 = vst.msk [vmem:[#allocation2 + $0x50] sm:$0xff] %vm664, %v617
    %676 = vst.msk [vmem:[#allocation2 + $0x58] sm:$0xff] %vm664, %v618
    %677 = vst.msk [vmem:[#allocation2 + $0x60] sm:$0xff] %vm664, %v619
    %678 = vst.msk [vmem:[#allocation2 + $0x68] sm:$0xff] %vm664, %v620
    %679 = vst.msk [vmem:[#allocation2 + $0x70] sm:$0xff] %vm664, %v621
    %680 = vst.msk [vmem:[#allocation2 + $0x78] sm:$0xff] %vm664, %v622
    %681 = vst.msk [vmem:[#allocation2 + $0x80] sm:$0xff] %vm664, %v623
    %682 = vst.msk [vmem:[#allocation2 + $0x88] sm:$0xff] %vm664, %v624
    %683 = vst.msk [vmem:[#allocation2 + $0x90] sm:$0xff] %vm664, %v625
    %684 = vst.msk [vmem:[#allocation2 + $0x98] sm:$0xff] %vm664, %v626
    %685 = vst.msk [vmem:[#allocation2 + $0xa0] sm:$0xff] %vm664, %v627
    %686 = vst.msk [vmem:[#allocation2 + $0xa8] sm:$0xff] %vm664, %v628
    %687 = vst.msk [vmem:[#allocation2 + $0xb0] sm:$0xff] %vm664, %v629
    %688 = vst.msk [vmem:[#allocation2 + $0xb8] sm:$0xff] %vm664, %v630
    %689 = vst.msk [vmem:[#allocation2 + $0xc0] sm:$0xff] %vm664, %v631
    %690 = vst.msk [vmem:[#allocation2 + $0xc8] sm:$0xff] %vm664, %v632
    %691 = vst.msk [vmem:[#allocation2 + $0xd0] sm:$0xff] %vm664, %v633
    %692 = vst.msk [vmem:[#allocation2 + $0xd8] sm:$0xff] %vm664, %v634
    %693 = vst.msk [vmem:[#allocation2 + $0xe0] sm:$0xff] %vm664, %v635
    %694 = vst.msk [vmem:[#allocation2 + $0xe8] sm:$0xff] %vm664, %v636
    %695 = vst.msk [vmem:[#allocation2 + $0xf0] sm:$0xff] %vm664, %v637
    %696 = vst.msk [vmem:[#allocation2 + $0xf8] sm:$0xff] %vm664, %v638
    %697 = vst.msk [vmem:[#allocation2 + $0x100] sm:$0xff] %vm664, %v639
    %698 = vst.msk [vmem:[#allocation2 + $0x108] sm:$0xff] %vm664, %v640
    %699 = vst.msk [vmem:[#allocation2 + $0x110] sm:$0xff] %vm664, %v641
    %700 = vst.msk [vmem:[#allocation2 + $0x118] sm:$0xff] %vm664, %v642
    %701 = vst.msk [vmem:[#allocation2 + $0x120] sm:$0xff] %vm664, %v643
    %702 = vst.msk [vmem:[#allocation2 + $0x128] sm:$0xff] %vm664, %v644
    %703 = vst.msk [vmem:[#allocation2 + $0x130] sm:$0xff] %vm664, %v645
    %704 = vst.msk [vmem:[#allocation2 + $0x138] sm:$0xff] %vm664, %v646
    %705 = vst.msk [vmem:[#allocation2 + $0x140] sm:$0xff] %vm664, %v647
    %706 = vst.msk [vmem:[#allocation2 + $0x148] sm:$0xff] %vm664, %v648
    %707 = vst.msk [vmem:[#allocation2 + $0x150] sm:$0xff] %vm664, %v649
    %708 = vst.msk [vmem:[#allocation2 + $0x158] sm:$0xff] %vm664, %v650
    %709 = vst.msk [vmem:[#allocation2 + $0x160] sm:$0xff] %vm664, %v651
    %710 = vst.msk [vmem:[#allocation2 + $0x168] sm:$0xff] %vm664, %v652
    %711 = vst.msk [vmem:[#allocation2 + $0x170] sm:$0xff] %vm664, %v653
    %712 = vst.msk [vmem:[#allocation2 + $0x178] sm:$0xff] %vm664, %v654
    %713 = vst.msk [vmem:[#allocation2 + $0x180] sm:$0xff] %vm664, %v655
    %714 = vst.msk [vmem:[#allocation2 + $0x188] sm:$0xff] %vm664, %v656
    %715 = vst.msk [vmem:[#allocation2 + $0x190] sm:$0xff] %vm664, %v657
    %716 = vst.msk [vmem:[#allocation2 + $0x198] sm:$0xff] %vm664, %v658
    %717 = vst.msk [vmem:[#allocation2 + $0x1a0] sm:$0xff] %vm664, %v659
    %718 = vst.msk [vmem:[#allocation2 + $0x1a8] sm:$0xff] %vm664, %v660
    %719 = vst.msk [vmem:[#allocation2 + $0x1b0] sm:$0xff] %vm664, %v661
    %720 = vst.msk [vmem:[#allocation2 + $0x1b8] sm:$0xff] %vm664, %v662
    %vm721 = vcmask 123904
    %722 = vst.msk [vmem:[#allocation2 + $0x1c0] sm:$0x3] %vm721, %v663
    %v723 = vld [vmem:[#allocation2] ss:$2 sm:$0x7f]
    %vm724 = vcmask 129024
    %725 = vst.msk [vmem:[#allocation5] sm:$0x7f] %vm724, %v723
    %s726 = scalar_lea.vmem [#allocation2], 1
    %v727 = vld [vmem:[%s726] ss:$2 sm:$0x7f]
    %729 = vrot.lane.b32.xlu0 %v727, 16
    %v730 = vpop.permute.xlu0 %729
    %vm732 = vcmask 260224
    %733 = vst.msk [vmem:[#allocation5] sm:$0x7f] %vm732, %v730
    %s734 = scalar_lea.vmem [#allocation2], 2
    %v735 = vld [vmem:[%s734] ss:$2 sm:$0x7f]
    %737 = vrot.lane.b32.xlu0 %v735, 32
    %v738 = vpop.permute.xlu0 %737
    %vm740 = vcmask 391424
    %741 = vst.msk [vmem:[#allocation5] sm:$0x7f] %vm740, %v738
    %s742 = scalar_lea.vmem [#allocation2], 15
    %v743 = vld [vmem:[%s742] ss:$2 sm:$0x7f]
    %745 = vrot.lane.b32.xlu0 %v743, 48
    %v746 = vpop.permute.xlu0 %745
    %vm748 = vcmask 522624
    %749 = vst.msk [vmem:[#allocation5] sm:$0x7f] %vm748, %v746
    %s750 = scalar_lea.vmem [#allocation2], 16
    %v751 = vld [vmem:[%s750] ss:$2 sm:$0x7f]
    %753 = vrot.lane.b32.xlu0 %v751, 64
    %v754 = vpop.permute.xlu0 %753
    %vm756 = vcmask 653824
    %757 = vst.msk [vmem:[#allocation5] sm:$0x7f] %vm756, %v754
    %s758 = scalar_lea.vmem [#allocation2], 17
    %v759 = vld [vmem:[%s758] ss:$2 sm:$0x7f]
    %761 = vrot.lane.b32.xlu0 %v759, 80
    %v762 = vpop.permute.xlu0 %761
    %vm764 = vcmask 785024
    %765 = vst.msk [vmem:[#allocation5] sm:$0x7f] %vm764, %v762
    %s766 = scalar_lea.vmem [#allocation2], 30
    %v767 = vld [vmem:[%s766] ss:$2 sm:$0x7f]
    %769 = vrot.lane.b32.xlu0 %v767, 96
    %v770 = vpop.permute.xlu0 %769
    %vm772 = vcmask 916224
    %773 = vst.msk [vmem:[#allocation5] sm:$0x7f] %vm772, %v770
    %s774 = scalar_lea.vmem [#allocation2], 31
    %v775 = vld [vmem:[%s774] ss:$2 sm:$0x7f]
    %777 = vrot.lane.b32.xlu0 %v775, 112
    %v778 = vpop.permute.xlu0 %777
    %vm780 = vcmask 1047424
    %781 = vst.msk [vmem:[#allocation5] sm:$0x7f] %vm780, %v778
    %s782 = scalar_lea.vmem [#allocation2], 32
    %v783 = vld [vmem:[%s782] ss:$2 sm:$0x7f]
    %784 = vst.msk [vmem:[#allocation5 + $0x8] sm:$0x7f] %vm724, %v783
    %v785 = vld [vmem:[%s766] ss:$2 sm:$0x7f]
    %v787 = vrot.slane %v785, 1
    %vm789 = vcmask 130055
    %790 = vst.msk [vmem:[#allocation5] sm:$0x80] %vm789, %v787
    %vm791 = vcmask 128000
    %792 = vst.msk [vmem:[#allocation5 + $0x10] sm:$0x3f] %vm791, %v787
    %v793 = vld [vmem:[%s774] ss:$2 sm:$0x7f]
    %v795 = vrot.slane %v793, 1
    %796 = vrot.lane.b32.xlu0 %v795, 16
    %v797 = vpop.permute.xlu0 %796
    %vm799 = vcmask 261255
    %800 = vst.msk [vmem:[#allocation5] sm:$0x80] %vm799, %v797
    %vm801 = vcmask 259200
    %802 = vst.msk [vmem:[#allocation5 + $0x10] sm:$0x3f] %vm801, %v797
    %v803 = vld [vmem:[%s782] ss:$2 sm:$0x7f]
    %v805 = vrot.slane %v803, 1
    %806 = vrot.lane.b32.xlu0 %v805, 32
    %v807 = vpop.permute.xlu0 %806
    %vm809 = vcmask 392455
    %810 = vst.msk [vmem:[#allocation5] sm:$0x80] %vm809, %v807
    %vm811 = vcmask 390400
    %812 = vst.msk [vmem:[#allocation5 + $0x10] sm:$0x3f] %vm811, %v807
    %s813 = scalar_lea.vmem [#allocation2], 45
    %v814 = vld [vmem:[%s813] ss:$2 sm:$0x7f]
    %v816 = vrot.slane %v814, 1
    %817 = vrot.lane.b32.xlu0 %v816, 48
    %v818 = vpop.permute.xlu0 %817
    %vm820 = vcmask 523655
    %821 = vst.msk [vmem:[#allocation5] sm:$0x80] %vm820, %v818
    %vm822 = vcmask 521600
    %823 = vst.msk [vmem:[#allocation5 + $0x10] sm:$0x3f] %vm822, %v818
    %s824 = scalar_lea.vmem [#allocation2], 46
    %v825 = vld [vmem:[%s824] ss:$2 sm:$0x7f]
    %v827 = vrot.slane %v825, 1
    %828 = vrot.lane.b32.xlu0 %v827, 64
    %v829 = vpop.permute.xlu0 %828
    %vm831 = vcmask 654855
    %832 = vst.msk [vmem:[#allocation5] sm:$0x80] %vm831, %v829
    %vm833 = vcmask 652800
    %834 = vst.msk [vmem:[#allocation5 + $0x10] sm:$0x3f] %vm833, %v829
    %s835 = scalar_lea.vmem [#allocation2], 47
    %v836 = vld [vmem:[%s835] ss:$2 sm:$0x7f]
    %v838 = vrot.slane %v836, 1
    %839 = vrot.lane.b32.xlu0 %v838, 80
    %v840 = vpop.permute.xlu0 %839
    %vm842 = vcmask 786055
    %843 = vst.msk [vmem:[#allocation5] sm:$0x80] %vm842, %v840
    %vm844 = vcmask 784000
    %845 = vst.msk [vmem:[#allocation5 + $0x10] sm:$0x3f] %vm844, %v840
    %s846 = scalar_lea.vmem [#allocation2], 60
    %v847 = vld [vmem:[%s846] ss:$2 sm:$0x7f]
    %v849 = vrot.slane %v847, 1
    %850 = vrot.lane.b32.xlu0 %v849, 96
    %v851 = vpop.permute.xlu0 %850
    %vm853 = vcmask 917255
    %854 = vst.msk [vmem:[#allocation5] sm:$0x80] %vm853, %v851
    %vm855 = vcmask 915200
    %856 = vst.msk [vmem:[#allocation5 + $0x10] sm:$0x3f] %vm855, %v851
    %s857 = scalar_lea.vmem [#allocation2], 61
    %v858 = vld [vmem:[%s857] ss:$2 sm:$0x7f]
    %v860 = vrot.slane %v858, 1
    %861 = vrot.lane.b32.xlu0 %v860, 112
    %v862 = vpop.permute.xlu0 %861
    %vm864 = vcmask 1048455
    %865 = vst.msk [vmem:[#allocation5] sm:$0x80] %vm864, %v862
    %vm866 = vcmask 1046400
    %867 = vst.msk [vmem:[#allocation5 + $0x10] sm:$0x3f] %vm866, %v862
    %s868 = scalar_lea.vmem [#allocation2], 62
    %v869 = vld [vmem:[%s868] ss:$2 sm:$0x7f]
    %v871 = vrot.slane %v869, 1
    %873 = vst.msk [vmem:[#allocation5 + $0x8] sm:$0x80] %vm789, %v871
    %874 = vst.msk [vmem:[#allocation5 + $0x18] sm:$0x3f] %vm791, %v871
    %v875 = vld [vmem:[%s846] ss:$2 sm:$0x7f]
    %v877 = vrot.slane %v875, 2
    %vm879 = vcmask 130054
    %880 = vst.msk [vmem:[#allocation5 + $0x10] sm:$0xc0] %vm879, %v877
    %vm881 = vcmask 126976
    %882 = vst.msk [vmem:[#allocation5 + $0x20] sm:$0x1f] %vm881, %v877
    %v883 = vld [vmem:[%s857] ss:$2 sm:$0x7f]
    %v885 = vrot.slane %v883, 2
    %886 = vrot.lane.b32.xlu0 %v885, 16
    %v887 = vpop.permute.xlu0 %886
    %vm889 = vcmask 261254
    %890 = vst.msk [vmem:[#allocation5 + $0x10] sm:$0xc0] %vm889, %v887
    %vm891 = vcmask 258176
    %892 = vst.msk [vmem:[#allocation5 + $0x20] sm:$0x1f] %vm891, %v887
    %v893 = vld [vmem:[%s868] ss:$2 sm:$0x7f]
    %v895 = vrot.slane %v893, 2
    %896 = vrot.lane.b32.xlu0 %v895, 32
    %v897 = vpop.permute.xlu0 %896
    %vm899 = vcmask 392454
    %900 = vst.msk [vmem:[#allocation5 + $0x10] sm:$0xc0] %vm899, %v897
    %vm901 = vcmask 389376
    %902 = vst.msk [vmem:[#allocation5 + $0x20] sm:$0x1f] %vm901, %v897
    %s903 = scalar_lea.vmem [#allocation2], 75
    %v904 = vld [vmem:[%s903] ss:$2 sm:$0x7f]
    %v906 = vrot.slane %v904, 2
    %907 = vrot.lane.b32.xlu0 %v906, 48
    %v908 = vpop.permute.xlu0 %907
    %vm910 = vcmask 523654
    %911 = vst.msk [vmem:[#allocation5 + $0x10] sm:$0xc0] %vm910, %v908
    %vm912 = vcmask 520576
    %913 = vst.msk [vmem:[#allocation5 + $0x20] sm:$0x1f] %vm912, %v908
    %s914 = scalar_lea.vmem [#allocation2], 76
    %v915 = vld [vmem:[%s914] ss:$2 sm:$0x7f]
    %v917 = vrot.slane %v915, 2
    %918 = vrot.lane.b32.xlu0 %v917, 64
    %v919 = vpop.permute.xlu0 %918
    %vm921 = vcmask 654854
    %922 = vst.msk [vmem:[#allocation5 + $0x10] sm:$0xc0] %vm921, %v919
    %vm923 = vcmask 651776
    %924 = vst.msk [vmem:[#allocation5 + $0x20] sm:$0x1f] %vm923, %v919
    %s925 = scalar_lea.vmem [#allocation2], 77
    %v926 = vld [vmem:[%s925] ss:$2 sm:$0x7f]
    %v928 = vrot.slane %v926, 2
    %929 = vrot.lane.b32.xlu0 %v928, 80
    %v930 = vpop.permute.xlu0 %929
    %vm932 = vcmask 786054
    %933 = vst.msk [vmem:[#allocation5 + $0x10] sm:$0xc0] %vm932, %v930
    %vm934 = vcmask 782976
    %935 = vst.msk [vmem:[#allocation5 + $0x20] sm:$0x1f] %vm934, %v930
    %s936 = scalar_lea.vmem [#allocation2], 90
    %v937 = vld [vmem:[%s936] ss:$2 sm:$0x7f]
    %v939 = vrot.slane %v937, 2
    %940 = vrot.lane.b32.xlu0 %v939, 96
    %v941 = vpop.permute.xlu0 %940
    %vm943 = vcmask 917254
    %944 = vst.msk [vmem:[#allocation5 + $0x10] sm:$0xc0] %vm943, %v941
    %vm945 = vcmask 914176
    %946 = vst.msk [vmem:[#allocation5 + $0x20] sm:$0x1f] %vm945, %v941
    %s947 = scalar_lea.vmem [#allocation2], 91
    %v948 = vld [vmem:[%s947] ss:$2 sm:$0x7f]
    %v950 = vrot.slane %v948, 2
    %951 = vrot.lane.b32.xlu0 %v950, 112
    %v952 = vpop.permute.xlu0 %951
    %vm954 = vcmask 1048454
    %955 = vst.msk [vmem:[#allocation5 + $0x10] sm:$0xc0] %vm954, %v952
    %vm956 = vcmask 1045376
    %957 = vst.msk [vmem:[#allocation5 + $0x20] sm:$0x1f] %vm956, %v952
    %s958 = scalar_lea.vmem [#allocation2], 92
    %v959 = vld [vmem:[%s958] ss:$2 sm:$0x7f]
    %v961 = vrot.slane %v959, 2
    %963 = vst.msk [vmem:[#allocation5 + $0x18] sm:$0xc0] %vm879, %v961
    %964 = vst.msk [vmem:[#allocation5 + $0x28] sm:$0x1f] %vm881, %v961
    %v965 = vld [vmem:[%s936] ss:$2 sm:$0x7f]
    %v967 = vrot.slane %v965, 3
    %vm969 = vcmask 130053
    %970 = vst.msk [vmem:[#allocation5 + $0x20] sm:$0xe0] %vm969, %v967
    %vm971 = vcmask 125952
    %972 = vst.msk [vmem:[#allocation5 + $0x30] sm:$0xf] %vm971, %v967
    %v973 = vld [vmem:[%s947] ss:$2 sm:$0x7f]
    %v975 = vrot.slane %v973, 3
    %976 = vrot.lane.b32.xlu0 %v975, 16
    %v977 = vpop.permute.xlu0 %976
    %vm979 = vcmask 261253
    %980 = vst.msk [vmem:[#allocation5 + $0x20] sm:$0xe0] %vm979, %v977
    %vm981 = vcmask 257152
    %982 = vst.msk [vmem:[#allocation5 + $0x30] sm:$0xf] %vm981, %v977
    %v983 = vld [vmem:[%s958] ss:$2 sm:$0x7f]
    %v985 = vrot.slane %v983, 3
    %986 = vrot.lane.b32.xlu0 %v985, 32
    %v987 = vpop.permute.xlu0 %986
    %vm989 = vcmask 392453
    %990 = vst.msk [vmem:[#allocation5 + $0x20] sm:$0xe0] %vm989, %v987
    %vm991 = vcmask 388352
    %992 = vst.msk [vmem:[#allocation5 + $0x30] sm:$0xf] %vm991, %v987
    %s993 = scalar_lea.vmem [#allocation2], 105
    %v994 = vld [vmem:[%s993] ss:$2 sm:$0x7f]
    %v996 = vrot.slane %v994, 3
    %997 = vrot.lane.b32.xlu0 %v996, 48
    %v998 = vpop.permute.xlu0 %997
    %vm1000 = vcmask 523653
    %1001 = vst.msk [vmem:[#allocation5 + $0x20] sm:$0xe0] %vm1000, %v998
    %vm1002 = vcmask 519552
    %1003 = vst.msk [vmem:[#allocation5 + $0x30] sm:$0xf] %vm1002, %v998
    %s1004 = scalar_lea.vmem [#allocation2], 106
    %v1005 = vld [vmem:[%s1004] ss:$2 sm:$0x7f]
    %v1007 = vrot.slane %v1005, 3
    %1008 = vrot.lane.b32.xlu0 %v1007, 64
    %v1009 = vpop.permute.xlu0 %1008
    %vm1011 = vcmask 654853
    %1012 = vst.msk [vmem:[#allocation5 + $0x20] sm:$0xe0] %vm1011, %v1009
    %vm1013 = vcmask 650752
    %1014 = vst.msk [vmem:[#allocation5 + $0x30] sm:$0xf] %vm1013, %v1009
    %s1015 = scalar_lea.vmem [#allocation2], 107
    %v1016 = vld [vmem:[%s1015] ss:$2 sm:$0x7f]
    %v1018 = vrot.slane %v1016, 3
    %1019 = vrot.lane.b32.xlu0 %v1018, 80
    %v1020 = vpop.permute.xlu0 %1019
    %vm1022 = vcmask 786053
    %1023 = vst.msk [vmem:[#allocation5 + $0x20] sm:$0xe0] %vm1022, %v1020
    %vm1024 = vcmask 781952
    %1025 = vst.msk [vmem:[#allocation5 + $0x30] sm:$0xf] %vm1024, %v1020
    %s1026 = scalar_lea.vmem [#allocation2], 120
    %v1027 = vld [vmem:[%s1026] ss:$2 sm:$0x7f]
    %v1029 = vrot.slane %v1027, 3
    %1030 = vrot.lane.b32.xlu0 %v1029, 96
    %v1031 = vpop.permute.xlu0 %1030
    %vm1033 = vcmask 917253
    %1034 = vst.msk [vmem:[#allocation5 + $0x20] sm:$0xe0] %vm1033, %v1031
    %vm1035 = vcmask 913152
    %1036 = vst.msk [vmem:[#allocation5 + $0x30] sm:$0xf] %vm1035, %v1031
    %s1037 = scalar_lea.vmem [#allocation2], 121
    %v1038 = vld [vmem:[%s1037] ss:$2 sm:$0x7f]
    %v1040 = vrot.slane %v1038, 3
    %1041 = vrot.lane.b32.xlu0 %v1040, 112
    %v1042 = vpop.permute.xlu0 %1041
    %vm1044 = vcmask 1048453
    %1045 = vst.msk [vmem:[#allocation5 + $0x20] sm:$0xe0] %vm1044, %v1042
    %vm1046 = vcmask 1044352
    %1047 = vst.msk [vmem:[#allocation5 + $0x30] sm:$0xf] %vm1046, %v1042
    %s1048 = scalar_lea.vmem [#allocation2], 122
    %v1049 = vld [vmem:[%s1048] ss:$2 sm:$0x7f]
    %v1051 = vrot.slane %v1049, 3
    %1053 = vst.msk [vmem:[#allocation5 + $0x28] sm:$0xe0] %vm969, %v1051
    %1054 = vst.msk [vmem:[#allocation5 + $0x38] sm:$0xf] %vm971, %v1051
    %v1055 = vld [vmem:[%s1026] ss:$2 sm:$0x7f]
    %v1057 = vrot.slane %v1055, 4
    %vm1059 = vcmask 130052
    %1060 = vst.msk [vmem:[#allocation5 + $0x30] sm:$0xf0] %vm1059, %v1057
    %vm1061 = vcmask 124928
    %1062 = vst.msk [vmem:[#allocation5 + $0x40] sm:$0x7] %vm1061, %v1057
    %v1063 = vld [vmem:[%s1037] ss:$2 sm:$0x7f]
    %v1065 = vrot.slane %v1063, 4
    %1066 = vrot.lane.b32.xlu0 %v1065, 16
    %v1067 = vpop.permute.xlu0 %1066
    %vm1069 = vcmask 261252
    %1070 = vst.msk [vmem:[#allocation5 + $0x30] sm:$0xf0] %vm1069, %v1067
    %vm1071 = vcmask 256128
    %1072 = vst.msk [vmem:[#allocation5 + $0x40] sm:$0x7] %vm1071, %v1067
    %v1073 = vld [vmem:[%s1048] ss:$2 sm:$0x7f]
    %v1075 = vrot.slane %v1073, 4
    %1076 = vrot.lane.b32.xlu0 %v1075, 32
    %v1077 = vpop.permute.xlu0 %1076
    %vm1079 = vcmask 392452
    %1080 = vst.msk [vmem:[#allocation5 + $0x30] sm:$0xf0] %vm1079, %v1077
    %vm1081 = vcmask 387328
    %1082 = vst.msk [vmem:[#allocation5 + $0x40] sm:$0x7] %vm1081, %v1077
    %s1083 = scalar_lea.vmem [#allocation2], 135
    %v1084 = vld [vmem:[%s1083] ss:$2 sm:$0x7f]
    %v1086 = vrot.slane %v1084, 4
    %1087 = vrot.lane.b32.xlu0 %v1086, 48
    %v1088 = vpop.permute.xlu0 %1087
    %vm1090 = vcmask 523652
    %1091 = vst.msk [vmem:[#allocation5 + $0x30] sm:$0xf0] %vm1090, %v1088
    %vm1092 = vcmask 518528
    %1093 = vst.msk [vmem:[#allocation5 + $0x40] sm:$0x7] %vm1092, %v1088
    %s1094 = scalar_lea.vmem [#allocation2], 136
    %v1095 = vld [vmem:[%s1094] ss:$2 sm:$0x7f]
    %v1097 = vrot.slane %v1095, 4
    %1098 = vrot.lane.b32.xlu0 %v1097, 64
    %v1099 = vpop.permute.xlu0 %1098
    %vm1101 = vcmask 654852
    %1102 = vst.msk [vmem:[#allocation5 + $0x30] sm:$0xf0] %vm1101, %v1099
    %vm1103 = vcmask 649728
    %1104 = vst.msk [vmem:[#allocation5 + $0x40] sm:$0x7] %vm1103, %v1099
    %s1105 = scalar_lea.vmem [#allocation2], 137
    %v1106 = vld [vmem:[%s1105] ss:$2 sm:$0x7f]
    %v1108 = vrot.slane %v1106, 4
    %1109 = vrot.lane.b32.xlu0 %v1108, 80
    %v1110 = vpop.permute.xlu0 %1109
    %vm1112 = vcmask 786052
    %1113 = vst.msk [vmem:[#allocation5 + $0x30] sm:$0xf0] %vm1112, %v1110
    %vm1114 = vcmask 780928
    %1115 = vst.msk [vmem:[#allocation5 + $0x40] sm:$0x7] %vm1114, %v1110
    %s1116 = scalar_lea.vmem [#allocation2], 150
    %v1117 = vld [vmem:[%s1116] ss:$2 sm:$0x7f]
    %v1119 = vrot.slane %v1117, 4
    %1120 = vrot.lane.b32.xlu0 %v1119, 96
    %v1121 = vpop.permute.xlu0 %1120
    %vm1123 = vcmask 917252
    %1124 = vst.msk [vmem:[#allocation5 + $0x30] sm:$0xf0] %vm1123, %v1121
    %vm1125 = vcmask 912128
    %1126 = vst.msk [vmem:[#allocation5 + $0x40] sm:$0x7] %vm1125, %v1121
    %s1127 = scalar_lea.vmem [#allocation2], 151
    %v1128 = vld [vmem:[%s1127] ss:$2 sm:$0x7f]
    %v1130 = vrot.slane %v1128, 4
    %1131 = vrot.lane.b32.xlu0 %v1130, 112
    %v1132 = vpop.permute.xlu0 %1131
    %vm1134 = vcmask 1048452
    %1135 = vst.msk [vmem:[#allocation5 + $0x30] sm:$0xf0] %vm1134, %v1132
    %vm1136 = vcmask 1043328
    %1137 = vst.msk [vmem:[#allocation5 + $0x40] sm:$0x7] %vm1136, %v1132
    %s1138 = scalar_lea.vmem [#allocation2], 152
    %v1139 = vld [vmem:[%s1138] ss:$2 sm:$0x7f]
    %v1141 = vrot.slane %v1139, 4
    %1143 = vst.msk [vmem:[#allocation5 + $0x38] sm:$0xf0] %vm1059, %v1141
    %1144 = vst.msk [vmem:[#allocation5 + $0x48] sm:$0x7] %vm1061, %v1141
    %v1145 = vld [vmem:[%s1116] ss:$2 sm:$0x7f]
    %v1147 = vrot.slane %v1145, 5
    %vm1149 = vcmask 130051
    %1150 = vst.msk [vmem:[#allocation5 + $0x40] sm:$0xf8] %vm1149, %v1147
    %1151 = vst.msk [vmem:[#allocation5 + $0x50] sm:$0x3] %vm721, %v1147
    %v1152 = vld [vmem:[%s1127] ss:$2 sm:$0x7f]
    %v1154 = vrot.slane %v1152, 5
    %1155 = vrot.lane.b32.xlu0 %v1154, 16
    %v1156 = vpop.permute.xlu0 %1155
    %vm1158 = vcmask 261251
    %1159 = vst.msk [vmem:[#allocation5 + $0x40] sm:$0xf8] %vm1158, %v1156
    %vm1160 = vcmask 255104
    %1161 = vst.msk [vmem:[#allocation5 + $0x50] sm:$0x3] %vm1160, %v1156
    %v1162 = vld [vmem:[%s1138] ss:$2 sm:$0x7f]
    %v1164 = vrot.slane %v1162, 5
    %1165 = vrot.lane.b32.xlu0 %v1164, 32
    %v1166 = vpop.permute.xlu0 %1165
    %vm1168 = vcmask 392451
    %1169 = vst.msk [vmem:[#allocation5 + $0x40] sm:$0xf8] %vm1168, %v1166
    %vm1170 = vcmask 386304
    %1171 = vst.msk [vmem:[#allocation5 + $0x50] sm:$0x3] %vm1170, %v1166
    %s1172 = scalar_lea.vmem [#allocation2], 165
    %v1173 = vld [vmem:[%s1172] ss:$2 sm:$0x7f]
    %v1175 = vrot.slane %v1173, 5
    %1176 = vrot.lane.b32.xlu0 %v1175, 48
    %v1177 = vpop.permute.xlu0 %1176
    %vm1179 = vcmask 523651
    %1180 = vst.msk [vmem:[#allocation5 + $0x40] sm:$0xf8] %vm1179, %v1177
    %vm1181 = vcmask 517504
    %1182 = vst.msk [vmem:[#allocation5 + $0x50] sm:$0x3] %vm1181, %v1177
    %s1183 = scalar_lea.vmem [#allocation2], 166
    %v1184 = vld [vmem:[%s1183] ss:$2 sm:$0x7f]
    %v1186 = vrot.slane %v1184, 5
    %1187 = vrot.lane.b32.xlu0 %v1186, 64
    %v1188 = vpop.permute.xlu0 %1187
    %vm1190 = vcmask 654851
    %1191 = vst.msk [vmem:[#allocation5 + $0x40] sm:$0xf8] %vm1190, %v1188
    %vm1192 = vcmask 648704
    %1193 = vst.msk [vmem:[#allocation5 + $0x50] sm:$0x3] %vm1192, %v1188
    %s1194 = scalar_lea.vmem [#allocation2], 167
    %v1195 = vld [vmem:[%s1194] ss:$2 sm:$0x7f]
    %v1197 = vrot.slane %v1195, 5
    %1198 = vrot.lane.b32.xlu0 %v1197, 80
    %v1199 = vpop.permute.xlu0 %1198
    %vm1201 = vcmask 786051
    %1202 = vst.msk [vmem:[#allocation5 + $0x40] sm:$0xf8] %vm1201, %v1199
    %vm1203 = vcmask 779904
    %1204 = vst.msk [vmem:[#allocation5 + $0x50] sm:$0x3] %vm1203, %v1199
    %s1205 = scalar_lea.vmem [#allocation2], 180
    %v1206 = vld [vmem:[%s1205] ss:$2 sm:$0x7f]
    %v1208 = vrot.slane %v1206, 5
    %1209 = vrot.lane.b32.xlu0 %v1208, 96
    %v1210 = vpop.permute.xlu0 %1209
    %vm1212 = vcmask 917251
    %1213 = vst.msk [vmem:[#allocation5 + $0x40] sm:$0xf8] %vm1212, %v1210
    %vm1214 = vcmask 911104
    %1215 = vst.msk [vmem:[#allocation5 + $0x50] sm:$0x3] %vm1214, %v1210
    %s1216 = scalar_lea.vmem [#allocation2], 181
    %v1217 = vld [vmem:[%s1216] ss:$2 sm:$0x7f]
    %v1219 = vrot.slane %v1217, 5
    %1220 = vrot.lane.b32.xlu0 %v1219, 112
    %v1221 = vpop.permute.xlu0 %1220
    %vm1223 = vcmask 1048451
    %1224 = vst.msk [vmem:[#allocation5 + $0x40] sm:$0xf8] %vm1223, %v1221
    %vm1225 = vcmask 1042304
    %1226 = vst.msk [vmem:[#allocation5 + $0x50] sm:$0x3] %vm1225, %v1221
    %s1227 = scalar_lea.vmem [#allocation2], 182
    %v1228 = vld [vmem:[%s1227] ss:$2 sm:$0x7f]
    %v1230 = vrot.slane %v1228, 5
    %1232 = vst.msk [vmem:[#allocation5 + $0x48] sm:$0xf8] %vm1149, %v1230
    %1233 = vst.msk [vmem:[#allocation5 + $0x58] sm:$0x3] %vm721, %v1230
    %v1234 = vld [vmem:[%s1205] ss:$2 sm:$0x7f]
    %v1236 = vrot.slane %v1234, 6
    %vm1238 = vcmask 130050
    %1239 = vst.msk [vmem:[#allocation5 + $0x50] sm:$0xfc] %vm1238, %v1236
    %vm1240 = vcmask 122880
    %1241 = vst.msk [vmem:[#allocation5 + $0x60] sm:$0x1] %vm1240, %v1236
    %v1242 = vld [vmem:[%s1216] ss:$2 sm:$0x7f]
    %v1244 = vrot.slane %v1242, 6
    %1245 = vrot.lane.b32.xlu0 %v1244, 16
    %v1246 = vpop.permute.xlu0 %1245
    %vm1248 = vcmask 261250
    %1249 = vst.msk [vmem:[#allocation5 + $0x50] sm:$0xfc] %vm1248, %v1246
    %vm1250 = vcmask 254080
    %1251 = vst.msk [vmem:[#allocation5 + $0x60] sm:$0x1] %vm1250, %v1246
    %v1252 = vld [vmem:[%s1227] ss:$2 sm:$0x7f]
    %v1254 = vrot.slane %v1252, 6
    %1255 = vrot.lane.b32.xlu0 %v1254, 32
    %v1256 = vpop.permute.xlu0 %1255
    %vm1258 = vcmask 392450
    %1259 = vst.msk [vmem:[#allocation5 + $0x50] sm:$0xfc] %vm1258, %v1256
    %vm1260 = vcmask 385280
    %1261 = vst.msk [vmem:[#allocation5 + $0x60] sm:$0x1] %vm1260, %v1256
    %s1262 = scalar_lea.vmem [#allocation2], 195
    %v1263 = vld [vmem:[%s1262] ss:$2 sm:$0x7f]
    %v1265 = vrot.slane %v1263, 6
    %1266 = vrot.lane.b32.xlu0 %v1265, 48
    %v1267 = vpop.permute.xlu0 %1266
    %vm1269 = vcmask 523650
    %1270 = vst.msk [vmem:[#allocation5 + $0x50] sm:$0xfc] %vm1269, %v1267
    %vm1271 = vcmask 516480
    %1272 = vst.msk [vmem:[#allocation5 + $0x60] sm:$0x1] %vm1271, %v1267
    %s1273 = scalar_lea.vmem [#allocation2], 196
    %v1274 = vld [vmem:[%s1273] ss:$2 sm:$0x7f]
    %v1276 = vrot.slane %v1274, 6
    %1277 = vrot.lane.b32.xlu0 %v1276, 64
    %v1278 = vpop.permute.xlu0 %1277
    %vm1280 = vcmask 654850
    %1281 = vst.msk [vmem:[#allocation5 + $0x50] sm:$0xfc] %vm1280, %v1278
    %vm1282 = vcmask 647680
    %1283 = vst.msk [vmem:[#allocation5 + $0x60] sm:$0x1] %vm1282, %v1278
    %s1284 = scalar_lea.vmem [#allocation2], 197
    %v1285 = vld [vmem:[%s1284] ss:$2 sm:$0x7f]
    %v1287 = vrot.slane %v1285, 6
    %1288 = vrot.lane.b32.xlu0 %v1287, 80
    %v1289 = vpop.permute.xlu0 %1288
    %vm1291 = vcmask 786050
    %1292 = vst.msk [vmem:[#allocation5 + $0x50] sm:$0xfc] %vm1291, %v1289
    %vm1293 = vcmask 778880
    %1294 = vst.msk [vmem:[#allocation5 + $0x60] sm:$0x1] %vm1293, %v1289
    %s1295 = scalar_lea.vmem [#allocation2], 210
    %v1296 = vld [vmem:[%s1295] ss:$2 sm:$0x7f]
    %v1298 = vrot.slane %v1296, 6
    %1299 = vrot.lane.b32.xlu0 %v1298, 96
    %v1300 = vpop.permute.xlu0 %1299
    %vm1302 = vcmask 917250
    %1303 = vst.msk [vmem:[#allocation5 + $0x50] sm:$0xfc] %vm1302, %v1300
    %vm1304 = vcmask 910080
    %1305 = vst.msk [vmem:[#allocation5 + $0x60] sm:$0x1] %vm1304, %v1300
    %s1306 = scalar_lea.vmem [#allocation2], 211
    %v1307 = vld [vmem:[%s1306] ss:$2 sm:$0x7f]
    %v1309 = vrot.slane %v1307, 6
    %1310 = vrot.lane.b32.xlu0 %v1309, 112
    %v1311 = vpop.permute.xlu0 %1310
    %vm1313 = vcmask 1048450
    %1314 = vst.msk [vmem:[#allocation5 + $0x50] sm:$0xfc] %vm1313, %v1311
    %vm1315 = vcmask 1041280
    %1316 = vst.msk [vmem:[#allocation5 + $0x60] sm:$0x1] %vm1315, %v1311
    %s1317 = scalar_lea.vmem [#allocation2], 212
    %v1318 = vld [vmem:[%s1317] ss:$2 sm:$0x7f]
    %v1320 = vrot.slane %v1318, 6
    %1322 = vst.msk [vmem:[#allocation5 + $0x58] sm:$0xfc] %vm1238, %v1320
    %1323 = vst.msk [vmem:[#allocation5 + $0x68] sm:$0x1] %vm1240, %v1320
    %s1324 = scalar_lea.vmem [#allocation2], 225
    %v1325 = vld [vmem:[%s1324] ss:$2 sm:$0x7f]
    %v1327 = vrot.slane %v1325, 7
    %vm1329 = vcmask 130049
    %1330 = vst.msk [vmem:[#allocation5 + $0x60] sm:$0xfe] %vm1329, %v1327
    %s1331 = scalar_lea.vmem [#allocation2], 226
    %v1332 = vld [vmem:[%s1331] ss:$2 sm:$0x7f]
    %v1334 = vrot.slane %v1332, 7
    %1335 = vrot.lane.b32.xlu0 %v1334, 16
    %v1336 = vpop.permute.xlu0 %1335
    %vm1338 = vcmask 261249
    %1339 = vst.msk [vmem:[#allocation5 + $0x60] sm:$0xfe] %vm1338, %v1336
    %s1340 = scalar_lea.vmem [#allocation2], 227
    %v1341 = vld [vmem:[%s1340] ss:$2 sm:$0x7f]
    %v1343 = vrot.slane %v1341, 7
    %1344 = vrot.lane.b32.xlu0 %v1343, 32
    %v1345 = vpop.permute.xlu0 %1344
    %vm1347 = vcmask 392449
    %1348 = vst.msk [vmem:[#allocation5 + $0x60] sm:$0xfe] %vm1347, %v1345
    %s1349 = scalar_lea.vmem [#allocation2], 240
    %v1350 = vld [vmem:[%s1349] ss:$2 sm:$0x7f]
    %v1352 = vrot.slane %v1350, 7
    %1353 = vrot.lane.b32.xlu0 %v1352, 48
    %v1354 = vpop.permute.xlu0 %1353
    %vm1356 = vcmask 523649
    %1357 = vst.msk [vmem:[#allocation5 + $0x60] sm:$0xfe] %vm1356, %v1354
    %s1358 = scalar_lea.vmem [#allocation2], 241
    %v1359 = vld [vmem:[%s1358] ss:$2 sm:$0x7f]
    %v1361 = vrot.slane %v1359, 7
    %1362 = vrot.lane.b32.xlu0 %v1361, 64
    %v1363 = vpop.permute.xlu0 %1362
    %vm1365 = vcmask 654849
    %1366 = vst.msk [vmem:[#allocation5 + $0x60] sm:$0xfe] %vm1365, %v1363
    %s1367 = scalar_lea.vmem [#allocation2], 242
    %v1368 = vld [vmem:[%s1367] ss:$2 sm:$0x7f]
    %v1370 = vrot.slane %v1368, 7
    %1371 = vrot.lane.b32.xlu0 %v1370, 80
    %v1372 = vpop.permute.xlu0 %1371
    %vm1374 = vcmask 786049
    %1375 = vst.msk [vmem:[#allocation5 + $0x60] sm:$0xfe] %vm1374, %v1372
    %s1376 = scalar_lea.vmem [#allocation2], 255
    %v1377 = vld [vmem:[%s1376] ss:$2 sm:$0x7f]
    %v1379 = vrot.slane %v1377, 7
    %1380 = vrot.lane.b32.xlu0 %v1379, 96
    %v1381 = vpop.permute.xlu0 %1380
    %vm1383 = vcmask 917249
    %1384 = vst.msk [vmem:[#allocation5 + $0x60] sm:$0xfe] %vm1383, %v1381
    %s1385 = scalar_lea.vmem [#allocation2], 256
    %v1386 = vld [vmem:[%s1385] ss:$2 sm:$0x7f]
    %v1388 = vrot.slane %v1386, 7
    %1389 = vrot.lane.b32.xlu0 %v1388, 112
    %v1390 = vpop.permute.xlu0 %1389
    %vm1392 = vcmask 1048449
    %1393 = vst.msk [vmem:[#allocation5 + $0x60] sm:$0xfe] %vm1392, %v1390
    %s1394 = scalar_lea.vmem [#allocation2], 257
    %v1395 = vld [vmem:[%s1394] ss:$2 sm:$0x7f]
    %v1397 = vrot.slane %v1395, 7
    %1399 = vst.msk [vmem:[#allocation5 + $0x68] sm:$0xfe] %vm1329, %v1397
    %v1400 = vld [vmem:[%s1376] ss:$2 sm:$0x7f]
    %1401 = vst.msk [vmem:[#allocation5 + $0x70] sm:$0x7f] %vm724, %v1400
    %v1402 = vld [vmem:[%s1385] ss:$2 sm:$0x7f]
    %1404 = vrot.lane.b32.xlu0 %v1402, 16
    %v1405 = vpop.permute.xlu0 %1404
    %1407 = vst.msk [vmem:[#allocation5 + $0x70] sm:$0x7f] %vm732, %v1405
    %v1408 = vld [vmem:[%s1394] ss:$2 sm:$0x7f]
    %1410 = vrot.lane.b32.xlu0 %v1408, 32
    %v1411 = vpop.permute.xlu0 %1410
    %1413 = vst.msk [vmem:[#allocation5 + $0x70] sm:$0x7f] %vm740, %v1411
    %s1414 = scalar_lea.vmem [#allocation2], 270
    %v1415 = vld [vmem:[%s1414] ss:$2 sm:$0x7f]
    %1417 = vrot.lane.b32.xlu0 %v1415, 48
    %v1418 = vpop.permute.xlu0 %1417
    %1420 = vst.msk [vmem:[#allocation5 + $0x70] sm:$0x7f] %vm748, %v1418
    %s1421 = scalar_lea.vmem [#allocation2], 271
    %v1422 = vld [vmem:[%s1421] ss:$2 sm:$0x7f]
    %1424 = vrot.lane.b32.xlu0 %v1422, 64
    %v1425 = vpop.permute.xlu0 %1424
    %1427 = vst.msk [vmem:[#allocation5 + $0x70] sm:$0x7f] %vm756, %v1425
    %s1428 = scalar_lea.vmem [#allocation2], 272
    %v1429 = vld [vmem:[%s1428] ss:$2 sm:$0x7f]
    %1431 = vrot.lane.b32.xlu0 %v1429, 80
    %v1432 = vpop.permute.xlu0 %1431
    %1434 = vst.msk [vmem:[#allocation5 + $0x70] sm:$0x7f] %vm764, %v1432
    %s1435 = scalar_lea.vmem [#allocation2], 285
    %v1436 = vld [vmem:[%s1435] ss:$2 sm:$0x7f]
    %1438 = vrot.lane.b32.xlu0 %v1436, 96
    %v1439 = vpop.permute.xlu0 %1438
    %1441 = vst.msk [vmem:[#allocation5 + $0x70] sm:$0x7f] %vm772, %v1439
    %s1442 = scalar_lea.vmem [#allocation2], 286
    %v1443 = vld [vmem:[%s1442] ss:$2 sm:$0x7f]
    %1445 = vrot.lane.b32.xlu0 %v1443, 112
    %v1446 = vpop.permute.xlu0 %1445
    %1448 = vst.msk [vmem:[#allocation5 + $0x70] sm:$0x7f] %vm780, %v1446
    %s1449 = scalar_lea.vmem [#allocation2], 287
    %v1450 = vld [vmem:[%s1449] ss:$2 sm:$0x7f]
    %1451 = vst.msk [vmem:[#allocation5 + $0x78] sm:$0x7f] %vm724, %v1450
    %v1452 = vld [vmem:[%s1435] ss:$2 sm:$0x7f]
    %v1454 = vrot.slane %v1452, 1
    %1456 = vst.msk [vmem:[#allocation5 + $0x70] sm:$0x80] %vm789, %v1454
    %1457 = vst.msk [vmem:[#allocation5 + $0x80] sm:$0x3f] %vm791, %v1454
    %v1458 = vld [vmem:[%s1442] ss:$2 sm:$0x7f]
    %v1460 = vrot.slane %v1458, 1
    %1461 = vrot.lane.b32.xlu0 %v1460, 16
    %v1462 = vpop.permute.xlu0 %1461
    %1464 = vst.msk [vmem:[#allocation5 + $0x70] sm:$0x80] %vm799, %v1462
    %1465 = vst.msk [vmem:[#allocation5 + $0x80] sm:$0x3f] %vm801, %v1462
    %v1466 = vld [vmem:[%s1449] ss:$2 sm:$0x7f]
    %v1468 = vrot.slane %v1466, 1
    %1469 = vrot.lane.b32.xlu0 %v1468, 32
    %v1470 = vpop.permute.xlu0 %1469
    %1472 = vst.msk [vmem:[#allocation5 + $0x70] sm:$0x80] %vm809, %v1470
    %1473 = vst.msk [vmem:[#allocation5 + $0x80] sm:$0x3f] %vm811, %v1470
    %s1474 = scalar_lea.vmem [#allocation2], 300
    %v1475 = vld [vmem:[%s1474] ss:$2 sm:$0x7f]
    %v1477 = vrot.slane %v1475, 1
    %1478 = vrot.lane.b32.xlu0 %v1477, 48
    %v1479 = vpop.permute.xlu0 %1478
    %1481 = vst.msk [vmem:[#allocation5 + $0x70] sm:$0x80] %vm820, %v1479
    %1482 = vst.msk [vmem:[#allocation5 + $0x80] sm:$0x3f] %vm822, %v1479
    %s1483 = scalar_lea.vmem [#allocation2], 301
    %v1484 = vld [vmem:[%s1483] ss:$2 sm:$0x7f]
    %v1486 = vrot.slane %v1484, 1
    %1487 = vrot.lane.b32.xlu0 %v1486, 64
    %v1488 = vpop.permute.xlu0 %1487
    %1490 = vst.msk [vmem:[#allocation5 + $0x70] sm:$0x80] %vm831, %v1488
    %1491 = vst.msk [vmem:[#allocation5 + $0x80] sm:$0x3f] %vm833, %v1488
    %s1492 = scalar_lea.vmem [#allocation2], 302
    %v1493 = vld [vmem:[%s1492] ss:$2 sm:$0x7f]
    %v1495 = vrot.slane %v1493, 1
    %1496 = vrot.lane.b32.xlu0 %v1495, 80
    %v1497 = vpop.permute.xlu0 %1496
    %1499 = vst.msk [vmem:[#allocation5 + $0x70] sm:$0x80] %vm842, %v1497
    %1500 = vst.msk [vmem:[#allocation5 + $0x80] sm:$0x3f] %vm844, %v1497
    %s1501 = scalar_lea.vmem [#allocation2], 315
    %v1502 = vld [vmem:[%s1501] ss:$2 sm:$0x7f]
    %v1504 = vrot.slane %v1502, 1
    %1505 = vrot.lane.b32.xlu0 %v1504, 96
    %v1506 = vpop.permute.xlu0 %1505
    %1508 = vst.msk [vmem:[#allocation5 + $0x70] sm:$0x80] %vm853, %v1506
    %1509 = vst.msk [vmem:[#allocation5 + $0x80] sm:$0x3f] %vm855, %v1506
    %s1510 = scalar_lea.vmem [#allocation2], 316
    %v1511 = vld [vmem:[%s1510] ss:$2 sm:$0x7f]
    %v1513 = vrot.slane %v1511, 1
    %1514 = vrot.lane.b32.xlu0 %v1513, 112
    %v1515 = vpop.permute.xlu0 %1514
    %1517 = vst.msk [vmem:[#allocation5 + $0x70] sm:$0x80] %vm864, %v1515
    %1518 = vst.msk [vmem:[#allocation5 + $0x80] sm:$0x3f] %vm866, %v1515
    %s1519 = scalar_lea.vmem [#allocation2], 317
    %v1520 = vld [vmem:[%s1519] ss:$2 sm:$0x7f]
    %v1522 = vrot.slane %v1520, 1
    %1524 = vst.msk [vmem:[#allocation5 + $0x78] sm:$0x80] %vm789, %v1522
    %1525 = vst.msk [vmem:[#allocation5 + $0x88] sm:$0x3f] %vm791, %v1522
    %v1526 = vld [vmem:[%s1501] ss:$2 sm:$0x7f]
    %v1528 = vrot.slane %v1526, 2
    %1530 = vst.msk [vmem:[#allocation5 + $0x80] sm:$0xc0] %vm879, %v1528
    %1531 = vst.msk [vmem:[#allocation5 + $0x90] sm:$0x1f] %vm881, %v1528
    %v1532 = vld [vmem:[%s1510] ss:$2 sm:$0x7f]
    %v1534 = vrot.slane %v1532, 2
    %1535 = vrot.lane.b32.xlu0 %v1534, 16
    %v1536 = vpop.permute.xlu0 %1535
    %1538 = vst.msk [vmem:[#allocation5 + $0x80] sm:$0xc0] %vm889, %v1536
    %1539 = vst.msk [vmem:[#allocation5 + $0x90] sm:$0x1f] %vm891, %v1536
    %v1540 = vld [vmem:[%s1519] ss:$2 sm:$0x7f]
    %v1542 = vrot.slane %v1540, 2
    %1543 = vrot.lane.b32.xlu0 %v1542, 32
    %v1544 = vpop.permute.xlu0 %1543
    %1546 = vst.msk [vmem:[#allocation5 + $0x80] sm:$0xc0] %vm899, %v1544
    %1547 = vst.msk [vmem:[#allocation5 + $0x90] sm:$0x1f] %vm901, %v1544
    %s1548 = scalar_lea.vmem [#allocation2], 330
    %v1549 = vld [vmem:[%s1548] ss:$2 sm:$0x7f]
    %v1551 = vrot.slane %v1549, 2
    %1552 = vrot.lane.b32.xlu0 %v1551, 48
    %v1553 = vpop.permute.xlu0 %1552
    %1555 = vst.msk [vmem:[#allocation5 + $0x80] sm:$0xc0] %vm910, %v1553
    %1556 = vst.msk [vmem:[#allocation5 + $0x90] sm:$0x1f] %vm912, %v1553
    %s1557 = scalar_lea.vmem [#allocation2], 331
    %v1558 = vld [vmem:[%s1557] ss:$2 sm:$0x7f]
    %v1560 = vrot.slane %v1558, 2
    %1561 = vrot.lane.b32.xlu0 %v1560, 64
    %v1562 = vpop.permute.xlu0 %1561
    %1564 = vst.msk [vmem:[#allocation5 + $0x80] sm:$0xc0] %vm921, %v1562
    %1565 = vst.msk [vmem:[#allocation5 + $0x90] sm:$0x1f] %vm923, %v1562
    %s1566 = scalar_lea.vmem [#allocation2], 332
    %v1567 = vld [vmem:[%s1566] ss:$2 sm:$0x7f]
    %v1569 = vrot.slane %v1567, 2
    %1570 = vrot.lane.b32.xlu0 %v1569, 80
    %v1571 = vpop.permute.xlu0 %1570
    %1573 = vst.msk [vmem:[#allocation5 + $0x80] sm:$0xc0] %vm932, %v1571
    %1574 = vst.msk [vmem:[#allocation5 + $0x90] sm:$0x1f] %vm934, %v1571
    %s1575 = scalar_lea.vmem [#allocation2], 345
    %v1576 = vld [vmem:[%s1575] ss:$2 sm:$0x7f]
    %v1578 = vrot.slane %v1576, 2
    %1579 = vrot.lane.b32.xlu0 %v1578, 96
    %v1580 = vpop.permute.xlu0 %1579
    %1582 = vst.msk [vmem:[#allocation5 + $0x80] sm:$0xc0] %vm943, %v1580
    %1583 = vst.msk [vmem:[#allocation5 + $0x90] sm:$0x1f] %vm945, %v1580
    %s1584 = scalar_lea.vmem [#allocation2], 346
    %v1585 = vld [vmem:[%s1584] ss:$2 sm:$0x7f]
    %v1587 = vrot.slane %v1585, 2
    %1588 = vrot.lane.b32.xlu0 %v1587, 112
    %v1589 = vpop.permute.xlu0 %1588
    %1591 = vst.msk [vmem:[#allocation5 + $0x80] sm:$0xc0] %vm954, %v1589
    %1592 = vst.msk [vmem:[#allocation5 + $0x90] sm:$0x1f] %vm956, %v1589
    %s1593 = scalar_lea.vmem [#allocation2], 347
    %v1594 = vld [vmem:[%s1593] ss:$2 sm:$0x7f]
    %v1596 = vrot.slane %v1594, 2
    %1598 = vst.msk [vmem:[#allocation5 + $0x88] sm:$0xc0] %vm879, %v1596
    %1599 = vst.msk [vmem:[#allocation5 + $0x98] sm:$0x1f] %vm881, %v1596
    %v1600 = vld [vmem:[%s1575] ss:$2 sm:$0x7f]
    %v1602 = vrot.slane %v1600, 3
    %1604 = vst.msk [vmem:[#allocation5 + $0x90] sm:$0xe0] %vm969, %v1602
    %1605 = vst.msk [vmem:[#allocation5 + $0xa0] sm:$0xf] %vm971, %v1602
    %v1606 = vld [vmem:[%s1584] ss:$2 sm:$0x7f]
    %v1608 = vrot.slane %v1606, 3
    %1609 = vrot.lane.b32.xlu0 %v1608, 16
    %v1610 = vpop.permute.xlu0 %1609
    %1612 = vst.msk [vmem:[#allocation5 + $0x90] sm:$0xe0] %vm979, %v1610
    %1613 = vst.msk [vmem:[#allocation5 + $0xa0] sm:$0xf] %vm981, %v1610
    %v1614 = vld [vmem:[%s1593] ss:$2 sm:$0x7f]
    %v1616 = vrot.slane %v1614, 3
    %1617 = vrot.lane.b32.xlu0 %v1616, 32
    %v1618 = vpop.permute.xlu0 %1617
    %1620 = vst.msk [vmem:[#allocation5 + $0x90] sm:$0xe0] %vm989, %v1618
    %1621 = vst.msk [vmem:[#allocation5 + $0xa0] sm:$0xf] %vm991, %v1618
    %s1622 = scalar_lea.vmem [#allocation2], 360
    %v1623 = vld [vmem:[%s1622] ss:$2 sm:$0x7f]
    %v1625 = vrot.slane %v1623, 3
    %1626 = vrot.lane.b32.xlu0 %v1625, 48
    %v1627 = vpop.permute.xlu0 %1626
    %1629 = vst.msk [vmem:[#allocation5 + $0x90] sm:$0xe0] %vm1000, %v1627
    %1630 = vst.msk [vmem:[#allocation5 + $0xa0] sm:$0xf] %vm1002, %v1627
    %s1631 = scalar_lea.vmem [#allocation2], 361
    %v1632 = vld [vmem:[%s1631] ss:$2 sm:$0x7f]
    %v1634 = vrot.slane %v1632, 3
    %1635 = vrot.lane.b32.xlu0 %v1634, 64
    %v1636 = vpop.permute.xlu0 %1635
    %1638 = vst.msk [vmem:[#allocation5 + $0x90] sm:$0xe0] %vm1011, %v1636
    %1639 = vst.msk [vmem:[#allocation5 + $0xa0] sm:$0xf] %vm1013, %v1636
    %s1640 = scalar_lea.vmem [#allocation2], 362
    %v1641 = vld [vmem:[%s1640] ss:$2 sm:$0x7f]
    %v1643 = vrot.slane %v1641, 3
    %1644 = vrot.lane.b32.xlu0 %v1643, 80
    %v1645 = vpop.permute.xlu0 %1644
    %1647 = vst.msk [vmem:[#allocation5 + $0x90] sm:$0xe0] %vm1022, %v1645
    %1648 = vst.msk [vmem:[#allocation5 + $0xa0] sm:$0xf] %vm1024, %v1645
    %s1649 = scalar_lea.vmem [#allocation2], 375
    %v1650 = vld [vmem:[%s1649] ss:$2 sm:$0x7f]
    %v1652 = vrot.slane %v1650, 3
    %1653 = vrot.lane.b32.xlu0 %v1652, 96
    %v1654 = vpop.permute.xlu0 %1653
    %1656 = vst.msk [vmem:[#allocation5 + $0x90] sm:$0xe0] %vm1033, %v1654
    %1657 = vst.msk [vmem:[#allocation5 + $0xa0] sm:$0xf] %vm1035, %v1654
    %s1658 = scalar_lea.vmem [#allocation2], 376
    %v1659 = vld [vmem:[%s1658] ss:$2 sm:$0x7f]
    %v1661 = vrot.slane %v1659, 3
    %1662 = vrot.lane.b32.xlu0 %v1661, 112
    %v1663 = vpop.permute.xlu0 %1662
    %1665 = vst.msk [vmem:[#allocation5 + $0x90] sm:$0xe0] %vm1044, %v1663
    %1666 = vst.msk [vmem:[#allocation5 + $0xa0] sm:$0xf] %vm1046, %v1663
    %s1667 = scalar_lea.vmem [#allocation2], 377
    %v1668 = vld [vmem:[%s1667] ss:$2 sm:$0x7f]
    %v1670 = vrot.slane %v1668, 3
    %1672 = vst.msk [vmem:[#allocation5 + $0x98] sm:$0xe0] %vm969, %v1670
    %1673 = vst.msk [vmem:[#allocation5 + $0xa8] sm:$0xf] %vm971, %v1670
    %v1674 = vld [vmem:[%s1649] ss:$2 sm:$0x7f]
    %v1676 = vrot.slane %v1674, 4
    %1678 = vst.msk [vmem:[#allocation5 + $0xa0] sm:$0xf0] %vm1059, %v1676
    %1679 = vst.msk [vmem:[#allocation5 + $0xb0] sm:$0x7] %vm1061, %v1676
    %v1680 = vld [vmem:[%s1658] ss:$2 sm:$0x7f]
    %v1682 = vrot.slane %v1680, 4
    %1683 = vrot.lane.b32.xlu0 %v1682, 16
    %v1684 = vpop.permute.xlu0 %1683
    %1686 = vst.msk [vmem:[#allocation5 + $0xa0] sm:$0xf0] %vm1069, %v1684
    %1687 = vst.msk [vmem:[#allocation5 + $0xb0] sm:$0x7] %vm1071, %v1684
    %v1688 = vld [vmem:[%s1667] ss:$2 sm:$0x7f]
    %v1690 = vrot.slane %v1688, 4
    %1691 = vrot.lane.b32.xlu0 %v1690, 32
    %v1692 = vpop.permute.xlu0 %1691
    %1694 = vst.msk [vmem:[#allocation5 + $0xa0] sm:$0xf0] %vm1079, %v1692
    %1695 = vst.msk [vmem:[#allocation5 + $0xb0] sm:$0x7] %vm1081, %v1692
    %s1696 = scalar_lea.vmem [#allocation2], 390
    %v1697 = vld [vmem:[%s1696] ss:$2 sm:$0x7f]
    %v1699 = vrot.slane %v1697, 4
    %1700 = vrot.lane.b32.xlu0 %v1699, 48
    %v1701 = vpop.permute.xlu0 %1700
    %1703 = vst.msk [vmem:[#allocation5 + $0xa0] sm:$0xf0] %vm1090, %v1701
    %1704 = vst.msk [vmem:[#allocation5 + $0xb0] sm:$0x7] %vm1092, %v1701
    %s1705 = scalar_lea.vmem [#allocation2], 391
    %v1706 = vld [vmem:[%s1705] ss:$2 sm:$0x7f]
    %v1708 = vrot.slane %v1706, 4
    %1709 = vrot.lane.b32.xlu0 %v1708, 64
    %v1710 = vpop.permute.xlu0 %1709
    %1712 = vst.msk [vmem:[#allocation5 + $0xa0] sm:$0xf0] %vm1101, %v1710
    %1713 = vst.msk [vmem:[#allocation5 + $0xb0] sm:$0x7] %vm1103, %v1710
    %s1714 = scalar_lea.vmem [#allocation2], 392
    %v1715 = vld [vmem:[%s1714] ss:$2 sm:$0x7f]
    %v1717 = vrot.slane %v1715, 4
    %1718 = vrot.lane.b32.xlu0 %v1717, 80
    %v1719 = vpop.permute.xlu0 %1718
    %1721 = vst.msk [vmem:[#allocation5 + $0xa0] sm:$0xf0] %vm1112, %v1719
    %1722 = vst.msk [vmem:[#allocation5 + $0xb0] sm:$0x7] %vm1114, %v1719
    %s1723 = scalar_lea.vmem [#allocation2], 405
    %v1724 = vld [vmem:[%s1723] ss:$2 sm:$0x7f]
    %v1726 = vrot.slane %v1724, 4
    %1727 = vrot.lane.b32.xlu0 %v1726, 96
    %v1728 = vpop.permute.xlu0 %1727
    %1730 = vst.msk [vmem:[#allocation5 + $0xa0] sm:$0xf0] %vm1123, %v1728
    %1731 = vst.msk [vmem:[#allocation5 + $0xb0] sm:$0x7] %vm1125, %v1728
    %s1732 = scalar_lea.vmem [#allocation2], 406
    %v1733 = vld [vmem:[%s1732] ss:$2 sm:$0x7f]
    %v1735 = vrot.slane %v1733, 4
    %1736 = vrot.lane.b32.xlu0 %v1735, 112
    %v1737 = vpop.permute.xlu0 %1736
    %1739 = vst.msk [vmem:[#allocation5 + $0xa0] sm:$0xf0] %vm1134, %v1737
    %1740 = vst.msk [vmem:[#allocation5 + $0xb0] sm:$0x7] %vm1136, %v1737
    %s1741 = scalar_lea.vmem [#allocation2], 407
    %v1742 = vld [vmem:[%s1741] ss:$2 sm:$0x7f]
    %v1744 = vrot.slane %v1742, 4
    %1746 = vst.msk [vmem:[#allocation5 + $0xa8] sm:$0xf0] %vm1059, %v1744
    %1747 = vst.msk [vmem:[#allocation5 + $0xb8] sm:$0x7] %vm1061, %v1744
    %v1748 = vld [vmem:[%s1723] ss:$2 sm:$0x7f]
    %v1750 = vrot.slane %v1748, 5
    %1752 = vst.msk [vmem:[#allocation5 + $0xb0] sm:$0xf8] %vm1149, %v1750
    %1753 = vst.msk [vmem:[#allocation5 + $0xc0] sm:$0x3] %vm721, %v1750
    %v1754 = vld [vmem:[%s1732] ss:$2 sm:$0x7f]
    %v1756 = vrot.slane %v1754, 5
    %1757 = vrot.lane.b32.xlu0 %v1756, 16
    %v1758 = vpop.permute.xlu0 %1757
    %1760 = vst.msk [vmem:[#allocation5 + $0xb0] sm:$0xf8] %vm1158, %v1758
    %1761 = vst.msk [vmem:[#allocation5 + $0xc0] sm:$0x3] %vm1160, %v1758
    %v1762 = vld [vmem:[%s1741] ss:$2 sm:$0x7f]
    %v1764 = vrot.slane %v1762, 5
    %1765 = vrot.lane.b32.xlu0 %v1764, 32
    %v1766 = vpop.permute.xlu0 %1765
    %1768 = vst.msk [vmem:[#allocation5 + $0xb0] sm:$0xf8] %vm1168, %v1766
    %1769 = vst.msk [vmem:[#allocation5 + $0xc0] sm:$0x3] %vm1170, %v1766
    %s1770 = scalar_lea.vmem [#allocation2], 420
    %v1771 = vld [vmem:[%s1770] ss:$2 sm:$0x7f]
    %v1773 = vrot.slane %v1771, 5
    %1774 = vrot.lane.b32.xlu0 %v1773, 48
    %v1775 = vpop.permute.xlu0 %1774
    %1777 = vst.msk [vmem:[#allocation5 + $0xb0] sm:$0xf8] %vm1179, %v1775
    %1778 = vst.msk [vmem:[#allocation5 + $0xc0] sm:$0x3] %vm1181, %v1775
    %s1779 = scalar_lea.vmem [#allocation2], 421
    %v1780 = vld [vmem:[%s1779] ss:$2 sm:$0x7f]
    %v1782 = vrot.slane %v1780, 5
    %1783 = vrot.lane.b32.xlu0 %v1782, 64
    %v1784 = vpop.permute.xlu0 %1783
    %1786 = vst.msk [vmem:[#allocation5 + $0xb0] sm:$0xf8] %vm1190, %v1784
    %1787 = vst.msk [vmem:[#allocation5 + $0xc0] sm:$0x3] %vm1192, %v1784
    %s1788 = scalar_lea.vmem [#allocation2], 422
    %v1789 = vld [vmem:[%s1788] ss:$2 sm:$0x7f]
    %v1791 = vrot.slane %v1789, 5
    %1792 = vrot.lane.b32.xlu0 %v1791, 80
    %v1793 = vpop.permute.xlu0 %1792
    %1795 = vst.msk [vmem:[#allocation5 + $0xb0] sm:$0xf8] %vm1201, %v1793
    %1796 = vst.msk [vmem:[#allocation5 + $0xc0] sm:$0x3] %vm1203, %v1793
    %s1797 = scalar_lea.vmem [#allocation2], 435
    %v1798 = vld [vmem:[%s1797] ss:$2 sm:$0x7f]
    %v1800 = vrot.slane %v1798, 5
    %1801 = vrot.lane.b32.xlu0 %v1800, 96
    %v1802 = vpop.permute.xlu0 %1801
    %1804 = vst.msk [vmem:[#allocation5 + $0xb0] sm:$0xf8] %vm1212, %v1802
    %1805 = vst.msk [vmem:[#allocation5 + $0xc0] sm:$0x3] %vm1214, %v1802
    %s1806 = scalar_lea.vmem [#allocation2], 436
    %v1807 = vld [vmem:[%s1806] ss:$2 sm:$0x7f]
    %v1809 = vrot.slane %v1807, 5
    %1810 = vrot.lane.b32.xlu0 %v1809, 112
    %v1811 = vpop.permute.xlu0 %1810
    %1813 = vst.msk [vmem:[#allocation5 + $0xb0] sm:$0xf8] %vm1223, %v1811
    %1814 = vst.msk [vmem:[#allocation5 + $0xc0] sm:$0x3] %vm1225, %v1811
    %s1815 = scalar_lea.vmem [#allocation2], 437
    %v1816 = vld [vmem:[%s1815] ss:$2 sm:$0x7f]
    %v1818 = vrot.slane %v1816, 5
    %1820 = vst.msk [vmem:[#allocation5 + $0xb8] sm:$0xf8] %vm1149, %v1818
    %1821 = vst.msk [vmem:[#allocation5 + $0xc8] sm:$0x3] %vm721, %v1818
    %v1822 = vld [vmem:[#allocation5] sm:$0xff]
    %v1823 = vld [vmem:[#allocation5 + $0x8] sm:$0xff]
    %v1824 = vld [vmem:[#allocation5 + $0x10] sm:$0xff]
    %v1825 = vld [vmem:[#allocation5 + $0x18] sm:$0xff]
    %v1826 = vld [vmem:[#allocation5 + $0x20] sm:$0xff]
    %v1827 = vld [vmem:[#allocation5 + $0x28] sm:$0xff]
    %v1828 = vld [vmem:[#allocation5 + $0x30] sm:$0xff]
    %v1829 = vld [vmem:[#allocation5 + $0x38] sm:$0xff]
    %v1830 = vld [vmem:[#allocation5 + $0x40] sm:$0xff]
    %v1831 = vld [vmem:[#allocation5 + $0x48] sm:$0xff]
    %v1832 = vld [vmem:[#allocation5 + $0x50] sm:$0xff]
    %v1833 = vld [vmem:[#allocation5 + $0x58] sm:$0xff]
    %v1834 = vld [vmem:[#allocation5 + $0x60] sm:$0xff]
    %v1835 = vld [vmem:[#allocation5 + $0x68] sm:$0xff]
    %v1836 = vld [vmem:[#allocation5 + $0x70] sm:$0xff]
    %v1837 = vld [vmem:[#allocation5 + $0x78] sm:$0xff]
    %v1838 = vld [vmem:[#allocation5 + $0x80] sm:$0xff]
    %v1839 = vld [vmem:[#allocation5 + $0x88] sm:$0xff]
    %v1840 = vld [vmem:[#allocation5 + $0x90] sm:$0xff]
    %v1841 = vld [vmem:[#allocation5 + $0x98] sm:$0xff]
    %v1842 = vld [vmem:[#allocation5 + $0xa0] sm:$0xff]
    %v1843 = vld [vmem:[#allocation5 + $0xa8] sm:$0xff]
    %v1844 = vld [vmem:[#allocation5 + $0xb0] sm:$0xff]
    %v1845 = vld [vmem:[#allocation5 + $0xb8] sm:$0xff]
    %v1846 = vld [vmem:[#allocation5 + $0xc0] sm:$0x3]
    %v1847 = vld [vmem:[#allocation5 + $0xc8] sm:$0x3]
    %v1848 = vpack.c.bf16 %v1824, %v1822
    %v1849 = vpack.c.bf16 %v1825, %v1823
    %v1850 = vpack.c.bf16 %v1828, %v1826
    %v1851 = vpack.c.bf16 %v1829, %v1827
    %v1852 = vpack.c.bf16 %v1832, %v1830
    %v1853 = vpack.c.bf16 %v1833, %v1831
    %v1854 = vpack.c.bf16 %v1836, %v1834
    %v1855 = vpack.c.bf16 %v1837, %v1835
    %v1856 = vpack.c.bf16 %v1840, %v1838
    %v1857 = vpack.c.bf16 %v1841, %v1839
    %v1858 = vpack.c.bf16 %v1844, %v1842
    %v1859 = vpack.c.bf16 %v1845, %v1843
    %v1860 = vpack.c.bf16 %v1846, %v1846
    %v1861 = vpack.c.bf16 %v1847, %v1847
    %s1862 = scalar_lea.vmem %s1, 144
    %v1863 = vld [vmem:[%s1862] sm:$0xf]
    %v1864 = vld [vmem:[%s1862 + $0x4] sm:$0xf]
    %v1865 = vld [vmem:[%s1862 + $0x8] sm:$0xf]
    %v1866 = vld [vmem:[%s1862 + $0xc] sm:$0xf]
    %v1867 = vld [vmem:[%s1862 + $0x10] sm:$0xf]
    %v1868 = vld [vmem:[%s1862 + $0x14] sm:$0xf]
    %v1869 = vld [vmem:[%s1862 + $0x18] sm:$0xf]
    %v1870 = vld [vmem:[%s1862 + $0x1c] sm:$0xf]
    %v1871 = vld [vmem:[%s1862 + $0x20] sm:$0xf]
    %v1872 = vld [vmem:[%s1862 + $0x24] sm:$0xf]
    %v1873 = vld [vmem:[%s1862 + $0x28] sm:$0xf]
    %v1874 = vld [vmem:[%s1862 + $0x2c] sm:$0xf]
    %v1875 = vld [vmem:[%s1862 + $0x30] sm:$0xf]
    %v1876 = vld [vmem:[%s1862 + $0x34] sm:$0xf]
    %v1877 = vld [vmem:[%s1862 + $0x38] sm:$0xf]
    %v1878 = vld [vmem:[%s1862 + $0x3c] sm:$0xf]
    %v1879 = vld [vmem:[%s1862 + $0x40] sm:$0xf]
    %v1880 = vld [vmem:[%s1862 + $0x44] sm:$0xf]
    %s1881 = scalar_lea.vmem %s2, 4
    %v1882 = vld [vmem:[%s1881] sm:$0x1]
    %v1883 = vperm.slane %v1882, 0
    %v1902 = vunpack.c.l.b16 %v1863
    %v1903 = vunpack.c.l.b16 %v1864
    %v1904 = vunpack.c.l.b16 %v1865
    %v1905 = vunpack.c.l.b16 %v1866
    %v1906 = vunpack.c.l.b16 %v1867
    %v1907 = vunpack.c.l.b16 %v1868
    %v1908 = vunpack.c.l.b16 %v1869
    %v1909 = vunpack.c.l.b16 %v1870
    %v1910 = vunpack.c.l.b16 %v1871
    %v1911 = vunpack.c.l.b16 %v1872
    %v1912 = vunpack.c.l.b16 %v1873
    %v1913 = vunpack.c.l.b16 %v1874
    %v1914 = vunpack.c.l.b16 %v1875
    %v1915 = vunpack.c.l.b16 %v1876
    %v1916 = vunpack.c.l.b16 %v1877
    %v1917 = vunpack.c.l.b16 %v1878
    %v1918 = vunpack.c.l.b16 %v1879
    %v1919 = vunpack.c.l.b16 %v1880
    %v1920 = vpack.c.b16 %v1903, %v1902
    %v1921 = vpack.c.b16 %v1905, %v1904
    %v1922 = vpack.c.b16 %v1907, %v1906
    %v1923 = vpack.c.b16 %v1909, %v1908
    %v1924 = vpack.c.b16 %v1911, %v1910
    %v1925 = vpack.c.b16 %v1913, %v1912
    %v1926 = vpack.c.b16 %v1915, %v1914
    %v1927 = vpack.c.b16 %v1917, %v1916
    %v1928 = vpack.c.b16 %v1919, %v1918
    %v1939 = vsel %vm664, %v1849, 0
    %v1942 = vsel %vm664, %v1851, 0
    %v1945 = vsel %vm664, %v1853, 0
    %v1948 = vsel %vm664, %v1855, 0
    %v1951 = vsel %vm664, %v1857, 0
    %v1954 = vsel %vm664, %v1859, 0
    %v1957 = vsel %vm664, %v1861, 0
    %1959 = vmatpush.bf16.msra.mxu0 %v1927
    %1960 = vmatpush.bf16.msra.mxu0 %v1926
    %1961 = vmatpush.bf16.msra.mxu0 %v1925
    %1962 = vmatpush.bf16.msra.mxu0 %v1924
    %1963 = vmatpush.bf16.msra.mxu0 %v1923
    %1964 = vmatpush.bf16.msra.mxu0 %v1922
    %1965 = vmatpush.bf16.msra.mxu0 %v1921
    %1966 = vmatpush.bf16.msra.mxu0 %v1920
    %1967 = vmatmul.bf16.gmra.mxu0 %v1848
    %v1968 = vpop.f32.mrf.mxu0
    %v1969 = vadd.f32 %v1883, %v1968
    %v1970 = vpop.f32.mrf.mxu0
    %v1971 = vadd.f32 %v1883, %v1970
    %1972 = vmatmul.bf16.gmra.mxu0 %v1850
    %v1973 = vpop.f32.mrf.mxu0
    %v1974 = vadd.f32 %v1883, %v1973
    %v1975 = vpop.f32.mrf.mxu0
    %v1976 = vadd.f32 %v1883, %v1975
    %1977 = vmatmul.bf16.gmra.mxu0 %v1852
    %v1978 = vpop.f32.mrf.mxu0
    %v1979 = vadd.f32 %v1883, %v1978
    %v1980 = vpop.f32.mrf.mxu0
    %v1981 = vadd.f32 %v1883, %v1980
    %1982 = vmatmul.bf16.gmra.mxu0 %v1854
    %v1983 = vpop.f32.mrf.mxu0
    %v1984 = vadd.f32 %v1883, %v1983
    %v1985 = vpop.f32.mrf.mxu0
    %v1986 = vadd.f32 %v1883, %v1985
    %1987 = vmatmul.bf16.gmra.mxu0 %v1856
    %v1988 = vpop.f32.mrf.mxu0
    %v1989 = vadd.f32 %v1883, %v1988
    %v1990 = vpop.f32.mrf.mxu0
    %v1991 = vadd.f32 %v1883, %v1990
    %1992 = vmatmul.bf16.gmra.mxu0 %v1858
    %v1993 = vpop.f32.mrf.mxu0
    %v1994 = vadd.f32 %v1883, %v1993
    %v1995 = vpop.f32.mrf.mxu0
    %v1996 = vadd.f32 %v1883, %v1995
    %1997 = vmatmul.bf16.gmra.mxu0 %v1860
    %v1998 = vpop.f32.mrf.mxu0
    %v1999 = vadd.f32 %v1883, %v1998
    %v2000 = vpop.f32.mrf.mxu0
    %2001 = vdwg.mxu0
    %2002 = vmatpush.bf16.msra.mxu0 0
    %2003 = vmatpush.bf16.msra.mxu0 0
    %2004 = vmatpush.bf16.msra.mxu0 0
    %2005 = vmatpush.bf16.msra.mxu0 0
    %2006 = vmatpush.bf16.msra.mxu0 0
    %2007 = vmatpush.bf16.msra.mxu0 0
    %2008 = vmatpush.bf16.msra.mxu0 0
    %2009 = vmatpush.bf16.msra.mxu0 %v1928
    %2010 = vmatmul.bf16.gmra.mxu0 %v1939
    %v2011 = vpop.f32.mrf.mxu0
    %v2012 = vadd.f32 %v1969, %v2011
    %v2013 = vpop.f32.mrf.mxu0
    %v2014 = vadd.f32 %v1971, %v2013
    %2015 = vmatmul.bf16.gmra.mxu0 %v1942
    %v2016 = vpop.f32.mrf.mxu0
    %v2017 = vadd.f32 %v1974, %v2016
    %v2018 = vpop.f32.mrf.mxu0
    %v2019 = vadd.f32 %v1976, %v2018
    %2020 = vmatmul.bf16.gmra.mxu0 %v1945
    %v2021 = vpop.f32.mrf.mxu0
    %v2022 = vadd.f32 %v1979, %v2021
    %v2023 = vpop.f32.mrf.mxu0
    %v2024 = vadd.f32 %v1981, %v2023
    %2025 = vmatmul.bf16.gmra.mxu0 %v1948
    %v2026 = vpop.f32.mrf.mxu0
    %v2027 = vadd.f32 %v1984, %v2026
    %v2028 = vpop.f32.mrf.mxu0
    %v2029 = vadd.f32 %v1986, %v2028
    %2030 = vmatmul.bf16.gmra.mxu0 %v1951
    %v2031 = vpop.f32.mrf.mxu0
    %v2032 = vadd.f32 %v1989, %v2031
    %v2033 = vpop.f32.mrf.mxu0
    %v2034 = vadd.f32 %v1991, %v2033
    %2035 = vmatmul.bf16.gmra.mxu0 %v1954
    %v2036 = vpop.f32.mrf.mxu0
    %v2037 = vadd.f32 %v1994, %v2036
    %v2038 = vpop.f32.mrf.mxu0
    %v2039 = vadd.f32 %v1996, %v2038
    %2040 = vmatmul.bf16.gmra.mxu0 %v1957
    %v2041 = vpop.f32.mrf.mxu0
    %v2042 = vadd.f32 %v1999, %v2041
    %v2043 = vpop.f32.mrf.mxu0
    %2044 = vdwg.mxu0
    %v2045 = vsel %vm664, %v2012, 0.0
    %v2046 = vsel %vm664, %v2014, 0.0
    %v2047 = vadd.f32 %v2045, %v2046
    %v2048 = vsel %vm664, %v2017, 0.0
    %v2049 = vadd.f32 %v2047, %v2048
    %v2050 = vsel %vm664, %v2019, 0.0
    %v2051 = vadd.f32 %v2049, %v2050
    %v2052 = vsel %vm664, %v2022, 0.0
    %v2053 = vadd.f32 %v2051, %v2052
    %v2054 = vsel %vm664, %v2024, 0.0
    %v2055 = vadd.f32 %v2053, %v2054
    %v2056 = vsel %vm664, %v2027, 0.0
    %v2057 = vadd.f32 %v2055, %v2056
    %v2058 = vsel %vm664, %v2029, 0.0
    %v2059 = vadd.f32 %v2057, %v2058
    %v2060 = vsel %vm664, %v2032, 0.0
    %v2061 = vadd.f32 %v2059, %v2060
    %v2062 = vsel %vm664, %v2034, 0.0
    %v2063 = vadd.f32 %v2061, %v2062
    %v2064 = vsel %vm664, %v2037, 0.0
    %v2065 = vadd.f32 %v2063, %v2064
    %v2066 = vsel %vm664, %v2039, 0.0
    %v2067 = vadd.f32 %v2065, %v2066
    %v2068 = vsel %vm721, %v2042, 0.0
    %v2069 = vadd.f32 %v2067, %v2068
    %v2070 = vrot.slane %v2069, 4
    %v2071 = vadd.f32 %v2069, %v2070
    %v2072 = vrot.slane %v2071, 2
    %v2073 = vadd.f32 %v2071, %v2072
    %v2074 = vrot.slane %v2073, 1
    %v2075 = vadd.f32 %v2073, %v2074
    %v2076 = vmul.f32 %v2075, 0.010204081
    %v2077 = vsub.f32 %v2012, %v2076
    %v2078 = vsub.f32 %v2014, %v2076
    %v2079 = vsub.f32 %v2017, %v2076
    %v2080 = vsub.f32 %v2019, %v2076
    %v2081 = vsub.f32 %v2022, %v2076
    %v2082 = vsub.f32 %v2024, %v2076
    %v2083 = vsub.f32 %v2027, %v2076
    %v2084 = vsub.f32 %v2029, %v2076
    %v2085 = vsub.f32 %v2032, %v2076
    %v2086 = vsub.f32 %v2034, %v2076
    %v2087 = vsub.f32 %v2037, %v2076
    %v2088 = vsub.f32 %v2039, %v2076
    %v2089 = vsub.f32 %v2042, %v2076
    %v2090 = vmul.f32 %v2077, %v2077
    %v2091 = vmul.f32 %v2078, %v2078
    %v2092 = vmul.f32 %v2079, %v2079
    %v2093 = vmul.f32 %v2080, %v2080
    %v2094 = vmul.f32 %v2081, %v2081
    %v2095 = vmul.f32 %v2082, %v2082
    %v2096 = vmul.f32 %v2083, %v2083
    %v2097 = vmul.f32 %v2084, %v2084
    %v2098 = vmul.f32 %v2085, %v2085
    %v2099 = vmul.f32 %v2086, %v2086
    %v2100 = vmul.f32 %v2087, %v2087
    %v2101 = vmul.f32 %v2088, %v2088
    %v2102 = vmul.f32 %v2089, %v2089
    %v2103 = vsel %vm664, %v2090, 0.0
    %v2104 = vsel %vm664, %v2091, 0.0
    %v2105 = vadd.f32 %v2103, %v2104
    %v2106 = vsel %vm664, %v2092, 0.0
    %v2107 = vadd.f32 %v2105, %v2106
    %v2108 = vsel %vm664, %v2093, 0.0
    %v2109 = vadd.f32 %v2107, %v2108
    %v2110 = vsel %vm664, %v2094, 0.0
    %v2111 = vadd.f32 %v2109, %v2110
    %v2112 = vsel %vm664, %v2095, 0.0
    %v2113 = vadd.f32 %v2111, %v2112
    %v2114 = vsel %vm664, %v2096, 0.0
    %v2115 = vadd.f32 %v2113, %v2114
    %v2116 = vsel %vm664, %v2097, 0.0
    %v2117 = vadd.f32 %v2115, %v2116
    %v2118 = vsel %vm664, %v2098, 0.0
    %v2119 = vadd.f32 %v2117, %v2118
    %v2120 = vsel %vm664, %v2099, 0.0
    %v2121 = vadd.f32 %v2119, %v2120
    %v2122 = vsel %vm664, %v2100, 0.0
    %v2123 = vadd.f32 %v2121, %v2122
    %v2124 = vsel %vm664, %v2101, 0.0
    %v2125 = vadd.f32 %v2123, %v2124
    %v2126 = vsel %vm721, %v2102, 0.0
    %v2127 = vadd.f32 %v2125, %v2126
    %v2128 = vrot.slane %v2127, 4
    %v2129 = vadd.f32 %v2127, %v2128
    %v2130 = vrot.slane %v2129, 2
    %v2131 = vadd.f32 %v2129, %v2130
    %v2132 = vrot.slane %v2131, 1
    %v2133 = vadd.f32 %v2131, %v2132
    %v2134 = vmul.f32 %v2133, 0.010204081
    %v2135 = vadd.f32 %v2134, 1e-05
    %v2136 = vrsqrt.pop %v2135
    %v2137 = vmul.f32 %v2136, %v2135
    %v2138 = vmul.f32 %v2137, %v2136
    %v2139 = vmul.f32 0.5, %v2138
    %v2140 = vsub.f32 1.5, %v2139
    %v2141 = vmul.f32 %v2136, %v2140
    %vm2142 = vweird.f32 %v2135
    %vm2143 = vweird.f32 %v2136
    %vm2144 = vmor %vm2142, %vm2143
    %v2145 = vsel %vm2144, %v2136, %v2141
    %v2146 = vmul.f32 %v2077, %v2145
    %v2147 = vmul.f32 %v2078, %v2145
    %v2148 = vmul.f32 %v2079, %v2145
    %v2149 = vmul.f32 %v2080, %v2145
    %v2150 = vmul.f32 %v2081, %v2145
    %v2151 = vmul.f32 %v2082, %v2145
    %v2152 = vmul.f32 %v2083, %v2145
    %v2153 = vmul.f32 %v2084, %v2145
    %v2154 = vmul.f32 %v2085, %v2145
    %v2155 = vmul.f32 %v2086, %v2145
    %v2156 = vmul.f32 %v2087, %v2145
    %v2157 = vmul.f32 %v2088, %v2145
    %v2158 = vmul.f32 %v2089, %v2145
    %v2159 = vld [vmem:[%s1881 + $0x1] sm:$0x1]
    %v2160 = vperm.slane %v2159, 0
    %v2161 = vmul.f32 %v2146, %v2160
    %v2162 = vmul.f32 %v2147, %v2160
    %v2163 = vmul.f32 %v2148, %v2160
    %v2164 = vmul.f32 %v2149, %v2160
    %v2165 = vmul.f32 %v2150, %v2160
    %v2166 = vmul.f32 %v2151, %v2160
    %v2167 = vmul.f32 %v2152, %v2160
    %v2168 = vmul.f32 %v2153, %v2160
    %v2169 = vmul.f32 %v2154, %v2160
    %v2170 = vmul.f32 %v2155, %v2160
    %v2171 = vmul.f32 %v2156, %v2160
    %v2172 = vmul.f32 %v2157, %v2160
    %v2173 = vmul.f32 %v2158, %v2160
    %v2174 = vld [vmem:[%s1881 + $0x2] sm:$0x1]
    %v2175 = vperm.slane %v2174, 0
    %v2176 = vadd.f32 %v2161, %v2175
    %v2177 = vadd.f32 %v2162, %v2175
    %v2178 = vadd.f32 %v2163, %v2175
    %v2179 = vadd.f32 %v2164, %v2175
    %v2180 = vadd.f32 %v2165, %v2175
    %v2181 = vadd.f32 %v2166, %v2175
    %v2182 = vadd.f32 %v2167, %v2175
    %v2183 = vadd.f32 %v2168, %v2175
    %v2184 = vadd.f32 %v2169, %v2175
    %v2185 = vadd.f32 %v2170, %v2175
    %v2186 = vadd.f32 %v2171, %v2175
    %v2187 = vadd.f32 %v2172, %v2175
    %v2188 = vadd.f32 %v2173, %v2175
    %vm2189 = vcmp.ge.f32.partialorder %v2176, 0.0
    %vm2190 = vcmp.ge.f32.partialorder %v2177, 0.0
    %vm2191 = vcmp.ge.f32.partialorder %v2178, 0.0
    %vm2192 = vcmp.ge.f32.partialorder %v2179, 0.0
    %vm2193 = vcmp.ge.f32.partialorder %v2180, 0.0
    %vm2194 = vcmp.ge.f32.partialorder %v2181, 0.0
    %vm2195 = vcmp.ge.f32.partialorder %v2182, 0.0
    %vm2196 = vcmp.ge.f32.partialorder %v2183, 0.0
    %vm2197 = vcmp.ge.f32.partialorder %v2184, 0.0
    %vm2198 = vcmp.ge.f32.partialorder %v2185, 0.0
    %vm2199 = vcmp.ge.f32.partialorder %v2186, 0.0
    %vm2200 = vcmp.ge.f32.partialorder %v2187, 0.0
    %vm2201 = vcmp.ge.f32.partialorder %v2188, 0.0
    %v2202 = vmul.f32 %v2176, 0.2
    %v2203 = vmul.f32 %v2177, 0.2
    %v2204 = vmul.f32 %v2178, 0.2
    %v2205 = vmul.f32 %v2179, 0.2
    %v2206 = vmul.f32 %v2180, 0.2
    %v2207 = vmul.f32 %v2181, 0.2
    %v2208 = vmul.f32 %v2182, 0.2
    %v2209 = vmul.f32 %v2183, 0.2
    %v2210 = vmul.f32 %v2184, 0.2
    %v2211 = vmul.f32 %v2185, 0.2
    %v2212 = vmul.f32 %v2186, 0.2
    %v2213 = vmul.f32 %v2187, 0.2
    %v2214 = vmul.f32 %v2188, 0.2
    %v2215 = vsel %vm2189, %v2176, %v2202
    %v2216 = vsel %vm2190, %v2177, %v2203
    %v2217 = vsel %vm2191, %v2178, %v2204
    %v2218 = vsel %vm2192, %v2179, %v2205
    %v2219 = vsel %vm2193, %v2180, %v2206
    %v2220 = vsel %vm2194, %v2181, %v2207
    %v2221 = vsel %vm2195, %v2182, %v2208
    %v2222 = vsel %vm2196, %v2183, %v2209
    %v2223 = vsel %vm2197, %v2184, %v2210
    %v2224 = vsel %vm2198, %v2185, %v2211
    %v2225 = vsel %vm2199, %v2186, %v2212
    %v2226 = vsel %vm2200, %v2187, %v2213
    %v2227 = vsel %vm2201, %v2188, %v2214
    %2228 = vst.msk [vmem:[#allocation3] sm:$0xff] %vm664, %v2215
    %2229 = vst.msk [vmem:[#allocation3 + $0x8] sm:$0xff] %vm664, %v2216
    %2230 = vst.msk [vmem:[#allocation3 + $0x10] sm:$0xff] %vm664, %v2217
    %2231 = vst.msk [vmem:[#allocation3 + $0x18] sm:$0xff] %vm664, %v2218
    %2232 = vst.msk [vmem:[#allocation3 + $0x20] sm:$0xff] %vm664, %v2219
    %2233 = vst.msk [vmem:[#allocation3 + $0x28] sm:$0xff] %vm664, %v2220
    %2234 = vst.msk [vmem:[#allocation3 + $0x30] sm:$0xff] %vm664, %v2221
    %2235 = vst.msk [vmem:[#allocation3 + $0x38] sm:$0xff] %vm664, %v2222
    %2236 = vst.msk [vmem:[#allocation3 + $0x40] sm:$0xff] %vm664, %v2223
    %2237 = vst.msk [vmem:[#allocation3 + $0x48] sm:$0xff] %vm664, %v2224
    %2238 = vst.msk [vmem:[#allocation3 + $0x50] sm:$0xff] %vm664, %v2225
    %2239 = vst.msk [vmem:[#allocation3 + $0x58] sm:$0xff] %vm664, %v2226
    %2240 = vst.msk [vmem:[#allocation3 + $0x60] sm:$0x3] %vm721, %v2227
    %v2241 = vld [vmem:[#allocation3] ss:$2 sm:$0x7]
    %2242 = vst.msk [vmem:[#allocation6] sm:$0x7] %vm1061, %v2241
    %s2243 = scalar_lea.vmem [#allocation3], 1
    %v2244 = vld [vmem:[%s2243] ss:$2 sm:$0x7]
    %2246 = vrot.lane.b32.xlu0 %v2244, 16
    %v2247 = vpop.permute.xlu0 %2246
    %2249 = vst.msk [vmem:[#allocation6] sm:$0x7] %vm1071, %v2247
    %s2250 = scalar_lea.vmem [#allocation3], 2
    %v2251 = vld [vmem:[%s2250] ss:$2 sm:$0x7]
    %2253 = vrot.lane.b32.xlu0 %v2251, 32
    %v2254 = vpop.permute.xlu0 %2253
    %2256 = vst.msk [vmem:[#allocation6] sm:$0x7] %vm1081, %v2254
    %s2257 = scalar_lea.vmem [#allocation3], 7
    %v2258 = vld [vmem:[%s2257] ss:$2 sm:$0x7]
    %2260 = vrot.lane.b32.xlu0 %v2258, 48
    %v2261 = vpop.permute.xlu0 %2260
    %2263 = vst.msk [vmem:[#allocation6] sm:$0x7] %vm1092, %v2261
    %s2264 = scalar_lea.vmem [#allocation3], 8
    %v2265 = vld [vmem:[%s2264] ss:$2 sm:$0x7]
    %2267 = vrot.lane.b32.xlu0 %v2265, 64
    %v2268 = vpop.permute.xlu0 %2267
    %2270 = vst.msk [vmem:[#allocation6] sm:$0x7] %vm1103, %v2268
    %s2271 = scalar_lea.vmem [#allocation3], 9
    %v2272 = vld [vmem:[%s2271] ss:$2 sm:$0x7]
    %2274 = vrot.lane.b32.xlu0 %v2272, 80
    %v2275 = vpop.permute.xlu0 %2274
    %2277 = vst.msk [vmem:[#allocation6] sm:$0x7] %vm1114, %v2275
    %s2278 = scalar_lea.vmem [#allocation3], 14
    %v2279 = vld [vmem:[%s2278] ss:$2 sm:$0x7]
    %2281 = vrot.lane.b32.xlu0 %v2279, 96
    %v2282 = vpop.permute.xlu0 %2281
    %2284 = vst.msk [vmem:[#allocation6] sm:$0x7] %vm1125, %v2282
    %s2285 = scalar_lea.vmem [#allocation3], 15
    %v2286 = vld [vmem:[%s2285] ss:$2 sm:$0x7]
    %2288 = vrot.lane.b32.xlu0 %v2286, 112
    %v2289 = vpop.permute.xlu0 %2288
    %2291 = vst.msk [vmem:[#allocation6] sm:$0x7] %vm1136, %v2289
    %s2292 = scalar_lea.vmem [#allocation3], 16
    %v2293 = vld [vmem:[%s2292] ss:$2 sm:$0x7]
    %2294 = vst.msk [vmem:[#allocation6 + $0x8] sm:$0x7] %vm1061, %v2293
    %v2295 = vld [vmem:[%s2278] ss:$2 sm:$0x7]
    %v2297 = vrot.slane %v2295, 5
    %vm2299 = vcmask 128003
    %2300 = vst.msk [vmem:[#allocation6] sm:$0x38] %vm2299, %v2297
    %v2301 = vld [vmem:[%s2285] ss:$2 sm:$0x7]
    %v2303 = vrot.slane %v2301, 5
    %2304 = vrot.lane.b32.xlu0 %v2303, 16
    %v2305 = vpop.permute.xlu0 %2304
    %vm2307 = vcmask 259203
    %2308 = vst.msk [vmem:[#allocation6] sm:$0x38] %vm2307, %v2305
    %v2309 = vld [vmem:[%s2292] ss:$2 sm:$0x7]
    %v2311 = vrot.slane %v2309, 5
    %2312 = vrot.lane.b32.xlu0 %v2311, 32
    %v2313 = vpop.permute.xlu0 %2312
    %vm2315 = vcmask 390403
    %2316 = vst.msk [vmem:[#allocation6] sm:$0x38] %vm2315, %v2313
    %s2317 = scalar_lea.vmem [#allocation3], 21
    %v2318 = vld [vmem:[%s2317] ss:$2 sm:$0x7]
    %v2320 = vrot.slane %v2318, 5
    %2321 = vrot.lane.b32.xlu0 %v2320, 48
    %v2322 = vpop.permute.xlu0 %2321
    %vm2324 = vcmask 521603
    %2325 = vst.msk [vmem:[#allocation6] sm:$0x38] %vm2324, %v2322
    %s2326 = scalar_lea.vmem [#allocation3], 22
    %v2327 = vld [vmem:[%s2326] ss:$2 sm:$0x7]
    %v2329 = vrot.slane %v2327, 5
    %2330 = vrot.lane.b32.xlu0 %v2329, 64
    %v2331 = vpop.permute.xlu0 %2330
    %vm2333 = vcmask 652803
    %2334 = vst.msk [vmem:[#allocation6] sm:$0x38] %vm2333, %v2331
    %s2335 = scalar_lea.vmem [#allocation3], 23
    %v2336 = vld [vmem:[%s2335] ss:$2 sm:$0x7]
    %v2338 = vrot.slane %v2336, 5
    %2339 = vrot.lane.b32.xlu0 %v2338, 80
    %v2340 = vpop.permute.xlu0 %2339
    %vm2342 = vcmask 784003
    %2343 = vst.msk [vmem:[#allocation6] sm:$0x38] %vm2342, %v2340
    %s2344 = scalar_lea.vmem [#allocation3], 28
    %v2345 = vld [vmem:[%s2344] ss:$2 sm:$0x7]
    %v2347 = vrot.slane %v2345, 5
    %2348 = vrot.lane.b32.xlu0 %v2347, 96
    %v2349 = vpop.permute.xlu0 %2348
    %vm2351 = vcmask 915203
    %2352 = vst.msk [vmem:[#allocation6] sm:$0x38] %vm2351, %v2349
    %s2353 = scalar_lea.vmem [#allocation3], 29
    %v2354 = vld [vmem:[%s2353] ss:$2 sm:$0x7]
    %v2356 = vrot.slane %v2354, 5
    %2357 = vrot.lane.b32.xlu0 %v2356, 112
    %v2358 = vpop.permute.xlu0 %2357
    %vm2360 = vcmask 1046403
    %2361 = vst.msk [vmem:[#allocation6] sm:$0x38] %vm2360, %v2358
    %s2362 = scalar_lea.vmem [#allocation3], 30
    %v2363 = vld [vmem:[%s2362] ss:$2 sm:$0x7]
    %v2365 = vrot.slane %v2363, 5
    %2367 = vst.msk [vmem:[#allocation6 + $0x8] sm:$0x38] %vm2299, %v2365
    %v2368 = vld [vmem:[%s2344] ss:$2 sm:$0x7]
    %v2370 = vrot.slane %v2368, 2
    %2372 = vst.msk [vmem:[#allocation6] sm:$0xc0] %vm879, %v2370
    %2373 = vst.msk [vmem:[#allocation6 + $0x10] sm:$0x1] %vm1240, %v2370
    %v2374 = vld [vmem:[%s2353] ss:$2 sm:$0x7]
    %v2376 = vrot.slane %v2374, 2
    %2377 = vrot.lane.b32.xlu0 %v2376, 16
    %v2378 = vpop.permute.xlu0 %2377
    %2380 = vst.msk [vmem:[#allocation6] sm:$0xc0] %vm889, %v2378
    %2381 = vst.msk [vmem:[#allocation6 + $0x10] sm:$0x1] %vm1250, %v2378
    %v2382 = vld [vmem:[%s2362] ss:$2 sm:$0x7]
    %v2384 = vrot.slane %v2382, 2
    %2385 = vrot.lane.b32.xlu0 %v2384, 32
    %v2386 = vpop.permute.xlu0 %2385
    %2388 = vst.msk [vmem:[#allocation6] sm:$0xc0] %vm899, %v2386
    %2389 = vst.msk [vmem:[#allocation6 + $0x10] sm:$0x1] %vm1260, %v2386
    %s2390 = scalar_lea.vmem [#allocation3], 35
    %v2391 = vld [vmem:[%s2390] ss:$2 sm:$0x7]
    %v2393 = vrot.slane %v2391, 2
    %2394 = vrot.lane.b32.xlu0 %v2393, 48
    %v2395 = vpop.permute.xlu0 %2394
    %2397 = vst.msk [vmem:[#allocation6] sm:$0xc0] %vm910, %v2395
    %2398 = vst.msk [vmem:[#allocation6 + $0x10] sm:$0x1] %vm1271, %v2395
    %s2399 = scalar_lea.vmem [#allocation3], 36
    %v2400 = vld [vmem:[%s2399] ss:$2 sm:$0x7]
    %v2402 = vrot.slane %v2400, 2
    %2403 = vrot.lane.b32.xlu0 %v2402, 64
    %v2404 = vpop.permute.xlu0 %2403
    %2406 = vst.msk [vmem:[#allocation6] sm:$0xc0] %vm921, %v2404
    %2407 = vst.msk [vmem:[#allocation6 + $0x10] sm:$0x1] %vm1282, %v2404
    %s2408 = scalar_lea.vmem [#allocation3], 37
    %v2409 = vld [vmem:[%s2408] ss:$2 sm:$0x7]
    %v2411 = vrot.slane %v2409, 2
    %2412 = vrot.lane.b32.xlu0 %v2411, 80
    %v2413 = vpop.permute.xlu0 %2412
    %2415 = vst.msk [vmem:[#allocation6] sm:$0xc0] %vm932, %v2413
    %2416 = vst.msk [vmem:[#allocation6 + $0x10] sm:$0x1] %vm1293, %v2413
    %s2417 = scalar_lea.vmem [#allocation3], 42
    %v2418 = vld [vmem:[%s2417] ss:$2 sm:$0x7]
    %v2420 = vrot.slane %v2418, 2
    %2421 = vrot.lane.b32.xlu0 %v2420, 96
    %v2422 = vpop.permute.xlu0 %2421
    %2424 = vst.msk [vmem:[#allocation6] sm:$0xc0] %vm943, %v2422
    %2425 = vst.msk [vmem:[#allocation6 + $0x10] sm:$0x1] %vm1304, %v2422
    %s2426 = scalar_lea.vmem [#allocation3], 43
    %v2427 = vld [vmem:[%s2426] ss:$2 sm:$0x7]
    %v2429 = vrot.slane %v2427, 2
    %2430 = vrot.lane.b32.xlu0 %v2429, 112
    %v2431 = vpop.permute.xlu0 %2430
    %2433 = vst.msk [vmem:[#allocation6] sm:$0xc0] %vm954, %v2431
    %2434 = vst.msk [vmem:[#allocation6 + $0x10] sm:$0x1] %vm1315, %v2431
    %s2435 = scalar_lea.vmem [#allocation3], 44
    %v2436 = vld [vmem:[%s2435] ss:$2 sm:$0x7]
    %v2438 = vrot.slane %v2436, 2
    %2440 = vst.msk [vmem:[#allocation6 + $0x8] sm:$0xc0] %vm879, %v2438
    %2441 = vst.msk [vmem:[#allocation6 + $0x18] sm:$0x1] %vm1240, %v2438
    %s2442 = scalar_lea.vmem [#allocation3], 49
    %v2443 = vld [vmem:[%s2442] ss:$2 sm:$0x7]
    %v2445 = vrot.slane %v2443, 7
    %vm2447 = vcmask 125953
    %2448 = vst.msk [vmem:[#allocation6 + $0x10] sm:$0xe] %vm2447, %v2445
    %s2449 = scalar_lea.vmem [#allocation3], 50
    %v2450 = vld [vmem:[%s2449] ss:$2 sm:$0x7]
    %v2452 = vrot.slane %v2450, 7
    %2453 = vrot.lane.b32.xlu0 %v2452, 16
    %v2454 = vpop.permute.xlu0 %2453
    %vm2456 = vcmask 257153
    %2457 = vst.msk [vmem:[#allocation6 + $0x10] sm:$0xe] %vm2456, %v2454
    %s2458 = scalar_lea.vmem [#allocation3], 51
    %v2459 = vld [vmem:[%s2458] ss:$2 sm:$0x7]
    %v2461 = vrot.slane %v2459, 7
    %2462 = vrot.lane.b32.xlu0 %v2461, 32
    %v2463 = vpop.permute.xlu0 %2462
    %vm2465 = vcmask 388353
    %2466 = vst.msk [vmem:[#allocation6 + $0x10] sm:$0xe] %vm2465, %v2463
    %s2467 = scalar_lea.vmem [#allocation3], 56
    %v2468 = vld [vmem:[%s2467] ss:$2 sm:$0x7]
    %v2470 = vrot.slane %v2468, 7
    %2471 = vrot.lane.b32.xlu0 %v2470, 48
    %v2472 = vpop.permute.xlu0 %2471
    %vm2474 = vcmask 519553
    %2475 = vst.msk [vmem:[#allocation6 + $0x10] sm:$0xe] %vm2474, %v2472
    %s2476 = scalar_lea.vmem [#allocation3], 57
    %v2477 = vld [vmem:[%s2476] ss:$2 sm:$0x7]
    %v2479 = vrot.slane %v2477, 7
    %2480 = vrot.lane.b32.xlu0 %v2479, 64
    %v2481 = vpop.permute.xlu0 %2480
    %vm2483 = vcmask 650753
    %2484 = vst.msk [vmem:[#allocation6 + $0x10] sm:$0xe] %vm2483, %v2481
    %s2485 = scalar_lea.vmem [#allocation3], 58
    %v2486 = vld [vmem:[%s2485] ss:$2 sm:$0x7]
    %v2488 = vrot.slane %v2486, 7
    %2489 = vrot.lane.b32.xlu0 %v2488, 80
    %v2490 = vpop.permute.xlu0 %2489
    %vm2492 = vcmask 781953
    %2493 = vst.msk [vmem:[#allocation6 + $0x10] sm:$0xe] %vm2492, %v2490
    %s2494 = scalar_lea.vmem [#allocation3], 63
    %v2495 = vld [vmem:[%s2494] ss:$2 sm:$0x7]
    %v2497 = vrot.slane %v2495, 7
    %2498 = vrot.lane.b32.xlu0 %v2497, 96
    %v2499 = vpop.permute.xlu0 %2498
    %vm2501 = vcmask 913153
    %2502 = vst.msk [vmem:[#allocation6 + $0x10] sm:$0xe] %vm2501, %v2499
    %s2503 = scalar_lea.vmem [#allocation3], 64
    %v2504 = vld [vmem:[%s2503] ss:$2 sm:$0x7]
    %v2506 = vrot.slane %v2504, 7
    %2507 = vrot.lane.b32.xlu0 %v2506, 112
    %v2508 = vpop.permute.xlu0 %2507
    %vm2510 = vcmask 1044353
    %2511 = vst.msk [vmem:[#allocation6 + $0x10] sm:$0xe] %vm2510, %v2508
    %s2512 = scalar_lea.vmem [#allocation3], 65
    %v2513 = vld [vmem:[%s2512] ss:$2 sm:$0x7]
    %v2515 = vrot.slane %v2513, 7
    %2517 = vst.msk [vmem:[#allocation6 + $0x18] sm:$0xe] %vm2447, %v2515
    %v2518 = vld [vmem:[%s2494] ss:$2 sm:$0x7]
    %v2520 = vrot.slane %v2518, 4
    %vm2522 = vcmask 129028
    %2523 = vst.msk [vmem:[#allocation6 + $0x10] sm:$0x70] %vm2522, %v2520
    %v2524 = vld [vmem:[%s2503] ss:$2 sm:$0x7]
    %v2526 = vrot.slane %v2524, 4
    %2527 = vrot.lane.b32.xlu0 %v2526, 16
    %v2528 = vpop.permute.xlu0 %2527
    %vm2530 = vcmask 260228
    %2531 = vst.msk [vmem:[#allocation6 + $0x10] sm:$0x70] %vm2530, %v2528
    %v2532 = vld [vmem:[%s2512] ss:$2 sm:$0x7]
    %v2534 = vrot.slane %v2532, 4
    %2535 = vrot.lane.b32.xlu0 %v2534, 32
    %v2536 = vpop.permute.xlu0 %2535
    %vm2538 = vcmask 391428
    %2539 = vst.msk [vmem:[#allocation6 + $0x10] sm:$0x70] %vm2538, %v2536
    %s2540 = scalar_lea.vmem [#allocation3], 70
    %v2541 = vld [vmem:[%s2540] ss:$2 sm:$0x7]
    %v2543 = vrot.slane %v2541, 4
    %2544 = vrot.lane.b32.xlu0 %v2543, 48
    %v2545 = vpop.permute.xlu0 %2544
    %vm2547 = vcmask 522628
    %2548 = vst.msk [vmem:[#allocation6 + $0x10] sm:$0x70] %vm2547, %v2545
    %s2549 = scalar_lea.vmem [#allocation3], 71
    %v2550 = vld [vmem:[%s2549] ss:$2 sm:$0x7]
    %v2552 = vrot.slane %v2550, 4
    %2553 = vrot.lane.b32.xlu0 %v2552, 64
    %v2554 = vpop.permute.xlu0 %2553
    %vm2556 = vcmask 653828
    %2557 = vst.msk [vmem:[#allocation6 + $0x10] sm:$0x70] %vm2556, %v2554
    %s2558 = scalar_lea.vmem [#allocation3], 72
    %v2559 = vld [vmem:[%s2558] ss:$2 sm:$0x7]
    %v2561 = vrot.slane %v2559, 4
    %2562 = vrot.lane.b32.xlu0 %v2561, 80
    %v2563 = vpop.permute.xlu0 %2562
    %vm2565 = vcmask 785028
    %2566 = vst.msk [vmem:[#allocation6 + $0x10] sm:$0x70] %vm2565, %v2563
    %s2567 = scalar_lea.vmem [#allocation3], 77
    %v2568 = vld [vmem:[%s2567] ss:$2 sm:$0x7]
    %v2570 = vrot.slane %v2568, 4
    %2571 = vrot.lane.b32.xlu0 %v2570, 96
    %v2572 = vpop.permute.xlu0 %2571
    %vm2574 = vcmask 916228
    %2575 = vst.msk [vmem:[#allocation6 + $0x10] sm:$0x70] %vm2574, %v2572
    %s2576 = scalar_lea.vmem [#allocation3], 78
    %v2577 = vld [vmem:[%s2576] ss:$2 sm:$0x7]
    %v2579 = vrot.slane %v2577, 4
    %2580 = vrot.lane.b32.xlu0 %v2579, 112
    %v2581 = vpop.permute.xlu0 %2580
    %vm2583 = vcmask 1047428
    %2584 = vst.msk [vmem:[#allocation6 + $0x10] sm:$0x70] %vm2583, %v2581
    %s2585 = scalar_lea.vmem [#allocation3], 79
    %v2586 = vld [vmem:[%s2585] ss:$2 sm:$0x7]
    %v2588 = vrot.slane %v2586, 4
    %2590 = vst.msk [vmem:[#allocation6 + $0x18] sm:$0x70] %vm2522, %v2588
    %v2591 = vld [vmem:[%s2567] ss:$2 sm:$0x7]
    %v2593 = vrot.slane %v2591, 1
    %2595 = vst.msk [vmem:[#allocation6 + $0x10] sm:$0x80] %vm789, %v2593
    %2596 = vst.msk [vmem:[#allocation6 + $0x20] sm:$0x3] %vm721, %v2593
    %v2597 = vld [vmem:[%s2576] ss:$2 sm:$0x7]
    %v2599 = vrot.slane %v2597, 1
    %2600 = vrot.lane.b32.xlu0 %v2599, 16
    %v2601 = vpop.permute.xlu0 %2600
    %2603 = vst.msk [vmem:[#allocation6 + $0x10] sm:$0x80] %vm799, %v2601
    %2604 = vst.msk [vmem:[#allocation6 + $0x20] sm:$0x3] %vm1160, %v2601
    %v2605 = vld [vmem:[%s2585] ss:$2 sm:$0x7]
    %v2607 = vrot.slane %v2605, 1
    %2608 = vrot.lane.b32.xlu0 %v2607, 32
    %v2609 = vpop.permute.xlu0 %2608
    %2611 = vst.msk [vmem:[#allocation6 + $0x10] sm:$0x80] %vm809, %v2609
    %2612 = vst.msk [vmem:[#allocation6 + $0x20] sm:$0x3] %vm1170, %v2609
    %s2613 = scalar_lea.vmem [#allocation3], 84
    %v2614 = vld [vmem:[%s2613] ss:$2 sm:$0x7]
    %v2616 = vrot.slane %v2614, 1
    %2617 = vrot.lane.b32.xlu0 %v2616, 48
    %v2618 = vpop.permute.xlu0 %2617
    %2620 = vst.msk [vmem:[#allocation6 + $0x10] sm:$0x80] %vm820, %v2618
    %2621 = vst.msk [vmem:[#allocation6 + $0x20] sm:$0x3] %vm1181, %v2618
    %s2622 = scalar_lea.vmem [#allocation3], 85
    %v2623 = vld [vmem:[%s2622] ss:$2 sm:$0x7]
    %v2625 = vrot.slane %v2623, 1
    %2626 = vrot.lane.b32.xlu0 %v2625, 64
    %v2627 = vpop.permute.xlu0 %2626
    %2629 = vst.msk [vmem:[#allocation6 + $0x10] sm:$0x80] %vm831, %v2627
    %2630 = vst.msk [vmem:[#allocation6 + $0x20] sm:$0x3] %vm1192, %v2627
    %s2631 = scalar_lea.vmem [#allocation3], 86
    %v2632 = vld [vmem:[%s2631] ss:$2 sm:$0x7]
    %v2634 = vrot.slane %v2632, 1
    %2635 = vrot.lane.b32.xlu0 %v2634, 80
    %v2636 = vpop.permute.xlu0 %2635
    %2638 = vst.msk [vmem:[#allocation6 + $0x10] sm:$0x80] %vm842, %v2636
    %2639 = vst.msk [vmem:[#allocation6 + $0x20] sm:$0x3] %vm1203, %v2636
    %s2640 = scalar_lea.vmem [#allocation3], 91
    %v2641 = vld [vmem:[%s2640] ss:$2 sm:$0x7]
    %v2643 = vrot.slane %v2641, 1
    %2644 = vrot.lane.b32.xlu0 %v2643, 96
    %v2645 = vpop.permute.xlu0 %2644
    %2647 = vst.msk [vmem:[#allocation6 + $0x10] sm:$0x80] %vm853, %v2645
    %2648 = vst.msk [vmem:[#allocation6 + $0x20] sm:$0x3] %vm1214, %v2645
    %s2649 = scalar_lea.vmem [#allocation3], 92
    %v2650 = vld [vmem:[%s2649] ss:$2 sm:$0x7]
    %v2652 = vrot.slane %v2650, 1
    %2653 = vrot.lane.b32.xlu0 %v2652, 112
    %v2654 = vpop.permute.xlu0 %2653
    %2656 = vst.msk [vmem:[#allocation6 + $0x10] sm:$0x80] %vm864, %v2654
    %2657 = vst.msk [vmem:[#allocation6 + $0x20] sm:$0x3] %vm1225, %v2654
    %s2658 = scalar_lea.vmem [#allocation3], 93
    %v2659 = vld [vmem:[%s2658] ss:$2 sm:$0x7]
    %v2661 = vrot.slane %v2659, 1
    %2663 = vst.msk [vmem:[#allocation6 + $0x18] sm:$0x80] %vm789, %v2661
    %2664 = vst.msk [vmem:[#allocation6 + $0x28] sm:$0x3] %vm721, %v2661
    %v2665 = vld [vmem:[#allocation6] sm:$0xff]
    %v2666 = vld [vmem:[#allocation6 + $0x8] sm:$0xff]
    %v2667 = vld [vmem:[#allocation6 + $0x10] sm:$0xff]
    %v2668 = vld [vmem:[#allocation6 + $0x18] sm:$0xff]
    %v2669 = vld [vmem:[#allocation6 + $0x20] sm:$0x3]
    %v2670 = vld [vmem:[#allocation6 + $0x28] sm:$0x3]
    %v2671 = vpack.c.bf16 %v2667, %v2665
    %v2672 = vpack.c.bf16 %v2668, %v2666
    %v2673 = vpack.c.bf16 %v2669, %v2669
    %v2674 = vpack.c.bf16 %v2670, %v2670
    %s2675 = scalar_lea.vmem %s1, 288
    %v2676 = vld [vmem:[%s2675] sm:$0xf]
    %v2677 = vld [vmem:[%s2675 + $0x4] sm:$0xf]
    %v2678 = vld [vmem:[%s2675 + $0x8] sm:$0xf]
    %v2679 = vld [vmem:[%s2675 + $0xc] sm:$0xf]
    %v2680 = vld [vmem:[%s2675 + $0x10] sm:$0xf]
    %v2681 = vld [vmem:[%s2675 + $0x14] sm:$0xf]
    %v2682 = vld [vmem:[%s2675 + $0x18] sm:$0xf]
    %v2683 = vld [vmem:[%s2675 + $0x1c] sm:$0xf]
    %v2684 = vld [vmem:[%s2675 + $0x20] sm:$0xf]
    %v2685 = vld [vmem:[%s2675 + $0x24] sm:$0xf]
    %v2686 = vld [vmem:[%s2675 + $0x28] sm:$0xf]
    %v2687 = vld [vmem:[%s2675 + $0x2c] sm:$0xf]
    %v2688 = vld [vmem:[%s2675 + $0x30] sm:$0xf]
    %v2689 = vld [vmem:[%s2675 + $0x34] sm:$0xf]
    %v2690 = vld [vmem:[%s2675 + $0x38] sm:$0xf]
    %v2691 = vld [vmem:[%s2675 + $0x3c] sm:$0xf]
    %v2692 = vld [vmem:[%s2675 + $0x40] sm:$0xf]
    %v2693 = vld [vmem:[%s2675 + $0x44] sm:$0xf]
    %s2694 = scalar_lea.vmem %s2, 8
    %v2695 = vld [vmem:[%s2694] sm:$0x1]
    %v2696 = vperm.slane %v2695, 0
    %v2715 = vunpack.c.l.b16 %v2676
    %v2716 = vunpack.c.l.b16 %v2677
    %v2717 = vunpack.c.l.b16 %v2678
    %v2718 = vunpack.c.l.b16 %v2679
    %v2719 = vunpack.c.l.b16 %v2680
    %v2720 = vunpack.c.l.b16 %v2681
    %v2721 = vunpack.c.l.b16 %v2682
    %v2722 = vunpack.c.l.b16 %v2683
    %v2723 = vunpack.c.l.b16 %v2684
    %v2724 = vunpack.c.l.b16 %v2685
    %v2725 = vunpack.c.l.b16 %v2686
    %v2726 = vunpack.c.l.b16 %v2687
    %v2727 = vunpack.c.l.b16 %v2688
    %v2728 = vunpack.c.l.b16 %v2689
    %v2729 = vunpack.c.l.b16 %v2690
    %v2730 = vunpack.c.l.b16 %v2691
    %v2731 = vunpack.c.l.b16 %v2692
    %v2732 = vunpack.c.l.b16 %v2693
    %v2733 = vpack.c.b16 %v2716, %v2715
    %v2734 = vpack.c.b16 %v2718, %v2717
    %v2735 = vpack.c.b16 %v2720, %v2719
    %v2736 = vpack.c.b16 %v2722, %v2721
    %v2737 = vpack.c.b16 %v2724, %v2723
    %v2738 = vpack.c.b16 %v2726, %v2725
    %v2739 = vpack.c.b16 %v2728, %v2727
    %v2740 = vpack.c.b16 %v2730, %v2729
    %v2741 = vpack.c.b16 %v2732, %v2731
    %v2752 = vsel %vm664, %v2672, 0
    %v2755 = vsel %vm664, %v2674, 0
    %2757 = vmatpush.bf16.msra.mxu0 %v2740
    %2758 = vmatpush.bf16.msra.mxu0 %v2739
    %2759 = vmatpush.bf16.msra.mxu0 %v2738
    %2760 = vmatpush.bf16.msra.mxu0 %v2737
    %2761 = vmatpush.bf16.msra.mxu0 %v2736
    %2762 = vmatpush.bf16.msra.mxu0 %v2735
    %2763 = vmatpush.bf16.msra.mxu0 %v2734
    %2764 = vmatpush.bf16.msra.mxu0 %v2733
    %2765 = vmatmul.bf16.gmra.mxu0 %v2671
    %v2766 = vpop.f32.mrf.mxu0
    %v2767 = vadd.f32 %v2696, %v2766
    %v2768 = vpop.f32.mrf.mxu0
    %v2769 = vadd.f32 %v2696, %v2768
    %2770 = vmatmul.bf16.gmra.mxu0 %v2673
    %v2771 = vpop.f32.mrf.mxu0
    %v2772 = vadd.f32 %v2696, %v2771
    %v2773 = vpop.f32.mrf.mxu0
    %2774 = vdwg.mxu0
    %2775 = vmatpush.bf16.msra.mxu0 0
    %2776 = vmatpush.bf16.msra.mxu0 0
    %2777 = vmatpush.bf16.msra.mxu0 0
    %2778 = vmatpush.bf16.msra.mxu0 0
    %2779 = vmatpush.bf16.msra.mxu0 0
    %2780 = vmatpush.bf16.msra.mxu0 0
    %2781 = vmatpush.bf16.msra.mxu0 0
    %2782 = vmatpush.bf16.msra.mxu0 %v2741
    %2783 = vmatmul.bf16.gmra.mxu0 %v2752
    %v2784 = vpop.f32.mrf.mxu0
    %v2785 = vadd.f32 %v2767, %v2784
    %v2786 = vpop.f32.mrf.mxu0
    %v2787 = vadd.f32 %v2769, %v2786
    %2788 = vmatmul.bf16.gmra.mxu0 %v2755
    %v2789 = vpop.f32.mrf.mxu0
    %v2790 = vadd.f32 %v2772, %v2789
    %v2791 = vpop.f32.mrf.mxu0
    %2792 = vdwg.mxu0
    %vm2793 = vcmask 261120
    %v2794 = vsel %vm2793, %v2785, 0.0
    %v2795 = vsel %vm2793, %v2787, 0.0
    %v2796 = vadd.f32 %v2794, %v2795
    %vm2797 = vcmask 254976
    %v2798 = vsel %vm2797, %v2790, 0.0
    %v2799 = vadd.f32 %v2796, %v2798
    %v2800 = vrot.slane %v2799, 4
    %v2801 = vadd.f32 %v2799, %v2800
    %v2802 = vrot.slane %v2801, 2
    %v2803 = vadd.f32 %v2801, %v2802
    %v2804 = vrot.slane %v2803, 1
    %v2805 = vadd.f32 %v2803, %v2804
    %v2806 = vmul.f32 %v2805, 0.055555556
    %v2807 = vsub.f32 %v2785, %v2806
    %v2808 = vsub.f32 %v2787, %v2806
    %v2809 = vsub.f32 %v2790, %v2806
    %v2810 = vmul.f32 %v2807, %v2807
    %v2811 = vmul.f32 %v2808, %v2808
    %v2812 = vmul.f32 %v2809, %v2809
    %v2813 = vsel %vm2793, %v2810, 0.0
    %v2814 = vsel %vm2793, %v2811, 0.0
    %v2815 = vadd.f32 %v2813, %v2814
    %v2816 = vsel %vm2797, %v2812, 0.0
    %v2817 = vadd.f32 %v2815, %v2816
    %v2818 = vrot.slane %v2817, 4
    %v2819 = vadd.f32 %v2817, %v2818
    %v2820 = vrot.slane %v2819, 2
    %v2821 = vadd.f32 %v2819, %v2820
    %v2822 = vrot.slane %v2821, 1
    %v2823 = vadd.f32 %v2821, %v2822
    %v2824 = vmul.f32 %v2823, 0.055555556
    %v2825 = vadd.f32 %v2824, 1e-05
    %v2826 = vrsqrt.pop %v2825
    %v2827 = vmul.f32 %v2826, %v2825
    %v2828 = vmul.f32 %v2827, %v2826
    %v2829 = vmul.f32 0.5, %v2828
    %v2830 = vsub.f32 1.5, %v2829
    %v2831 = vmul.f32 %v2826, %v2830
    %vm2832 = vweird.f32 %v2825
    %vm2833 = vweird.f32 %v2826
    %vm2834 = vmor %vm2832, %vm2833
    %v2835 = vsel %vm2834, %v2826, %v2831
    %v2836 = vmul.f32 %v2807, %v2835
    %v2837 = vmul.f32 %v2808, %v2835
    %v2838 = vmul.f32 %v2809, %v2835
    %v2839 = vld [vmem:[%s2694 + $0x1] sm:$0x1]
    %v2840 = vperm.slane %v2839, 0
    %v2841 = vmul.f32 %v2836, %v2840
    %v2842 = vmul.f32 %v2837, %v2840
    %v2843 = vmul.f32 %v2838, %v2840
    %v2844 = vld [vmem:[%s2694 + $0x2] sm:$0x1]
    %v2845 = vperm.slane %v2844, 0
    %v2846 = vadd.f32 %v2841, %v2845
    %v2847 = vadd.f32 %v2842, %v2845
    %v2848 = vadd.f32 %v2843, %v2845
    %vm2849 = vcmp.ge.f32.partialorder %v2846, 0.0
    %vm2850 = vcmp.ge.f32.partialorder %v2847, 0.0
    %vm2851 = vcmp.ge.f32.partialorder %v2848, 0.0
    %v2852 = vmul.f32 %v2846, 0.2
    %v2853 = vmul.f32 %v2847, 0.2
    %v2854 = vmul.f32 %v2848, 0.2
    %v2855 = vsel %vm2849, %v2846, %v2852
    %v2856 = vsel %vm2850, %v2847, %v2853
    %v2857 = vsel %vm2851, %v2848, %v2854
    %2858 = vst.msk [vmem:[#allocation4] sm:$0xff] %vm2793, %v2855
    %2859 = vst.msk [vmem:[#allocation4 + $0x8] sm:$0xff] %vm2793, %v2856
    %2860 = vst.msk [vmem:[#allocation4 + $0x10] sm:$0x3] %vm2797, %v2857
    %v2861 = vld [vmem:[#allocation4] sm:$0x1]
    %vm2862 = vcmask 253952
    %2863 = vst.msk [vmem:[#allocation7] sm:$0x1] %vm2862, %v2861
    %v2864 = vld [vmem:[#allocation4 + $0x1] sm:$0x1]
    %2866 = vrot.lane.b32.xlu0 %v2864, 32
    %v2867 = vpop.permute.xlu0 %2866
    %vm2869 = vcmask 516352
    %2870 = vst.msk [vmem:[#allocation7] sm:$0x1] %vm2869, %v2867
    %v2871 = vld [vmem:[#allocation4 + $0x2] sm:$0x1]
    %2873 = vrot.lane.b32.xlu0 %v2871, 64
    %v2874 = vpop.permute.xlu0 %2873
    %vm2876 = vcmask 778752
    %2877 = vst.msk [vmem:[#allocation7] sm:$0x1] %vm2876, %v2874
    %v2878 = vld [vmem:[#allocation4 + $0x3] sm:$0x1]
    %2880 = vrot.lane.b32.xlu0 %v2878, 96
    %v2881 = vpop.permute.xlu0 %2880
    %vm2883 = vcmask 1041152
    %2884 = vst.msk [vmem:[#allocation7] sm:$0x1] %vm2883, %v2881
    %v2885 = vld [vmem:[#allocation4 + $0x4] sm:$0x1]
    %2886 = vst.msk [vmem:[#allocation7 + $0x2] sm:$0x1] %vm2862, %v2885
    %v2887 = vld [vmem:[#allocation4 + $0x5] sm:$0x1]
    %2889 = vrot.lane.b32.xlu0 %v2887, 32
    %v2890 = vpop.permute.xlu0 %2889
    %2892 = vst.msk [vmem:[#allocation7 + $0x2] sm:$0x1] %vm2869, %v2890
    %v2893 = vld [vmem:[#allocation4 + $0x6] sm:$0x1]
    %2895 = vrot.lane.b32.xlu0 %v2893, 64
    %v2896 = vpop.permute.xlu0 %2895
    %2898 = vst.msk [vmem:[#allocation7 + $0x2] sm:$0x1] %vm2876, %v2896
    %v2899 = vld [vmem:[#allocation4 + $0x7] sm:$0x1]
    %2901 = vrot.lane.b32.xlu0 %v2899, 96
    %v2902 = vpop.permute.xlu0 %2901
    %2904 = vst.msk [vmem:[#allocation7 + $0x2] sm:$0x1] %vm2883, %v2902
    %v2905 = vld [vmem:[#allocation4 + $0x8] sm:$0x1]
    %2906 = vst.msk [vmem:[#allocation7 + $0x4] sm:$0x1] %vm2862, %v2905
    %v2907 = vld [vmem:[#allocation4 + $0x9] sm:$0x1]
    %2908 = vst.msk [vmem:[#allocation7 + $0x1] sm:$0x1] %vm2862, %v2907
    %v2909 = vld [vmem:[#allocation4 + $0xa] sm:$0x1]
    %2911 = vrot.lane.b32.xlu0 %v2909, 32
    %v2912 = vpop.permute.xlu0 %2911
    %2914 = vst.msk [vmem:[#allocation7 + $0x1] sm:$0x1] %vm2869, %v2912
    %v2915 = vld [vmem:[#allocation4 + $0xb] sm:$0x1]
    %2917 = vrot.lane.b32.xlu0 %v2915, 64
    %v2918 = vpop.permute.xlu0 %2917
    %2920 = vst.msk [vmem:[#allocation7 + $0x1] sm:$0x1] %vm2876, %v2918
    %v2921 = vld [vmem:[#allocation4 + $0xc] sm:$0x1]
    %2923 = vrot.lane.b32.xlu0 %v2921, 96
    %v2924 = vpop.permute.xlu0 %2923
    %2926 = vst.msk [vmem:[#allocation7 + $0x1] sm:$0x1] %vm2883, %v2924
    %v2927 = vld [vmem:[#allocation4 + $0xd] sm:$0x1]
    %2928 = vst.msk [vmem:[#allocation7 + $0x3] sm:$0x1] %vm2862, %v2927
    %v2929 = vld [vmem:[#allocation4 + $0xe] sm:$0x1]
    %2931 = vrot.lane.b32.xlu0 %v2929, 32
    %v2932 = vpop.permute.xlu0 %2931
    %2934 = vst.msk [vmem:[#allocation7 + $0x3] sm:$0x1] %vm2869, %v2932
    %v2935 = vld [vmem:[#allocation4 + $0xf] sm:$0x1]
    %2937 = vrot.lane.b32.xlu0 %v2935, 64
    %v2938 = vpop.permute.xlu0 %2937
    %2940 = vst.msk [vmem:[#allocation7 + $0x3] sm:$0x1] %vm2876, %v2938
    %v2941 = vld [vmem:[#allocation4 + $0x10] sm:$0x1]
    %2943 = vrot.lane.b32.xlu0 %v2941, 96
    %v2944 = vpop.permute.xlu0 %2943
    %2946 = vst.msk [vmem:[#allocation7 + $0x3] sm:$0x1] %vm2883, %v2944
    %v2947 = vld [vmem:[#allocation4 + $0x11] sm:$0x1]
    %2948 = vst.msk [vmem:[#allocation7 + $0x5] sm:$0x1] %vm2862, %v2947
    %v2949 = vld [vmem:[#allocation7] sm:$0x3f]
    %2951 = vst [vmem:[#allocation1] ss:$4 sm:$0xff] %v2949
    %v2952 = vld.sshfl [vmem:[#allocation1] sm:$0xff pattern:$0x73625140]
    %v2953 = vld.sshfl [vmem:[#allocation1 + $0x8] sm:$0xff pattern:$0x73625140]
    %v2954 = vld.sshfl [vmem:[#allocation1 + $0x10] sm:$0xff pattern:$0x73625140]
    %v2958 = vpack.c.bf16 %v2952, %v2952
    %v2959 = vpack.c.bf16 %v2953, %v2953
    %v2960 = vpack.c.bf16 %v2954, %v2954
    %s2961 = scalar_lea.vmem %s1, 432
    %v2962 = vld [vmem:[%s2961] sm:$0xf]
    %v2963 = vld [vmem:[%s2961 + $0x4] sm:$0xf]
    %v2964 = vld [vmem:[%s2961 + $0x8] sm:$0xf]
    %v2965 = vld [vmem:[%s2961 + $0xc] sm:$0xf]
    %v2966 = vld [vmem:[%s2961 + $0x10] sm:$0xf]
    %v2967 = vld [vmem:[%s2961 + $0x14] sm:$0xf]
    %v2968 = vld [vmem:[%s2961 + $0x18] sm:$0xf]
    %v2969 = vld [vmem:[%s2961 + $0x1c] sm:$0xf]
    %v2970 = vld [vmem:[%s2961 + $0x20] sm:$0xf]
    %v2971 = vld [vmem:[%s2961 + $0x24] sm:$0xf]
    %v2972 = vld [vmem:[%s2961 + $0x28] sm:$0xf]
    %v2973 = vld [vmem:[%s2961 + $0x2c] sm:$0xf]
    %v2974 = vld [vmem:[%s2961 + $0x30] sm:$0xf]
    %v2975 = vld [vmem:[%s2961 + $0x34] sm:$0xf]
    %v2976 = vld [vmem:[%s2961 + $0x38] sm:$0xf]
    %v2977 = vld [vmem:[%s2961 + $0x3c] sm:$0xf]
    %v2978 = vld [vmem:[%s2961 + $0x40] sm:$0xf]
    %v2979 = vld [vmem:[%s2961 + $0x44] sm:$0xf]
    %v2980 = vld [vmem:[%s2961 + $0x48] sm:$0xf]
    %v2981 = vld [vmem:[%s2961 + $0x4c] sm:$0xf]
    %v2982 = vld [vmem:[%s2961 + $0x50] sm:$0xf]
    %v2983 = vld [vmem:[%s2961 + $0x54] sm:$0xf]
    %v2984 = vld [vmem:[%s2961 + $0x58] sm:$0xf]
    %v2985 = vld [vmem:[%s2961 + $0x5c] sm:$0xf]
    %v2986 = vld [vmem:[%s2961 + $0x60] sm:$0xf]
    %v2987 = vld [vmem:[%s2961 + $0x64] sm:$0xf]
    %v2988 = vld [vmem:[%s2961 + $0x68] sm:$0xf]
    %v2989 = vld [vmem:[%s2961 + $0x6c] sm:$0xf]
    %v2990 = vld [vmem:[%s2961 + $0x70] sm:$0xf]
    %v2991 = vld [vmem:[%s2961 + $0x74] sm:$0xf]
    %v2992 = vld [vmem:[%s2961 + $0x78] sm:$0xf]
    %v2993 = vld [vmem:[%s2961 + $0x7c] sm:$0xf]
    %v2994 = vld [vmem:[%s2961 + $0x80] sm:$0xf]
    %v2995 = vld [vmem:[%s2961 + $0x84] sm:$0xf]
    %v2996 = vld [vmem:[%s2961 + $0x88] sm:$0xf]
    %v2997 = vld [vmem:[%s2961 + $0x8c] sm:$0xf]
    %s2998 = scalar_lea.vmem %s2, 12
    %v2999 = vld [vmem:[%s2998] sm:$0x1]
    %v3000 = vperm.slane %v2999, 0
    %v3037 = vunpack.c.l.b16 %v2962
    %v3038 = vunpack.c.l.b16 %v2963
    %v3039 = vunpack.c.l.b16 %v2964
    %v3040 = vunpack.c.l.b16 %v2965
    %v3041 = vunpack.c.l.b16 %v2966
    %v3042 = vunpack.c.l.b16 %v2967
    %v3043 = vunpack.c.l.b16 %v2968
    %v3044 = vunpack.c.l.b16 %v2969
    %v3045 = vunpack.c.l.b16 %v2970
    %v3046 = vunpack.c.l.b16 %v2971
    %v3047 = vunpack.c.l.b16 %v2972
    %v3048 = vunpack.c.l.b16 %v2973
    %v3049 = vunpack.c.l.b16 %v2974
    %v3050 = vunpack.c.l.b16 %v2975
    %v3051 = vunpack.c.l.b16 %v2976
    %v3052 = vunpack.c.l.b16 %v2977
    %v3053 = vunpack.c.l.b16 %v2978
    %v3054 = vunpack.c.l.b16 %v2979
    %v3055 = vunpack.c.l.b16 %v2980
    %v3056 = vunpack.c.l.b16 %v2981
    %v3057 = vunpack.c.l.b16 %v2982
    %v3058 = vunpack.c.l.b16 %v2983
    %v3059 = vunpack.c.l.b16 %v2984
    %v3060 = vunpack.c.l.b16 %v2985
    %v3061 = vunpack.c.l.b16 %v2986
    %v3062 = vunpack.c.l.b16 %v2987
    %v3063 = vunpack.c.l.b16 %v2988
    %v3064 = vunpack.c.l.b16 %v2989
    %v3065 = vunpack.c.l.b16 %v2990
    %v3066 = vunpack.c.l.b16 %v2991
    %v3067 = vunpack.c.l.b16 %v2992
    %v3068 = vunpack.c.l.b16 %v2993
    %v3069 = vunpack.c.l.b16 %v2994
    %v3070 = vunpack.c.l.b16 %v2995
    %v3071 = vunpack.c.l.b16 %v2996
    %v3072 = vunpack.c.l.b16 %v2997
    %v3073 = vpack.c.b16 %v3038, %v3037
    %v3074 = vpack.c.b16 %v3040, %v3039
    %v3075 = vpack.c.b16 %v3042, %v3041
    %v3076 = vpack.c.b16 %v3044, %v3043
    %v3077 = vpack.c.b16 %v3046, %v3045
    %v3078 = vpack.c.b16 %v3048, %v3047
    %v3079 = vpack.c.b16 %v3050, %v3049
    %v3080 = vpack.c.b16 %v3052, %v3051
    %v3081 = vpack.c.b16 %v3054, %v3053
    %v3082 = vpack.c.b16 %v3056, %v3055
    %v3083 = vpack.c.b16 %v3058, %v3057
    %v3084 = vpack.c.b16 %v3060, %v3059
    %v3085 = vpack.c.b16 %v3062, %v3061
    %v3086 = vpack.c.b16 %v3064, %v3063
    %v3087 = vpack.c.b16 %v3066, %v3065
    %v3088 = vpack.c.b16 %v3068, %v3067
    %v3089 = vpack.c.b16 %v3070, %v3069
    %v3090 = vpack.c.b16 %v3072, %v3071
    %v3110 = vsel %vm2793, %v2960, 0
    %3112 = vmatpush.bf16.msra.mxu0 %v3080
    %3113 = vmatpush.bf16.msra.mxu0 %v3079
    %3114 = vmatpush.bf16.msra.mxu0 %v3078
    %3115 = vmatpush.bf16.msra.mxu0 %v3077
    %3116 = vmatpush.bf16.msra.mxu0 %v3076
    %3117 = vmatpush.bf16.msra.mxu0 %v3075
    %3118 = vmatpush.bf16.msra.mxu0 %v3074
    %3119 = vmatpush.bf16.msra.mxu0 %v3073
    %3120 = vmatmul.bf16.gmra.mxu0 %v2958
    %v3121 = vpop.f32.mrf.mxu0
    %v3122 = vadd.f32 %v3000, %v3121
    %v3123 = vpop.f32.mrf.mxu0
    %3124 = vdwg.mxu0
    %3125 = vmatpush.bf16.msra.mxu0 %v3088
    %3126 = vmatpush.bf16.msra.mxu0 %v3087
    %3127 = vmatpush.bf16.msra.mxu0 %v3086
    %3128 = vmatpush.bf16.msra.mxu0 %v3085
    %3129 = vmatpush.bf16.msra.mxu0 %v3084
    %3130 = vmatpush.bf16.msra.mxu0 %v3083
    %3131 = vmatpush.bf16.msra.mxu0 %v3082
    %3132 = vmatpush.bf16.msra.mxu0 %v3081
    %3133 = vmatmul.bf16.gmra.mxu0 %v2959
    %v3134 = vpop.f32.mrf.mxu0
    %v3135 = vadd.f32 %v3122, %v3134
    %v3136 = vpop.f32.mrf.mxu0
    %3137 = vdwg.mxu0
    %3138 = vmatpush.bf16.msra.mxu0 0
    %3139 = vmatpush.bf16.msra.mxu0 0
    %3140 = vmatpush.bf16.msra.mxu0 0
    %3141 = vmatpush.bf16.msra.mxu0 0
    %3142 = vmatpush.bf16.msra.mxu0 0
    %3143 = vmatpush.bf16.msra.mxu0 0
    %3144 = vmatpush.bf16.msra.mxu0 %v3090
    %3145 = vmatpush.bf16.msra.mxu0 %v3089
    %3146 = vmatmul.bf16.gmra.mxu0 %v3110
    %v3147 = vpop.f32.mrf.mxu0
    %v3148 = vadd.f32 %v3135, %v3147
    %v3149 = vpop.f32.mrf.mxu0
    %3150 = vdwg.mxu0
    %vm3151 = vcmask 517120
    %v3152 = vsel %vm3151, %v3148, 0.0
    %v3153 = vrot.slane %v3152, 4
    %v3154 = vadd.f32 %v3152, %v3153
    %v3155 = vrot.slane %v3154, 2
    %v3156 = vadd.f32 %v3154, %v3155
    %v3157 = vrot.slane %v3156, 1
    %v3158 = vadd.f32 %v3156, %v3157
    %v3159 = vmul.f32 %v3158, 0.5
    %v3160 = vsub.f32 %v3148, %v3159
    %v3161 = vmul.f32 %v3160, %v3160
    %v3162 = vsel %vm3151, %v3161, 0.0
    %v3163 = vrot.slane %v3162, 4
    %v3164 = vadd.f32 %v3162, %v3163
    %v3165 = vrot.slane %v3164, 2
    %v3166 = vadd.f32 %v3164, %v3165
    %v3167 = vrot.slane %v3166, 1
    %v3168 = vadd.f32 %v3166, %v3167
    %v3169 = vmul.f32 %v3168, 0.5
    %v3170 = vadd.f32 %v3169, 1e-05
    %v3171 = vrsqrt.pop %v3170
    %v3172 = vmul.f32 %v3171, %v3170
    %v3173 = vmul.f32 %v3172, %v3171
    %v3174 = vmul.f32 0.5, %v3173
    %v3175 = vsub.f32 1.5, %v3174
    %v3176 = vmul.f32 %v3171, %v3175
    %vm3177 = vweird.f32 %v3170
    %vm3178 = vweird.f32 %v3171
    %vm3179 = vmor %vm3177, %vm3178
    %v3180 = vsel %vm3179, %v3171, %v3176
    %v3181 = vmul.f32 %v3160, %v3180
    %v3182 = vld [vmem:[%s2998 + $0x1] sm:$0x1]
    %v3183 = vperm.slane %v3182, 0
    %v3184 = vmul.f32 %v3181, %v3183
    %v3185 = vld [vmem:[%s2998 + $0x2] sm:$0x1]
    %v3186 = vperm.slane %v3185, 0
    %v3187 = vadd.f32 %v3184, %v3186
    %vm3188 = vcmp.ge.f32.partialorder %v3187, 0.0
    %v3189 = vmul.f32 %v3187, 0.2
    %v3190 = vsel %vm3188, %v3187, %v3189
    %v3191 = vpack.c.bf16 %v3190, %v3190
    %v3192 = vld [vmem:[%s3] sm:$0xff]
    %v3193 = vld [vmem:[%s3 + $0x8] sm:$0xff]
    %v3194 = vld [vmem:[%s3 + $0x10] sm:$0xff]
    %v3195 = vld [vmem:[%s3 + $0x18] sm:$0xff]
    %v3196 = vld [vmem:[%s3 + $0x20] sm:$0xff]
    %v3197 = vld [vmem:[%s3 + $0x28] sm:$0xff]
    %v3198 = vld [vmem:[%s3 + $0x30] sm:$0xff]
    %v3199 = vld [vmem:[%s3 + $0x38] sm:$0xff]
    %v3200 = vld [vmem:[%s3 + $0x40] sm:$0xff]
    %v3201 = vld [vmem:[%s3 + $0x48] sm:$0xff]
    %v3202 = vld [vmem:[%s3 + $0x50] sm:$0xff]
    %v3203 = vld [vmem:[%s3 + $0x58] sm:$0xff]
    %v3204 = vld [vmem:[%s3 + $0x60] sm:$0xff]
    %v3205 = vld [vmem:[%s3 + $0x68] sm:$0xff]
    %v3206 = vld [vmem:[%s3 + $0x70] sm:$0xff]
    %v3207 = vld [vmem:[%s3 + $0x78] sm:$0xff]
    %v3208 = vld [vmem:[%s3 + $0x80] sm:$0xff]
    %v3209 = vld [vmem:[%s3 + $0x88] sm:$0xff]
    %v3210 = vld [vmem:[%s3 + $0x90] sm:$0xff]
    %v3211 = vld [vmem:[%s3 + $0x98] sm:$0xff]
    %v3212 = vld [vmem:[%s3 + $0xa0] sm:$0xff]
    %v3213 = vld [vmem:[%s3 + $0xa8] sm:$0xff]
    %v3214 = vld [vmem:[%s3 + $0xb0] sm:$0xff]
    %v3215 = vld [vmem:[%s3 + $0xb8] sm:$0xff]
    %v3216 = vld [vmem:[%s3 + $0xc0] sm:$0xff]
    %v3217 = vld [vmem:[%s3 + $0xc8] sm:$0xff]
    %v3218 = vld [vmem:[%s3 + $0xd0] sm:$0xff]
    %v3219 = vld [vmem:[%s3 + $0xd8] sm:$0xff]
    %v3220 = vld [vmem:[%s3 + $0xe0] sm:$0xff]
    %v3221 = vld [vmem:[%s3 + $0xe8] sm:$0xff]
    %v3222 = vld [vmem:[%s3 + $0xf0] sm:$0xff]
    %v3223 = vld [vmem:[%s3 + $0xf8] sm:$0xff]
    %v3224 = vld [vmem:[%s5] ss:$2 sm:$0xff]
    %v3226 = vperm.slane %v3224, 0
    %v3227 = vperm.slane %v3224, 1
    %v3228 = vperm.slane %v3224, 2
    %v3229 = vperm.slane %v3224, 3
    %v3230 = vperm.slane %v3224, 4
    %v3231 = vperm.slane %v3224, 5
    %v3232 = vperm.slane %v3224, 6
    %v3233 = vperm.slane %v3224, 7
    %v3274 = vunpack.c.l.b16 %v3192
    %v3275 = vunpack.c.h.b16 %v3192
    %v3276 = vunpack.c.l.b16 %v3193
    %v3277 = vunpack.c.h.b16 %v3193
    %v3278 = vunpack.c.l.b16 %v3194
    %v3279 = vunpack.c.h.b16 %v3194
    %v3280 = vunpack.c.l.b16 %v3195
    %v3281 = vunpack.c.h.b16 %v3195
    %v3282 = vunpack.c.l.b16 %v3196
    %v3283 = vunpack.c.h.b16 %v3196
    %v3284 = vunpack.c.l.b16 %v3197
    %v3285 = vunpack.c.h.b16 %v3197
    %v3286 = vunpack.c.l.b16 %v3198
    %v3287 = vunpack.c.h.b16 %v3198
    %v3288 = vunpack.c.l.b16 %v3199
    %v3289 = vunpack.c.h.b16 %v3199
    %v3290 = vunpack.c.l.b16 %v3200
    %v3291 = vunpack.c.h.b16 %v3200
    %v3292 = vunpack.c.l.b16 %v3201
    %v3293 = vunpack.c.h.b16 %v3201
    %v3294 = vunpack.c.l.b16 %v3202
    %v3295 = vunpack.c.h.b16 %v3202
    %v3296 = vunpack.c.l.b16 %v3203
    %v3297 = vunpack.c.h.b16 %v3203
    %v3298 = vunpack.c.l.b16 %v3204
    %v3299 = vunpack.c.h.b16 %v3204
    %v3300 = vunpack.c.l.b16 %v3205
    %v3301 = vunpack.c.h.b16 %v3205
    %v3302 = vunpack.c.l.b16 %v3206
    %v3303 = vunpack.c.h.b16 %v3206
    %v3304 = vunpack.c.l.b16 %v3207
    %v3305 = vunpack.c.h.b16 %v3207
    %v3306 = vunpack.c.l.b16 %v3208
    %v3307 = vunpack.c.h.b16 %v3208
    %v3308 = vunpack.c.l.b16 %v3209
    %v3309 = vunpack.c.h.b16 %v3209
    %v3310 = vunpack.c.l.b16 %v3210
    %v3311 = vunpack.c.h.b16 %v3210
    %v3312 = vunpack.c.l.b16 %v3211
    %v3313 = vunpack.c.h.b16 %v3211
    %v3314 = vunpack.c.l.b16 %v3212
    %v3315 = vunpack.c.h.b16 %v3212
    %v3316 = vunpack.c.l.b16 %v3213
    %v3317 = vunpack.c.h.b16 %v3213
    %v3318 = vunpack.c.l.b16 %v3214
    %v3319 = vunpack.c.h.b16 %v3214
    %v3320 = vunpack.c.l.b16 %v3215
    %v3321 = vunpack.c.h.b16 %v3215
    %v3322 = vunpack.c.l.b16 %v3216
    %v3323 = vunpack.c.h.b16 %v3216
    %v3324 = vunpack.c.l.b16 %v3217
    %v3325 = vunpack.c.h.b16 %v3217
    %v3326 = vunpack.c.l.b16 %v3218
    %v3327 = vunpack.c.h.b16 %v3218
    %v3328 = vunpack.c.l.b16 %v3219
    %v3329 = vunpack.c.h.b16 %v3219
    %v3330 = vunpack.c.l.b16 %v3220
    %v3331 = vunpack.c.h.b16 %v3220
    %v3332 = vunpack.c.l.b16 %v3221
    %v3333 = vunpack.c.h.b16 %v3221
    %v3334 = vunpack.c.l.b16 %v3222
    %v3335 = vunpack.c.h.b16 %v3222
    %v3336 = vunpack.c.l.b16 %v3223
    %v3337 = vunpack.c.h.b16 %v3223
    %v3338 = vpack.c.b16 %v3282, %v3274
    %v3339 = vpack.c.b16 %v3283, %v3275
    %v3340 = vpack.c.b16 %v3284, %v3276
    %v3341 = vpack.c.b16 %v3285, %v3277
    %v3342 = vpack.c.b16 %v3286, %v3278
    %v3343 = vpack.c.b16 %v3287, %v3279
    %v3344 = vpack.c.b16 %v3288, %v3280
    %v3345 = vpack.c.b16 %v3289, %v3281
    %v3346 = vpack.c.b16 %v3298, %v3290
    %v3347 = vpack.c.b16 %v3299, %v3291
    %v3348 = vpack.c.b16 %v3300, %v3292
    %v3349 = vpack.c.b16 %v3301, %v3293
    %v3350 = vpack.c.b16 %v3302, %v3294
    %v3351 = vpack.c.b16 %v3303, %v3295
    %v3352 = vpack.c.b16 %v3304, %v3296
    %v3353 = vpack.c.b16 %v3305, %v3297
    %v3354 = vpack.c.b16 %v3314, %v3306
    %v3355 = vpack.c.b16 %v3315, %v3307
    %v3356 = vpack.c.b16 %v3316, %v3308
    %v3357 = vpack.c.b16 %v3317, %v3309
    %v3358 = vpack.c.b16 %v3318, %v3310
    %v3359 = vpack.c.b16 %v3319, %v3311
    %v3360 = vpack.c.b16 %v3320, %v3312
    %v3361 = vpack.c.b16 %v3321, %v3313
    %v3362 = vpack.c.b16 %v3330, %v3322
    %v3363 = vpack.c.b16 %v3331, %v3323
    %v3364 = vpack.c.b16 %v3332, %v3324
    %v3365 = vpack.c.b16 %v3333, %v3325
    %v3366 = vpack.c.b16 %v3334, %v3326
    %v3367 = vpack.c.b16 %v3335, %v3327
    %v3368 = vpack.c.b16 %v3336, %v3328
    %v3369 = vpack.c.b16 %v3337, %v3329
    %vm3402 = vcmask 523264
    %v3404 = vsel %vm3402, %v3191, 0
    %3406 = vmatpush.bf16.msra.mxu0 0
    %3407 = vmatpush.bf16.msra.mxu0 0
    %3408 = vmatpush.bf16.msra.mxu0 0
    %3409 = vmatpush.bf16.msra.mxu0 0
    %3410 = vmatpush.bf16.msra.mxu0 %v3362
    %3411 = vmatpush.bf16.msra.mxu0 %v3354
    %3412 = vmatpush.bf16.msra.mxu0 %v3346
    %3413 = vmatpush.bf16.msra.mxu0 %v3338
    %3414 = vmatmul.bf16.gmra.mxu0 %v3404
    %v3415 = vpop.f32.mrf.mxu0
    %v3416 = vadd.f32 %v3226, %v3415
    %v3417 = vpop.f32.mrf.mxu0
    %3418 = vdwg.mxu0
    %3419 = vmatpush.bf16.msra.mxu0 0
    %3420 = vmatpush.bf16.msra.mxu0 0
    %3421 = vmatpush.bf16.msra.mxu0 0
    %3422 = vmatpush.bf16.msra.mxu0 0
    %3423 = vmatpush.bf16.msra.mxu0 %v3363
    %3424 = vmatpush.bf16.msra.mxu0 %v3355
    %3425 = vmatpush.bf16.msra.mxu0 %v3347
    %3426 = vmatpush.bf16.msra.mxu0 %v3339
    %3427 = vmatmul.bf16.gmra.mxu0 %v3404
    %v3428 = vpop.f32.mrf.mxu0
    %v3429 = vadd.f32 %v3227, %v3428
    %v3430 = vpop.f32.mrf.mxu0
    %3431 = vdwg.mxu0
    %3432 = vmatpush.bf16.msra.mxu0 0
    %3433 = vmatpush.bf16.msra.mxu0 0
    %3434 = vmatpush.bf16.msra.mxu0 0
    %3435 = vmatpush.bf16.msra.mxu0 0
    %3436 = vmatpush.bf16.msra.mxu0 %v3364
    %3437 = vmatpush.bf16.msra.mxu0 %v3356
    %3438 = vmatpush.bf16.msra.mxu0 %v3348
    %3439 = vmatpush.bf16.msra.mxu0 %v3340
    %3440 = vmatmul.bf16.gmra.mxu0 %v3404
    %v3441 = vpop.f32.mrf.mxu0
    %v3442 = vadd.f32 %v3228, %v3441
    %v3443 = vpop.f32.mrf.mxu0
    %3444 = vdwg.mxu0
    %3445 = vmatpush.bf16.msra.mxu0 0
    %3446 = vmatpush.bf16.msra.mxu0 0
    %3447 = vmatpush.bf16.msra.mxu0 0
    %3448 = vmatpush.bf16.msra.mxu0 0
    %3449 = vmatpush.bf16.msra.mxu0 %v3365
    %3450 = vmatpush.bf16.msra.mxu0 %v3357
    %3451 = vmatpush.bf16.msra.mxu0 %v3349
    %3452 = vmatpush.bf16.msra.mxu0 %v3341
    %3453 = vmatmul.bf16.gmra.mxu0 %v3404
    %v3454 = vpop.f32.mrf.mxu0
    %v3455 = vadd.f32 %v3229, %v3454
    %v3456 = vpop.f32.mrf.mxu0
    %3457 = vdwg.mxu0
    %3458 = vmatpush.bf16.msra.mxu0 0
    %3459 = vmatpush.bf16.msra.mxu0 0
    %3460 = vmatpush.bf16.msra.mxu0 0
    %3461 = vmatpush.bf16.msra.mxu0 0
    %3462 = vmatpush.bf16.msra.mxu0 %v3366
    %3463 = vmatpush.bf16.msra.mxu0 %v3358
    %3464 = vmatpush.bf16.msra.mxu0 %v3350
    %3465 = vmatpush.bf16.msra.mxu0 %v3342
    %3466 = vmatmul.bf16.gmra.mxu0 %v3404
    %v3467 = vpop.f32.mrf.mxu0
    %v3468 = vadd.f32 %v3230, %v3467
    %v3469 = vpop.f32.mrf.mxu0
    %3470 = vdwg.mxu0
    %3471 = vmatpush.bf16.msra.mxu0 0
    %3472 = vmatpush.bf16.msra.mxu0 0
    %3473 = vmatpush.bf16.msra.mxu0 0
    %3474 = vmatpush.bf16.msra.mxu0 0
    %3475 = vmatpush.bf16.msra.mxu0 %v3367
    %3476 = vmatpush.bf16.msra.mxu0 %v3359
    %3477 = vmatpush.bf16.msra.mxu0 %v3351
    %3478 = vmatpush.bf16.msra.mxu0 %v3343
    %3479 = vmatmul.bf16.gmra.mxu0 %v3404
    %v3480 = vpop.f32.mrf.mxu0
    %v3481 = vadd.f32 %v3231, %v3480
    %v3482 = vpop.f32.mrf.mxu0
    %3483 = vdwg.mxu0
    %3484 = vmatpush.bf16.msra.mxu0 0
    %3485 = vmatpush.bf16.msra.mxu0 0
    %3486 = vmatpush.bf16.msra.mxu0 0
    %3487 = vmatpush.bf16.msra.mxu0 0
    %3488 = vmatpush.bf16.msra.mxu0 %v3368
    %3489 = vmatpush.bf16.msra.mxu0 %v3360
    %3490 = vmatpush.bf16.msra.mxu0 %v3352
    %3491 = vmatpush.bf16.msra.mxu0 %v3344
    %3492 = vmatmul.bf16.gmra.mxu0 %v3404
    %v3493 = vpop.f32.mrf.mxu0
    %v3494 = vadd.f32 %v3232, %v3493
    %v3495 = vpop.f32.mrf.mxu0
    %3496 = vdwg.mxu0
    %3497 = vmatpush.bf16.msra.mxu0 0
    %3498 = vmatpush.bf16.msra.mxu0 0
    %3499 = vmatpush.bf16.msra.mxu0 0
    %3500 = vmatpush.bf16.msra.mxu0 0
    %3501 = vmatpush.bf16.msra.mxu0 %v3369
    %3502 = vmatpush.bf16.msra.mxu0 %v3361
    %3503 = vmatpush.bf16.msra.mxu0 %v3353
    %3504 = vmatpush.bf16.msra.mxu0 %v3345
    %3505 = vmatmul.bf16.gmra.mxu0 %v3404
    %v3506 = vpop.f32.mrf.mxu0
    %v3507 = vadd.f32 %v3233, %v3506
    %v3508 = vpop.f32.mrf.mxu0
    %3509 = vdwg.mxu0
    %v3510 = vpack.c.bf16 %v3416, %v3416
    %v3511 = vpack.c.bf16 %v3429, %v3429
    %v3512 = vpack.c.bf16 %v3442, %v3442
    %v3513 = vpack.c.bf16 %v3455, %v3455
    %v3514 = vpack.c.bf16 %v3468, %v3468
    %v3515 = vpack.c.bf16 %v3481, %v3481
    %v3516 = vpack.c.bf16 %v3494, %v3494
    %v3517 = vpack.c.bf16 %v3507, %v3507
    %v3518 = vld [vmem:[%s4] sm:$0xf]
    %v3519 = vld [vmem:[%s4 + $0x4] sm:$0xf]
    %v3520 = vld [vmem:[%s4 + $0x8] sm:$0xf]
    %v3521 = vld [vmem:[%s4 + $0xc] sm:$0xf]
    %v3522 = vld [vmem:[%s4 + $0x10] sm:$0xf]
    %v3523 = vld [vmem:[%s4 + $0x14] sm:$0xf]
    %v3524 = vld [vmem:[%s4 + $0x18] sm:$0xf]
    %v3525 = vld [vmem:[%s4 + $0x1c] sm:$0xf]
    %v3526 = vld [vmem:[%s4 + $0x20] sm:$0xf]
    %v3527 = vld [vmem:[%s4 + $0x24] sm:$0xf]
    %v3528 = vld [vmem:[%s4 + $0x28] sm:$0xf]
    %v3529 = vld [vmem:[%s4 + $0x2c] sm:$0xf]
    %v3530 = vld [vmem:[%s4 + $0x30] sm:$0xf]
    %v3531 = vld [vmem:[%s4 + $0x34] sm:$0xf]
    %v3532 = vld [vmem:[%s4 + $0x38] sm:$0xf]
    %v3533 = vld [vmem:[%s4 + $0x3c] sm:$0xf]
    %v3534 = vld [vmem:[%s4 + $0x40] sm:$0xf]
    %v3535 = vld [vmem:[%s4 + $0x44] sm:$0xf]
    %v3536 = vld [vmem:[%s4 + $0x48] sm:$0xf]
    %v3537 = vld [vmem:[%s4 + $0x4c] sm:$0xf]
    %v3538 = vld [vmem:[%s4 + $0x50] sm:$0xf]
    %v3539 = vld [vmem:[%s4 + $0x54] sm:$0xf]
    %v3540 = vld [vmem:[%s4 + $0x58] sm:$0xf]
    %v3541 = vld [vmem:[%s4 + $0x5c] sm:$0xf]
    %v3542 = vld [vmem:[%s4 + $0x60] sm:$0xf]
    %v3543 = vld [vmem:[%s4 + $0x64] sm:$0xf]
    %v3544 = vld [vmem:[%s4 + $0x68] sm:$0xf]
    %v3545 = vld [vmem:[%s4 + $0x6c] sm:$0xf]
    %v3546 = vld [vmem:[%s4 + $0x70] sm:$0xf]
    %v3547 = vld [vmem:[%s4 + $0x74] sm:$0xf]
    %v3548 = vld [vmem:[%s4 + $0x78] sm:$0xf]
    %v3549 = vld [vmem:[%s4 + $0x7c] sm:$0xf]
    %v3550 = vld [vmem:[%s4 + $0x80] sm:$0xf]
    %v3551 = vld [vmem:[%s4 + $0x84] sm:$0xf]
    %v3552 = vld [vmem:[%s4 + $0x88] sm:$0xf]
    %v3553 = vld [vmem:[%s4 + $0x8c] sm:$0xf]
    %v3554 = vld [vmem:[%s4 + $0x90] sm:$0xf]
    %v3555 = vld [vmem:[%s4 + $0x94] sm:$0xf]
    %v3556 = vld [vmem:[%s4 + $0x98] sm:$0xf]
    %v3557 = vld [vmem:[%s4 + $0x9c] sm:$0xf]
    %v3558 = vld [vmem:[%s4 + $0xa0] sm:$0xf]
    %v3559 = vld [vmem:[%s4 + $0xa4] sm:$0xf]
    %v3560 = vld [vmem:[%s4 + $0xa8] sm:$0xf]
    %v3561 = vld [vmem:[%s4 + $0xac] sm:$0xf]
    %v3562 = vld [vmem:[%s4 + $0xb0] sm:$0xf]
    %v3563 = vld [vmem:[%s4 + $0xb4] sm:$0xf]
    %v3564 = vld [vmem:[%s4 + $0xb8] sm:$0xf]
    %v3565 = vld [vmem:[%s4 + $0xbc] sm:$0xf]
    %v3566 = vld [vmem:[%s4 + $0xc0] sm:$0xf]
    %v3567 = vld [vmem:[%s4 + $0xc4] sm:$0xf]
    %v3568 = vld [vmem:[%s4 + $0xc8] sm:$0xf]
    %v3569 = vld [vmem:[%s4 + $0xcc] sm:$0xf]
    %v3570 = vld [vmem:[%s4 + $0xd0] sm:$0xf]
    %v3571 = vld [vmem:[%s4 + $0xd4] sm:$0xf]
    %v3572 = vld [vmem:[%s4 + $0xd8] sm:$0xf]
    %v3573 = vld [vmem:[%s4 + $0xdc] sm:$0xf]
    %v3574 = vld [vmem:[%s4 + $0xe0] sm:$0xf]
    %v3575 = vld [vmem:[%s4 + $0xe4] sm:$0xf]
    %v3576 = vld [vmem:[%s4 + $0xe8] sm:$0xf]
    %v3577 = vld [vmem:[%s4 + $0xec] sm:$0xf]
    %v3578 = vld [vmem:[%s4 + $0xf0] sm:$0xf]
    %v3579 = vld [vmem:[%s4 + $0xf4] sm:$0xf]
    %v3580 = vld [vmem:[%s4 + $0xf8] sm:$0xf]
    %v3581 = vld [vmem:[%s4 + $0xfc] sm:$0xf]
    %v3582 = vld [vmem:[%s4 + $0x100] sm:$0xf]
    %v3583 = vld [vmem:[%s4 + $0x104] sm:$0xf]
    %v3584 = vld [vmem:[%s4 + $0x108] sm:$0xf]
    %v3585 = vld [vmem:[%s4 + $0x10c] sm:$0xf]
    %v3586 = vld [vmem:[%s4 + $0x110] sm:$0xf]
    %v3587 = vld [vmem:[%s4 + $0x114] sm:$0xf]
    %v3588 = vld [vmem:[%s4 + $0x118] sm:$0xf]
    %v3589 = vld [vmem:[%s4 + $0x11c] sm:$0xf]
    %v3590 = vld [vmem:[%s4 + $0x120] sm:$0xf]
    %v3591 = vld [vmem:[%s4 + $0x124] sm:$0xf]
    %v3592 = vld [vmem:[%s4 + $0x128] sm:$0xf]
    %v3593 = vld [vmem:[%s4 + $0x12c] sm:$0xf]
    %v3594 = vld [vmem:[%s4 + $0x130] sm:$0xf]
    %v3595 = vld [vmem:[%s4 + $0x134] sm:$0xf]
    %v3596 = vld [vmem:[%s4 + $0x138] sm:$0xf]
    %v3597 = vld [vmem:[%s4 + $0x13c] sm:$0xf]
    %v3598 = vld [vmem:[%s4 + $0x140] sm:$0xf]
    %v3599 = vld [vmem:[%s4 + $0x144] sm:$0xf]
    %v3600 = vld [vmem:[%s4 + $0x148] sm:$0xf]
    %v3601 = vld [vmem:[%s4 + $0x14c] sm:$0xf]
    %v3602 = vld [vmem:[%s4 + $0x150] sm:$0xf]
    %v3603 = vld [vmem:[%s4 + $0x154] sm:$0xf]
    %v3604 = vld [vmem:[%s4 + $0x158] sm:$0xf]
    %v3605 = vld [vmem:[%s4 + $0x15c] sm:$0xf]
    %v3606 = vld [vmem:[%s4 + $0x160] sm:$0xf]
    %v3607 = vld [vmem:[%s4 + $0x164] sm:$0xf]
    %v3608 = vld [vmem:[%s4 + $0x168] sm:$0xf]
    %v3609 = vld [vmem:[%s4 + $0x16c] sm:$0xf]
    %v3610 = vld [vmem:[%s4 + $0x170] sm:$0xf]
    %v3611 = vld [vmem:[%s4 + $0x174] sm:$0xf]
    %v3612 = vld [vmem:[%s4 + $0x178] sm:$0xf]
    %v3613 = vld [vmem:[%s4 + $0x17c] sm:$0xf]
    %v3614 = vld [vmem:[%s4 + $0x180] sm:$0xf]
    %v3615 = vld [vmem:[%s4 + $0x184] sm:$0xf]
    %v3616 = vld [vmem:[%s4 + $0x188] sm:$0xf]
    %v3617 = vld [vmem:[%s4 + $0x18c] sm:$0xf]
    %v3618 = vld [vmem:[%s4 + $0x190] sm:$0xf]
    %v3619 = vld [vmem:[%s4 + $0x194] sm:$0xf]
    %v3620 = vld [vmem:[%s4 + $0x198] sm:$0xf]
    %v3621 = vld [vmem:[%s4 + $0x19c] sm:$0xf]
    %v3622 = vld [vmem:[%s4 + $0x1a0] sm:$0xf]
    %v3623 = vld [vmem:[%s4 + $0x1a4] sm:$0xf]
    %v3624 = vld [vmem:[%s4 + $0x1a8] sm:$0xf]
    %v3625 = vld [vmem:[%s4 + $0x1ac] sm:$0xf]
    %v3626 = vld [vmem:[%s4 + $0x1b0] sm:$0xf]
    %v3627 = vld [vmem:[%s4 + $0x1b4] sm:$0xf]
    %v3628 = vld [vmem:[%s4 + $0x1b8] sm:$0xf]
    %v3629 = vld [vmem:[%s4 + $0x1bc] sm:$0xf]
    %v3630 = vld [vmem:[%s4 + $0x1c0] sm:$0xf]
    %v3631 = vld [vmem:[%s4 + $0x1c4] sm:$0xf]
    %v3632 = vld [vmem:[%s4 + $0x1c8] sm:$0xf]
    %v3633 = vld [vmem:[%s4 + $0x1cc] sm:$0xf]
    %v3634 = vld [vmem:[%s4 + $0x1d0] sm:$0xf]
    %v3635 = vld [vmem:[%s4 + $0x1d4] sm:$0xf]
    %v3636 = vld [vmem:[%s4 + $0x1d8] sm:$0xf]
    %v3637 = vld [vmem:[%s4 + $0x1dc] sm:$0xf]
    %v3638 = vld [vmem:[%s4 + $0x1e0] sm:$0xf]
    %v3639 = vld [vmem:[%s4 + $0x1e4] sm:$0xf]
    %v3640 = vld [vmem:[%s4 + $0x1e8] sm:$0xf]
    %v3641 = vld [vmem:[%s4 + $0x1ec] sm:$0xf]
    %v3642 = vld [vmem:[%s4 + $0x1f0] sm:$0xf]
    %v3643 = vld [vmem:[%s4 + $0x1f4] sm:$0xf]
    %v3644 = vld [vmem:[%s4 + $0x1f8] sm:$0xf]
    %v3645 = vld [vmem:[%s4 + $0x1fc] sm:$0xf]
    %v3646 = vld [vmem:[%s5 + $0x1] sm:$0x1]
    %v3647 = vperm.slane %v3646, 0
    %v3776 = vunpack.c.l.b16 %v3518
    %v3777 = vunpack.c.l.b16 %v3519
    %v3778 = vunpack.c.l.b16 %v3520
    %v3779 = vunpack.c.l.b16 %v3521
    %v3780 = vunpack.c.l.b16 %v3522
    %v3781 = vunpack.c.l.b16 %v3523
    %v3782 = vunpack.c.l.b16 %v3524
    %v3783 = vunpack.c.l.b16 %v3525
    %v3784 = vunpack.c.l.b16 %v3526
    %v3785 = vunpack.c.l.b16 %v3527
    %v3786 = vunpack.c.l.b16 %v3528
    %v3787 = vunpack.c.l.b16 %v3529
    %v3788 = vunpack.c.l.b16 %v3530
    %v3789 = vunpack.c.l.b16 %v3531
    %v3790 = vunpack.c.l.b16 %v3532
    %v3791 = vunpack.c.l.b16 %v3533
    %v3792 = vunpack.c.l.b16 %v3534
    %v3793 = vunpack.c.l.b16 %v3535
    %v3794 = vunpack.c.l.b16 %v3536
    %v3795 = vunpack.c.l.b16 %v3537
    %v3796 = vunpack.c.l.b16 %v3538
    %v3797 = vunpack.c.l.b16 %v3539
    %v3798 = vunpack.c.l.b16 %v3540
    %v3799 = vunpack.c.l.b16 %v3541
    %v3800 = vunpack.c.l.b16 %v3542
    %v3801 = vunpack.c.l.b16 %v3543
    %v3802 = vunpack.c.l.b16 %v3544
    %v3803 = vunpack.c.l.b16 %v3545
    %v3804 = vunpack.c.l.b16 %v3546
    %v3805 = vunpack.c.l.b16 %v3547
    %v3806 = vunpack.c.l.b16 %v3548
    %v3807 = vunpack.c.l.b16 %v3549
    %v3808 = vunpack.c.l.b16 %v3550
    %v3809 = vunpack.c.l.b16 %v3551
    %v3810 = vunpack.c.l.b16 %v3552
    %v3811 = vunpack.c.l.b16 %v3553
    %v3812 = vunpack.c.l.b16 %v3554
    %v3813 = vunpack.c.l.b16 %v3555
    %v3814 = vunpack.c.l.b16 %v3556
    %v3815 = vunpack.c.l.b16 %v3557
    %v3816 = vunpack.c.l.b16 %v3558
    %v3817 = vunpack.c.l.b16 %v3559
    %v3818 = vunpack.c.l.b16 %v3560
    %v3819 = vunpack.c.l.b16 %v3561
    %v3820 = vunpack.c.l.b16 %v3562
    %v3821 = vunpack.c.l.b16 %v3563
    %v3822 = vunpack.c.l.b16 %v3564
    %v3823 = vunpack.c.l.b16 %v3565
    %v3824 = vunpack.c.l.b16 %v3566
    %v3825 = vunpack.c.l.b16 %v3567
    %v3826 = vunpack.c.l.b16 %v3568
    %v3827 = vunpack.c.l.b16 %v3569
    %v3828 = vunpack.c.l.b16 %v3570
    %v3829 = vunpack.c.l.b16 %v3571
    %v3830 = vunpack.c.l.b16 %v3572
    %v3831 = vunpack.c.l.b16 %v3573
    %v3832 = vunpack.c.l.b16 %v3574
    %v3833 = vunpack.c.l.b16 %v3575
    %v3834 = vunpack.c.l.b16 %v3576
    %v3835 = vunpack.c.l.b16 %v3577
    %v3836 = vunpack.c.l.b16 %v3578
    %v3837 = vunpack.c.l.b16 %v3579
    %v3838 = vunpack.c.l.b16 %v3580
    %v3839 = vunpack.c.l.b16 %v3581
    %v3840 = vunpack.c.l.b16 %v3582
    %v3841 = vunpack.c.l.b16 %v3583
    %v3842 = vunpack.c.l.b16 %v3584
    %v3843 = vunpack.c.l.b16 %v3585
    %v3844 = vunpack.c.l.b16 %v3586
    %v3845 = vunpack.c.l.b16 %v3587
    %v3846 = vunpack.c.l.b16 %v3588
    %v3847 = vunpack.c.l.b16 %v3589
    %v3848 = vunpack.c.l.b16 %v3590
    %v3849 = vunpack.c.l.b16 %v3591
    %v3850 = vunpack.c.l.b16 %v3592
    %v3851 = vunpack.c.l.b16 %v3593
    %v3852 = vunpack.c.l.b16 %v3594
    %v3853 = vunpack.c.l.b16 %v3595
    %v3854 = vunpack.c.l.b16 %v3596
    %v3855 = vunpack.c.l.b16 %v3597
    %v3856 = vunpack.c.l.b16 %v3598
    %v3857 = vunpack.c.l.b16 %v3599
    %v3858 = vunpack.c.l.b16 %v3600
    %v3859 = vunpack.c.l.b16 %v3601
    %v3860 = vunpack.c.l.b16 %v3602
    %v3861 = vunpack.c.l.b16 %v3603
    %v3862 = vunpack.c.l.b16 %v3604
    %v3863 = vunpack.c.l.b16 %v3605
    %v3864 = vunpack.c.l.b16 %v3606
    %v3865 = vunpack.c.l.b16 %v3607
    %v3866 = vunpack.c.l.b16 %v3608
    %v3867 = vunpack.c.l.b16 %v3609
    %v3868 = vunpack.c.l.b16 %v3610
    %v3869 = vunpack.c.l.b16 %v3611
    %v3870 = vunpack.c.l.b16 %v3612
    %v3871 = vunpack.c.l.b16 %v3613
    %v3872 = vunpack.c.l.b16 %v3614
    %v3873 = vunpack.c.l.b16 %v3615
    %v3874 = vunpack.c.l.b16 %v3616
    %v3875 = vunpack.c.l.b16 %v3617
    %v3876 = vunpack.c.l.b16 %v3618
    %v3877 = vunpack.c.l.b16 %v3619
    %v3878 = vunpack.c.l.b16 %v3620
    %v3879 = vunpack.c.l.b16 %v3621
    %v3880 = vunpack.c.l.b16 %v3622
    %v3881 = vunpack.c.l.b16 %v3623
    %v3882 = vunpack.c.l.b16 %v3624
    %v3883 = vunpack.c.l.b16 %v3625
    %v3884 = vunpack.c.l.b16 %v3626
    %v3885 = vunpack.c.l.b16 %v3627
    %v3886 = vunpack.c.l.b16 %v3628
    %v3887 = vunpack.c.l.b16 %v3629
    %v3888 = vunpack.c.l.b16 %v3630
    %v3889 = vunpack.c.l.b16 %v3631
    %v3890 = vunpack.c.l.b16 %v3632
    %v3891 = vunpack.c.l.b16 %v3633
    %v3892 = vunpack.c.l.b16 %v3634
    %v3893 = vunpack.c.l.b16 %v3635
    %v3894 = vunpack.c.l.b16 %v3636
    %v3895 = vunpack.c.l.b16 %v3637
    %v3896 = vunpack.c.l.b16 %v3638
    %v3897 = vunpack.c.l.b16 %v3639
    %v3898 = vunpack.c.l.b16 %v3640
    %v3899 = vunpack.c.l.b16 %v3641
    %v3900 = vunpack.c.l.b16 %v3642
    %v3901 = vunpack.c.l.b16 %v3643
    %v3902 = vunpack.c.l.b16 %v3644
    %v3903 = vunpack.c.l.b16 %v3645
    %v3904 = vpack.c.b16 %v3777, %v3776
    %v3905 = vpack.c.b16 %v3779, %v3778
    %v3906 = vpack.c.b16 %v3781, %v3780
    %v3907 = vpack.c.b16 %v3783, %v3782
    %v3908 = vpack.c.b16 %v3785, %v3784
    %v3909 = vpack.c.b16 %v3787, %v3786
    %v3910 = vpack.c.b16 %v3789, %v3788
    %v3911 = vpack.c.b16 %v3791, %v3790
    %v3912 = vpack.c.b16 %v3793, %v3792
    %v3913 = vpack.c.b16 %v3795, %v3794
    %v3914 = vpack.c.b16 %v3797, %v3796
    %v3915 = vpack.c.b16 %v3799, %v3798
    %v3916 = vpack.c.b16 %v3801, %v3800
    %v3917 = vpack.c.b16 %v3803, %v3802
    %v3918 = vpack.c.b16 %v3805, %v3804
    %v3919 = vpack.c.b16 %v3807, %v3806
    %v3920 = vpack.c.b16 %v3809, %v3808
    %v3921 = vpack.c.b16 %v3811, %v3810
    %v3922 = vpack.c.b16 %v3813, %v3812
    %v3923 = vpack.c.b16 %v3815, %v3814
    %v3924 = vpack.c.b16 %v3817, %v3816
    %v3925 = vpack.c.b16 %v3819, %v3818
    %v3926 = vpack.c.b16 %v3821, %v3820
    %v3927 = vpack.c.b16 %v3823, %v3822
    %v3928 = vpack.c.b16 %v3825, %v3824
    %v3929 = vpack.c.b16 %v3827, %v3826
    %v3930 = vpack.c.b16 %v3829, %v3828
    %v3931 = vpack.c.b16 %v3831, %v3830
    %v3932 = vpack.c.b16 %v3833, %v3832
    %v3933 = vpack.c.b16 %v3835, %v3834
    %v3934 = vpack.c.b16 %v3837, %v3836
    %v3935 = vpack.c.b16 %v3839, %v3838
    %v3936 = vpack.c.b16 %v3841, %v3840
    %v3937 = vpack.c.b16 %v3843, %v3842
    %v3938 = vpack.c.b16 %v3845, %v3844
    %v3939 = vpack.c.b16 %v3847, %v3846
    %v3940 = vpack.c.b16 %v3849, %v3848
    %v3941 = vpack.c.b16 %v3851, %v3850
    %v3942 = vpack.c.b16 %v3853, %v3852
    %v3943 = vpack.c.b16 %v3855, %v3854
    %v3944 = vpack.c.b16 %v3857, %v3856
    %v3945 = vpack.c.b16 %v3859, %v3858
    %v3946 = vpack.c.b16 %v3861, %v3860
    %v3947 = vpack.c.b16 %v3863, %v3862
    %v3948 = vpack.c.b16 %v3865, %v3864
    %v3949 = vpack.c.b16 %v3867, %v3866
    %v3950 = vpack.c.b16 %v3869, %v3868
    %v3951 = vpack.c.b16 %v3871, %v3870
    %v3952 = vpack.c.b16 %v3873, %v3872
    %v3953 = vpack.c.b16 %v3875, %v3874
    %v3954 = vpack.c.b16 %v3877, %v3876
    %v3955 = vpack.c.b16 %v3879, %v3878
    %v3956 = vpack.c.b16 %v3881, %v3880
    %v3957 = vpack.c.b16 %v3883, %v3882
    %v3958 = vpack.c.b16 %v3885, %v3884
    %v3959 = vpack.c.b16 %v3887, %v3886
    %v3960 = vpack.c.b16 %v3889, %v3888
    %v3961 = vpack.c.b16 %v3891, %v3890
    %v3962 = vpack.c.b16 %v3893, %v3892
    %v3963 = vpack.c.b16 %v3895, %v3894
    %v3964 = vpack.c.b16 %v3897, %v3896
    %v3965 = vpack.c.b16 %v3899, %v3898
    %v3966 = vpack.c.b16 %v3901, %v3900
    %v3967 = vpack.c.b16 %v3903, %v3902
    %4032 = vmatpush.bf16.msra.mxu0 %v3911
    %4033 = vmatpush.bf16.msra.mxu0 %v3910
    %4034 = vmatpush.bf16.msra.mxu0 %v3909
    %4035 = vmatpush.bf16.msra.mxu0 %v3908
    %4036 = vmatpush.bf16.msra.mxu0 %v3907
    %4037 = vmatpush.bf16.msra.mxu0 %v3906
    %4038 = vmatpush.bf16.msra.mxu0 %v3905
    %4039 = vmatpush.bf16.msra.mxu0 %v3904
    %4040 = vmatmul.bf16.gmra.mxu0 %v3510
    %v4041 = vpop.f32.mrf.mxu0
    %v4042 = vadd.f32 %v3647, %v4041
    %v4043 = vpop.f32.mrf.mxu0
    %4044 = vdwg.mxu0
    %4045 = vmatpush.bf16.msra.mxu0 %v3919
    %4046 = vmatpush.bf16.msra.mxu0 %v3918
    %4047 = vmatpush.bf16.msra.mxu0 %v3917
    %4048 = vmatpush.bf16.msra.mxu0 %v3916
    %4049 = vmatpush.bf16.msra.mxu0 %v3915
    %4050 = vmatpush.bf16.msra.mxu0 %v3914
    %4051 = vmatpush.bf16.msra.mxu0 %v3913
    %4052 = vmatpush.bf16.msra.mxu0 %v3912
    %4053 = vmatmul.bf16.gmra.mxu0 %v3511
    %v4054 = vpop.f32.mrf.mxu0
    %v4055 = vadd.f32 %v4042, %v4054
    %v4056 = vpop.f32.mrf.mxu0
    %4057 = vdwg.mxu0
    %4058 = vmatpush.bf16.msra.mxu0 %v3927
    %4059 = vmatpush.bf16.msra.mxu0 %v3926
    %4060 = vmatpush.bf16.msra.mxu0 %v3925
    %4061 = vmatpush.bf16.msra.mxu0 %v3924
    %4062 = vmatpush.bf16.msra.mxu0 %v3923
    %4063 = vmatpush.bf16.msra.mxu0 %v3922
    %4064 = vmatpush.bf16.msra.mxu0 %v3921
    %4065 = vmatpush.bf16.msra.mxu0 %v3920
    %4066 = vmatmul.bf16.gmra.mxu0 %v3512
    %v4067 = vpop.f32.mrf.mxu0
    %v4068 = vadd.f32 %v4055, %v4067
    %v4069 = vpop.f32.mrf.mxu0
    %4070 = vdwg.mxu0
    %4071 = vmatpush.bf16.msra.mxu0 %v3935
    %4072 = vmatpush.bf16.msra.mxu0 %v3934
    %4073 = vmatpush.bf16.msra.mxu0 %v3933
    %4074 = vmatpush.bf16.msra.mxu0 %v3932
    %4075 = vmatpush.bf16.msra.mxu0 %v3931
    %4076 = vmatpush.bf16.msra.mxu0 %v3930
    %4077 = vmatpush.bf16.msra.mxu0 %v3929
    %4078 = vmatpush.bf16.msra.mxu0 %v3928
    %4079 = vmatmul.bf16.gmra.mxu0 %v3513
    %v4080 = vpop.f32.mrf.mxu0
    %v4081 = vadd.f32 %v4068, %v4080
    %v4082 = vpop.f32.mrf.mxu0
    %4083 = vdwg.mxu0
    %4084 = vmatpush.bf16.msra.mxu0 %v3943
    %4085 = vmatpush.bf16.msra.mxu0 %v3942
    %4086 = vmatpush.bf16.msra.mxu0 %v3941
    %4087 = vmatpush.bf16.msra.mxu0 %v3940
    %4088 = vmatpush.bf16.msra.mxu0 %v3939
    %4089 = vmatpush.bf16.msra.mxu0 %v3938
    %4090 = vmatpush.bf16.msra.mxu0 %v3937
    %4091 = vmatpush.bf16.msra.mxu0 %v3936
    %4092 = vmatmul.bf16.gmra.mxu0 %v3514
    %v4093 = vpop.f32.mrf.mxu0
    %v4094 = vadd.f32 %v4081, %v4093
    %v4095 = vpop.f32.mrf.mxu0
    %4096 = vdwg.mxu0
    %4097 = vmatpush.bf16.msra.mxu0 %v3951
    %4098 = vmatpush.bf16.msra.mxu0 %v3950
    %4099 = vmatpush.bf16.msra.mxu0 %v3949
    %4100 = vmatpush.bf16.msra.mxu0 %v3948
    %4101 = vmatpush.bf16.msra.mxu0 %v3947
    %4102 = vmatpush.bf16.msra.mxu0 %v3946
    %4103 = vmatpush.bf16.msra.mxu0 %v3945
    %4104 = vmatpush.bf16.msra.mxu0 %v3944
    %4105 = vmatmul.bf16.gmra.mxu0 %v3515
    %v4106 = vpop.f32.mrf.mxu0
    %v4107 = vadd.f32 %v4094, %v4106
    %v4108 = vpop.f32.mrf.mxu0
    %4109 = vdwg.mxu0
    %4110 = vmatpush.bf16.msra.mxu0 %v3959
    %4111 = vmatpush.bf16.msra.mxu0 %v3958
    %4112 = vmatpush.bf16.msra.mxu0 %v3957
    %4113 = vmatpush.bf16.msra.mxu0 %v3956
    %4114 = vmatpush.bf16.msra.mxu0 %v3955
    %4115 = vmatpush.bf16.msra.mxu0 %v3954
    %4116 = vmatpush.bf16.msra.mxu0 %v3953
    %4117 = vmatpush.bf16.msra.mxu0 %v3952
    %4118 = vmatmul.bf16.gmra.mxu0 %v3516
    %v4119 = vpop.f32.mrf.mxu0
    %v4120 = vadd.f32 %v4107, %v4119
    %v4121 = vpop.f32.mrf.mxu0
    %4122 = vdwg.mxu0
    %4123 = vmatpush.bf16.msra.mxu0 %v3967
    %4124 = vmatpush.bf16.msra.mxu0 %v3966
    %4125 = vmatpush.bf16.msra.mxu0 %v3965
    %4126 = vmatpush.bf16.msra.mxu0 %v3964
    %4127 = vmatpush.bf16.msra.mxu0 %v3963
    %4128 = vmatpush.bf16.msra.mxu0 %v3962
    %4129 = vmatpush.bf16.msra.mxu0 %v3961
    %4130 = vmatpush.bf16.msra.mxu0 %v3960
    %4131 = vmatmul.bf16.gmra.mxu0 %v3517
    %v4132 = vpop.f32.mrf.mxu0
    %v4133 = vadd.f32 %v4120, %v4132
    %v4134 = vpop.f32.mrf.mxu0
    %4135 = vdwg.mxu0
    %vm4136 = vcmask 74752
    %4137 = vst.msk [vmem:[#allocation8] sm:$0x3] %vm4136, %v4133
    %v4138 = vsel %vm4136, %v4133, -inf
    %4139 = vmax.xlane.f32.xlu0 %v4138
    %v4140 = vpop.xlane.xlu0 %4139
    %v4141 = vsub.f32 %v4133, %v4140
    %v4142 = vmul.f32 %v4141, 1.442695
    %v4143 = vpow.pop %v4142
    %v4144 = vsel %vm4136, %v4143, 0.0
    %4145 = vadd.xlane.f32.xlu0 %v4144
    %v4146 = vpop.xlane.xlu0 %4145
    %v4147 = vrcp.pop %v4146
    %v4148 = vmul.f32 %v4146, %v4147
    %v4149 = vsub.f32 1.0, %v4148
    %v4150 = vmul.f32 %v4147, %v4149
    %v4151 = vadd.f32 %v4147, %v4150
    %vm4152 = vweird.f32 %v4146
    %vm4153 = vweird.f32 %v4147
    %vm4154 = vmor %vm4152, %vm4153
    %v4155 = vsel %vm4154, %v4147, %v4151
    %v4156 = vand.u32 2147483647, %v4146
    %vm4157 = vcmp.eq.f32.partialorder %v4156, 8.507059e+37
    %v4158 = vand.u32 %v4146, 2147483648
    %v4159 = vor.u32 1.1754944e-38, %v4158
    %v4160 = vsel %vm4157, %v4159, %v4155
    %v4161 = vmul.f32 %v4143, %v4160
    %v4162 = vlog2.pop %v4146
    %v4163 = vmul.f32 %v4162, 0.6931472
    %v4164 = vsub.f32 %v4141, %v4163
    %v4165 = vmul.f32 %v4161, %v4164
    %v4166 = vsel %vm4136, %v4165, 0.0
    %4167 = vadd.xlane.f32.xlu0 %v4166
    %v4168 = vpop.xlane.xlu0 %4167
    %v4169 = vsub.f32 0.0, %v4168
    %v4170 = vrcp.pop 2.9444
    %v4171 = vmul.f32 2.9444, %v4170
    %v4172 = vsub.f32 1.0, %v4171
    %v4173 = vmul.f32 %v4170, %v4172
    %v4174 = vadd.f32 %v4170, %v4173
    %vm4175 = vweird.f32 %v4170
    %v4176 = vsel %vm4175, %v4170, %v4174
    %v4177 = vmul.f32 %v4169, %v4176
    %v4178 = vmul.f32 %v4177, %v4177
    %v4179 = vadd.f32 %v4178, 1e-08
    %v4180 = vlog2.pop %v4179
    %v4181 = vmul.f32 %v4180, 0.6931472
    %v4182 = vmul.f32 %v4181, 1.5
    %v4183 = vmul.f32 %v4182, 1.442695
    %v4184 = vpow.pop %v4183
    %vm4185 = vcmask 1041408
    %v4186 = vsel %vm4185, %v4184, 0.0
    %v4187 = vrot.slane %v4186, 4
    %v4188 = vadd.f32 %v4186, %v4187
    %v4189 = vrot.slane %v4188, 2
    %v4190 = vadd.f32 %v4188, %v4189
    %v4191 = vrot.slane %v4190, 1
    %v4192 = vadd.f32 %v4190, %v4191
    %v4193 = vmul.f32 %v4192, 0.5
    %vm4194 = vcmask 0
    %4195 = vst.msk [vmem:[#allocation10] sm:$0x1] %vm4194, %v4193
    // Predicated region
    $region26: #{classifier_forward.1} parent=1 // pred_check
      _
    $region27: #{classifier_forward.1} parent=1 // pred_check_branch
      %4197 = sbr.rel (0) target = $region29
    $region28: #{classifier_forward.1} parent=1 // pred_region
      %4199 = vsyncadd [#allocation9], 0
      %s4201 = sshll.u32 [#allocation8], 4
      %s4202 = int_to_ptr.vmem [resolvable:$true] %s4201
      %s4203 = sshll.u32 %s6, 4
      %s4204 = int_to_ptr.hbm [resolvable:$true] %s4203
      %4206 = dma.vmem_to_hbm [thread:$0]  %s4202, 32, %s4204, [#allocation9]
    $region29: #{classifier_forward.1} parent=1 // pred_fallthru
      _
    // Predicated region
    $region30: #{classifier_forward.1} parent=1 // pred_check
      _
    $region31: #{classifier_forward.1} parent=1 // pred_check_branch
      %4208 = sbr.rel (0) target = $region33
    $region32: #{classifier_forward.1} parent=1 // pred_region
      %4210 = vsyncadd [#allocation11], 0
      %s4212 = sshll.u32 [#allocation10], 4
      %s4213 = int_to_ptr.vmem [resolvable:$true] %s4212
      %s4214 = sshll.u32 %s7, 4
      %s4215 = int_to_ptr.hbm [resolvable:$true] %s4214
      %4217 = dma.vmem_to_hbm [thread:$0]  %s4213, 16, %s4215, [#allocation11]
    $region33: #{classifier_forward.1} parent=1 // pred_fallthru
      _
    // Predicated region
    $region34: #{classifier_forward.1} parent=1 // pred_check
      _
    $region35: #{classifier_forward.1} parent=1 // pred_check_branch
      %4219 = sbr.rel (0) target = $region37
    $region36: #{classifier_forward.1} parent=1 // pred_region
      %4221 = dma.done [#allocation9], 32
    $region37: #{classifier_forward.1} parent=1 // pred_fallthru
      _
    // Predicated region
    $region38: #{classifier_forward.1} parent=1 // pred_check
      _
    $region39: #{classifier_forward.1} parent=1 // pred_check_branch
      %4223 = sbr.rel (0) target = $region41
    $region40: #{classifier_forward.1} parent=1 // pred_region
      %4225 = dma.done [#allocation11], 16
    $region41: #{classifier_forward.1} parent=1 // pred_fallthru
      _
    %4226 = vsyncpa [#allocation9], 1
    %4227 = vsyncpa [#allocation11], 1

</llo_original>
